<compile_context>
chip_gen: v5e
topology: v5e:2x2
jax: 0.10.0
libtpu: 0.0.40
codegen_flags: <defaults>
</compile_context>

<pallas_src>
import jax
import jax.numpy as jnp
from jax.experimental import pallas as pl
from jax.experimental.pallas import tpu as pltpu

EPS = 1e-5
OUT_RAW = 784            # real fc4 width
OUT_PAD = 896            # 7 * 128, lane-dense padded width


def _bn_relu(h, gamma, beta):
    # BatchNorm1d (training mode: batch stats, biased variance) + ReLU.
    # Single pass: sum and sum-of-squares together, var = E[x^2] - mean^2,
    # fused into one broadcasted scale/shift FMA.  All math stays f32
    # (v5e VPU has no bf16).
    inv_n = 1.0 / h.shape[0]
    mean = jnp.sum(h, axis=0, keepdims=True) * inv_n
    ex2 = jnp.sum(h * h, axis=0, keepdims=True) * inv_n
    var = ex2 - mean * mean
    scale = gamma * jax.lax.rsqrt(var + EPS)      # rsqrt -> EUP slot
    shift = beta - mean * scale
    return jnp.maximum(h * scale + shift, 0.0)


def generator_kernel(noise_ref, label_ref,
                     w11_ref, g11_ref, be11_ref,
                     w12_ref, g12_ref, be12_ref,
                     w2a_ref, w2b_ref, g2_ref, be2_ref,
                     w3_hbm_ref, g3_ref, be3_ref,
                     w4_hbm_ref, b4_ref,
                     out_ref,
                     w3_vmem, w4_vmem, dma_sem):
    f32 = jnp.float32
    bf16 = jnp.bfloat16

    # Kick off the big fc3/fc4 weight DMAs so they overlap fc1/fc2/BN compute.
    cp3 = pltpu.make_async_copy(w3_hbm_ref, w3_vmem, dma_sem.at[0])
    cp4 = pltpu.make_async_copy(w4_hbm_ref, w4_vmem, dma_sem.at[1])
    cp3.start()
    cp4.start()

    # ---- branch 1: noise (B,100) -> 256 (bf16 x bf16 MXU, f32 accumulate) --
    x = jnp.dot(noise_ref[...].astype(bf16), w11_ref[...],
                preferred_element_type=f32)
    x = _bn_relu(x, g11_ref[...], be11_ref[...])

    # ---- branch 2: label (B,3) -> 256 on the VPU (K=3 wastes the MXU) ------
    label = label_ref[...]
    w12 = w12_ref[...]                             # (3, 256) f32
    y = (label[:, 0:1] * w12[0:1, :]
         + label[:, 1:2] * w12[1:2, :]
         + label[:, 2:3] * w12[2:3, :])
    y = _bn_relu(y, g12_ref[...], be12_ref[...])

    # ---- fc2 (512 -> 512); concat folded into a split weight:
    #      [x, y] @ w2 == x @ w2[:256] + y @ w2[256:] ------------------------
    h = (jnp.dot(x.astype(bf16), w2a_ref[...], preferred_element_type=f32)
         + jnp.dot(y.astype(bf16), w2b_ref[...], preferred_element_type=f32))
    h = _bn_relu(h, g2_ref[...], be2_ref[...])

    # ---- fc3 (512 -> 1024) --------------------------------------------------
    cp3.wait()
    h = jnp.dot(h.astype(bf16), w3_vmem[...], preferred_element_type=f32)
    h = _bn_relu(h, g3_ref[...], be3_ref[...])

    # ---- fc4 (1024 -> 896 lane-padded; real width 784) + sigmoid ------------
    cp4.wait()
    h = jnp.dot(h.astype(bf16), w4_vmem[...],
                preferred_element_type=f32) + b4_ref[...]
    out_ref[...] = pl.reciprocal(1.0 + jnp.exp(-h), approx=True)


def generator_forward(noise, label, params):
    B = noise.shape[0]
    args = (
        noise, label,
        params["w11"], params["g11"], params["be11"],
        params["w12"], params["g12"], params["be12"],
        params["w2a"], params["w2b"], params["g2"], params["be2"],
        params["w3"], params["g3"], params["be3"],
        params["w4"], params["b4"],
    )
    vmem = pl.BlockSpec(memory_space=pltpu.MemorySpace.VMEM)
    hbm = pl.BlockSpec(memory_space=pl.ANY)
    # w3 (index 12) and w4 (index 15) stay in HBM and are DMA'd manually so
    # the transfer overlaps early-layer compute.
    in_specs = [vmem] * 12 + [hbm, vmem, vmem, hbm, vmem]

    out_padded = pl.pallas_call(
        generator_kernel,
        out_shape=jax.ShapeDtypeStruct((B, OUT_PAD), jnp.float32),
        in_specs=in_specs,
        out_specs=vmem,
        scratch_shapes=[
            pltpu.VMEM((512, 1024), jnp.bfloat16),      # w3 landing buffer
            pltpu.VMEM((1024, OUT_PAD), jnp.bfloat16),  # w4 landing buffer
            pltpu.SemaphoreType.DMA((2,)),
        ],
        compiler_params=pltpu.CompilerParams(
            vmem_limit_bytes=16 * 1024 * 1024),
    )(*args)
    return out_padded[:, :OUT_RAW]


def init_params(key):
    """Deterministic normal(0, 0.02) weight init (like weight_init(0, 0.02)).
    Linear biases are zero under normal_init; b1_1/b1_2/b2/b3 are dropped
    entirely since a constant per-column bias followed by training-mode BN
    cancels exactly.  Large weights stored (in, out) in bfloat16 (halves DMA
    traffic); the tiny label weight and BN params stay float32."""
    std = 0.02
    ks = jax.random.split(key, 5)

    def lin_w(k, fan_in, fan_out, dtype=jnp.bfloat16):
        return (std * jax.random.normal(k, (fan_in, fan_out))).astype(dtype)

    def bn(width):
        return (jnp.ones((1, width), jnp.float32),
                jnp.zeros((1, width), jnp.float32))

    p = {}
    p["w11"] = lin_w(ks[0], 100, 256)
    p["g11"], p["be11"] = bn(256)

    p["w12"] = lin_w(ks[1], 3, 256, dtype=jnp.float32)   # VPU path, tiny
    p["g12"], p["be12"] = bn(256)

    w2 = lin_w(ks[2], 512, 512)
    p["w2a"], p["w2b"] = w2[:256, :], w2[256:, :]          # concat-free fc2
    p["g2"], p["be2"] = bn(512)

    p["w3"] = lin_w(ks[3], 512, 1024)
    p["g3"], p["be3"] = bn(1024)

    w4 = lin_w(ks[4], 1024, OUT_RAW)
    # lane-pad N: 784 -> 896 with zero columns (sliced off in the wrapper)
    p["w4"] = jnp.pad(w4, ((0, 0), (0, OUT_PAD - OUT_RAW)))
    p["b4"] = jnp.zeros((1, OUT_PAD), jnp.float32)
    return p


def reference_forward(noise, label, p):
    """Pure-JAX reference: same (bf16-stored) weight values, f32 math."""
    hi = jax.lax.Precision.HIGHEST
    f32 = jnp.float32

    def bn_relu(h, g, b):
        m = jnp.mean(h, axis=0, keepdims=True)
        v = jnp.mean(jnp.square(h - m), axis=0, keepdims=True)
        return jnp.maximum(g * (h - m) / jnp.sqrt(v + EPS) + b, 0.0)

    x = bn_relu(jnp.dot(noise, p["w11"].astype(f32), precision=hi),
                p["g11"], p["be11"])
    y = bn_relu(jnp.dot(label, p["w12"], precision=hi),
                p["g12"], p["be12"])
    h = jnp.concatenate([x, y], axis=1)
    w2 = jnp.concatenate([p["w2a"], p["w2b"]], axis=0).astype(f32)
    h = bn_relu(jnp.dot(h, w2, precision=hi), p["g2"], p["be2"])
    h = bn_relu(jnp.dot(h, p["w3"].astype(f32), precision=hi),
                p["g3"], p["be3"])
    logits = (jnp.dot(h, p["w4"].astype(f32)[:, :OUT_RAW], precision=hi)
              + p["b4"][:, :OUT_RAW])
    return jax.nn.sigmoid(logits)


if __name__ == "__main__":
    key = jax.random.PRNGKey(0)
    k_noise, k_label, k_params = jax.random.split(key, 3)

    B = 8
    noise = jax.random.normal(k_noise, (B, 100), dtype=jnp.float32)
    # one-hot 3-d label vector, like the conditional input of the GAN
    label = jax.nn.one_hot(
        jax.random.randint(k_label, (B,), 0, 3), 3, dtype=jnp.float32)

    params = init_params(k_params)

    out = generator_forward(noise, label, params)
    out = jax.block_until_ready(out)

    ref = reference_forward(noise, label, params)
    assert out.shape == (B, OUT_RAW) and out.dtype == jnp.float32
    # tolerance reflects bf16 MXU operands (weights AND activations) plus the
    # EUP approx-reciprocal sigmoid, vs. an f32 precision=HIGHEST reference
    max_err = float(jnp.max(jnp.abs(out - ref)))
    assert jnp.allclose(out, ref, atol=1e-2, rtol=1e-2), max_err

    print("KERNEL_OK")
</pallas_src>

<mosaic_0001>
module attributes {stable_mosaic.version = 11 : i64} {
  func.func @generator_kernel(%arg0: memref<8x100xf32, #tpu.memory_space<vmem>>, %arg1: memref<8x3xf32, #tpu.memory_space<vmem>>, %arg2: memref<100x256xbf16, #tpu.memory_space<vmem>>, %arg3: memref<1x256xf32, #tpu.memory_space<vmem>>, %arg4: memref<1x256xf32, #tpu.memory_space<vmem>>, %arg5: memref<3x256xf32, #tpu.memory_space<vmem>>, %arg6: memref<1x256xf32, #tpu.memory_space<vmem>>, %arg7: memref<1x256xf32, #tpu.memory_space<vmem>>, %arg8: memref<256x512xbf16, #tpu.memory_space<vmem>>, %arg9: memref<256x512xbf16, #tpu.memory_space<vmem>>, %arg10: memref<1x512xf32, #tpu.memory_space<vmem>>, %arg11: memref<1x512xf32, #tpu.memory_space<vmem>>, %arg12: memref<512x1024xbf16, #tpu.memory_space<any>>, %arg13: memref<1x1024xf32, #tpu.memory_space<vmem>>, %arg14: memref<1x1024xf32, #tpu.memory_space<vmem>>, %arg15: memref<1024x896xbf16, #tpu.memory_space<any>>, %arg16: memref<1x896xf32, #tpu.memory_space<vmem>>, %arg17: memref<8x896xf32, #tpu.memory_space<vmem>>, %arg18: memref<512x1024xbf16, #tpu.memory_space<vmem>>, %arg19: memref<1024x896xbf16, #tpu.memory_space<vmem>>, %arg20: memref<2x!tpu.dma_semaphore, #tpu.memory_space<semaphore_mem>>) attributes {dimension_semantics = [], scalar_prefetch = 0 : i64, scratch_operands = 3 : i64, tpu.core_type = #tpu.core_type<tc>} {
    %c0_i32 = arith.constant 0 : i32
    %0 = tpu.memref_slice %arg20[%c0_i32] : memref<2x!tpu.dma_semaphore, #tpu.memory_space<semaphore_mem>> -> memref<1x!tpu.dma_semaphore, #tpu.memory_space<semaphore_mem>>
    %1 = tpu.memref_squeeze %0 : memref<1x!tpu.dma_semaphore, #tpu.memory_space<semaphore_mem>> -> memref<!tpu.dma_semaphore, #tpu.memory_space<semaphore_mem>>
    tpu.enqueue_dma source(%arg12 : memref<512x1024xbf16, #tpu.memory_space<any>>) target(%arg18 : memref<512x1024xbf16, #tpu.memory_space<vmem>>) target_semaphore(%1 : memref<!tpu.dma_semaphore, #tpu.memory_space<semaphore_mem>>)
    %c1_i32 = arith.constant 1 : i32
    %2 = tpu.memref_slice %arg20[%c1_i32] : memref<2x!tpu.dma_semaphore, #tpu.memory_space<semaphore_mem>> -> memref<1x!tpu.dma_semaphore, #tpu.memory_space<semaphore_mem>>
    %3 = tpu.memref_squeeze %2 : memref<1x!tpu.dma_semaphore, #tpu.memory_space<semaphore_mem>> -> memref<!tpu.dma_semaphore, #tpu.memory_space<semaphore_mem>>
    tpu.enqueue_dma source(%arg15 : memref<1024x896xbf16, #tpu.memory_space<any>>) target(%arg19 : memref<1024x896xbf16, #tpu.memory_space<vmem>>) target_semaphore(%3 : memref<!tpu.dma_semaphore, #tpu.memory_space<semaphore_mem>>)
    %c0 = arith.constant 0 : index
    %c0_0 = arith.constant 0 : index
    %4 = vector.load %arg0[%c0, %c0_0] : memref<8x100xf32, #tpu.memory_space<vmem>>, vector<8x100xf32>
    %5 = arith.truncf %4 : vector<8x100xf32> to vector<8x100xbf16>
    %c0_1 = arith.constant 0 : index
    %c0_2 = arith.constant 0 : index
    %6 = vector.load %arg2[%c0_1, %c0_2] : memref<100x256xbf16, #tpu.memory_space<vmem>>, vector<100x256xbf16>
    %cst = arith.constant dense<0.000000e+00> : vector<8x256xf32>
    %7 = tpu.matmul %5, %6, %cst {dimension_numbers = #tpu.dot_dimension_numbers<[1], [0], [0], [1], [0, 0, 1, 1], [], []>} : vector<8x100xbf16>, vector<100x256xbf16>, vector<8x256xf32> -> vector<8x256xf32>
    %c0_3 = arith.constant 0 : index
    %c0_4 = arith.constant 0 : index
    %8 = vector.load %arg3[%c0_3, %c0_4] : memref<1x256xf32, #tpu.memory_space<vmem>>, vector<1x256xf32>
    %c0_5 = arith.constant 0 : index
    %c0_6 = arith.constant 0 : index
    %9 = vector.load %arg4[%c0_5, %c0_6] : memref<1x256xf32, #tpu.memory_space<vmem>>, vector<1x256xf32>
    %cst_7 = arith.constant dense<0.000000e+00> : vector<256xf32>
    %10 = vector.multi_reduction <add>, %7, %cst_7 [0] : vector<8x256xf32> to vector<256xf32>
    %11 = vector.shape_cast %10 : vector<256xf32> to vector<1x256xf32>
    %cst_8 = arith.constant 1.250000e-01 : f32
    %12 = vector.broadcast %cst_8 : f32 to vector<1x256xf32>
    %13 = arith.mulf %11, %12 : vector<1x256xf32>
    %14 = arith.mulf %7, %7 : vector<8x256xf32>
    %cst_9 = arith.constant dense<0.000000e+00> : vector<256xf32>
    %15 = vector.multi_reduction <add>, %14, %cst_9 [0] : vector<8x256xf32> to vector<256xf32>
    %16 = vector.shape_cast %15 : vector<256xf32> to vector<1x256xf32>
    %cst_10 = arith.constant 1.250000e-01 : f32
    %17 = vector.broadcast %cst_10 : f32 to vector<1x256xf32>
    %18 = arith.mulf %16, %17 : vector<1x256xf32>
    %19 = arith.mulf %13, %13 : vector<1x256xf32>
    %20 = arith.subf %18, %19 : vector<1x256xf32>
    %cst_11 = arith.constant 9.99999974E-6 : f32
    %21 = vector.broadcast %cst_11 : f32 to vector<1x256xf32>
    %22 = arith.addf %20, %21 : vector<1x256xf32>
    %23 = math.rsqrt %22 : vector<1x256xf32>
    %24 = arith.mulf %8, %23 : vector<1x256xf32>
    %25 = arith.mulf %13, %24 : vector<1x256xf32>
    %26 = arith.subf %9, %25 : vector<1x256xf32>
    %27 = vector.broadcast %24 : vector<1x256xf32> to vector<8x256xf32>
    %28 = arith.mulf %7, %27 : vector<8x256xf32>
    %29 = vector.broadcast %26 : vector<1x256xf32> to vector<8x256xf32>
    %30 = arith.addf %28, %29 : vector<8x256xf32>
    %cst_12 = arith.constant 0.000000e+00 : f32
    %31 = vector.broadcast %cst_12 : f32 to vector<8x256xf32>
    %32 = arith.maximumf %30, %31 : vector<8x256xf32>
    %c0_13 = arith.constant 0 : index
    %c0_14 = arith.constant 0 : index
    %33 = vector.load %arg1[%c0_13, %c0_14] : memref<8x3xf32, #tpu.memory_space<vmem>>, vector<8x3xf32>
    %c0_15 = arith.constant 0 : index
    %c0_16 = arith.constant 0 : index
    %34 = vector.load %arg5[%c0_15, %c0_16] : memref<3x256xf32, #tpu.memory_space<vmem>>, vector<3x256xf32>
    %35 = vector.extract_strided_slice %33 {offsets = [0, 0], sizes = [8, 1], strides = [1, 1]} : vector<8x3xf32> to vector<8x1xf32>
    %36 = vector.extract_strided_slice %34 {offsets = [0, 0], sizes = [1, 256], strides = [1, 1]} : vector<3x256xf32> to vector<1x256xf32>
    %37 = vector.broadcast %35 : vector<8x1xf32> to vector<8x256xf32>
    %38 = vector.broadcast %36 : vector<1x256xf32> to vector<8x256xf32>
    %39 = arith.mulf %37, %38 : vector<8x256xf32>
    %40 = vector.extract_strided_slice %33 {offsets = [0, 1], sizes = [8, 1], strides = [1, 1]} : vector<8x3xf32> to vector<8x1xf32>
    %41 = vector.extract_strided_slice %34 {offsets = [1, 0], sizes = [1, 256], strides = [1, 1]} : vector<3x256xf32> to vector<1x256xf32>
    %42 = vector.broadcast %40 : vector<8x1xf32> to vector<8x256xf32>
    %43 = vector.broadcast %41 : vector<1x256xf32> to vector<8x256xf32>
    %44 = arith.mulf %42, %43 : vector<8x256xf32>
    %45 = arith.addf %39, %44 : vector<8x256xf32>
    %46 = vector.extract_strided_slice %33 {offsets = [0, 2], sizes = [8, 1], strides = [1, 1]} : vector<8x3xf32> to vector<8x1xf32>
    %47 = vector.extract_strided_slice %34 {offsets = [2, 0], sizes = [1, 256], strides = [1, 1]} : vector<3x256xf32> to vector<1x256xf32>
    %48 = vector.broadcast %46 : vector<8x1xf32> to vector<8x256xf32>
    %49 = vector.broadcast %47 : vector<1x256xf32> to vector<8x256xf32>
    %50 = arith.mulf %48, %49 : vector<8x256xf32>
    %51 = arith.addf %45, %50 : vector<8x256xf32>
    %c0_17 = arith.constant 0 : index
    %c0_18 = arith.constant 0 : index
    %52 = vector.load %arg6[%c0_17, %c0_18] : memref<1x256xf32, #tpu.memory_space<vmem>>, vector<1x256xf32>
    %c0_19 = arith.constant 0 : index
    %c0_20 = arith.constant 0 : index
    %53 = vector.load %arg7[%c0_19, %c0_20] : memref<1x256xf32, #tpu.memory_space<vmem>>, vector<1x256xf32>
    %cst_21 = arith.constant dense<0.000000e+00> : vector<256xf32>
    %54 = vector.multi_reduction <add>, %51, %cst_21 [0] : vector<8x256xf32> to vector<256xf32>
    %55 = vector.shape_cast %54 : vector<256xf32> to vector<1x256xf32>
    %cst_22 = arith.constant 1.250000e-01 : f32
    %56 = vector.broadcast %cst_22 : f32 to vector<1x256xf32>
    %57 = arith.mulf %55, %56 : vector<1x256xf32>
    %58 = arith.mulf %51, %51 : vector<8x256xf32>
    %cst_23 = arith.constant dense<0.000000e+00> : vector<256xf32>
    %59 = vector.multi_reduction <add>, %58, %cst_23 [0] : vector<8x256xf32> to vector<256xf32>
    %60 = vector.shape_cast %59 : vector<256xf32> to vector<1x256xf32>
    %cst_24 = arith.constant 1.250000e-01 : f32
    %61 = vector.broadcast %cst_24 : f32 to vector<1x256xf32>
    %62 = arith.mulf %60, %61 : vector<1x256xf32>
    %63 = arith.mulf %57, %57 : vector<1x256xf32>
    %64 = arith.subf %62, %63 : vector<1x256xf32>
    %cst_25 = arith.constant 9.99999974E-6 : f32
    %65 = vector.broadcast %cst_25 : f32 to vector<1x256xf32>
    %66 = arith.addf %64, %65 : vector<1x256xf32>
    %67 = math.rsqrt %66 : vector<1x256xf32>
    %68 = arith.mulf %52, %67 : vector<1x256xf32>
    %69 = arith.mulf %57, %68 : vector<1x256xf32>
    %70 = arith.subf %53, %69 : vector<1x256xf32>
    %71 = vector.broadcast %68 : vector<1x256xf32> to vector<8x256xf32>
    %72 = arith.mulf %51, %71 : vector<8x256xf32>
    %73 = vector.broadcast %70 : vector<1x256xf32> to vector<8x256xf32>
    %74 = arith.addf %72, %73 : vector<8x256xf32>
    %cst_26 = arith.constant 0.000000e+00 : f32
    %75 = vector.broadcast %cst_26 : f32 to vector<8x256xf32>
    %76 = arith.maximumf %74, %75 : vector<8x256xf32>
    %77 = arith.truncf %32 : vector<8x256xf32> to vector<8x256xbf16>
    %c0_27 = arith.constant 0 : index
    %c0_28 = arith.constant 0 : index
    %78 = vector.load %arg8[%c0_27, %c0_28] : memref<256x512xbf16, #tpu.memory_space<vmem>>, vector<256x512xbf16>
    %cst_29 = arith.constant dense<0.000000e+00> : vector<8x512xf32>
    %79 = tpu.matmul %77, %78, %cst_29 {dimension_numbers = #tpu.dot_dimension_numbers<[1], [0], [0], [1], [0, 0, 1, 1], [], []>} : vector<8x256xbf16>, vector<256x512xbf16>, vector<8x512xf32> -> vector<8x512xf32>
    %80 = arith.truncf %76 : vector<8x256xf32> to vector<8x256xbf16>
    %c0_30 = arith.constant 0 : index
    %c0_31 = arith.constant 0 : index
    %81 = vector.load %arg9[%c0_30, %c0_31] : memref<256x512xbf16, #tpu.memory_space<vmem>>, vector<256x512xbf16>
    %cst_32 = arith.constant dense<0.000000e+00> : vector<8x512xf32>
    %82 = tpu.matmul %80, %81, %cst_32 {dimension_numbers = #tpu.dot_dimension_numbers<[1], [0], [0], [1], [0, 0, 1, 1], [], []>} : vector<8x256xbf16>, vector<256x512xbf16>, vector<8x512xf32> -> vector<8x512xf32>
    %83 = arith.addf %79, %82 : vector<8x512xf32>
    %c0_33 = arith.constant 0 : index
    %c0_34 = arith.constant 0 : index
    %84 = vector.load %arg10[%c0_33, %c0_34] : memref<1x512xf32, #tpu.memory_space<vmem>>, vector<1x512xf32>
    %c0_35 = arith.constant 0 : index
    %c0_36 = arith.constant 0 : index
    %85 = vector.load %arg11[%c0_35, %c0_36] : memref<1x512xf32, #tpu.memory_space<vmem>>, vector<1x512xf32>
    %cst_37 = arith.constant dense<0.000000e+00> : vector<512xf32>
    %86 = vector.multi_reduction <add>, %83, %cst_37 [0] : vector<8x512xf32> to vector<512xf32>
    %87 = vector.shape_cast %86 : vector<512xf32> to vector<1x512xf32>
    %cst_38 = arith.constant 1.250000e-01 : f32
    %88 = vector.broadcast %cst_38 : f32 to vector<1x512xf32>
    %89 = arith.mulf %87, %88 : vector<1x512xf32>
    %90 = arith.mulf %83, %83 : vector<8x512xf32>
    %cst_39 = arith.constant dense<0.000000e+00> : vector<512xf32>
    %91 = vector.multi_reduction <add>, %90, %cst_39 [0] : vector<8x512xf32> to vector<512xf32>
    %92 = vector.shape_cast %91 : vector<512xf32> to vector<1x512xf32>
    %cst_40 = arith.constant 1.250000e-01 : f32
    %93 = vector.broadcast %cst_40 : f32 to vector<1x512xf32>
    %94 = arith.mulf %92, %93 : vector<1x512xf32>
    %95 = arith.mulf %89, %89 : vector<1x512xf32>
    %96 = arith.subf %94, %95 : vector<1x512xf32>
    %cst_41 = arith.constant 9.99999974E-6 : f32
    %97 = vector.broadcast %cst_41 : f32 to vector<1x512xf32>
    %98 = arith.addf %96, %97 : vector<1x512xf32>
    %99 = math.rsqrt %98 : vector<1x512xf32>
    %100 = arith.mulf %84, %99 : vector<1x512xf32>
    %101 = arith.mulf %89, %100 : vector<1x512xf32>
    %102 = arith.subf %85, %101 : vector<1x512xf32>
    %103 = vector.broadcast %100 : vector<1x512xf32> to vector<8x512xf32>
    %104 = arith.mulf %83, %103 : vector<8x512xf32>
    %105 = vector.broadcast %102 : vector<1x512xf32> to vector<8x512xf32>
    %106 = arith.addf %104, %105 : vector<8x512xf32>
    %cst_42 = arith.constant 0.000000e+00 : f32
    %107 = vector.broadcast %cst_42 : f32 to vector<8x512xf32>
    %108 = arith.maximumf %106, %107 : vector<8x512xf32>
    %c0_i32_43 = arith.constant 0 : i32
    %109 = tpu.memref_slice %arg20[%c0_i32_43] : memref<2x!tpu.dma_semaphore, #tpu.memory_space<semaphore_mem>> -> memref<1x!tpu.dma_semaphore, #tpu.memory_space<semaphore_mem>>
    %110 = tpu.memref_squeeze %109 : memref<1x!tpu.dma_semaphore, #tpu.memory_space<semaphore_mem>> -> memref<!tpu.dma_semaphore, #tpu.memory_space<semaphore_mem>>
    tpu.wait_dma2 semaphore(%110 : memref<!tpu.dma_semaphore, #tpu.memory_space<semaphore_mem>>) src(%arg12 : memref<512x1024xbf16, #tpu.memory_space<any>>) dst(%arg18 : memref<512x1024xbf16, #tpu.memory_space<vmem>>)
    %111 = arith.truncf %108 : vector<8x512xf32> to vector<8x512xbf16>
    %c0_44 = arith.constant 0 : index
    %c0_45 = arith.constant 0 : index
    %112 = vector.load %arg18[%c0_44, %c0_45] : memref<512x1024xbf16, #tpu.memory_space<vmem>>, vector<512x1024xbf16>
    %cst_46 = arith.constant dense<0.000000e+00> : vector<8x1024xf32>
    %113 = tpu.matmul %111, %112, %cst_46 {dimension_numbers = #tpu.dot_dimension_numbers<[1], [0], [0], [1], [0, 0, 1, 1], [], []>} : vector<8x512xbf16>, vector<512x1024xbf16>, vector<8x1024xf32> -> vector<8x1024xf32>
    %c0_47 = arith.constant 0 : index
    %c0_48 = arith.constant 0 : index
    %114 = vector.load %arg13[%c0_47, %c0_48] : memref<1x1024xf32, #tpu.memory_space<vmem>>, vector<1x1024xf32>
    %c0_49 = arith.constant 0 : index
    %c0_50 = arith.constant 0 : index
    %115 = vector.load %arg14[%c0_49, %c0_50] : memref<1x1024xf32, #tpu.memory_space<vmem>>, vector<1x1024xf32>
    %cst_51 = arith.constant dense<0.000000e+00> : vector<1024xf32>
    %116 = vector.multi_reduction <add>, %113, %cst_51 [0] : vector<8x1024xf32> to vector<1024xf32>
    %117 = vector.shape_cast %116 : vector<1024xf32> to vector<1x1024xf32>
    %cst_52 = arith.constant 1.250000e-01 : f32
    %118 = vector.broadcast %cst_52 : f32 to vector<1x1024xf32>
    %119 = arith.mulf %117, %118 : vector<1x1024xf32>
    %120 = arith.mulf %113, %113 : vector<8x1024xf32>
    %cst_53 = arith.constant dense<0.000000e+00> : vector<1024xf32>
    %121 = vector.multi_reduction <add>, %120, %cst_53 [0] : vector<8x1024xf32> to vector<1024xf32>
    %122 = vector.shape_cast %121 : vector<1024xf32> to vector<1x1024xf32>
    %cst_54 = arith.constant 1.250000e-01 : f32
    %123 = vector.broadcast %cst_54 : f32 to vector<1x1024xf32>
    %124 = arith.mulf %122, %123 : vector<1x1024xf32>
    %125 = arith.mulf %119, %119 : vector<1x1024xf32>
    %126 = arith.subf %124, %125 : vector<1x1024xf32>
    %cst_55 = arith.constant 9.99999974E-6 : f32
    %127 = vector.broadcast %cst_55 : f32 to vector<1x1024xf32>
    %128 = arith.addf %126, %127 : vector<1x1024xf32>
    %129 = math.rsqrt %128 : vector<1x1024xf32>
    %130 = arith.mulf %114, %129 : vector<1x1024xf32>
    %131 = arith.mulf %119, %130 : vector<1x1024xf32>
    %132 = arith.subf %115, %131 : vector<1x1024xf32>
    %133 = vector.broadcast %130 : vector<1x1024xf32> to vector<8x1024xf32>
    %134 = arith.mulf %113, %133 : vector<8x1024xf32>
    %135 = vector.broadcast %132 : vector<1x1024xf32> to vector<8x1024xf32>
    %136 = arith.addf %134, %135 : vector<8x1024xf32>
    %cst_56 = arith.constant 0.000000e+00 : f32
    %137 = vector.broadcast %cst_56 : f32 to vector<8x1024xf32>
    %138 = arith.maximumf %136, %137 : vector<8x1024xf32>
    %c1_i32_57 = arith.constant 1 : i32
    %139 = tpu.memref_slice %arg20[%c1_i32_57] : memref<2x!tpu.dma_semaphore, #tpu.memory_space<semaphore_mem>> -> memref<1x!tpu.dma_semaphore, #tpu.memory_space<semaphore_mem>>
    %140 = tpu.memref_squeeze %139 : memref<1x!tpu.dma_semaphore, #tpu.memory_space<semaphore_mem>> -> memref<!tpu.dma_semaphore, #tpu.memory_space<semaphore_mem>>
    tpu.wait_dma2 semaphore(%140 : memref<!tpu.dma_semaphore, #tpu.memory_space<semaphore_mem>>) src(%arg15 : memref<1024x896xbf16, #tpu.memory_space<any>>) dst(%arg19 : memref<1024x896xbf16, #tpu.memory_space<vmem>>)
    %141 = arith.truncf %138 : vector<8x1024xf32> to vector<8x1024xbf16>
    %c0_58 = arith.constant 0 : index
    %c0_59 = arith.constant 0 : index
    %142 = vector.load %arg19[%c0_58, %c0_59] : memref<1024x896xbf16, #tpu.memory_space<vmem>>, vector<1024x896xbf16>
    %cst_60 = arith.constant dense<0.000000e+00> : vector<8x896xf32>
    %143 = tpu.matmul %141, %142, %cst_60 {dimension_numbers = #tpu.dot_dimension_numbers<[1], [0], [0], [1], [0, 0, 1, 1], [], []>} : vector<8x1024xbf16>, vector<1024x896xbf16>, vector<8x896xf32> -> vector<8x896xf32>
    %c0_61 = arith.constant 0 : index
    %c0_62 = arith.constant 0 : index
    %144 = vector.load %arg16[%c0_61, %c0_62] : memref<1x896xf32, #tpu.memory_space<vmem>>, vector<1x896xf32>
    %145 = vector.broadcast %144 : vector<1x896xf32> to vector<8x896xf32>
    %146 = arith.addf %143, %145 : vector<8x896xf32>
    %cst_63 = arith.constant 0.000000e+00 : f32
    %147 = vector.broadcast %cst_63 : f32 to vector<8x896xf32>
    %148 = arith.subf %147, %146 : vector<8x896xf32>
    %149 = math.exp %148 : vector<8x896xf32>
    %cst_64 = arith.constant 1.000000e+00 : f32
    %150 = vector.broadcast %cst_64 : f32 to vector<8x896xf32>
    %151 = arith.addf %150, %149 : vector<8x896xf32>
    %152 = tpu.reciprocal %151 {approx = true} : vector<8x896xf32> -> vector<8x896xf32>
    %c0_65 = arith.constant 0 : index
    %c0_66 = arith.constant 0 : index
    %153 = vector.load %arg17[%c0_65, %c0_66] : memref<8x896xf32, #tpu.memory_space<vmem>>, vector<8x896xf32>
    tpu.vector_store %arg17[%c0_65, %c0_66], %152 {strides = array<i32>} : memref<8x896xf32, #tpu.memory_space<vmem>>, vector<8x896xf32>,
    return
  }
}

</mosaic_0001>

<llo_original>
// kernel: tpu_custom_call.1
$region0: #{tpu_custom_call.1}
  #allocation0 [shape = 'u32[]', space=smem, size = 0x4, offset = 0x4, fixed_abs, tag = 'smem constant byte address 0x4 - core index']
  #allocation1 [shape = 'u32[72,128]{1,0:T(1,128)}', space=vmem, size = 0x9000, scoped, tag = 'internal scratch']
  #allocation2 [shape = 'bf16[512,1024]{1,0:T(8,128)(2,1)}', space=vmem, size = 0x100000, scoped, tag = 'scratch operand']
  #allocation3 [shape = 'bf16[1024,896]{1,0:T(8,128)(2,1)}', space=vmem, size = 0x1c0000, scoped, tag = 'scratch operand']
  #allocation4 [shape = 's32[2]{0}', space=sflag, size = 0x8, scoped, tag = 'scratch operand']
  #allocation29 [shape = 's32[]', space=sflag, size = 0x4, offset = 0, fixed_abs, tag = 'sflag constant byte address 0x0 - dummy sync flag']
  #allocation30 [shape = 's32[]', space=sflag, size = 0x4, offset = 0, fixed_abs, tag = 'sflag constant byte address 0x0 - dummy sync flag']
  #allocation31 [shape = 'u32[]', space=smem, size = 0x4, offset = 0x44, fixed_abs, tag = 'smem constant byte address 0x44 - assertion arg 0']
  #allocation32 [shape = 'u32[]', space=smem, size = 0x4, offset = 0x48, fixed_abs, tag = 'smem constant byte address 0x48 - assertion arg 1']
  #allocation33 [shape = 's32[]', space=sflag, size = 0x4, offset = 0, fixed_abs, tag = 'sflag constant byte address 0x0 - dummy sync flag']
  #allocation34 [shape = 's32[]', space=sflag, size = 0x4, offset = 0, fixed_abs, tag = 'sflag constant byte address 0x0 - dummy sync flag']
  %s0 = inlined_call_operand.hbm [shape: f32[8,100], index: 0, kind: input, shape index: {}]
  %s1 = inlined_call_operand.vmem [shape: f32[8,3], index: 1, kind: input, shape index: {}]
  %s2 = inlined_call_operand.hbm [shape: bf16[100,256], index: 2, kind: input, shape index: {}]
  %s3 = inlined_call_operand.hbm [shape: f32[1,256], index: 3, kind: input, shape index: {}]
  %s4 = inlined_call_operand.hbm [shape: f32[1,256], index: 4, kind: input, shape index: {}]
  %s5 = inlined_call_operand.hbm [shape: f32[3,256], index: 5, kind: input, shape index: {}]
  %s6 = inlined_call_operand.hbm [shape: f32[1,256], index: 6, kind: input, shape index: {}]
  %s7 = inlined_call_operand.hbm [shape: f32[1,256], index: 7, kind: input, shape index: {}]
  %s8 = inlined_call_operand.hbm [shape: bf16[256,512], index: 8, kind: input, shape index: {}]
  %s9 = inlined_call_operand.hbm [shape: bf16[256,512], index: 9, kind: input, shape index: {}]
  %s10 = inlined_call_operand.hbm [shape: f32[1,512], index: 10, kind: input, shape index: {}]
  %s11 = inlined_call_operand.hbm [shape: f32[1,512], index: 11, kind: input, shape index: {}]
  %s12 = inlined_call_operand.hbm [shape: bf16[512,1024], index: 12, kind: input, shape index: {}]
  %s13 = inlined_call_operand.hbm [shape: f32[1,1024], index: 13, kind: input, shape index: {}]
  %s14 = inlined_call_operand.hbm [shape: f32[1,1024], index: 14, kind: input, shape index: {}]
  %s15 = inlined_call_operand.hbm [shape: bf16[1024,896], index: 15, kind: input, shape index: {}]
  %s16 = inlined_call_operand.hbm [shape: f32[1,896], index: 16, kind: input, shape index: {}]
  %s17 = inlined_call_operand.hbm [shape: f32[8,896], index: 17, kind: output, shape index: {}]
  %s18 = sld [smem:[#allocation0]]
  $region134: #{tpu_custom_call.1} parent=0
    _
  %s20 = ssub.s32 1, %s18
  %s21 = scalar_select 0, %s20, %s18
  $region1: #{tpu_custom_call.1} parent=0
    #allocation5 [shape = 'u8[4096]{0}', space=vmem, size = 0x1000, scoped, tag = 'input window, operand 0, single buffered']
    #allocation6 [shape = 's32[1]{0}', space=sflag, size = 0x4, scoped, tag = 'scoped memory for tpu_custom_call.1']
    #allocation7 [shape = 's32[1]{0}', space=sflag, size = 0x4, scoped, tag = 'scoped memory for tpu_custom_call.1']
    #allocation8 [shape = 'u8[53248]{0}', space=vmem, size = 0xd000, scoped, tag = 'input window, operand 2, single buffered']
    #allocation9 [shape = 's32[1]{0}', space=sflag, size = 0x4, scoped, tag = 'scoped memory for tpu_custom_call.1']
    #allocation10 [shape = 'u8[1024]{0}', space=vmem, size = 0x400, scoped, tag = 'input window, operand 3, single buffered']
    #allocation11 [shape = 'u8[1024]{0}', space=vmem, size = 0x400, scoped, tag = 'input window, operand 4, single buffered']
    #allocation12 [shape = 's32[1]{0}', space=sflag, size = 0x4, scoped, tag = 'scoped memory for tpu_custom_call.1']
    #allocation13 [shape = 'u8[4096]{0}', space=vmem, size = 0x1000, scoped, tag = 'input window, operand 5, single buffered']
    #allocation14 [shape = 'u8[1024]{0}', space=vmem, size = 0x400, scoped, tag = 'input window, operand 6, single buffered']
    #allocation15 [shape = 's32[1]{0}', space=sflag, size = 0x4, scoped, tag = 'scoped memory for tpu_custom_call.1']
    #allocation16 [shape = 'u8[1024]{0}', space=vmem, size = 0x400, scoped, tag = 'input window, operand 7, single buffered']
    #allocation17 [shape = 'u8[262144]{0}', space=vmem, size = 0x40000, scoped, tag = 'input window, operand 8, single buffered']
    #allocation18 [shape = 's32[1]{0}', space=sflag, size = 0x4, scoped, tag = 'scoped memory for tpu_custom_call.1']
    #allocation19 [shape = 'u8[262144]{0}', space=vmem, size = 0x40000, scoped, tag = 'input window, operand 9, single buffered']
    #allocation20 [shape = 'u8[2048]{0}', space=vmem, size = 0x800, scoped, tag = 'input window, operand 10, single buffered']
    #allocation21 [shape = 's32[1]{0}', space=sflag, size = 0x4, scoped, tag = 'scoped memory for tpu_custom_call.1']
    #allocation22 [shape = 'u8[2048]{0}', space=vmem, size = 0x800, scoped, tag = 'input window, operand 11, single buffered']
    #allocation23 [shape = 'u8[4096]{0}', space=vmem, size = 0x1000, scoped, tag = 'input window, operand 13, single buffered']
    #allocation24 [shape = 's32[1]{0}', space=sflag, size = 0x4, scoped, tag = 'scoped memory for tpu_custom_call.1']
    #allocation25 [shape = 'u8[4096]{0}', space=vmem, size = 0x1000, scoped, tag = 'input window, operand 14, single buffered']
    #allocation26 [shape = 'u8[3584]{0}', space=vmem, size = 0x1000, scoped, tag = 'input window, operand 16, single buffered']
    #allocation27 [shape = 's32[1]{0}', space=sflag, size = 0x4, scoped, tag = 'scoped memory for tpu_custom_call.1']
    #allocation28 [shape = 'u8[28672]{0}', space=vmem, size = 0x7000, scoped, tag = 'output window, operand 0, single buffered']
    %22 = vsyncpa [#allocation6], 0
    %23 = vsyncpa [#allocation9], 0
    %24 = vsyncpa [#allocation12], 0
    %25 = vsyncpa [#allocation15], 0
    %26 = vsyncpa [#allocation18], 0
    %27 = vsyncpa [#allocation21], 0
    %28 = vsyncpa [#allocation24], 0
    %29 = vsyncpa [#allocation27], 0
    %30 = vsyncpa [#allocation7], 0
    // Predicated region
    $region2: #{tpu_custom_call.1} parent=1 // pred_check
      _
    $region3: #{tpu_custom_call.1} parent=1 // pred_check_branch
      %32 = sbr.rel (0) target = $region5
    $region4: #{tpu_custom_call.1} parent=1 // pred_region
      %34 = vsyncadd [#allocation6], 0
      %s36 = sshll.u32 %s0, 4
      %s37 = int_to_ptr.hbm [resolvable:$true] %s36
      %s38 = sshll.u32 [#allocation5], 4
      %s39 = int_to_ptr.vmem [resolvable:$true] %s38
      %41 = dma.hbm_to_vmem [thread:$0]  %s37, 128, %s39, [#allocation6]
    $region5: #{tpu_custom_call.1} parent=1 // pred_fallthru
      _
    // Predicated region
    $region6: #{tpu_custom_call.1} parent=1 // pred_check
      _
    $region7: #{tpu_custom_call.1} parent=1 // pred_check_branch
      %43 = sbr.rel (0) target = $region9
    $region8: #{tpu_custom_call.1} parent=1 // pred_region
      _
    $region9: #{tpu_custom_call.1} parent=1 // pred_fallthru
      _
    // Predicated region
    $region10: #{tpu_custom_call.1} parent=1 // pred_check
      _
    $region11: #{tpu_custom_call.1} parent=1 // pred_check_branch
      %45 = sbr.rel (0) target = $region13
    $region12: #{tpu_custom_call.1} parent=1 // pred_region
      %47 = vsyncadd [#allocation9], 0
      %s48 = sshll.u32 %s2, 4
      %s49 = int_to_ptr.hbm [resolvable:$true] %s48
      %s50 = sshll.u32 [#allocation8], 4
      %s51 = int_to_ptr.vmem [resolvable:$true] %s50
      %56 = dma.hbm_to_vmem [thread:$0]  %s49, 1664, %s51, [#allocation9], 128, 128, 8
    $region13: #{tpu_custom_call.1} parent=1 // pred_fallthru
      _
    // Predicated region
    $region14: #{tpu_custom_call.1} parent=1 // pred_check
      _
    $region15: #{tpu_custom_call.1} parent=1 // pred_check_branch
      %58 = sbr.rel (0) target = $region17
    $region16: #{tpu_custom_call.1} parent=1 // pred_region
      %60 = vsyncadd [#allocation9], 0
      %s62 = sshll.u32 %s3, 4
      %s63 = int_to_ptr.hbm [resolvable:$true] %s62
      %s64 = sshll.u32 [#allocation10], 4
      %s65 = int_to_ptr.vmem [resolvable:$true] %s64
      %67 = dma.hbm_to_vmem [thread:$0]  %s63, 32, %s65, [#allocation9]
    $region17: #{tpu_custom_call.1} parent=1 // pred_fallthru
      _
    // Predicated region
    $region18: #{tpu_custom_call.1} parent=1 // pred_check
      _
    $region19: #{tpu_custom_call.1} parent=1 // pred_check_branch
      %69 = sbr.rel (0) target = $region21
    $region20: #{tpu_custom_call.1} parent=1 // pred_region
      %71 = vsyncadd [#allocation12], 0
      %s73 = sshll.u32 %s4, 4
      %s74 = int_to_ptr.hbm [resolvable:$true] %s73
      %s75 = sshll.u32 [#allocation11], 4
      %s76 = int_to_ptr.vmem [resolvable:$true] %s75
      %78 = dma.hbm_to_vmem [thread:$0]  %s74, 32, %s76, [#allocation12]
    $region21: #{tpu_custom_call.1} parent=1 // pred_fallthru
      _
    // Predicated region
    $region22: #{tpu_custom_call.1} parent=1 // pred_check
      _
    $region23: #{tpu_custom_call.1} parent=1 // pred_check_branch
      %80 = sbr.rel (0) target = $region25
    $region24: #{tpu_custom_call.1} parent=1 // pred_region
      %82 = vsyncadd [#allocation12], 0
      %s84 = sshll.u32 %s5, 4
      %s85 = int_to_ptr.hbm [resolvable:$true] %s84
      %s86 = sshll.u32 [#allocation13], 4
      %s87 = int_to_ptr.vmem [resolvable:$true] %s86
      %89 = dma.hbm_to_vmem [thread:$0]  %s85, 128, %s87, [#allocation12]
    $region25: #{tpu_custom_call.1} parent=1 // pred_fallthru
      _
    // Predicated region
    $region26: #{tpu_custom_call.1} parent=1 // pred_check
      _
    $region27: #{tpu_custom_call.1} parent=1 // pred_check_branch
      %91 = sbr.rel (0) target = $region29
    $region28: #{tpu_custom_call.1} parent=1 // pred_region
      %93 = vsyncadd [#allocation15], 0
      %s95 = sshll.u32 %s6, 4
      %s96 = int_to_ptr.hbm [resolvable:$true] %s95
      %s97 = sshll.u32 [#allocation14], 4
      %s98 = int_to_ptr.vmem [resolvable:$true] %s97
      %100 = dma.hbm_to_vmem [thread:$0]  %s96, 32, %s98, [#allocation15]
    $region29: #{tpu_custom_call.1} parent=1 // pred_fallthru
      _
    // Predicated region
    $region30: #{tpu_custom_call.1} parent=1 // pred_check
      _
    $region31: #{tpu_custom_call.1} parent=1 // pred_check_branch
      %102 = sbr.rel (0) target = $region33
    $region32: #{tpu_custom_call.1} parent=1 // pred_region
      %104 = vsyncadd [#allocation15], 0
      %s106 = sshll.u32 %s7, 4
      %s107 = int_to_ptr.hbm [resolvable:$true] %s106
      %s108 = sshll.u32 [#allocation16], 4
      %s109 = int_to_ptr.vmem [resolvable:$true] %s108
      %111 = dma.hbm_to_vmem [thread:$0]  %s107, 32, %s109, [#allocation15]
    $region33: #{tpu_custom_call.1} parent=1 // pred_fallthru
      _
    // Predicated region
    $region34: #{tpu_custom_call.1} parent=1 // pred_check
      _
    $region35: #{tpu_custom_call.1} parent=1 // pred_check_branch
      %113 = sbr.rel (0) target = $region37
    $region36: #{tpu_custom_call.1} parent=1 // pred_region
      %115 = vsyncadd [#allocation18], 0
      %s116 = sshll.u32 %s8, 4
      %s117 = int_to_ptr.hbm [resolvable:$true] %s116
      %s118 = sshll.u32 [#allocation17], 4
      %s119 = int_to_ptr.vmem [resolvable:$true] %s118
      %124 = dma.hbm_to_vmem [thread:$0]  %s117, 8192, %s119, [#allocation18], 256, 256, 16
    $region37: #{tpu_custom_call.1} parent=1 // pred_fallthru
      _
    // Predicated region
    $region38: #{tpu_custom_call.1} parent=1 // pred_check
      _
    $region39: #{tpu_custom_call.1} parent=1 // pred_check_branch
      %126 = sbr.rel (0) target = $region41
    $region40: #{tpu_custom_call.1} parent=1 // pred_region
      %128 = vsyncadd [#allocation18], 0
      %s129 = sshll.u32 %s9, 4
      %s130 = int_to_ptr.hbm [resolvable:$true] %s129
      %s131 = sshll.u32 [#allocation19], 4
      %s132 = int_to_ptr.vmem [resolvable:$true] %s131
      %137 = dma.hbm_to_vmem [thread:$0]  %s130, 8192, %s132, [#allocation18], 256, 256, 16
    $region41: #{tpu_custom_call.1} parent=1 // pred_fallthru
      _
    // Predicated region
    $region42: #{tpu_custom_call.1} parent=1 // pred_check
      _
    $region43: #{tpu_custom_call.1} parent=1 // pred_check_branch
      %139 = sbr.rel (0) target = $region45
    $region44: #{tpu_custom_call.1} parent=1 // pred_region
      %141 = vsyncadd [#allocation21], 0
      %s143 = sshll.u32 %s10, 4
      %s144 = int_to_ptr.hbm [resolvable:$true] %s143
      %s145 = sshll.u32 [#allocation20], 4
      %s146 = int_to_ptr.vmem [resolvable:$true] %s145
      %148 = dma.hbm_to_vmem [thread:$0]  %s144, 64, %s146, [#allocation21]
    $region45: #{tpu_custom_call.1} parent=1 // pred_fallthru
      _
    // Predicated region
    $region46: #{tpu_custom_call.1} parent=1 // pred_check
      _
    $region47: #{tpu_custom_call.1} parent=1 // pred_check_branch
      %150 = sbr.rel (0) target = $region49
    $region48: #{tpu_custom_call.1} parent=1 // pred_region
      %152 = vsyncadd [#allocation21], 0
      %s154 = sshll.u32 %s11, 4
      %s155 = int_to_ptr.hbm [resolvable:$true] %s154
      %s156 = sshll.u32 [#allocation22], 4
      %s157 = int_to_ptr.vmem [resolvable:$true] %s156
      %159 = dma.hbm_to_vmem [thread:$0]  %s155, 64, %s157, [#allocation21]
    $region49: #{tpu_custom_call.1} parent=1 // pred_fallthru
      _
    // Predicated region
    $region50: #{tpu_custom_call.1} parent=1 // pred_check
      _
    $region51: #{tpu_custom_call.1} parent=1 // pred_check_branch
      %161 = sbr.rel (0) target = $region53
    $region52: #{tpu_custom_call.1} parent=1 // pred_region
      %163 = vsyncadd [#allocation24], 0
      %s165 = sshll.u32 %s13, 4
      %s166 = int_to_ptr.hbm [resolvable:$true] %s165
      %s167 = sshll.u32 [#allocation23], 4
      %s168 = int_to_ptr.vmem [resolvable:$true] %s167
      %170 = dma.hbm_to_vmem [thread:$0]  %s166, 128, %s168, [#allocation24]
    $region53: #{tpu_custom_call.1} parent=1 // pred_fallthru
      _
    // Predicated region
    $region54: #{tpu_custom_call.1} parent=1 // pred_check
      _
    $region55: #{tpu_custom_call.1} parent=1 // pred_check_branch
      %172 = sbr.rel (0) target = $region57
    $region56: #{tpu_custom_call.1} parent=1 // pred_region
      %174 = vsyncadd [#allocation24], 0
      %s176 = sshll.u32 %s14, 4
      %s177 = int_to_ptr.hbm [resolvable:$true] %s176
      %s178 = sshll.u32 [#allocation25], 4
      %s179 = int_to_ptr.vmem [resolvable:$true] %s178
      %181 = dma.hbm_to_vmem [thread:$0]  %s177, 128, %s179, [#allocation24]
    $region57: #{tpu_custom_call.1} parent=1 // pred_fallthru
      _
    // Predicated region
    $region58: #{tpu_custom_call.1} parent=1 // pred_check
      _
    $region59: #{tpu_custom_call.1} parent=1 // pred_check_branch
      %183 = sbr.rel (0) target = $region61
    $region60: #{tpu_custom_call.1} parent=1 // pred_region
      %185 = vsyncadd [#allocation27], 0
      %s187 = sshll.u32 %s16, 4
      %s188 = int_to_ptr.hbm [resolvable:$true] %s187
      %s189 = sshll.u32 [#allocation26], 4
      %s190 = int_to_ptr.vmem [resolvable:$true] %s189
      %192 = dma.hbm_to_vmem [thread:$0]  %s188, 112, %s190, [#allocation27]
    $region61: #{tpu_custom_call.1} parent=1 // pred_fallthru
      _
    // Predicated region
    $region62: #{tpu_custom_call.1} parent=1 // pred_check
      _
    $region63: #{tpu_custom_call.1} parent=1 // pred_check_branch
      %194 = sbr.rel (0) target = $region65
    $region64: #{tpu_custom_call.1} parent=1 // pred_region
      %196 = dma.done [#allocation6], 128
    $region65: #{tpu_custom_call.1} parent=1 // pred_fallthru
      _
    // Predicated region
    $region66: #{tpu_custom_call.1} parent=1 // pred_check
      _
    $region67: #{tpu_custom_call.1} parent=1 // pred_check_branch
      %198 = sbr.rel (0) target = $region69
    $region68: #{tpu_custom_call.1} parent=1 // pred_region
      %200 = dma.done [#allocation9], 1664
    $region69: #{tpu_custom_call.1} parent=1 // pred_fallthru
      _
    // Predicated region
    $region70: #{tpu_custom_call.1} parent=1 // pred_check
      _
    $region71: #{tpu_custom_call.1} parent=1 // pred_check_branch
      %202 = sbr.rel (0) target = $region73
    $region72: #{tpu_custom_call.1} parent=1 // pred_region
      %204 = dma.done [#allocation9], 32
    $region73: #{tpu_custom_call.1} parent=1 // pred_fallthru
      _
    // Predicated region
    $region74: #{tpu_custom_call.1} parent=1 // pred_check
      _
    $region75: #{tpu_custom_call.1} parent=1 // pred_check_branch
      %206 = sbr.rel (0) target = $region77
    $region76: #{tpu_custom_call.1} parent=1 // pred_region
      %208 = dma.done [#allocation12], 32
    $region77: #{tpu_custom_call.1} parent=1 // pred_fallthru
      _
    // Predicated region
    $region78: #{tpu_custom_call.1} parent=1 // pred_check
      _
    $region79: #{tpu_custom_call.1} parent=1 // pred_check_branch
      %210 = sbr.rel (0) target = $region81
    $region80: #{tpu_custom_call.1} parent=1 // pred_region
      %212 = dma.done [#allocation12], 128
    $region81: #{tpu_custom_call.1} parent=1 // pred_fallthru
      _
    // Predicated region
    $region82: #{tpu_custom_call.1} parent=1 // pred_check
      _
    $region83: #{tpu_custom_call.1} parent=1 // pred_check_branch
      %214 = sbr.rel (0) target = $region85
    $region84: #{tpu_custom_call.1} parent=1 // pred_region
      %216 = dma.done [#allocation15], 32
    $region85: #{tpu_custom_call.1} parent=1 // pred_fallthru
      _
    // Predicated region
    $region86: #{tpu_custom_call.1} parent=1 // pred_check
      _
    $region87: #{tpu_custom_call.1} parent=1 // pred_check_branch
      %218 = sbr.rel (0) target = $region89
    $region88: #{tpu_custom_call.1} parent=1 // pred_region
      %220 = dma.done [#allocation15], 32
    $region89: #{tpu_custom_call.1} parent=1 // pred_fallthru
      _
    // Predicated region
    $region90: #{tpu_custom_call.1} parent=1 // pred_check
      _
    $region91: #{tpu_custom_call.1} parent=1 // pred_check_branch
      %222 = sbr.rel (0) target = $region93
    $region92: #{tpu_custom_call.1} parent=1 // pred_region
      %224 = dma.done [#allocation18], 8192
    $region93: #{tpu_custom_call.1} parent=1 // pred_fallthru
      _
    // Predicated region
    $region94: #{tpu_custom_call.1} parent=1 // pred_check
      _
    $region95: #{tpu_custom_call.1} parent=1 // pred_check_branch
      %226 = sbr.rel (0) target = $region97
    $region96: #{tpu_custom_call.1} parent=1 // pred_region
      %228 = dma.done [#allocation18], 8192
    $region97: #{tpu_custom_call.1} parent=1 // pred_fallthru
      _
    // Predicated region
    $region98: #{tpu_custom_call.1} parent=1 // pred_check
      _
    $region99: #{tpu_custom_call.1} parent=1 // pred_check_branch
      %230 = sbr.rel (0) target = $region101
    $region100: #{tpu_custom_call.1} parent=1 // pred_region
      %232 = dma.done [#allocation21], 64
    $region101: #{tpu_custom_call.1} parent=1 // pred_fallthru
      _
    // Predicated region
    $region102: #{tpu_custom_call.1} parent=1 // pred_check
      _
    $region103: #{tpu_custom_call.1} parent=1 // pred_check_branch
      %234 = sbr.rel (0) target = $region105
    $region104: #{tpu_custom_call.1} parent=1 // pred_region
      %236 = dma.done [#allocation21], 64
    $region105: #{tpu_custom_call.1} parent=1 // pred_fallthru
      _
    // Predicated region
    $region106: #{tpu_custom_call.1} parent=1 // pred_check
      _
    $region107: #{tpu_custom_call.1} parent=1 // pred_check_branch
      %238 = sbr.rel (0) target = $region109
    $region108: #{tpu_custom_call.1} parent=1 // pred_region
      %240 = dma.done [#allocation24], 128
    $region109: #{tpu_custom_call.1} parent=1 // pred_fallthru
      _
    // Predicated region
    $region110: #{tpu_custom_call.1} parent=1 // pred_check
      _
    $region111: #{tpu_custom_call.1} parent=1 // pred_check_branch
      %242 = sbr.rel (0) target = $region113
    $region112: #{tpu_custom_call.1} parent=1 // pred_region
      %244 = dma.done [#allocation24], 128
    $region113: #{tpu_custom_call.1} parent=1 // pred_fallthru
      _
    // Predicated region
    $region114: #{tpu_custom_call.1} parent=1 // pred_check
      _
    $region115: #{tpu_custom_call.1} parent=1 // pred_check_branch
      %246 = sbr.rel (0) target = $region117
    $region116: #{tpu_custom_call.1} parent=1 // pred_region
      %248 = dma.done [#allocation27], 112
    $region117: #{tpu_custom_call.1} parent=1 // pred_fallthru
      _
    // Predicated region
    $region118: #{tpu_custom_call.1} parent=1 // pred_check
      _
    $region119: #{tpu_custom_call.1} parent=1 // pred_check_branch
      %251 = sbr.rel target = $region121
    $region120: #{tpu_custom_call.1} parent=1 // pred_region
      %252 = sst [smem:[#allocation31]] [#allocation30]
      %253 = sst [smem:[#allocation32]] [#allocation29]
    $region121: #{tpu_custom_call.1} parent=1 // pred_fallthru
      _
    %255 = shalt.err (0)
    %s257 = sshll.u32 %s12, 4
    %s258 = int_to_ptr.hbm [resolvable:$true] %s257
    %s259 = sshll.u32 [#allocation2], 4
    %s260 = int_to_ptr.vmem [resolvable:$true] %s259
    %262 = dma.hbm_to_vmem [thread:$0]  %s258, 32768, %s260, [#allocation4]
    %s263 = scalar_lea.sflag [#allocation4], 1
    // Predicated region
    $region122: #{tpu_custom_call.1} parent=1 // pred_check
      _
    $region123: #{tpu_custom_call.1} parent=1 // pred_check_branch
      %265 = sbr.rel target = $region125
    $region124: #{tpu_custom_call.1} parent=1 // pred_region
      %266 = sst [smem:[#allocation31]] [#allocation34]
      %267 = sst [smem:[#allocation32]] [#allocation33]
    $region125: #{tpu_custom_call.1} parent=1 // pred_fallthru
      _
    %269 = shalt.err (0)
    %s271 = sshll.u32 %s15, 4
    %s272 = int_to_ptr.hbm [resolvable:$true] %s271
    %s273 = sshll.u32 [#allocation3], 4
    %s274 = int_to_ptr.vmem [resolvable:$true] %s273
    %276 = dma.hbm_to_vmem [thread:$0]  %s272, 57344, %s274, %s263
    %v277 = vld [vmem:[#allocation5] sm:$0xff]
    %v278 = vpack.c.bf16 %v277, %v277
    %v279 = vld [vmem:[#allocation8] sm:$0xff]
    %v280 = vld [vmem:[#allocation8 + $0x8] sm:$0xff]
    %v281 = vld [vmem:[#allocation8 + $0x10] sm:$0xff]
    %v282 = vld [vmem:[#allocation8 + $0x18] sm:$0xff]
    %v283 = vld [vmem:[#allocation8 + $0x20] sm:$0xff]
    %v284 = vld [vmem:[#allocation8 + $0x28] sm:$0xff]
    %v285 = vld [vmem:[#allocation8 + $0x30] sm:$0xff]
    %v286 = vld [vmem:[#allocation8 + $0x38] sm:$0xff]
    %v287 = vld [vmem:[#allocation8 + $0x40] sm:$0xff]
    %v288 = vld [vmem:[#allocation8 + $0x48] sm:$0xff]
    %v289 = vld [vmem:[#allocation8 + $0x50] sm:$0xff]
    %v290 = vld [vmem:[#allocation8 + $0x58] sm:$0xff]
    %v291 = vld [vmem:[#allocation8 + $0x60] sm:$0x33]
    %v305 = vunpack.c.l.b16 %v279
    %v306 = vunpack.c.h.b16 %v279
    %v307 = vunpack.c.l.b16 %v280
    %v308 = vunpack.c.h.b16 %v280
    %v309 = vunpack.c.l.b16 %v281
    %v310 = vunpack.c.h.b16 %v281
    %v311 = vunpack.c.l.b16 %v282
    %v312 = vunpack.c.h.b16 %v282
    %v313 = vunpack.c.l.b16 %v283
    %v314 = vunpack.c.h.b16 %v283
    %v315 = vunpack.c.l.b16 %v284
    %v316 = vunpack.c.h.b16 %v284
    %v317 = vunpack.c.l.b16 %v285
    %v318 = vunpack.c.h.b16 %v285
    %v319 = vunpack.c.l.b16 %v286
    %v320 = vunpack.c.h.b16 %v286
    %v321 = vunpack.c.l.b16 %v287
    %v322 = vunpack.c.h.b16 %v287
    %v323 = vunpack.c.l.b16 %v288
    %v324 = vunpack.c.h.b16 %v288
    %v325 = vunpack.c.l.b16 %v289
    %v326 = vunpack.c.h.b16 %v289
    %v327 = vunpack.c.l.b16 %v290
    %v328 = vunpack.c.h.b16 %v290
    %v329 = vunpack.c.l.b16 %v291
    %v330 = vunpack.c.h.b16 %v291
    %v331 = vpack.c.b16 %v307, %v305
    %v332 = vpack.c.b16 %v308, %v306
    %v333 = vpack.c.b16 %v311, %v309
    %v334 = vpack.c.b16 %v312, %v310
    %v335 = vpack.c.b16 %v315, %v313
    %v336 = vpack.c.b16 %v316, %v314
    %v337 = vpack.c.b16 %v319, %v317
    %v338 = vpack.c.b16 %v320, %v318
    %v339 = vpack.c.b16 %v323, %v321
    %v340 = vpack.c.b16 %v324, %v322
    %v341 = vpack.c.b16 %v327, %v325
    %v342 = vpack.c.b16 %v328, %v326
    %v343 = vpack.c.b16 %v329, %v329
    %v344 = vpack.c.b16 %v330, %v330
    %vm357 = vcmask 818176
    %v359 = vsel %vm357, %v278, 0
    %vm361 = vcmask 1041408
    %v363 = vsel %vm361, %v343, 0
    %v366 = vsel %vm361, %v344, 0
    %368 = vmatpush.bf16.msra.mxu0 0
    %369 = vmatpush.bf16.msra.mxu0 %v363
    %370 = vmatpush.bf16.msra.mxu0 %v341
    %371 = vmatpush.bf16.msra.mxu0 %v339
    %372 = vmatpush.bf16.msra.mxu0 %v337
    %373 = vmatpush.bf16.msra.mxu0 %v335
    %374 = vmatpush.bf16.msra.mxu0 %v333
    %375 = vmatpush.bf16.msra.mxu0 %v331
    %376 = vmatmul.bf16.gmra.mxu0 %v359
    %v377 = vpop.f32.mrf.mxu0
    %v378 = vadd.f32 0.0, %v377
    %v379 = vpop.f32.mrf.mxu0
    %380 = vdwg.mxu0
    %381 = vmatpush.bf16.msra.mxu0 0
    %382 = vmatpush.bf16.msra.mxu0 %v366
    %383 = vmatpush.bf16.msra.mxu0 %v342
    %384 = vmatpush.bf16.msra.mxu0 %v340
    %385 = vmatpush.bf16.msra.mxu0 %v338
    %386 = vmatpush.bf16.msra.mxu0 %v336
    %387 = vmatpush.bf16.msra.mxu0 %v334
    %388 = vmatpush.bf16.msra.mxu0 %v332
    %389 = vmatmul.bf16.gmra.mxu0 %v359
    %v390 = vpop.f32.mrf.mxu0
    %v391 = vadd.f32 0.0, %v390
    %v392 = vpop.f32.mrf.mxu0
    %393 = vdwg.mxu0
    %v394 = vld [vmem:[#allocation10] sm:$0x3]
    %v395 = vld [vmem:[#allocation11] sm:$0x3]
    %v396 = vrot.slane %v378, 4
    %v397 = vadd.f32 %v378, %v396
    %v398 = vrot.slane %v397, 2
    %v399 = vadd.f32 %v397, %v398
    %v400 = vrot.slane %v399, 1
    %v401 = vadd.f32 %v399, %v400
    %v402 = vrot.slane %v391, 4
    %v403 = vadd.f32 %v391, %v402
    %v404 = vrot.slane %v403, 2
    %v405 = vadd.f32 %v403, %v404
    %v406 = vrot.slane %v405, 1
    %v407 = vadd.f32 %v405, %v406
    %v408 = vmul.f32 %v401, 0.125
    %v409 = vmul.f32 %v407, 0.125
    %v410 = vmul.f32 %v378, %v378
    %v411 = vmul.f32 %v391, %v391
    %v412 = vrot.slane %v410, 4
    %v413 = vadd.f32 %v410, %v412
    %v414 = vrot.slane %v413, 2
    %v415 = vadd.f32 %v413, %v414
    %v416 = vrot.slane %v415, 1
    %v417 = vadd.f32 %v415, %v416
    %v418 = vrot.slane %v411, 4
    %v419 = vadd.f32 %v411, %v418
    %v420 = vrot.slane %v419, 2
    %v421 = vadd.f32 %v419, %v420
    %v422 = vrot.slane %v421, 1
    %v423 = vadd.f32 %v421, %v422
    %v424 = vmul.f32 %v417, 0.125
    %v425 = vmul.f32 %v423, 0.125
    %v426 = vmul.f32 %v408, %v408
    %v427 = vmul.f32 %v409, %v409
    %v428 = vsub.f32 %v424, %v426
    %v429 = vsub.f32 %v425, %v427
    %v430 = vadd.f32 %v428, 1e-05
    %v431 = vadd.f32 %v429, 1e-05
    %v432 = vrsqrt.pop %v430
    %v433 = vmul.f32 %v432, %v430
    %v434 = vmul.f32 %v433, %v432
    %v435 = vmul.f32 0.5, %v434
    %v436 = vsub.f32 1.5, %v435
    %v437 = vmul.f32 %v432, %v436
    %vm438 = vweird.f32 %v430
    %vm439 = vweird.f32 %v432
    %vm440 = vmor %vm438, %vm439
    %v441 = vsel %vm440, %v432, %v437
    %v442 = vrsqrt.pop %v431
    %v443 = vmul.f32 %v442, %v431
    %v444 = vmul.f32 %v443, %v442
    %v445 = vmul.f32 0.5, %v444
    %v446 = vsub.f32 1.5, %v445
    %v447 = vmul.f32 %v442, %v446
    %vm448 = vweird.f32 %v431
    %vm449 = vweird.f32 %v442
    %vm450 = vmor %vm448, %vm449
    %v451 = vsel %vm450, %v442, %v447
    %v454 = vrot.slane %v451, 7
    %vm455 = vcmask 1040384
    %v456 = vsel %vm455, %v441, %v454
    %v458 = vmul.f32 %v394, %v456
    %v460 = vperm.slane %v458, 0
    %v461 = vperm.slane %v458, 1
    %v464 = vmul.f32 %v408, %v460
    %v465 = vmul.f32 %v409, %v461
    %v468 = vrot.slane %v465, 7
    %v469 = vsel %vm455, %v464, %v468
    %v471 = vsub.f32 %v395, %v469
    %v472 = vmul.f32 %v378, %v460
    %v473 = vmul.f32 %v391, %v461
    %v475 = vperm.slane %v471, 0
    %v476 = vperm.slane %v471, 1
    %v479 = vadd.f32 %v472, %v475
    %v480 = vadd.f32 %v473, %v476
    %v481 = vmax.f32 %v479, 0.0
    %v482 = vmax.f32 %v480, 0.0
    %v483 = vld [vmem:[%s1] sm:$0xff]
    %v484 = vld [vmem:[#allocation13] sm:$0x77]
    %486 = vset.pattern.permute.xlu0 0
    %487 = vperm.xlu0 %486, %v483
    %v488 = vpop.permute.xlu0 %487
    %v491 = vperm.slane %v484, 0
    %v492 = vperm.slane %v484, 4
    %v495 = vperm.slane %v491, 0
    %v496 = vperm.slane %v492, 0
    %v497 = vmul.f32 %v488, %v495
    %v498 = vmul.f32 %v488, %v496
    %499 = vset.pattern.permute.xlu0 1
    %500 = vperm.xlu0 %499, %v483
    %v501 = vpop.permute.xlu0 %500
    %v503 = vperm.slane %v484, 1
    %v504 = vperm.slane %v484, 5
    %v507 = vperm.slane %v503, 1
    %v508 = vperm.slane %v504, 1
    %v509 = vmul.f32 %v501, %v507
    %v510 = vmul.f32 %v501, %v508
    %v511 = vadd.f32 %v497, %v509
    %v512 = vadd.f32 %v498, %v510
    %513 = vset.pattern.permute.xlu0 2
    %514 = vperm.xlu0 %513, %v483
    %v515 = vpop.permute.xlu0 %514
    %v517 = vperm.slane %v484, 2
    %v518 = vperm.slane %v484, 6
    %v521 = vperm.slane %v517, 2
    %v522 = vperm.slane %v518, 2
    %v523 = vmul.f32 %v515, %v521
    %v524 = vmul.f32 %v515, %v522
    %v525 = vadd.f32 %v511, %v523
    %v526 = vadd.f32 %v512, %v524
    %v527 = vld [vmem:[#allocation14] sm:$0x3]
    %v528 = vld [vmem:[#allocation16] sm:$0x3]
    %v529 = vrot.slane %v525, 4
    %v530 = vadd.f32 %v525, %v529
    %v531 = vrot.slane %v530, 2
    %v532 = vadd.f32 %v530, %v531
    %v533 = vrot.slane %v532, 1
    %v534 = vadd.f32 %v532, %v533
    %v535 = vrot.slane %v526, 4
    %v536 = vadd.f32 %v526, %v535
    %v537 = vrot.slane %v536, 2
    %v538 = vadd.f32 %v536, %v537
    %v539 = vrot.slane %v538, 1
    %v540 = vadd.f32 %v538, %v539
    %v541 = vmul.f32 %v534, 0.125
    %v542 = vmul.f32 %v540, 0.125
    %v543 = vmul.f32 %v525, %v525
    %v544 = vmul.f32 %v526, %v526
    %v545 = vrot.slane %v543, 4
    %v546 = vadd.f32 %v543, %v545
    %v547 = vrot.slane %v546, 2
    %v548 = vadd.f32 %v546, %v547
    %v549 = vrot.slane %v548, 1
    %v550 = vadd.f32 %v548, %v549
    %v551 = vrot.slane %v544, 4
    %v552 = vadd.f32 %v544, %v551
    %v553 = vrot.slane %v552, 2
    %v554 = vadd.f32 %v552, %v553
    %v555 = vrot.slane %v554, 1
    %v556 = vadd.f32 %v554, %v555
    %v557 = vmul.f32 %v550, 0.125
    %v558 = vmul.f32 %v556, 0.125
    %v559 = vmul.f32 %v541, %v541
    %v560 = vmul.f32 %v542, %v542
    %v561 = vsub.f32 %v557, %v559
    %v562 = vsub.f32 %v558, %v560
    %v563 = vadd.f32 %v561, 1e-05
    %v564 = vadd.f32 %v562, 1e-05
    %v565 = vrsqrt.pop %v563
    %v566 = vmul.f32 %v565, %v563
    %v567 = vmul.f32 %v566, %v565
    %v568 = vmul.f32 0.5, %v567
    %v569 = vsub.f32 1.5, %v568
    %v570 = vmul.f32 %v565, %v569
    %vm571 = vweird.f32 %v563
    %vm572 = vweird.f32 %v565
    %vm573 = vmor %vm571, %vm572
    %v574 = vsel %vm573, %v565, %v570
    %v575 = vrsqrt.pop %v564
    %v576 = vmul.f32 %v575, %v564
    %v577 = vmul.f32 %v576, %v575
    %v578 = vmul.f32 0.5, %v577
    %v579 = vsub.f32 1.5, %v578
    %v580 = vmul.f32 %v575, %v579
    %vm581 = vweird.f32 %v564
    %vm582 = vweird.f32 %v575
    %vm583 = vmor %vm581, %vm582
    %v584 = vsel %vm583, %v575, %v580
    %v587 = vrot.slane %v584, 7
    %v588 = vsel %vm455, %v574, %v587
    %v590 = vmul.f32 %v527, %v588
    %v592 = vperm.slane %v590, 0
    %v593 = vperm.slane %v590, 1
    %v596 = vmul.f32 %v541, %v592
    %v597 = vmul.f32 %v542, %v593
    %v600 = vrot.slane %v597, 7
    %v601 = vsel %vm455, %v596, %v600
    %v603 = vsub.f32 %v528, %v601
    %v604 = vmul.f32 %v525, %v592
    %v605 = vmul.f32 %v526, %v593
    %v607 = vperm.slane %v603, 0
    %v608 = vperm.slane %v603, 1
    %v611 = vadd.f32 %v604, %v607
    %v612 = vadd.f32 %v605, %v608
    %v613 = vmax.f32 %v611, 0.0
    %v614 = vmax.f32 %v612, 0.0
    %v615 = vpack.c.bf16 %v481, %v481
    %v616 = vpack.c.bf16 %v482, %v482
    %v617 = vld [vmem:[#allocation17] sm:$0xff]
    %v618 = vld [vmem:[#allocation17 + $0x8] sm:$0xff]
    %v619 = vld [vmem:[#allocation17 + $0x10] sm:$0xff]
    %v620 = vld [vmem:[#allocation17 + $0x18] sm:$0xff]
    %v621 = vld [vmem:[#allocation17 + $0x20] sm:$0xff]
    %v622 = vld [vmem:[#allocation17 + $0x28] sm:$0xff]
    %v623 = vld [vmem:[#allocation17 + $0x30] sm:$0xff]
    %v624 = vld [vmem:[#allocation17 + $0x38] sm:$0xff]
    %v625 = vld [vmem:[#allocation17 + $0x40] sm:$0xff]
    %v626 = vld [vmem:[#allocation17 + $0x48] sm:$0xff]
    %v627 = vld [vmem:[#allocation17 + $0x50] sm:$0xff]
    %v628 = vld [vmem:[#allocation17 + $0x58] sm:$0xff]
    %v629 = vld [vmem:[#allocation17 + $0x60] sm:$0xff]
    %v630 = vld [vmem:[#allocation17 + $0x68] sm:$0xff]
    %v631 = vld [vmem:[#allocation17 + $0x70] sm:$0xff]
    %v632 = vld [vmem:[#allocation17 + $0x78] sm:$0xff]
    %v633 = vld [vmem:[#allocation17 + $0x80] sm:$0xff]
    %v634 = vld [vmem:[#allocation17 + $0x88] sm:$0xff]
    %v635 = vld [vmem:[#allocation17 + $0x90] sm:$0xff]
    %v636 = vld [vmem:[#allocation17 + $0x98] sm:$0xff]
    %v637 = vld [vmem:[#allocation17 + $0xa0] sm:$0xff]
    %v638 = vld [vmem:[#allocation17 + $0xa8] sm:$0xff]
    %v639 = vld [vmem:[#allocation17 + $0xb0] sm:$0xff]
    %v640 = vld [vmem:[#allocation17 + $0xb8] sm:$0xff]
    %v641 = vld [vmem:[#allocation17 + $0xc0] sm:$0xff]
    %v642 = vld [vmem:[#allocation17 + $0xc8] sm:$0xff]
    %v643 = vld [vmem:[#allocation17 + $0xd0] sm:$0xff]
    %v644 = vld [vmem:[#allocation17 + $0xd8] sm:$0xff]
    %v645 = vld [vmem:[#allocation17 + $0xe0] sm:$0xff]
    %v646 = vld [vmem:[#allocation17 + $0xe8] sm:$0xff]
    %v647 = vld [vmem:[#allocation17 + $0xf0] sm:$0xff]
    %v648 = vld [vmem:[#allocation17 + $0xf8] sm:$0xff]
    %v649 = vld [vmem:[#allocation17 + $0x100] sm:$0xff]
    %v650 = vld [vmem:[#allocation17 + $0x108] sm:$0xff]
    %v651 = vld [vmem:[#allocation17 + $0x110] sm:$0xff]
    %v652 = vld [vmem:[#allocation17 + $0x118] sm:$0xff]
    %v653 = vld [vmem:[#allocation17 + $0x120] sm:$0xff]
    %v654 = vld [vmem:[#allocation17 + $0x128] sm:$0xff]
    %v655 = vld [vmem:[#allocation17 + $0x130] sm:$0xff]
    %v656 = vld [vmem:[#allocation17 + $0x138] sm:$0xff]
    %v657 = vld [vmem:[#allocation17 + $0x140] sm:$0xff]
    %v658 = vld [vmem:[#allocation17 + $0x148] sm:$0xff]
    %v659 = vld [vmem:[#allocation17 + $0x150] sm:$0xff]
    %v660 = vld [vmem:[#allocation17 + $0x158] sm:$0xff]
    %v661 = vld [vmem:[#allocation17 + $0x160] sm:$0xff]
    %v662 = vld [vmem:[#allocation17 + $0x168] sm:$0xff]
    %v663 = vld [vmem:[#allocation17 + $0x170] sm:$0xff]
    %v664 = vld [vmem:[#allocation17 + $0x178] sm:$0xff]
    %v665 = vld [vmem:[#allocation17 + $0x180] sm:$0xff]
    %v666 = vld [vmem:[#allocation17 + $0x188] sm:$0xff]
    %v667 = vld [vmem:[#allocation17 + $0x190] sm:$0xff]
    %v668 = vld [vmem:[#allocation17 + $0x198] sm:$0xff]
    %v669 = vld [vmem:[#allocation17 + $0x1a0] sm:$0xff]
    %v670 = vld [vmem:[#allocation17 + $0x1a8] sm:$0xff]
    %v671 = vld [vmem:[#allocation17 + $0x1b0] sm:$0xff]
    %v672 = vld [vmem:[#allocation17 + $0x1b8] sm:$0xff]
    %v673 = vld [vmem:[#allocation17 + $0x1c0] sm:$0xff]
    %v674 = vld [vmem:[#allocation17 + $0x1c8] sm:$0xff]
    %v675 = vld [vmem:[#allocation17 + $0x1d0] sm:$0xff]
    %v676 = vld [vmem:[#allocation17 + $0x1d8] sm:$0xff]
    %v677 = vld [vmem:[#allocation17 + $0x1e0] sm:$0xff]
    %v678 = vld [vmem:[#allocation17 + $0x1e8] sm:$0xff]
    %v679 = vld [vmem:[#allocation17 + $0x1f0] sm:$0xff]
    %v680 = vld [vmem:[#allocation17 + $0x1f8] sm:$0xff]
    %v681 = vpack.c.bf16 %v613, %v613
    %v682 = vpack.c.bf16 %v614, %v614
    %v683 = vld [vmem:[#allocation19] sm:$0xff]
    %v684 = vld [vmem:[#allocation19 + $0x8] sm:$0xff]
    %v685 = vld [vmem:[#allocation19 + $0x10] sm:$0xff]
    %v686 = vld [vmem:[#allocation19 + $0x18] sm:$0xff]
    %v687 = vld [vmem:[#allocation19 + $0x20] sm:$0xff]
    %v688 = vld [vmem:[#allocation19 + $0x28] sm:$0xff]
    %v689 = vld [vmem:[#allocation19 + $0x30] sm:$0xff]
    %v690 = vld [vmem:[#allocation19 + $0x38] sm:$0xff]
    %v691 = vld [vmem:[#allocation19 + $0x40] sm:$0xff]
    %v692 = vld [vmem:[#allocation19 + $0x48] sm:$0xff]
    %v693 = vld [vmem:[#allocation19 + $0x50] sm:$0xff]
    %v694 = vld [vmem:[#allocation19 + $0x58] sm:$0xff]
    %v695 = vld [vmem:[#allocation19 + $0x60] sm:$0xff]
    %v696 = vld [vmem:[#allocation19 + $0x68] sm:$0xff]
    %v697 = vld [vmem:[#allocation19 + $0x70] sm:$0xff]
    %v698 = vld [vmem:[#allocation19 + $0x78] sm:$0xff]
    %v699 = vld [vmem:[#allocation19 + $0x80] sm:$0xff]
    %v700 = vld [vmem:[#allocation19 + $0x88] sm:$0xff]
    %v701 = vld [vmem:[#allocation19 + $0x90] sm:$0xff]
    %v702 = vld [vmem:[#allocation19 + $0x98] sm:$0xff]
    %v703 = vld [vmem:[#allocation19 + $0xa0] sm:$0xff]
    %v704 = vld [vmem:[#allocation19 + $0xa8] sm:$0xff]
    %v705 = vld [vmem:[#allocation19 + $0xb0] sm:$0xff]
    %v706 = vld [vmem:[#allocation19 + $0xb8] sm:$0xff]
    %v707 = vld [vmem:[#allocation19 + $0xc0] sm:$0xff]
    %v708 = vld [vmem:[#allocation19 + $0xc8] sm:$0xff]
    %v709 = vld [vmem:[#allocation19 + $0xd0] sm:$0xff]
    %v710 = vld [vmem:[#allocation19 + $0xd8] sm:$0xff]
    %v711 = vld [vmem:[#allocation19 + $0xe0] sm:$0xff]
    %v712 = vld [vmem:[#allocation19 + $0xe8] sm:$0xff]
    %v713 = vld [vmem:[#allocation19 + $0xf0] sm:$0xff]
    %v714 = vld [vmem:[#allocation19 + $0xf8] sm:$0xff]
    %v715 = vld [vmem:[#allocation19 + $0x100] sm:$0xff]
    %v716 = vld [vmem:[#allocation19 + $0x108] sm:$0xff]
    %v717 = vld [vmem:[#allocation19 + $0x110] sm:$0xff]
    %v718 = vld [vmem:[#allocation19 + $0x118] sm:$0xff]
    %v719 = vld [vmem:[#allocation19 + $0x120] sm:$0xff]
    %v720 = vld [vmem:[#allocation19 + $0x128] sm:$0xff]
    %v721 = vld [vmem:[#allocation19 + $0x130] sm:$0xff]
    %v722 = vld [vmem:[#allocation19 + $0x138] sm:$0xff]
    %v723 = vld [vmem:[#allocation19 + $0x140] sm:$0xff]
    %v724 = vld [vmem:[#allocation19 + $0x148] sm:$0xff]
    %v725 = vld [vmem:[#allocation19 + $0x150] sm:$0xff]
    %v726 = vld [vmem:[#allocation19 + $0x158] sm:$0xff]
    %v727 = vld [vmem:[#allocation19 + $0x160] sm:$0xff]
    %v728 = vld [vmem:[#allocation19 + $0x168] sm:$0xff]
    %v729 = vld [vmem:[#allocation19 + $0x170] sm:$0xff]
    %v730 = vld [vmem:[#allocation19 + $0x178] sm:$0xff]
    %v731 = vld [vmem:[#allocation19 + $0x180] sm:$0xff]
    %v732 = vld [vmem:[#allocation19 + $0x188] sm:$0xff]
    %v733 = vld [vmem:[#allocation19 + $0x190] sm:$0xff]
    %v734 = vld [vmem:[#allocation19 + $0x198] sm:$0xff]
    %v735 = vld [vmem:[#allocation19 + $0x1a0] sm:$0xff]
    %v736 = vld [vmem:[#allocation19 + $0x1a8] sm:$0xff]
    %v737 = vld [vmem:[#allocation19 + $0x1b0] sm:$0xff]
    %v738 = vld [vmem:[#allocation19 + $0x1b8] sm:$0xff]
    %v739 = vld [vmem:[#allocation19 + $0x1c0] sm:$0xff]
    %v740 = vld [vmem:[#allocation19 + $0x1c8] sm:$0xff]
    %v741 = vld [vmem:[#allocation19 + $0x1d0] sm:$0xff]
    %v742 = vld [vmem:[#allocation19 + $0x1d8] sm:$0xff]
    %v743 = vld [vmem:[#allocation19 + $0x1e0] sm:$0xff]
    %v744 = vld [vmem:[#allocation19 + $0x1e8] sm:$0xff]
    %v745 = vld [vmem:[#allocation19 + $0x1f0] sm:$0xff]
    %v746 = vld [vmem:[#allocation19 + $0x1f8] sm:$0xff]
    %v811 = vunpack.c.l.b16 %v683
    %v812 = vunpack.c.h.b16 %v683
    %v813 = vunpack.c.l.b16 %v684
    %v814 = vunpack.c.h.b16 %v684
    %v815 = vunpack.c.l.b16 %v685
    %v816 = vunpack.c.h.b16 %v685
    %v817 = vunpack.c.l.b16 %v686
    %v818 = vunpack.c.h.b16 %v686
    %v819 = vunpack.c.l.b16 %v687
    %v820 = vunpack.c.h.b16 %v687
    %v821 = vunpack.c.l.b16 %v688
    %v822 = vunpack.c.h.b16 %v688
    %v823 = vunpack.c.l.b16 %v689
    %v824 = vunpack.c.h.b16 %v689
    %v825 = vunpack.c.l.b16 %v690
    %v826 = vunpack.c.h.b16 %v690
    %v827 = vunpack.c.l.b16 %v691
    %v828 = vunpack.c.h.b16 %v691
    %v829 = vunpack.c.l.b16 %v692
    %v830 = vunpack.c.h.b16 %v692
    %v831 = vunpack.c.l.b16 %v693
    %v832 = vunpack.c.h.b16 %v693
    %v833 = vunpack.c.l.b16 %v694
    %v834 = vunpack.c.h.b16 %v694
    %v835 = vunpack.c.l.b16 %v695
    %v836 = vunpack.c.h.b16 %v695
    %v837 = vunpack.c.l.b16 %v696
    %v838 = vunpack.c.h.b16 %v696
    %v839 = vunpack.c.l.b16 %v697
    %v840 = vunpack.c.h.b16 %v697
    %v841 = vunpack.c.l.b16 %v698
    %v842 = vunpack.c.h.b16 %v698
    %v843 = vunpack.c.l.b16 %v699
    %v844 = vunpack.c.h.b16 %v699
    %v845 = vunpack.c.l.b16 %v700
    %v846 = vunpack.c.h.b16 %v700
    %v847 = vunpack.c.l.b16 %v701
    %v848 = vunpack.c.h.b16 %v701
    %v849 = vunpack.c.l.b16 %v702
    %v850 = vunpack.c.h.b16 %v702
    %v851 = vunpack.c.l.b16 %v703
    %v852 = vunpack.c.h.b16 %v703
    %v853 = vunpack.c.l.b16 %v704
    %v854 = vunpack.c.h.b16 %v704
    %v855 = vunpack.c.l.b16 %v705
    %v856 = vunpack.c.h.b16 %v705
    %v857 = vunpack.c.l.b16 %v706
    %v858 = vunpack.c.h.b16 %v706
    %v859 = vunpack.c.l.b16 %v707
    %v860 = vunpack.c.h.b16 %v707
    %v861 = vunpack.c.l.b16 %v708
    %v862 = vunpack.c.h.b16 %v708
    %v863 = vunpack.c.l.b16 %v709
    %v864 = vunpack.c.h.b16 %v709
    %v865 = vunpack.c.l.b16 %v710
    %v866 = vunpack.c.h.b16 %v710
    %v867 = vunpack.c.l.b16 %v711
    %v868 = vunpack.c.h.b16 %v711
    %v869 = vunpack.c.l.b16 %v712
    %v870 = vunpack.c.h.b16 %v712
    %v871 = vunpack.c.l.b16 %v713
    %v872 = vunpack.c.h.b16 %v713
    %v873 = vunpack.c.l.b16 %v714
    %v874 = vunpack.c.h.b16 %v714
    %v875 = vunpack.c.l.b16 %v715
    %v876 = vunpack.c.h.b16 %v715
    %v877 = vunpack.c.l.b16 %v716
    %v878 = vunpack.c.h.b16 %v716
    %v879 = vunpack.c.l.b16 %v717
    %v880 = vunpack.c.h.b16 %v717
    %v881 = vunpack.c.l.b16 %v718
    %v882 = vunpack.c.h.b16 %v718
    %v883 = vunpack.c.l.b16 %v719
    %v884 = vunpack.c.h.b16 %v719
    %v885 = vunpack.c.l.b16 %v720
    %v886 = vunpack.c.h.b16 %v720
    %v887 = vunpack.c.l.b16 %v721
    %v888 = vunpack.c.h.b16 %v721
    %v889 = vunpack.c.l.b16 %v722
    %v890 = vunpack.c.h.b16 %v722
    %v891 = vunpack.c.l.b16 %v723
    %v892 = vunpack.c.h.b16 %v723
    %v893 = vunpack.c.l.b16 %v724
    %v894 = vunpack.c.h.b16 %v724
    %v895 = vunpack.c.l.b16 %v725
    %v896 = vunpack.c.h.b16 %v725
    %v897 = vunpack.c.l.b16 %v726
    %v898 = vunpack.c.h.b16 %v726
    %v899 = vunpack.c.l.b16 %v727
    %v900 = vunpack.c.h.b16 %v727
    %v901 = vunpack.c.l.b16 %v728
    %v902 = vunpack.c.h.b16 %v728
    %v903 = vunpack.c.l.b16 %v729
    %v904 = vunpack.c.h.b16 %v729
    %v905 = vunpack.c.l.b16 %v730
    %v906 = vunpack.c.h.b16 %v730
    %v907 = vunpack.c.l.b16 %v731
    %v908 = vunpack.c.h.b16 %v731
    %v909 = vunpack.c.l.b16 %v732
    %v910 = vunpack.c.h.b16 %v732
    %v911 = vunpack.c.l.b16 %v733
    %v912 = vunpack.c.h.b16 %v733
    %v913 = vunpack.c.l.b16 %v734
    %v914 = vunpack.c.h.b16 %v734
    %v915 = vunpack.c.l.b16 %v735
    %v916 = vunpack.c.h.b16 %v735
    %v917 = vunpack.c.l.b16 %v736
    %v918 = vunpack.c.h.b16 %v736
    %v919 = vunpack.c.l.b16 %v737
    %v920 = vunpack.c.h.b16 %v737
    %v921 = vunpack.c.l.b16 %v738
    %v922 = vunpack.c.h.b16 %v738
    %v923 = vunpack.c.l.b16 %v739
    %v924 = vunpack.c.h.b16 %v739
    %v925 = vunpack.c.l.b16 %v740
    %v926 = vunpack.c.h.b16 %v740
    %v927 = vunpack.c.l.b16 %v741
    %v928 = vunpack.c.h.b16 %v741
    %v929 = vunpack.c.l.b16 %v742
    %v930 = vunpack.c.h.b16 %v742
    %v931 = vunpack.c.l.b16 %v743
    %v932 = vunpack.c.h.b16 %v743
    %v933 = vunpack.c.l.b16 %v744
    %v934 = vunpack.c.h.b16 %v744
    %v935 = vunpack.c.l.b16 %v745
    %v936 = vunpack.c.h.b16 %v745
    %v937 = vunpack.c.l.b16 %v746
    %v938 = vunpack.c.h.b16 %v746
    %v939 = vpack.c.b16 %v815, %v811
    %v940 = vpack.c.b16 %v816, %v812
    %v941 = vpack.c.b16 %v817, %v813
    %v942 = vpack.c.b16 %v818, %v814
    %v943 = vpack.c.b16 %v823, %v819
    %v944 = vpack.c.b16 %v824, %v820
    %v945 = vpack.c.b16 %v825, %v821
    %v946 = vpack.c.b16 %v826, %v822
    %v947 = vpack.c.b16 %v831, %v827
    %v948 = vpack.c.b16 %v832, %v828
    %v949 = vpack.c.b16 %v833, %v829
    %v950 = vpack.c.b16 %v834, %v830
    %v951 = vpack.c.b16 %v839, %v835
    %v952 = vpack.c.b16 %v840, %v836
    %v953 = vpack.c.b16 %v841, %v837
    %v954 = vpack.c.b16 %v842, %v838
    %v955 = vpack.c.b16 %v847, %v843
    %v956 = vpack.c.b16 %v848, %v844
    %v957 = vpack.c.b16 %v849, %v845
    %v958 = vpack.c.b16 %v850, %v846
    %v959 = vpack.c.b16 %v855, %v851
    %v960 = vpack.c.b16 %v856, %v852
    %v961 = vpack.c.b16 %v857, %v853
    %v962 = vpack.c.b16 %v858, %v854
    %v963 = vpack.c.b16 %v863, %v859
    %v964 = vpack.c.b16 %v864, %v860
    %v965 = vpack.c.b16 %v865, %v861
    %v966 = vpack.c.b16 %v866, %v862
    %v967 = vpack.c.b16 %v871, %v867
    %v968 = vpack.c.b16 %v872, %v868
    %v969 = vpack.c.b16 %v873, %v869
    %v970 = vpack.c.b16 %v874, %v870
    %v971 = vpack.c.b16 %v879, %v875
    %v972 = vpack.c.b16 %v880, %v876
    %v973 = vpack.c.b16 %v881, %v877
    %v974 = vpack.c.b16 %v882, %v878
    %v975 = vpack.c.b16 %v887, %v883
    %v976 = vpack.c.b16 %v888, %v884
    %v977 = vpack.c.b16 %v889, %v885
    %v978 = vpack.c.b16 %v890, %v886
    %v979 = vpack.c.b16 %v895, %v891
    %v980 = vpack.c.b16 %v896, %v892
    %v981 = vpack.c.b16 %v897, %v893
    %v982 = vpack.c.b16 %v898, %v894
    %v983 = vpack.c.b16 %v903, %v899
    %v984 = vpack.c.b16 %v904, %v900
    %v985 = vpack.c.b16 %v905, %v901
    %v986 = vpack.c.b16 %v906, %v902
    %v987 = vpack.c.b16 %v911, %v907
    %v988 = vpack.c.b16 %v912, %v908
    %v989 = vpack.c.b16 %v913, %v909
    %v990 = vpack.c.b16 %v914, %v910
    %v991 = vpack.c.b16 %v919, %v915
    %v992 = vpack.c.b16 %v920, %v916
    %v993 = vpack.c.b16 %v921, %v917
    %v994 = vpack.c.b16 %v922, %v918
    %v995 = vpack.c.b16 %v927, %v923
    %v996 = vpack.c.b16 %v928, %v924
    %v997 = vpack.c.b16 %v929, %v925
    %v998 = vpack.c.b16 %v930, %v926
    %v999 = vpack.c.b16 %v935, %v931
    %v1000 = vpack.c.b16 %v936, %v932
    %v1001 = vpack.c.b16 %v937, %v933
    %v1002 = vpack.c.b16 %v938, %v934
    %1067 = vmatpush.bf16.msra.mxu0 %v967
    %1068 = vmatpush.bf16.msra.mxu0 %v963
    %1069 = vmatpush.bf16.msra.mxu0 %v959
    %1070 = vmatpush.bf16.msra.mxu0 %v955
    %1071 = vmatpush.bf16.msra.mxu0 %v951
    %1072 = vmatpush.bf16.msra.mxu0 %v947
    %1073 = vmatpush.bf16.msra.mxu0 %v943
    %1074 = vmatpush.bf16.msra.mxu0 %v939
    %1075 = vmatmul.bf16.gmra.mxu0 %v681
    %v1076 = vpop.f32.mrf.mxu0
    %v1077 = vadd.f32 0.0, %v1076
    %v1078 = vpop.f32.mrf.mxu0
    %1079 = vdwg.mxu0
    %1080 = vmatpush.bf16.msra.mxu0 %v999
    %1081 = vmatpush.bf16.msra.mxu0 %v995
    %1082 = vmatpush.bf16.msra.mxu0 %v991
    %1083 = vmatpush.bf16.msra.mxu0 %v987
    %1084 = vmatpush.bf16.msra.mxu0 %v983
    %1085 = vmatpush.bf16.msra.mxu0 %v979
    %1086 = vmatpush.bf16.msra.mxu0 %v975
    %1087 = vmatpush.bf16.msra.mxu0 %v971
    %1088 = vmatmul.bf16.gmra.mxu0 %v682
    %v1089 = vpop.f32.mrf.mxu0
    %v1090 = vadd.f32 %v1077, %v1089
    %v1091 = vpop.f32.mrf.mxu0
    %1092 = vdwg.mxu0
    %1093 = vmatpush.bf16.msra.mxu0 %v968
    %1094 = vmatpush.bf16.msra.mxu0 %v964
    %1095 = vmatpush.bf16.msra.mxu0 %v960
    %1096 = vmatpush.bf16.msra.mxu0 %v956
    %1097 = vmatpush.bf16.msra.mxu0 %v952
    %1098 = vmatpush.bf16.msra.mxu0 %v948
    %1099 = vmatpush.bf16.msra.mxu0 %v944
    %1100 = vmatpush.bf16.msra.mxu0 %v940
    %1101 = vmatmul.bf16.gmra.mxu0 %v681
    %v1102 = vpop.f32.mrf.mxu0
    %v1103 = vadd.f32 0.0, %v1102
    %v1104 = vpop.f32.mrf.mxu0
    %1105 = vdwg.mxu0
    %1106 = vmatpush.bf16.msra.mxu0 %v1000
    %1107 = vmatpush.bf16.msra.mxu0 %v996
    %1108 = vmatpush.bf16.msra.mxu0 %v992
    %1109 = vmatpush.bf16.msra.mxu0 %v988
    %1110 = vmatpush.bf16.msra.mxu0 %v984
    %1111 = vmatpush.bf16.msra.mxu0 %v980
    %1112 = vmatpush.bf16.msra.mxu0 %v976
    %1113 = vmatpush.bf16.msra.mxu0 %v972
    %1114 = vmatmul.bf16.gmra.mxu0 %v682
    %v1115 = vpop.f32.mrf.mxu0
    %v1116 = vadd.f32 %v1103, %v1115
    %v1117 = vpop.f32.mrf.mxu0
    %1118 = vdwg.mxu0
    %1119 = vmatpush.bf16.msra.mxu0 %v969
    %1120 = vmatpush.bf16.msra.mxu0 %v965
    %1121 = vmatpush.bf16.msra.mxu0 %v961
    %1122 = vmatpush.bf16.msra.mxu0 %v957
    %1123 = vmatpush.bf16.msra.mxu0 %v953
    %1124 = vmatpush.bf16.msra.mxu0 %v949
    %1125 = vmatpush.bf16.msra.mxu0 %v945
    %1126 = vmatpush.bf16.msra.mxu0 %v941
    %1127 = vmatmul.bf16.gmra.mxu0 %v681
    %v1128 = vpop.f32.mrf.mxu0
    %v1129 = vadd.f32 0.0, %v1128
    %v1130 = vpop.f32.mrf.mxu0
    %1131 = vdwg.mxu0
    %1132 = vmatpush.bf16.msra.mxu0 %v1001
    %1133 = vmatpush.bf16.msra.mxu0 %v997
    %1134 = vmatpush.bf16.msra.mxu0 %v993
    %1135 = vmatpush.bf16.msra.mxu0 %v989
    %1136 = vmatpush.bf16.msra.mxu0 %v985
    %1137 = vmatpush.bf16.msra.mxu0 %v981
    %1138 = vmatpush.bf16.msra.mxu0 %v977
    %1139 = vmatpush.bf16.msra.mxu0 %v973
    %1140 = vmatmul.bf16.gmra.mxu0 %v682
    %v1141 = vpop.f32.mrf.mxu0
    %v1142 = vadd.f32 %v1129, %v1141
    %v1143 = vpop.f32.mrf.mxu0
    %1144 = vdwg.mxu0
    %1145 = vmatpush.bf16.msra.mxu0 %v970
    %1146 = vmatpush.bf16.msra.mxu0 %v966
    %1147 = vmatpush.bf16.msra.mxu0 %v962
    %1148 = vmatpush.bf16.msra.mxu0 %v958
    %1149 = vmatpush.bf16.msra.mxu0 %v954
    %1150 = vmatpush.bf16.msra.mxu0 %v950
    %1151 = vmatpush.bf16.msra.mxu0 %v946
    %1152 = vmatpush.bf16.msra.mxu0 %v942
    %1153 = vmatmul.bf16.gmra.mxu0 %v681
    %v1154 = vpop.f32.mrf.mxu0
    %v1155 = vadd.f32 0.0, %v1154
    %v1156 = vpop.f32.mrf.mxu0
    %1157 = vdwg.mxu0
    %1158 = vmatpush.bf16.msra.mxu0 %v1002
    %1159 = vmatpush.bf16.msra.mxu0 %v998
    %1160 = vmatpush.bf16.msra.mxu0 %v994
    %1161 = vmatpush.bf16.msra.mxu0 %v990
    %1162 = vmatpush.bf16.msra.mxu0 %v986
    %1163 = vmatpush.bf16.msra.mxu0 %v982
    %1164 = vmatpush.bf16.msra.mxu0 %v978
    %1165 = vmatpush.bf16.msra.mxu0 %v974
    %1166 = vmatmul.bf16.gmra.mxu0 %v682
    %v1167 = vpop.f32.mrf.mxu0
    %v1168 = vadd.f32 %v1155, %v1167
    %v1169 = vpop.f32.mrf.mxu0
    %1170 = vdwg.mxu0
    %v1235 = vunpack.c.l.b16 %v617
    %v1236 = vunpack.c.h.b16 %v617
    %v1237 = vunpack.c.l.b16 %v618
    %v1238 = vunpack.c.h.b16 %v618
    %v1239 = vunpack.c.l.b16 %v619
    %v1240 = vunpack.c.h.b16 %v619
    %v1241 = vunpack.c.l.b16 %v620
    %v1242 = vunpack.c.h.b16 %v620
    %v1243 = vunpack.c.l.b16 %v621
    %v1244 = vunpack.c.h.b16 %v621
    %v1245 = vunpack.c.l.b16 %v622
    %v1246 = vunpack.c.h.b16 %v622
    %v1247 = vunpack.c.l.b16 %v623
    %v1248 = vunpack.c.h.b16 %v623
    %v1249 = vunpack.c.l.b16 %v624
    %v1250 = vunpack.c.h.b16 %v624
    %v1251 = vunpack.c.l.b16 %v625
    %v1252 = vunpack.c.h.b16 %v625
    %v1253 = vunpack.c.l.b16 %v626
    %v1254 = vunpack.c.h.b16 %v626
    %v1255 = vunpack.c.l.b16 %v627
    %v1256 = vunpack.c.h.b16 %v627
    %v1257 = vunpack.c.l.b16 %v628
    %v1258 = vunpack.c.h.b16 %v628
    %v1259 = vunpack.c.l.b16 %v629
    %v1260 = vunpack.c.h.b16 %v629
    %v1261 = vunpack.c.l.b16 %v630
    %v1262 = vunpack.c.h.b16 %v630
    %v1263 = vunpack.c.l.b16 %v631
    %v1264 = vunpack.c.h.b16 %v631
    %v1265 = vunpack.c.l.b16 %v632
    %v1266 = vunpack.c.h.b16 %v632
    %v1267 = vunpack.c.l.b16 %v633
    %v1268 = vunpack.c.h.b16 %v633
    %v1269 = vunpack.c.l.b16 %v634
    %v1270 = vunpack.c.h.b16 %v634
    %v1271 = vunpack.c.l.b16 %v635
    %v1272 = vunpack.c.h.b16 %v635
    %v1273 = vunpack.c.l.b16 %v636
    %v1274 = vunpack.c.h.b16 %v636
    %v1275 = vunpack.c.l.b16 %v637
    %v1276 = vunpack.c.h.b16 %v637
    %v1277 = vunpack.c.l.b16 %v638
    %v1278 = vunpack.c.h.b16 %v638
    %v1279 = vunpack.c.l.b16 %v639
    %v1280 = vunpack.c.h.b16 %v639
    %v1281 = vunpack.c.l.b16 %v640
    %v1282 = vunpack.c.h.b16 %v640
    %v1283 = vunpack.c.l.b16 %v641
    %v1284 = vunpack.c.h.b16 %v641
    %v1285 = vunpack.c.l.b16 %v642
    %v1286 = vunpack.c.h.b16 %v642
    %v1287 = vunpack.c.l.b16 %v643
    %v1288 = vunpack.c.h.b16 %v643
    %v1289 = vunpack.c.l.b16 %v644
    %v1290 = vunpack.c.h.b16 %v644
    %v1291 = vunpack.c.l.b16 %v645
    %v1292 = vunpack.c.h.b16 %v645
    %v1293 = vunpack.c.l.b16 %v646
    %v1294 = vunpack.c.h.b16 %v646
    %v1295 = vunpack.c.l.b16 %v647
    %v1296 = vunpack.c.h.b16 %v647
    %v1297 = vunpack.c.l.b16 %v648
    %v1298 = vunpack.c.h.b16 %v648
    %v1299 = vunpack.c.l.b16 %v649
    %v1300 = vunpack.c.h.b16 %v649
    %v1301 = vunpack.c.l.b16 %v650
    %v1302 = vunpack.c.h.b16 %v650
    %v1303 = vunpack.c.l.b16 %v651
    %v1304 = vunpack.c.h.b16 %v651
    %v1305 = vunpack.c.l.b16 %v652
    %v1306 = vunpack.c.h.b16 %v652
    %v1307 = vunpack.c.l.b16 %v653
    %v1308 = vunpack.c.h.b16 %v653
    %v1309 = vunpack.c.l.b16 %v654
    %v1310 = vunpack.c.h.b16 %v654
    %v1311 = vunpack.c.l.b16 %v655
    %v1312 = vunpack.c.h.b16 %v655
    %v1313 = vunpack.c.l.b16 %v656
    %v1314 = vunpack.c.h.b16 %v656
    %v1315 = vunpack.c.l.b16 %v657
    %v1316 = vunpack.c.h.b16 %v657
    %v1317 = vunpack.c.l.b16 %v658
    %v1318 = vunpack.c.h.b16 %v658
    %v1319 = vunpack.c.l.b16 %v659
    %v1320 = vunpack.c.h.b16 %v659
    %v1321 = vunpack.c.l.b16 %v660
    %v1322 = vunpack.c.h.b16 %v660
    %v1323 = vunpack.c.l.b16 %v661
    %v1324 = vunpack.c.h.b16 %v661
    %v1325 = vunpack.c.l.b16 %v662
    %v1326 = vunpack.c.h.b16 %v662
    %v1327 = vunpack.c.l.b16 %v663
    %v1328 = vunpack.c.h.b16 %v663
    %v1329 = vunpack.c.l.b16 %v664
    %v1330 = vunpack.c.h.b16 %v664
    %v1331 = vunpack.c.l.b16 %v665
    %v1332 = vunpack.c.h.b16 %v665
    %v1333 = vunpack.c.l.b16 %v666
    %v1334 = vunpack.c.h.b16 %v666
    %v1335 = vunpack.c.l.b16 %v667
    %v1336 = vunpack.c.h.b16 %v667
    %v1337 = vunpack.c.l.b16 %v668
    %v1338 = vunpack.c.h.b16 %v668
    %v1339 = vunpack.c.l.b16 %v669
    %v1340 = vunpack.c.h.b16 %v669
    %v1341 = vunpack.c.l.b16 %v670
    %v1342 = vunpack.c.h.b16 %v670
    %v1343 = vunpack.c.l.b16 %v671
    %v1344 = vunpack.c.h.b16 %v671
    %v1345 = vunpack.c.l.b16 %v672
    %v1346 = vunpack.c.h.b16 %v672
    %v1347 = vunpack.c.l.b16 %v673
    %v1348 = vunpack.c.h.b16 %v673
    %v1349 = vunpack.c.l.b16 %v674
    %v1350 = vunpack.c.h.b16 %v674
    %v1351 = vunpack.c.l.b16 %v675
    %v1352 = vunpack.c.h.b16 %v675
    %v1353 = vunpack.c.l.b16 %v676
    %v1354 = vunpack.c.h.b16 %v676
    %v1355 = vunpack.c.l.b16 %v677
    %v1356 = vunpack.c.h.b16 %v677
    %v1357 = vunpack.c.l.b16 %v678
    %v1358 = vunpack.c.h.b16 %v678
    %v1359 = vunpack.c.l.b16 %v679
    %v1360 = vunpack.c.h.b16 %v679
    %v1361 = vunpack.c.l.b16 %v680
    %v1362 = vunpack.c.h.b16 %v680
    %v1363 = vpack.c.b16 %v1239, %v1235
    %v1364 = vpack.c.b16 %v1240, %v1236
    %v1365 = vpack.c.b16 %v1241, %v1237
    %v1366 = vpack.c.b16 %v1242, %v1238
    %v1367 = vpack.c.b16 %v1247, %v1243
    %v1368 = vpack.c.b16 %v1248, %v1244
    %v1369 = vpack.c.b16 %v1249, %v1245
    %v1370 = vpack.c.b16 %v1250, %v1246
    %v1371 = vpack.c.b16 %v1255, %v1251
    %v1372 = vpack.c.b16 %v1256, %v1252
    %v1373 = vpack.c.b16 %v1257, %v1253
    %v1374 = vpack.c.b16 %v1258, %v1254
    %v1375 = vpack.c.b16 %v1263, %v1259
    %v1376 = vpack.c.b16 %v1264, %v1260
    %v1377 = vpack.c.b16 %v1265, %v1261
    %v1378 = vpack.c.b16 %v1266, %v1262
    %v1379 = vpack.c.b16 %v1271, %v1267
    %v1380 = vpack.c.b16 %v1272, %v1268
    %v1381 = vpack.c.b16 %v1273, %v1269
    %v1382 = vpack.c.b16 %v1274, %v1270
    %v1383 = vpack.c.b16 %v1279, %v1275
    %v1384 = vpack.c.b16 %v1280, %v1276
    %v1385 = vpack.c.b16 %v1281, %v1277
    %v1386 = vpack.c.b16 %v1282, %v1278
    %v1387 = vpack.c.b16 %v1287, %v1283
    %v1388 = vpack.c.b16 %v1288, %v1284
    %v1389 = vpack.c.b16 %v1289, %v1285
    %v1390 = vpack.c.b16 %v1290, %v1286
    %v1391 = vpack.c.b16 %v1295, %v1291
    %v1392 = vpack.c.b16 %v1296, %v1292
    %v1393 = vpack.c.b16 %v1297, %v1293
    %v1394 = vpack.c.b16 %v1298, %v1294
    %v1395 = vpack.c.b16 %v1303, %v1299
    %v1396 = vpack.c.b16 %v1304, %v1300
    %v1397 = vpack.c.b16 %v1305, %v1301
    %v1398 = vpack.c.b16 %v1306, %v1302
    %v1399 = vpack.c.b16 %v1311, %v1307
    %v1400 = vpack.c.b16 %v1312, %v1308
    %v1401 = vpack.c.b16 %v1313, %v1309
    %v1402 = vpack.c.b16 %v1314, %v1310
    %v1403 = vpack.c.b16 %v1319, %v1315
    %v1404 = vpack.c.b16 %v1320, %v1316
    %v1405 = vpack.c.b16 %v1321, %v1317
    %v1406 = vpack.c.b16 %v1322, %v1318
    %v1407 = vpack.c.b16 %v1327, %v1323
    %v1408 = vpack.c.b16 %v1328, %v1324
    %v1409 = vpack.c.b16 %v1329, %v1325
    %v1410 = vpack.c.b16 %v1330, %v1326
    %v1411 = vpack.c.b16 %v1335, %v1331
    %v1412 = vpack.c.b16 %v1336, %v1332
    %v1413 = vpack.c.b16 %v1337, %v1333
    %v1414 = vpack.c.b16 %v1338, %v1334
    %v1415 = vpack.c.b16 %v1343, %v1339
    %v1416 = vpack.c.b16 %v1344, %v1340
    %v1417 = vpack.c.b16 %v1345, %v1341
    %v1418 = vpack.c.b16 %v1346, %v1342
    %v1419 = vpack.c.b16 %v1351, %v1347
    %v1420 = vpack.c.b16 %v1352, %v1348
    %v1421 = vpack.c.b16 %v1353, %v1349
    %v1422 = vpack.c.b16 %v1354, %v1350
    %v1423 = vpack.c.b16 %v1359, %v1355
    %v1424 = vpack.c.b16 %v1360, %v1356
    %v1425 = vpack.c.b16 %v1361, %v1357
    %v1426 = vpack.c.b16 %v1362, %v1358
    %1491 = vmatpush.bf16.msra.mxu0 %v1391
    %1492 = vmatpush.bf16.msra.mxu0 %v1387
    %1493 = vmatpush.bf16.msra.mxu0 %v1383
    %1494 = vmatpush.bf16.msra.mxu0 %v1379
    %1495 = vmatpush.bf16.msra.mxu0 %v1375
    %1496 = vmatpush.bf16.msra.mxu0 %v1371
    %1497 = vmatpush.bf16.msra.mxu0 %v1367
    %1498 = vmatpush.bf16.msra.mxu0 %v1363
    %1499 = vmatmul.bf16.gmra.mxu0 %v615
    %v1500 = vpop.f32.mrf.mxu0
    %v1501 = vadd.f32 %v1090, %v1500
    %v1502 = vpop.f32.mrf.mxu0
    %1503 = vdwg.mxu0
    %1504 = vmatpush.bf16.msra.mxu0 %v1423
    %1505 = vmatpush.bf16.msra.mxu0 %v1419
    %1506 = vmatpush.bf16.msra.mxu0 %v1415
    %1507 = vmatpush.bf16.msra.mxu0 %v1411
    %1508 = vmatpush.bf16.msra.mxu0 %v1407
    %1509 = vmatpush.bf16.msra.mxu0 %v1403
    %1510 = vmatpush.bf16.msra.mxu0 %v1399
    %1511 = vmatpush.bf16.msra.mxu0 %v1395
    %1512 = vmatmul.bf16.gmra.mxu0 %v616
    %v1513 = vpop.f32.mrf.mxu0
    %v1514 = vadd.f32 %v1501, %v1513
    %v1515 = vpop.f32.mrf.mxu0
    %1516 = vdwg.mxu0
    %1517 = vmatpush.bf16.msra.mxu0 %v1392
    %1518 = vmatpush.bf16.msra.mxu0 %v1388
    %1519 = vmatpush.bf16.msra.mxu0 %v1384
    %1520 = vmatpush.bf16.msra.mxu0 %v1380
    %1521 = vmatpush.bf16.msra.mxu0 %v1376
    %1522 = vmatpush.bf16.msra.mxu0 %v1372
    %1523 = vmatpush.bf16.msra.mxu0 %v1368
    %1524 = vmatpush.bf16.msra.mxu0 %v1364
    %1525 = vmatmul.bf16.gmra.mxu0 %v615
    %v1526 = vpop.f32.mrf.mxu0
    %v1527 = vadd.f32 %v1116, %v1526
    %v1528 = vpop.f32.mrf.mxu0
    %1529 = vdwg.mxu0
    %1530 = vmatpush.bf16.msra.mxu0 %v1424
    %1531 = vmatpush.bf16.msra.mxu0 %v1420
    %1532 = vmatpush.bf16.msra.mxu0 %v1416
    %1533 = vmatpush.bf16.msra.mxu0 %v1412
    %1534 = vmatpush.bf16.msra.mxu0 %v1408
    %1535 = vmatpush.bf16.msra.mxu0 %v1404
    %1536 = vmatpush.bf16.msra.mxu0 %v1400
    %1537 = vmatpush.bf16.msra.mxu0 %v1396
    %1538 = vmatmul.bf16.gmra.mxu0 %v616
    %v1539 = vpop.f32.mrf.mxu0
    %v1540 = vadd.f32 %v1527, %v1539
    %v1541 = vpop.f32.mrf.mxu0
    %1542 = vdwg.mxu0
    %1543 = vmatpush.bf16.msra.mxu0 %v1393
    %1544 = vmatpush.bf16.msra.mxu0 %v1389
    %1545 = vmatpush.bf16.msra.mxu0 %v1385
    %1546 = vmatpush.bf16.msra.mxu0 %v1381
    %1547 = vmatpush.bf16.msra.mxu0 %v1377
    %1548 = vmatpush.bf16.msra.mxu0 %v1373
    %1549 = vmatpush.bf16.msra.mxu0 %v1369
    %1550 = vmatpush.bf16.msra.mxu0 %v1365
    %1551 = vmatmul.bf16.gmra.mxu0 %v615
    %v1552 = vpop.f32.mrf.mxu0
    %v1553 = vadd.f32 %v1142, %v1552
    %v1554 = vpop.f32.mrf.mxu0
    %1555 = vdwg.mxu0
    %1556 = vmatpush.bf16.msra.mxu0 %v1425
    %1557 = vmatpush.bf16.msra.mxu0 %v1421
    %1558 = vmatpush.bf16.msra.mxu0 %v1417
    %1559 = vmatpush.bf16.msra.mxu0 %v1413
    %1560 = vmatpush.bf16.msra.mxu0 %v1409
    %1561 = vmatpush.bf16.msra.mxu0 %v1405
    %1562 = vmatpush.bf16.msra.mxu0 %v1401
    %1563 = vmatpush.bf16.msra.mxu0 %v1397
    %1564 = vmatmul.bf16.gmra.mxu0 %v616
    %v1565 = vpop.f32.mrf.mxu0
    %v1566 = vadd.f32 %v1553, %v1565
    %v1567 = vpop.f32.mrf.mxu0
    %1568 = vdwg.mxu0
    %1569 = vmatpush.bf16.msra.mxu0 %v1394
    %1570 = vmatpush.bf16.msra.mxu0 %v1390
    %1571 = vmatpush.bf16.msra.mxu0 %v1386
    %1572 = vmatpush.bf16.msra.mxu0 %v1382
    %1573 = vmatpush.bf16.msra.mxu0 %v1378
    %1574 = vmatpush.bf16.msra.mxu0 %v1374
    %1575 = vmatpush.bf16.msra.mxu0 %v1370
    %1576 = vmatpush.bf16.msra.mxu0 %v1366
    %1577 = vmatmul.bf16.gmra.mxu0 %v615
    %v1578 = vpop.f32.mrf.mxu0
    %v1579 = vadd.f32 %v1168, %v1578
    %v1580 = vpop.f32.mrf.mxu0
    %1581 = vdwg.mxu0
    %1582 = vmatpush.bf16.msra.mxu0 %v1426
    %1583 = vmatpush.bf16.msra.mxu0 %v1422
    %1584 = vmatpush.bf16.msra.mxu0 %v1418
    %1585 = vmatpush.bf16.msra.mxu0 %v1414
    %1586 = vmatpush.bf16.msra.mxu0 %v1410
    %1587 = vmatpush.bf16.msra.mxu0 %v1406
    %1588 = vmatpush.bf16.msra.mxu0 %v1402
    %1589 = vmatpush.bf16.msra.mxu0 %v1398
    %1590 = vmatmul.bf16.gmra.mxu0 %v616
    %v1591 = vpop.f32.mrf.mxu0
    %v1592 = vadd.f32 %v1579, %v1591
    %v1593 = vpop.f32.mrf.mxu0
    %1594 = vdwg.mxu0
    %v1595 = vld [vmem:[#allocation20] sm:$0xf]
    %v1596 = vld [vmem:[#allocation22] sm:$0xf]
    %v1597 = vrot.slane %v1514, 4
    %v1598 = vadd.f32 %v1514, %v1597
    %v1599 = vrot.slane %v1598, 2
    %v1600 = vadd.f32 %v1598, %v1599
    %v1601 = vrot.slane %v1600, 1
    %v1602 = vadd.f32 %v1600, %v1601
    %v1603 = vrot.slane %v1540, 4
    %v1604 = vadd.f32 %v1540, %v1603
    %v1605 = vrot.slane %v1604, 2
    %v1606 = vadd.f32 %v1604, %v1605
    %v1607 = vrot.slane %v1606, 1
    %v1608 = vadd.f32 %v1606, %v1607
    %v1609 = vrot.slane %v1566, 4
    %v1610 = vadd.f32 %v1566, %v1609
    %v1611 = vrot.slane %v1610, 2
    %v1612 = vadd.f32 %v1610, %v1611
    %v1613 = vrot.slane %v1612, 1
    %v1614 = vadd.f32 %v1612, %v1613
    %v1615 = vrot.slane %v1592, 4
    %v1616 = vadd.f32 %v1592, %v1615
    %v1617 = vrot.slane %v1616, 2
    %v1618 = vadd.f32 %v1616, %v1617
    %v1619 = vrot.slane %v1618, 1
    %v1620 = vadd.f32 %v1618, %v1619
    %v1621 = vmul.f32 %v1602, 0.125
    %v1622 = vmul.f32 %v1608, 0.125
    %v1623 = vmul.f32 %v1614, 0.125
    %v1624 = vmul.f32 %v1620, 0.125
    %v1625 = vmul.f32 %v1514, %v1514
    %v1626 = vmul.f32 %v1540, %v1540
    %v1627 = vmul.f32 %v1566, %v1566
    %v1628 = vmul.f32 %v1592, %v1592
    %v1629 = vrot.slane %v1625, 4
    %v1630 = vadd.f32 %v1625, %v1629
    %v1631 = vrot.slane %v1630, 2
    %v1632 = vadd.f32 %v1630, %v1631
    %v1633 = vrot.slane %v1632, 1
    %v1634 = vadd.f32 %v1632, %v1633
    %v1635 = vrot.slane %v1626, 4
    %v1636 = vadd.f32 %v1626, %v1635
    %v1637 = vrot.slane %v1636, 2
    %v1638 = vadd.f32 %v1636, %v1637
    %v1639 = vrot.slane %v1638, 1
    %v1640 = vadd.f32 %v1638, %v1639
    %v1641 = vrot.slane %v1627, 4
    %v1642 = vadd.f32 %v1627, %v1641
    %v1643 = vrot.slane %v1642, 2
    %v1644 = vadd.f32 %v1642, %v1643
    %v1645 = vrot.slane %v1644, 1
    %v1646 = vadd.f32 %v1644, %v1645
    %v1647 = vrot.slane %v1628, 4
    %v1648 = vadd.f32 %v1628, %v1647
    %v1649 = vrot.slane %v1648, 2
    %v1650 = vadd.f32 %v1648, %v1649
    %v1651 = vrot.slane %v1650, 1
    %v1652 = vadd.f32 %v1650, %v1651
    %v1653 = vmul.f32 %v1634, 0.125
    %v1654 = vmul.f32 %v1640, 0.125
    %v1655 = vmul.f32 %v1646, 0.125
    %v1656 = vmul.f32 %v1652, 0.125
    %v1657 = vmul.f32 %v1621, %v1621
    %v1658 = vmul.f32 %v1622, %v1622
    %v1659 = vmul.f32 %v1623, %v1623
    %v1660 = vmul.f32 %v1624, %v1624
    %v1661 = vsub.f32 %v1653, %v1657
    %v1662 = vsub.f32 %v1654, %v1658
    %v1663 = vsub.f32 %v1655, %v1659
    %v1664 = vsub.f32 %v1656, %v1660
    %v1665 = vadd.f32 %v1661, 1e-05
    %v1666 = vadd.f32 %v1662, 1e-05
    %v1667 = vadd.f32 %v1663, 1e-05
    %v1668 = vadd.f32 %v1664, 1e-05
    %v1669 = vrsqrt.pop %v1665
    %v1670 = vmul.f32 %v1669, %v1665
    %v1671 = vmul.f32 %v1670, %v1669
    %v1672 = vmul.f32 0.5, %v1671
    %v1673 = vsub.f32 1.5, %v1672
    %v1674 = vmul.f32 %v1669, %v1673
    %vm1675 = vweird.f32 %v1665
    %vm1676 = vweird.f32 %v1669
    %vm1677 = vmor %vm1675, %vm1676
    %v1678 = vsel %vm1677, %v1669, %v1674
    %v1679 = vrsqrt.pop %v1666
    %v1680 = vmul.f32 %v1679, %v1666
    %v1681 = vmul.f32 %v1680, %v1679
    %v1682 = vmul.f32 0.5, %v1681
    %v1683 = vsub.f32 1.5, %v1682
    %v1684 = vmul.f32 %v1679, %v1683
    %vm1685 = vweird.f32 %v1666
    %vm1686 = vweird.f32 %v1679
    %vm1687 = vmor %vm1685, %vm1686
    %v1688 = vsel %vm1687, %v1679, %v1684
    %v1689 = vrsqrt.pop %v1667
    %v1690 = vmul.f32 %v1689, %v1667
    %v1691 = vmul.f32 %v1690, %v1689
    %v1692 = vmul.f32 0.5, %v1691
    %v1693 = vsub.f32 1.5, %v1692
    %v1694 = vmul.f32 %v1689, %v1693
    %vm1695 = vweird.f32 %v1667
    %vm1696 = vweird.f32 %v1689
    %vm1697 = vmor %vm1695, %vm1696
    %v1698 = vsel %vm1697, %v1689, %v1694
    %v1699 = vrsqrt.pop %v1668
    %v1700 = vmul.f32 %v1699, %v1668
    %v1701 = vmul.f32 %v1700, %v1699
    %v1702 = vmul.f32 0.5, %v1701
    %v1703 = vsub.f32 1.5, %v1702
    %v1704 = vmul.f32 %v1699, %v1703
    %vm1705 = vweird.f32 %v1668
    %vm1706 = vweird.f32 %v1699
    %vm1707 = vmor %vm1705, %vm1706
    %v1708 = vsel %vm1707, %v1699, %v1704
    %v1713 = vrot.slane %v1688, 7
    %v1714 = vrot.slane %v1698, 6
    %v1715 = vrot.slane %v1708, 5
    %v1716 = vsel %vm455, %v1678, %v1713
    %vm1717 = vcmask 1042434
    %v1718 = vsel %vm1717, %v1714, %v1715
    %v1719 = vsel %vm361, %v1716, %v1718
    %v1721 = vmul.f32 %v1595, %v1719
    %v1723 = vperm.slane %v1721, 0
    %v1724 = vperm.slane %v1721, 1
    %v1725 = vperm.slane %v1721, 2
    %v1726 = vperm.slane %v1721, 3
    %v1731 = vmul.f32 %v1621, %v1723
    %v1732 = vmul.f32 %v1622, %v1724
    %v1733 = vmul.f32 %v1623, %v1725
    %v1734 = vmul.f32 %v1624, %v1726
    %v1739 = vrot.slane %v1732, 7
    %v1740 = vrot.slane %v1733, 6
    %v1741 = vrot.slane %v1734, 5
    %v1742 = vsel %vm455, %v1731, %v1739
    %v1743 = vsel %vm1717, %v1740, %v1741
    %v1744 = vsel %vm361, %v1742, %v1743
    %v1746 = vsub.f32 %v1596, %v1744
    %v1747 = vmul.f32 %v1514, %v1723
    %v1748 = vmul.f32 %v1540, %v1724
    %v1749 = vmul.f32 %v1566, %v1725
    %v1750 = vmul.f32 %v1592, %v1726
    %v1752 = vperm.slane %v1746, 0
    %v1753 = vperm.slane %v1746, 1
    %v1754 = vperm.slane %v1746, 2
    %v1755 = vperm.slane %v1746, 3
    %v1760 = vadd.f32 %v1747, %v1752
    %v1761 = vadd.f32 %v1748, %v1753
    %v1762 = vadd.f32 %v1749, %v1754
    %v1763 = vadd.f32 %v1750, %v1755
    %v1764 = vmax.f32 %v1760, 0.0
    %v1765 = vmax.f32 %v1761, 0.0
    %v1766 = vmax.f32 %v1762, 0.0
    %v1767 = vmax.f32 %v1763, 0.0
    %s1768 = smul.u32 4, 64
    %s1769 = smul.u32 %s1768, 8
    %s1770 = sshll.u32 %s1769, 4
    %1771 = dma.done [#allocation4], %s1770
    %v1772 = vpack.c.bf16 %v1764, %v1764
    %v1773 = vpack.c.bf16 %v1765, %v1765
    %v1774 = vpack.c.bf16 %v1766, %v1766
    %v1775 = vpack.c.bf16 %v1767, %v1767
    %v1776 = vld [vmem:[#allocation2] sm:$0xff]
    %v1777 = vld [vmem:[#allocation2 + $0x8] sm:$0xff]
    %v1778 = vld [vmem:[#allocation2 + $0x10] sm:$0xff]
    %v1779 = vld [vmem:[#allocation2 + $0x18] sm:$0xff]
    %v1780 = vld [vmem:[#allocation2 + $0x20] sm:$0xff]
    %v1781 = vld [vmem:[#allocation2 + $0x28] sm:$0xff]
    %v1782 = vld [vmem:[#allocation2 + $0x30] sm:$0xff]
    %v1783 = vld [vmem:[#allocation2 + $0x38] sm:$0xff]
    %v1784 = vld [vmem:[#allocation2 + $0x40] sm:$0xff]
    %v1785 = vld [vmem:[#allocation2 + $0x48] sm:$0xff]
    %v1786 = vld [vmem:[#allocation2 + $0x50] sm:$0xff]
    %v1787 = vld [vmem:[#allocation2 + $0x58] sm:$0xff]
    %v1788 = vld [vmem:[#allocation2 + $0x60] sm:$0xff]
    %v1789 = vld [vmem:[#allocation2 + $0x68] sm:$0xff]
    %v1790 = vld [vmem:[#allocation2 + $0x70] sm:$0xff]
    %v1791 = vld [vmem:[#allocation2 + $0x78] sm:$0xff]
    %v1792 = vld [vmem:[#allocation2 + $0x80] sm:$0xff]
    %v1793 = vld [vmem:[#allocation2 + $0x88] sm:$0xff]
    %v1794 = vld [vmem:[#allocation2 + $0x90] sm:$0xff]
    %v1795 = vld [vmem:[#allocation2 + $0x98] sm:$0xff]
    %v1796 = vld [vmem:[#allocation2 + $0xa0] sm:$0xff]
    %v1797 = vld [vmem:[#allocation2 + $0xa8] sm:$0xff]
    %v1798 = vld [vmem:[#allocation2 + $0xb0] sm:$0xff]
    %v1799 = vld [vmem:[#allocation2 + $0xb8] sm:$0xff]
    %v1800 = vld [vmem:[#allocation2 + $0xc0] sm:$0xff]
    %v1801 = vld [vmem:[#allocation2 + $0xc8] sm:$0xff]
    %v1802 = vld [vmem:[#allocation2 + $0xd0] sm:$0xff]
    %v1803 = vld [vmem:[#allocation2 + $0xd8] sm:$0xff]
    %v1804 = vld [vmem:[#allocation2 + $0xe0] sm:$0xff]
    %v1805 = vld [vmem:[#allocation2 + $0xe8] sm:$0xff]
    %v1806 = vld [vmem:[#allocation2 + $0xf0] sm:$0xff]
    %v1807 = vld [vmem:[#allocation2 + $0xf8] sm:$0xff]
    %v1808 = vld [vmem:[#allocation2 + $0x100] sm:$0xff]
    %v1809 = vld [vmem:[#allocation2 + $0x108] sm:$0xff]
    %v1810 = vld [vmem:[#allocation2 + $0x110] sm:$0xff]
    %v1811 = vld [vmem:[#allocation2 + $0x118] sm:$0xff]
    %v1812 = vld [vmem:[#allocation2 + $0x120] sm:$0xff]
    %v1813 = vld [vmem:[#allocation2 + $0x128] sm:$0xff]
    %v1814 = vld [vmem:[#allocation2 + $0x130] sm:$0xff]
    %v1815 = vld [vmem:[#allocation2 + $0x138] sm:$0xff]
    %v1816 = vld [vmem:[#allocation2 + $0x140] sm:$0xff]
    %v1817 = vld [vmem:[#allocation2 + $0x148] sm:$0xff]
    %v1818 = vld [vmem:[#allocation2 + $0x150] sm:$0xff]
    %v1819 = vld [vmem:[#allocation2 + $0x158] sm:$0xff]
    %v1820 = vld [vmem:[#allocation2 + $0x160] sm:$0xff]
    %v1821 = vld [vmem:[#allocation2 + $0x168] sm:$0xff]
    %v1822 = vld [vmem:[#allocation2 + $0x170] sm:$0xff]
    %v1823 = vld [vmem:[#allocation2 + $0x178] sm:$0xff]
    %v1824 = vld [vmem:[#allocation2 + $0x180] sm:$0xff]
    %v1825 = vld [vmem:[#allocation2 + $0x188] sm:$0xff]
    %v1826 = vld [vmem:[#allocation2 + $0x190] sm:$0xff]
    %v1827 = vld [vmem:[#allocation2 + $0x198] sm:$0xff]
    %v1828 = vld [vmem:[#allocation2 + $0x1a0] sm:$0xff]
    %v1829 = vld [vmem:[#allocation2 + $0x1a8] sm:$0xff]
    %v1830 = vld [vmem:[#allocation2 + $0x1b0] sm:$0xff]
    %v1831 = vld [vmem:[#allocation2 + $0x1b8] sm:$0xff]
    %v1832 = vld [vmem:[#allocation2 + $0x1c0] sm:$0xff]
    %v1833 = vld [vmem:[#allocation2 + $0x1c8] sm:$0xff]
    %v1834 = vld [vmem:[#allocation2 + $0x1d0] sm:$0xff]
    %v1835 = vld [vmem:[#allocation2 + $0x1d8] sm:$0xff]
    %v1836 = vld [vmem:[#allocation2 + $0x1e0] sm:$0xff]
    %v1837 = vld [vmem:[#allocation2 + $0x1e8] sm:$0xff]
    %v1838 = vld [vmem:[#allocation2 + $0x1f0] sm:$0xff]
    %v1839 = vld [vmem:[#allocation2 + $0x1f8] sm:$0xff]
    %v1840 = vld [vmem:[#allocation2 + $0x200] sm:$0xff]
    %v1841 = vld [vmem:[#allocation2 + $0x208] sm:$0xff]
    %v1842 = vld [vmem:[#allocation2 + $0x210] sm:$0xff]
    %v1843 = vld [vmem:[#allocation2 + $0x218] sm:$0xff]
    %v1844 = vld [vmem:[#allocation2 + $0x220] sm:$0xff]
    %v1845 = vld [vmem:[#allocation2 + $0x228] sm:$0xff]
    %v1846 = vld [vmem:[#allocation2 + $0x230] sm:$0xff]
    %v1847 = vld [vmem:[#allocation2 + $0x238] sm:$0xff]
    %v1848 = vld [vmem:[#allocation2 + $0x240] sm:$0xff]
    %v1849 = vld [vmem:[#allocation2 + $0x248] sm:$0xff]
    %v1850 = vld [vmem:[#allocation2 + $0x250] sm:$0xff]
    %v1851 = vld [vmem:[#allocation2 + $0x258] sm:$0xff]
    %v1852 = vld [vmem:[#allocation2 + $0x260] sm:$0xff]
    %v1853 = vld [vmem:[#allocation2 + $0x268] sm:$0xff]
    %v1854 = vld [vmem:[#allocation2 + $0x270] sm:$0xff]
    %v1855 = vld [vmem:[#allocation2 + $0x278] sm:$0xff]
    %v1856 = vld [vmem:[#allocation2 + $0x280] sm:$0xff]
    %v1857 = vld [vmem:[#allocation2 + $0x288] sm:$0xff]
    %v1858 = vld [vmem:[#allocation2 + $0x290] sm:$0xff]
    %v1859 = vld [vmem:[#allocation2 + $0x298] sm:$0xff]
    %v1860 = vld [vmem:[#allocation2 + $0x2a0] sm:$0xff]
    %v1861 = vld [vmem:[#allocation2 + $0x2a8] sm:$0xff]
    %v1862 = vld [vmem:[#allocation2 + $0x2b0] sm:$0xff]
    %v1863 = vld [vmem:[#allocation2 + $0x2b8] sm:$0xff]
    %v1864 = vld [vmem:[#allocation2 + $0x2c0] sm:$0xff]
    %v1865 = vld [vmem:[#allocation2 + $0x2c8] sm:$0xff]
    %v1866 = vld [vmem:[#allocation2 + $0x2d0] sm:$0xff]
    %v1867 = vld [vmem:[#allocation2 + $0x2d8] sm:$0xff]
    %v1868 = vld [vmem:[#allocation2 + $0x2e0] sm:$0xff]
    %v1869 = vld [vmem:[#allocation2 + $0x2e8] sm:$0xff]
    %v1870 = vld [vmem:[#allocation2 + $0x2f0] sm:$0xff]
    %v1871 = vld [vmem:[#allocation2 + $0x2f8] sm:$0xff]
    %v1872 = vld [vmem:[#allocation2 + $0x300] sm:$0xff]
    %v1873 = vld [vmem:[#allocation2 + $0x308] sm:$0xff]
    %v1874 = vld [vmem:[#allocation2 + $0x310] sm:$0xff]
    %v1875 = vld [vmem:[#allocation2 + $0x318] sm:$0xff]
    %v1876 = vld [vmem:[#allocation2 + $0x320] sm:$0xff]
    %v1877 = vld [vmem:[#allocation2 + $0x328] sm:$0xff]
    %v1878 = vld [vmem:[#allocation2 + $0x330] sm:$0xff]
    %v1879 = vld [vmem:[#allocation2 + $0x338] sm:$0xff]
    %v1880 = vld [vmem:[#allocation2 + $0x340] sm:$0xff]
    %v1881 = vld [vmem:[#allocation2 + $0x348] sm:$0xff]
    %v1882 = vld [vmem:[#allocation2 + $0x350] sm:$0xff]
    %v1883 = vld [vmem:[#allocation2 + $0x358] sm:$0xff]
    %v1884 = vld [vmem:[#allocation2 + $0x360] sm:$0xff]
    %v1885 = vld [vmem:[#allocation2 + $0x368] sm:$0xff]
    %v1886 = vld [vmem:[#allocation2 + $0x370] sm:$0xff]
    %v1887 = vld [vmem:[#allocation2 + $0x378] sm:$0xff]
    %v1888 = vld [vmem:[#allocation2 + $0x380] sm:$0xff]
    %v1889 = vld [vmem:[#allocation2 + $0x388] sm:$0xff]
    %v1890 = vld [vmem:[#allocation2 + $0x390] sm:$0xff]
    %v1891 = vld [vmem:[#allocation2 + $0x398] sm:$0xff]
    %v1892 = vld [vmem:[#allocation2 + $0x3a0] sm:$0xff]
    %v1893 = vld [vmem:[#allocation2 + $0x3a8] sm:$0xff]
    %v1894 = vld [vmem:[#allocation2 + $0x3b0] sm:$0xff]
    %v1895 = vld [vmem:[#allocation2 + $0x3b8] sm:$0xff]
    %v1896 = vld [vmem:[#allocation2 + $0x3c0] sm:$0xff]
    %v1897 = vld [vmem:[#allocation2 + $0x3c8] sm:$0xff]
    %v1898 = vld [vmem:[#allocation2 + $0x3d0] sm:$0xff]
    %v1899 = vld [vmem:[#allocation2 + $0x3d8] sm:$0xff]
    %v1900 = vld [vmem:[#allocation2 + $0x3e0] sm:$0xff]
    %v1901 = vld [vmem:[#allocation2 + $0x3e8] sm:$0xff]
    %v1902 = vld [vmem:[#allocation2 + $0x3f0] sm:$0xff]
    %v1903 = vld [vmem:[#allocation2 + $0x3f8] sm:$0xff]
    %v1904 = vld [vmem:[#allocation2 + $0x400] sm:$0xff]
    %v1905 = vld [vmem:[#allocation2 + $0x408] sm:$0xff]
    %v1906 = vld [vmem:[#allocation2 + $0x410] sm:$0xff]
    %v1907 = vld [vmem:[#allocation2 + $0x418] sm:$0xff]
    %v1908 = vld [vmem:[#allocation2 + $0x420] sm:$0xff]
    %v1909 = vld [vmem:[#allocation2 + $0x428] sm:$0xff]
    %v1910 = vld [vmem:[#allocation2 + $0x430] sm:$0xff]
    %v1911 = vld [vmem:[#allocation2 + $0x438] sm:$0xff]
    %v1912 = vld [vmem:[#allocation2 + $0x440] sm:$0xff]
    %v1913 = vld [vmem:[#allocation2 + $0x448] sm:$0xff]
    %v1914 = vld [vmem:[#allocation2 + $0x450] sm:$0xff]
    %v1915 = vld [vmem:[#allocation2 + $0x458] sm:$0xff]
    %v1916 = vld [vmem:[#allocation2 + $0x460] sm:$0xff]
    %v1917 = vld [vmem:[#allocation2 + $0x468] sm:$0xff]
    %v1918 = vld [vmem:[#allocation2 + $0x470] sm:$0xff]
    %v1919 = vld [vmem:[#allocation2 + $0x478] sm:$0xff]
    %v1920 = vld [vmem:[#allocation2 + $0x480] sm:$0xff]
    %v1921 = vld [vmem:[#allocation2 + $0x488] sm:$0xff]
    %v1922 = vld [vmem:[#allocation2 + $0x490] sm:$0xff]
    %v1923 = vld [vmem:[#allocation2 + $0x498] sm:$0xff]
    %v1924 = vld [vmem:[#allocation2 + $0x4a0] sm:$0xff]
    %v1925 = vld [vmem:[#allocation2 + $0x4a8] sm:$0xff]
    %v1926 = vld [vmem:[#allocation2 + $0x4b0] sm:$0xff]
    %v1927 = vld [vmem:[#allocation2 + $0x4b8] sm:$0xff]
    %v1928 = vld [vmem:[#allocation2 + $0x4c0] sm:$0xff]
    %v1929 = vld [vmem:[#allocation2 + $0x4c8] sm:$0xff]
    %v1930 = vld [vmem:[#allocation2 + $0x4d0] sm:$0xff]
    %v1931 = vld [vmem:[#allocation2 + $0x4d8] sm:$0xff]
    %v1932 = vld [vmem:[#allocation2 + $0x4e0] sm:$0xff]
    %v1933 = vld [vmem:[#allocation2 + $0x4e8] sm:$0xff]
    %v1934 = vld [vmem:[#allocation2 + $0x4f0] sm:$0xff]
    %v1935 = vld [vmem:[#allocation2 + $0x4f8] sm:$0xff]
    %v1936 = vld [vmem:[#allocation2 + $0x500] sm:$0xff]
    %v1937 = vld [vmem:[#allocation2 + $0x508] sm:$0xff]
    %v1938 = vld [vmem:[#allocation2 + $0x510] sm:$0xff]
    %v1939 = vld [vmem:[#allocation2 + $0x518] sm:$0xff]
    %v1940 = vld [vmem:[#allocation2 + $0x520] sm:$0xff]
    %v1941 = vld [vmem:[#allocation2 + $0x528] sm:$0xff]
    %v1942 = vld [vmem:[#allocation2 + $0x530] sm:$0xff]
    %v1943 = vld [vmem:[#allocation2 + $0x538] sm:$0xff]
    %v1944 = vld [vmem:[#allocation2 + $0x540] sm:$0xff]
    %v1945 = vld [vmem:[#allocation2 + $0x548] sm:$0xff]
    %v1946 = vld [vmem:[#allocation2 + $0x550] sm:$0xff]
    %v1947 = vld [vmem:[#allocation2 + $0x558] sm:$0xff]
    %v1948 = vld [vmem:[#allocation2 + $0x560] sm:$0xff]
    %v1949 = vld [vmem:[#allocation2 + $0x568] sm:$0xff]
    %v1950 = vld [vmem:[#allocation2 + $0x570] sm:$0xff]
    %v1951 = vld [vmem:[#allocation2 + $0x578] sm:$0xff]
    %v1952 = vld [vmem:[#allocation2 + $0x580] sm:$0xff]
    %v1953 = vld [vmem:[#allocation2 + $0x588] sm:$0xff]
    %v1954 = vld [vmem:[#allocation2 + $0x590] sm:$0xff]
    %v1955 = vld [vmem:[#allocation2 + $0x598] sm:$0xff]
    %v1956 = vld [vmem:[#allocation2 + $0x5a0] sm:$0xff]
    %v1957 = vld [vmem:[#allocation2 + $0x5a8] sm:$0xff]
    %v1958 = vld [vmem:[#allocation2 + $0x5b0] sm:$0xff]
    %v1959 = vld [vmem:[#allocation2 + $0x5b8] sm:$0xff]
    %v1960 = vld [vmem:[#allocation2 + $0x5c0] sm:$0xff]
    %v1961 = vld [vmem:[#allocation2 + $0x5c8] sm:$0xff]
    %v1962 = vld [vmem:[#allocation2 + $0x5d0] sm:$0xff]
    %v1963 = vld [vmem:[#allocation2 + $0x5d8] sm:$0xff]
    %v1964 = vld [vmem:[#allocation2 + $0x5e0] sm:$0xff]
    %v1965 = vld [vmem:[#allocation2 + $0x5e8] sm:$0xff]
    %v1966 = vld [vmem:[#allocation2 + $0x5f0] sm:$0xff]
    %v1967 = vld [vmem:[#allocation2 + $0x5f8] sm:$0xff]
    %v1968 = vld [vmem:[#allocation2 + $0x600] sm:$0xff]
    %v1969 = vld [vmem:[#allocation2 + $0x608] sm:$0xff]
    %v1970 = vld [vmem:[#allocation2 + $0x610] sm:$0xff]
    %v1971 = vld [vmem:[#allocation2 + $0x618] sm:$0xff]
    %v1972 = vld [vmem:[#allocation2 + $0x620] sm:$0xff]
    %v1973 = vld [vmem:[#allocation2 + $0x628] sm:$0xff]
    %v1974 = vld [vmem:[#allocation2 + $0x630] sm:$0xff]
    %v1975 = vld [vmem:[#allocation2 + $0x638] sm:$0xff]
    %v1976 = vld [vmem:[#allocation2 + $0x640] sm:$0xff]
    %v1977 = vld [vmem:[#allocation2 + $0x648] sm:$0xff]
    %v1978 = vld [vmem:[#allocation2 + $0x650] sm:$0xff]
    %v1979 = vld [vmem:[#allocation2 + $0x658] sm:$0xff]
    %v1980 = vld [vmem:[#allocation2 + $0x660] sm:$0xff]
    %v1981 = vld [vmem:[#allocation2 + $0x668] sm:$0xff]
    %v1982 = vld [vmem:[#allocation2 + $0x670] sm:$0xff]
    %v1983 = vld [vmem:[#allocation2 + $0x678] sm:$0xff]
    %v1984 = vld [vmem:[#allocation2 + $0x680] sm:$0xff]
    %v1985 = vld [vmem:[#allocation2 + $0x688] sm:$0xff]
    %v1986 = vld [vmem:[#allocation2 + $0x690] sm:$0xff]
    %v1987 = vld [vmem:[#allocation2 + $0x698] sm:$0xff]
    %v1988 = vld [vmem:[#allocation2 + $0x6a0] sm:$0xff]
    %v1989 = vld [vmem:[#allocation2 + $0x6a8] sm:$0xff]
    %v1990 = vld [vmem:[#allocation2 + $0x6b0] sm:$0xff]
    %v1991 = vld [vmem:[#allocation2 + $0x6b8] sm:$0xff]
    %v1992 = vld [vmem:[#allocation2 + $0x6c0] sm:$0xff]
    %v1993 = vld [vmem:[#allocation2 + $0x6c8] sm:$0xff]
    %v1994 = vld [vmem:[#allocation2 + $0x6d0] sm:$0xff]
    %v1995 = vld [vmem:[#allocation2 + $0x6d8] sm:$0xff]
    %v1996 = vld [vmem:[#allocation2 + $0x6e0] sm:$0xff]
    %v1997 = vld [vmem:[#allocation2 + $0x6e8] sm:$0xff]
    %v1998 = vld [vmem:[#allocation2 + $0x6f0] sm:$0xff]
    %v1999 = vld [vmem:[#allocation2 + $0x6f8] sm:$0xff]
    %v2000 = vld [vmem:[#allocation2 + $0x700] sm:$0xff]
    %v2001 = vld [vmem:[#allocation2 + $0x708] sm:$0xff]
    %v2002 = vld [vmem:[#allocation2 + $0x710] sm:$0xff]
    %v2003 = vld [vmem:[#allocation2 + $0x718] sm:$0xff]
    %v2004 = vld [vmem:[#allocation2 + $0x720] sm:$0xff]
    %v2005 = vld [vmem:[#allocation2 + $0x728] sm:$0xff]
    %v2006 = vld [vmem:[#allocation2 + $0x730] sm:$0xff]
    %v2007 = vld [vmem:[#allocation2 + $0x738] sm:$0xff]
    %v2008 = vld [vmem:[#allocation2 + $0x740] sm:$0xff]
    %v2009 = vld [vmem:[#allocation2 + $0x748] sm:$0xff]
    %v2010 = vld [vmem:[#allocation2 + $0x750] sm:$0xff]
    %v2011 = vld [vmem:[#allocation2 + $0x758] sm:$0xff]
    %v2012 = vld [vmem:[#allocation2 + $0x760] sm:$0xff]
    %v2013 = vld [vmem:[#allocation2 + $0x768] sm:$0xff]
    %v2014 = vld [vmem:[#allocation2 + $0x770] sm:$0xff]
    %v2015 = vld [vmem:[#allocation2 + $0x778] sm:$0xff]
    %v2016 = vld [vmem:[#allocation2 + $0x780] sm:$0xff]
    %v2017 = vld [vmem:[#allocation2 + $0x788] sm:$0xff]
    %v2018 = vld [vmem:[#allocation2 + $0x790] sm:$0xff]
    %v2019 = vld [vmem:[#allocation2 + $0x798] sm:$0xff]
    %v2020 = vld [vmem:[#allocation2 + $0x7a0] sm:$0xff]
    %v2021 = vld [vmem:[#allocation2 + $0x7a8] sm:$0xff]
    %v2022 = vld [vmem:[#allocation2 + $0x7b0] sm:$0xff]
    %v2023 = vld [vmem:[#allocation2 + $0x7b8] sm:$0xff]
    %v2024 = vld [vmem:[#allocation2 + $0x7c0] sm:$0xff]
    %v2025 = vld [vmem:[#allocation2 + $0x7c8] sm:$0xff]
    %v2026 = vld [vmem:[#allocation2 + $0x7d0] sm:$0xff]
    %v2027 = vld [vmem:[#allocation2 + $0x7d8] sm:$0xff]
    %v2028 = vld [vmem:[#allocation2 + $0x7e0] sm:$0xff]
    %v2029 = vld [vmem:[#allocation2 + $0x7e8] sm:$0xff]
    %v2030 = vld [vmem:[#allocation2 + $0x7f0] sm:$0xff]
    %v2031 = vld [vmem:[#allocation2 + $0x7f8] sm:$0xff]
    %v2288 = vunpack.c.l.b16 %v1776
    %v2289 = vunpack.c.h.b16 %v1776
    %v2290 = vunpack.c.l.b16 %v1777
    %v2291 = vunpack.c.h.b16 %v1777
    %v2292 = vunpack.c.l.b16 %v1778
    %v2293 = vunpack.c.h.b16 %v1778
    %v2294 = vunpack.c.l.b16 %v1779
    %v2295 = vunpack.c.h.b16 %v1779
    %v2296 = vunpack.c.l.b16 %v1780
    %v2297 = vunpack.c.h.b16 %v1780
    %v2298 = vunpack.c.l.b16 %v1781
    %v2299 = vunpack.c.h.b16 %v1781
    %v2300 = vunpack.c.l.b16 %v1782
    %v2301 = vunpack.c.h.b16 %v1782
    %v2302 = vunpack.c.l.b16 %v1783
    %v2303 = vunpack.c.h.b16 %v1783
    %v2304 = vunpack.c.l.b16 %v1784
    %v2305 = vunpack.c.h.b16 %v1784
    %v2306 = vunpack.c.l.b16 %v1785
    %v2307 = vunpack.c.h.b16 %v1785
    %v2308 = vunpack.c.l.b16 %v1786
    %v2309 = vunpack.c.h.b16 %v1786
    %v2310 = vunpack.c.l.b16 %v1787
    %v2311 = vunpack.c.h.b16 %v1787
    %v2312 = vunpack.c.l.b16 %v1788
    %v2313 = vunpack.c.h.b16 %v1788
    %v2314 = vunpack.c.l.b16 %v1789
    %v2315 = vunpack.c.h.b16 %v1789
    %v2316 = vunpack.c.l.b16 %v1790
    %v2317 = vunpack.c.h.b16 %v1790
    %v2318 = vunpack.c.l.b16 %v1791
    %v2319 = vunpack.c.h.b16 %v1791
    %v2320 = vunpack.c.l.b16 %v1792
    %v2321 = vunpack.c.h.b16 %v1792
    %v2322 = vunpack.c.l.b16 %v1793
    %v2323 = vunpack.c.h.b16 %v1793
    %v2324 = vunpack.c.l.b16 %v1794
    %v2325 = vunpack.c.h.b16 %v1794
    %v2326 = vunpack.c.l.b16 %v1795
    %v2327 = vunpack.c.h.b16 %v1795
    %v2328 = vunpack.c.l.b16 %v1796
    %v2329 = vunpack.c.h.b16 %v1796
    %v2330 = vunpack.c.l.b16 %v1797
    %v2331 = vunpack.c.h.b16 %v1797
    %v2332 = vunpack.c.l.b16 %v1798
    %v2333 = vunpack.c.h.b16 %v1798
    %v2334 = vunpack.c.l.b16 %v1799
    %v2335 = vunpack.c.h.b16 %v1799
    %v2336 = vunpack.c.l.b16 %v1800
    %v2337 = vunpack.c.h.b16 %v1800
    %v2338 = vunpack.c.l.b16 %v1801
    %v2339 = vunpack.c.h.b16 %v1801
    %v2340 = vunpack.c.l.b16 %v1802
    %v2341 = vunpack.c.h.b16 %v1802
    %v2342 = vunpack.c.l.b16 %v1803
    %v2343 = vunpack.c.h.b16 %v1803
    %v2344 = vunpack.c.l.b16 %v1804
    %v2345 = vunpack.c.h.b16 %v1804
    %v2346 = vunpack.c.l.b16 %v1805
    %v2347 = vunpack.c.h.b16 %v1805
    %v2348 = vunpack.c.l.b16 %v1806
    %v2349 = vunpack.c.h.b16 %v1806
    %v2350 = vunpack.c.l.b16 %v1807
    %v2351 = vunpack.c.h.b16 %v1807
    %v2352 = vunpack.c.l.b16 %v1808
    %v2353 = vunpack.c.h.b16 %v1808
    %v2354 = vunpack.c.l.b16 %v1809
    %v2355 = vunpack.c.h.b16 %v1809
    %v2356 = vunpack.c.l.b16 %v1810
    %v2357 = vunpack.c.h.b16 %v1810
    %v2358 = vunpack.c.l.b16 %v1811
    %v2359 = vunpack.c.h.b16 %v1811
    %v2360 = vunpack.c.l.b16 %v1812
    %v2361 = vunpack.c.h.b16 %v1812
    %v2362 = vunpack.c.l.b16 %v1813
    %v2363 = vunpack.c.h.b16 %v1813
    %v2364 = vunpack.c.l.b16 %v1814
    %v2365 = vunpack.c.h.b16 %v1814
    %v2366 = vunpack.c.l.b16 %v1815
    %v2367 = vunpack.c.h.b16 %v1815
    %v2368 = vunpack.c.l.b16 %v1816
    %v2369 = vunpack.c.h.b16 %v1816
    %v2370 = vunpack.c.l.b16 %v1817
    %v2371 = vunpack.c.h.b16 %v1817
    %v2372 = vunpack.c.l.b16 %v1818
    %v2373 = vunpack.c.h.b16 %v1818
    %v2374 = vunpack.c.l.b16 %v1819
    %v2375 = vunpack.c.h.b16 %v1819
    %v2376 = vunpack.c.l.b16 %v1820
    %v2377 = vunpack.c.h.b16 %v1820
    %v2378 = vunpack.c.l.b16 %v1821
    %v2379 = vunpack.c.h.b16 %v1821
    %v2380 = vunpack.c.l.b16 %v1822
    %v2381 = vunpack.c.h.b16 %v1822
    %v2382 = vunpack.c.l.b16 %v1823
    %v2383 = vunpack.c.h.b16 %v1823
    %v2384 = vunpack.c.l.b16 %v1824
    %v2385 = vunpack.c.h.b16 %v1824
    %v2386 = vunpack.c.l.b16 %v1825
    %v2387 = vunpack.c.h.b16 %v1825
    %v2388 = vunpack.c.l.b16 %v1826
    %v2389 = vunpack.c.h.b16 %v1826
    %v2390 = vunpack.c.l.b16 %v1827
    %v2391 = vunpack.c.h.b16 %v1827
    %v2392 = vunpack.c.l.b16 %v1828
    %v2393 = vunpack.c.h.b16 %v1828
    %v2394 = vunpack.c.l.b16 %v1829
    %v2395 = vunpack.c.h.b16 %v1829
    %v2396 = vunpack.c.l.b16 %v1830
    %v2397 = vunpack.c.h.b16 %v1830
    %v2398 = vunpack.c.l.b16 %v1831
    %v2399 = vunpack.c.h.b16 %v1831
    %v2400 = vunpack.c.l.b16 %v1832
    %v2401 = vunpack.c.h.b16 %v1832
    %v2402 = vunpack.c.l.b16 %v1833
    %v2403 = vunpack.c.h.b16 %v1833
    %v2404 = vunpack.c.l.b16 %v1834
    %v2405 = vunpack.c.h.b16 %v1834
    %v2406 = vunpack.c.l.b16 %v1835
    %v2407 = vunpack.c.h.b16 %v1835
    %v2408 = vunpack.c.l.b16 %v1836
    %v2409 = vunpack.c.h.b16 %v1836
    %v2410 = vunpack.c.l.b16 %v1837
    %v2411 = vunpack.c.h.b16 %v1837
    %v2412 = vunpack.c.l.b16 %v1838
    %v2413 = vunpack.c.h.b16 %v1838
    %v2414 = vunpack.c.l.b16 %v1839
    %v2415 = vunpack.c.h.b16 %v1839
    %v2416 = vunpack.c.l.b16 %v1840
    %v2417 = vunpack.c.h.b16 %v1840
    %v2418 = vunpack.c.l.b16 %v1841
    %v2419 = vunpack.c.h.b16 %v1841
    %v2420 = vunpack.c.l.b16 %v1842
    %v2421 = vunpack.c.h.b16 %v1842
    %v2422 = vunpack.c.l.b16 %v1843
    %v2423 = vunpack.c.h.b16 %v1843
    %v2424 = vunpack.c.l.b16 %v1844
    %v2425 = vunpack.c.h.b16 %v1844
    %v2426 = vunpack.c.l.b16 %v1845
    %v2427 = vunpack.c.h.b16 %v1845
    %v2428 = vunpack.c.l.b16 %v1846
    %v2429 = vunpack.c.h.b16 %v1846
    %v2430 = vunpack.c.l.b16 %v1847
    %v2431 = vunpack.c.h.b16 %v1847
    %v2432 = vunpack.c.l.b16 %v1848
    %v2433 = vunpack.c.h.b16 %v1848
    %v2434 = vunpack.c.l.b16 %v1849
    %v2435 = vunpack.c.h.b16 %v1849
    %v2436 = vunpack.c.l.b16 %v1850
    %v2437 = vunpack.c.h.b16 %v1850
    %v2438 = vunpack.c.l.b16 %v1851
    %v2439 = vunpack.c.h.b16 %v1851
    %v2440 = vunpack.c.l.b16 %v1852
    %v2441 = vunpack.c.h.b16 %v1852
    %v2442 = vunpack.c.l.b16 %v1853
    %v2443 = vunpack.c.h.b16 %v1853
    %v2444 = vunpack.c.l.b16 %v1854
    %v2445 = vunpack.c.h.b16 %v1854
    %v2446 = vunpack.c.l.b16 %v1855
    %v2447 = vunpack.c.h.b16 %v1855
    %v2448 = vunpack.c.l.b16 %v1856
    %v2449 = vunpack.c.h.b16 %v1856
    %v2450 = vunpack.c.l.b16 %v1857
    %v2451 = vunpack.c.h.b16 %v1857
    %v2452 = vunpack.c.l.b16 %v1858
    %v2453 = vunpack.c.h.b16 %v1858
    %v2454 = vunpack.c.l.b16 %v1859
    %v2455 = vunpack.c.h.b16 %v1859
    %v2456 = vunpack.c.l.b16 %v1860
    %v2457 = vunpack.c.h.b16 %v1860
    %v2458 = vunpack.c.l.b16 %v1861
    %v2459 = vunpack.c.h.b16 %v1861
    %v2460 = vunpack.c.l.b16 %v1862
    %v2461 = vunpack.c.h.b16 %v1862
    %v2462 = vunpack.c.l.b16 %v1863
    %v2463 = vunpack.c.h.b16 %v1863
    %v2464 = vunpack.c.l.b16 %v1864
    %v2465 = vunpack.c.h.b16 %v1864
    %v2466 = vunpack.c.l.b16 %v1865
    %v2467 = vunpack.c.h.b16 %v1865
    %v2468 = vunpack.c.l.b16 %v1866
    %v2469 = vunpack.c.h.b16 %v1866
    %v2470 = vunpack.c.l.b16 %v1867
    %v2471 = vunpack.c.h.b16 %v1867
    %v2472 = vunpack.c.l.b16 %v1868
    %v2473 = vunpack.c.h.b16 %v1868
    %v2474 = vunpack.c.l.b16 %v1869
    %v2475 = vunpack.c.h.b16 %v1869
    %v2476 = vunpack.c.l.b16 %v1870
    %v2477 = vunpack.c.h.b16 %v1870
    %v2478 = vunpack.c.l.b16 %v1871
    %v2479 = vunpack.c.h.b16 %v1871
    %v2480 = vunpack.c.l.b16 %v1872
    %v2481 = vunpack.c.h.b16 %v1872
    %v2482 = vunpack.c.l.b16 %v1873
    %v2483 = vunpack.c.h.b16 %v1873
    %v2484 = vunpack.c.l.b16 %v1874
    %v2485 = vunpack.c.h.b16 %v1874
    %v2486 = vunpack.c.l.b16 %v1875
    %v2487 = vunpack.c.h.b16 %v1875
    %v2488 = vunpack.c.l.b16 %v1876
    %v2489 = vunpack.c.h.b16 %v1876
    %v2490 = vunpack.c.l.b16 %v1877
    %v2491 = vunpack.c.h.b16 %v1877
    %v2492 = vunpack.c.l.b16 %v1878
    %v2493 = vunpack.c.h.b16 %v1878
    %v2494 = vunpack.c.l.b16 %v1879
    %v2495 = vunpack.c.h.b16 %v1879
    %v2496 = vunpack.c.l.b16 %v1880
    %v2497 = vunpack.c.h.b16 %v1880
    %v2498 = vunpack.c.l.b16 %v1881
    %v2499 = vunpack.c.h.b16 %v1881
    %v2500 = vunpack.c.l.b16 %v1882
    %v2501 = vunpack.c.h.b16 %v1882
    %v2502 = vunpack.c.l.b16 %v1883
    %v2503 = vunpack.c.h.b16 %v1883
    %v2504 = vunpack.c.l.b16 %v1884
    %v2505 = vunpack.c.h.b16 %v1884
    %v2506 = vunpack.c.l.b16 %v1885
    %v2507 = vunpack.c.h.b16 %v1885
    %v2508 = vunpack.c.l.b16 %v1886
    %v2509 = vunpack.c.h.b16 %v1886
    %v2510 = vunpack.c.l.b16 %v1887
    %v2511 = vunpack.c.h.b16 %v1887
    %v2512 = vunpack.c.l.b16 %v1888
    %v2513 = vunpack.c.h.b16 %v1888
    %v2514 = vunpack.c.l.b16 %v1889
    %v2515 = vunpack.c.h.b16 %v1889
    %v2516 = vunpack.c.l.b16 %v1890
    %v2517 = vunpack.c.h.b16 %v1890
    %v2518 = vunpack.c.l.b16 %v1891
    %v2519 = vunpack.c.h.b16 %v1891
    %v2520 = vunpack.c.l.b16 %v1892
    %v2521 = vunpack.c.h.b16 %v1892
    %v2522 = vunpack.c.l.b16 %v1893
    %v2523 = vunpack.c.h.b16 %v1893
    %v2524 = vunpack.c.l.b16 %v1894
    %v2525 = vunpack.c.h.b16 %v1894
    %v2526 = vunpack.c.l.b16 %v1895
    %v2527 = vunpack.c.h.b16 %v1895
    %v2528 = vunpack.c.l.b16 %v1896
    %v2529 = vunpack.c.h.b16 %v1896
    %v2530 = vunpack.c.l.b16 %v1897
    %v2531 = vunpack.c.h.b16 %v1897
    %v2532 = vunpack.c.l.b16 %v1898
    %v2533 = vunpack.c.h.b16 %v1898
    %v2534 = vunpack.c.l.b16 %v1899
    %v2535 = vunpack.c.h.b16 %v1899
    %v2536 = vunpack.c.l.b16 %v1900
    %v2537 = vunpack.c.h.b16 %v1900
    %v2538 = vunpack.c.l.b16 %v1901
    %v2539 = vunpack.c.h.b16 %v1901
    %v2540 = vunpack.c.l.b16 %v1902
    %v2541 = vunpack.c.h.b16 %v1902
    %v2542 = vunpack.c.l.b16 %v1903
    %v2543 = vunpack.c.h.b16 %v1903
    %v2544 = vunpack.c.l.b16 %v1904
    %v2545 = vunpack.c.h.b16 %v1904
    %v2546 = vunpack.c.l.b16 %v1905
    %v2547 = vunpack.c.h.b16 %v1905
    %v2548 = vunpack.c.l.b16 %v1906
    %v2549 = vunpack.c.h.b16 %v1906
    %v2550 = vunpack.c.l.b16 %v1907
    %v2551 = vunpack.c.h.b16 %v1907
    %v2552 = vunpack.c.l.b16 %v1908
    %v2553 = vunpack.c.h.b16 %v1908
    %v2554 = vunpack.c.l.b16 %v1909
    %v2555 = vunpack.c.h.b16 %v1909
    %v2556 = vunpack.c.l.b16 %v1910
    %v2557 = vunpack.c.h.b16 %v1910
    %v2558 = vunpack.c.l.b16 %v1911
    %v2559 = vunpack.c.h.b16 %v1911
    %v2560 = vunpack.c.l.b16 %v1912
    %v2561 = vunpack.c.h.b16 %v1912
    %v2562 = vunpack.c.l.b16 %v1913
    %v2563 = vunpack.c.h.b16 %v1913
    %v2564 = vunpack.c.l.b16 %v1914
    %v2565 = vunpack.c.h.b16 %v1914
    %v2566 = vunpack.c.l.b16 %v1915
    %v2567 = vunpack.c.h.b16 %v1915
    %v2568 = vunpack.c.l.b16 %v1916
    %v2569 = vunpack.c.h.b16 %v1916
    %v2570 = vunpack.c.l.b16 %v1917
    %v2571 = vunpack.c.h.b16 %v1917
    %v2572 = vunpack.c.l.b16 %v1918
    %v2573 = vunpack.c.h.b16 %v1918
    %v2574 = vunpack.c.l.b16 %v1919
    %v2575 = vunpack.c.h.b16 %v1919
    %v2576 = vunpack.c.l.b16 %v1920
    %v2577 = vunpack.c.h.b16 %v1920
    %v2578 = vunpack.c.l.b16 %v1921
    %v2579 = vunpack.c.h.b16 %v1921
    %v2580 = vunpack.c.l.b16 %v1922
    %v2581 = vunpack.c.h.b16 %v1922
    %v2582 = vunpack.c.l.b16 %v1923
    %v2583 = vunpack.c.h.b16 %v1923
    %v2584 = vunpack.c.l.b16 %v1924
    %v2585 = vunpack.c.h.b16 %v1924
    %v2586 = vunpack.c.l.b16 %v1925
    %v2587 = vunpack.c.h.b16 %v1925
    %v2588 = vunpack.c.l.b16 %v1926
    %v2589 = vunpack.c.h.b16 %v1926
    %v2590 = vunpack.c.l.b16 %v1927
    %v2591 = vunpack.c.h.b16 %v1927
    %v2592 = vunpack.c.l.b16 %v1928
    %v2593 = vunpack.c.h.b16 %v1928
    %v2594 = vunpack.c.l.b16 %v1929
    %v2595 = vunpack.c.h.b16 %v1929
    %v2596 = vunpack.c.l.b16 %v1930
    %v2597 = vunpack.c.h.b16 %v1930
    %v2598 = vunpack.c.l.b16 %v1931
    %v2599 = vunpack.c.h.b16 %v1931
    %v2600 = vunpack.c.l.b16 %v1932
    %v2601 = vunpack.c.h.b16 %v1932
    %v2602 = vunpack.c.l.b16 %v1933
    %v2603 = vunpack.c.h.b16 %v1933
    %v2604 = vunpack.c.l.b16 %v1934
    %v2605 = vunpack.c.h.b16 %v1934
    %v2606 = vunpack.c.l.b16 %v1935
    %v2607 = vunpack.c.h.b16 %v1935
    %v2608 = vunpack.c.l.b16 %v1936
    %v2609 = vunpack.c.h.b16 %v1936
    %v2610 = vunpack.c.l.b16 %v1937
    %v2611 = vunpack.c.h.b16 %v1937
    %v2612 = vunpack.c.l.b16 %v1938
    %v2613 = vunpack.c.h.b16 %v1938
    %v2614 = vunpack.c.l.b16 %v1939
    %v2615 = vunpack.c.h.b16 %v1939
    %v2616 = vunpack.c.l.b16 %v1940
    %v2617 = vunpack.c.h.b16 %v1940
    %v2618 = vunpack.c.l.b16 %v1941
    %v2619 = vunpack.c.h.b16 %v1941
    %v2620 = vunpack.c.l.b16 %v1942
    %v2621 = vunpack.c.h.b16 %v1942
    %v2622 = vunpack.c.l.b16 %v1943
    %v2623 = vunpack.c.h.b16 %v1943
    %v2624 = vunpack.c.l.b16 %v1944
    %v2625 = vunpack.c.h.b16 %v1944
    %v2626 = vunpack.c.l.b16 %v1945
    %v2627 = vunpack.c.h.b16 %v1945
    %v2628 = vunpack.c.l.b16 %v1946
    %v2629 = vunpack.c.h.b16 %v1946
    %v2630 = vunpack.c.l.b16 %v1947
    %v2631 = vunpack.c.h.b16 %v1947
    %v2632 = vunpack.c.l.b16 %v1948
    %v2633 = vunpack.c.h.b16 %v1948
    %v2634 = vunpack.c.l.b16 %v1949
    %v2635 = vunpack.c.h.b16 %v1949
    %v2636 = vunpack.c.l.b16 %v1950
    %v2637 = vunpack.c.h.b16 %v1950
    %v2638 = vunpack.c.l.b16 %v1951
    %v2639 = vunpack.c.h.b16 %v1951
    %v2640 = vunpack.c.l.b16 %v1952
    %v2641 = vunpack.c.h.b16 %v1952
    %v2642 = vunpack.c.l.b16 %v1953
    %v2643 = vunpack.c.h.b16 %v1953
    %v2644 = vunpack.c.l.b16 %v1954
    %v2645 = vunpack.c.h.b16 %v1954
    %v2646 = vunpack.c.l.b16 %v1955
    %v2647 = vunpack.c.h.b16 %v1955
    %v2648 = vunpack.c.l.b16 %v1956
    %v2649 = vunpack.c.h.b16 %v1956
    %v2650 = vunpack.c.l.b16 %v1957
    %v2651 = vunpack.c.h.b16 %v1957
    %v2652 = vunpack.c.l.b16 %v1958
    %v2653 = vunpack.c.h.b16 %v1958
    %v2654 = vunpack.c.l.b16 %v1959
    %v2655 = vunpack.c.h.b16 %v1959
    %v2656 = vunpack.c.l.b16 %v1960
    %v2657 = vunpack.c.h.b16 %v1960
    %v2658 = vunpack.c.l.b16 %v1961
    %v2659 = vunpack.c.h.b16 %v1961
    %v2660 = vunpack.c.l.b16 %v1962
    %v2661 = vunpack.c.h.b16 %v1962
    %v2662 = vunpack.c.l.b16 %v1963
    %v2663 = vunpack.c.h.b16 %v1963
    %v2664 = vunpack.c.l.b16 %v1964
    %v2665 = vunpack.c.h.b16 %v1964
    %v2666 = vunpack.c.l.b16 %v1965
    %v2667 = vunpack.c.h.b16 %v1965
    %v2668 = vunpack.c.l.b16 %v1966
    %v2669 = vunpack.c.h.b16 %v1966
    %v2670 = vunpack.c.l.b16 %v1967
    %v2671 = vunpack.c.h.b16 %v1967
    %v2672 = vunpack.c.l.b16 %v1968
    %v2673 = vunpack.c.h.b16 %v1968
    %v2674 = vunpack.c.l.b16 %v1969
    %v2675 = vunpack.c.h.b16 %v1969
    %v2676 = vunpack.c.l.b16 %v1970
    %v2677 = vunpack.c.h.b16 %v1970
    %v2678 = vunpack.c.l.b16 %v1971
    %v2679 = vunpack.c.h.b16 %v1971
    %v2680 = vunpack.c.l.b16 %v1972
    %v2681 = vunpack.c.h.b16 %v1972
    %v2682 = vunpack.c.l.b16 %v1973
    %v2683 = vunpack.c.h.b16 %v1973
    %v2684 = vunpack.c.l.b16 %v1974
    %v2685 = vunpack.c.h.b16 %v1974
    %v2686 = vunpack.c.l.b16 %v1975
    %v2687 = vunpack.c.h.b16 %v1975
    %v2688 = vunpack.c.l.b16 %v1976
    %v2689 = vunpack.c.h.b16 %v1976
    %v2690 = vunpack.c.l.b16 %v1977
    %v2691 = vunpack.c.h.b16 %v1977
    %v2692 = vunpack.c.l.b16 %v1978
    %v2693 = vunpack.c.h.b16 %v1978
    %v2694 = vunpack.c.l.b16 %v1979
    %v2695 = vunpack.c.h.b16 %v1979
    %v2696 = vunpack.c.l.b16 %v1980
    %v2697 = vunpack.c.h.b16 %v1980
    %v2698 = vunpack.c.l.b16 %v1981
    %v2699 = vunpack.c.h.b16 %v1981
    %v2700 = vunpack.c.l.b16 %v1982
    %v2701 = vunpack.c.h.b16 %v1982
    %v2702 = vunpack.c.l.b16 %v1983
    %v2703 = vunpack.c.h.b16 %v1983
    %v2704 = vunpack.c.l.b16 %v1984
    %v2705 = vunpack.c.h.b16 %v1984
    %v2706 = vunpack.c.l.b16 %v1985
    %v2707 = vunpack.c.h.b16 %v1985
    %v2708 = vunpack.c.l.b16 %v1986
    %v2709 = vunpack.c.h.b16 %v1986
    %v2710 = vunpack.c.l.b16 %v1987
    %v2711 = vunpack.c.h.b16 %v1987
    %v2712 = vunpack.c.l.b16 %v1988
    %v2713 = vunpack.c.h.b16 %v1988
    %v2714 = vunpack.c.l.b16 %v1989
    %v2715 = vunpack.c.h.b16 %v1989
    %v2716 = vunpack.c.l.b16 %v1990
    %v2717 = vunpack.c.h.b16 %v1990
    %v2718 = vunpack.c.l.b16 %v1991
    %v2719 = vunpack.c.h.b16 %v1991
    %v2720 = vunpack.c.l.b16 %v1992
    %v2721 = vunpack.c.h.b16 %v1992
    %v2722 = vunpack.c.l.b16 %v1993
    %v2723 = vunpack.c.h.b16 %v1993
    %v2724 = vunpack.c.l.b16 %v1994
    %v2725 = vunpack.c.h.b16 %v1994
    %v2726 = vunpack.c.l.b16 %v1995
    %v2727 = vunpack.c.h.b16 %v1995
    %v2728 = vunpack.c.l.b16 %v1996
    %v2729 = vunpack.c.h.b16 %v1996
    %v2730 = vunpack.c.l.b16 %v1997
    %v2731 = vunpack.c.h.b16 %v1997
    %v2732 = vunpack.c.l.b16 %v1998
    %v2733 = vunpack.c.h.b16 %v1998
    %v2734 = vunpack.c.l.b16 %v1999
    %v2735 = vunpack.c.h.b16 %v1999
    %v2736 = vunpack.c.l.b16 %v2000
    %v2737 = vunpack.c.h.b16 %v2000
    %v2738 = vunpack.c.l.b16 %v2001
    %v2739 = vunpack.c.h.b16 %v2001
    %v2740 = vunpack.c.l.b16 %v2002
    %v2741 = vunpack.c.h.b16 %v2002
    %v2742 = vunpack.c.l.b16 %v2003
    %v2743 = vunpack.c.h.b16 %v2003
    %v2744 = vunpack.c.l.b16 %v2004
    %v2745 = vunpack.c.h.b16 %v2004
    %v2746 = vunpack.c.l.b16 %v2005
    %v2747 = vunpack.c.h.b16 %v2005
    %v2748 = vunpack.c.l.b16 %v2006
    %v2749 = vunpack.c.h.b16 %v2006
    %v2750 = vunpack.c.l.b16 %v2007
    %v2751 = vunpack.c.h.b16 %v2007
    %v2752 = vunpack.c.l.b16 %v2008
    %v2753 = vunpack.c.h.b16 %v2008
    %v2754 = vunpack.c.l.b16 %v2009
    %v2755 = vunpack.c.h.b16 %v2009
    %v2756 = vunpack.c.l.b16 %v2010
    %v2757 = vunpack.c.h.b16 %v2010
    %v2758 = vunpack.c.l.b16 %v2011
    %v2759 = vunpack.c.h.b16 %v2011
    %v2760 = vunpack.c.l.b16 %v2012
    %v2761 = vunpack.c.h.b16 %v2012
    %v2762 = vunpack.c.l.b16 %v2013
    %v2763 = vunpack.c.h.b16 %v2013
    %v2764 = vunpack.c.l.b16 %v2014
    %v2765 = vunpack.c.h.b16 %v2014
    %v2766 = vunpack.c.l.b16 %v2015
    %v2767 = vunpack.c.h.b16 %v2015
    %v2768 = vunpack.c.l.b16 %v2016
    %v2769 = vunpack.c.h.b16 %v2016
    %v2770 = vunpack.c.l.b16 %v2017
    %v2771 = vunpack.c.h.b16 %v2017
    %v2772 = vunpack.c.l.b16 %v2018
    %v2773 = vunpack.c.h.b16 %v2018
    %v2774 = vunpack.c.l.b16 %v2019
    %v2775 = vunpack.c.h.b16 %v2019
    %v2776 = vunpack.c.l.b16 %v2020
    %v2777 = vunpack.c.h.b16 %v2020
    %v2778 = vunpack.c.l.b16 %v2021
    %v2779 = vunpack.c.h.b16 %v2021
    %v2780 = vunpack.c.l.b16 %v2022
    %v2781 = vunpack.c.h.b16 %v2022
    %v2782 = vunpack.c.l.b16 %v2023
    %v2783 = vunpack.c.h.b16 %v2023
    %v2784 = vunpack.c.l.b16 %v2024
    %v2785 = vunpack.c.h.b16 %v2024
    %v2786 = vunpack.c.l.b16 %v2025
    %v2787 = vunpack.c.h.b16 %v2025
    %v2788 = vunpack.c.l.b16 %v2026
    %v2789 = vunpack.c.h.b16 %v2026
    %v2790 = vunpack.c.l.b16 %v2027
    %v2791 = vunpack.c.h.b16 %v2027
    %v2792 = vunpack.c.l.b16 %v2028
    %v2793 = vunpack.c.h.b16 %v2028
    %v2794 = vunpack.c.l.b16 %v2029
    %v2795 = vunpack.c.h.b16 %v2029
    %v2796 = vunpack.c.l.b16 %v2030
    %v2797 = vunpack.c.h.b16 %v2030
    %v2798 = vunpack.c.l.b16 %v2031
    %v2799 = vunpack.c.h.b16 %v2031
    %v2800 = vpack.c.b16 %v2296, %v2288
    %v2801 = vpack.c.b16 %v2297, %v2289
    %v2802 = vpack.c.b16 %v2298, %v2290
    %v2803 = vpack.c.b16 %v2299, %v2291
    %v2804 = vpack.c.b16 %v2300, %v2292
    %v2805 = vpack.c.b16 %v2301, %v2293
    %v2806 = vpack.c.b16 %v2302, %v2294
    %v2807 = vpack.c.b16 %v2303, %v2295
    %v2808 = vpack.c.b16 %v2312, %v2304
    %v2809 = vpack.c.b16 %v2313, %v2305
    %v2810 = vpack.c.b16 %v2314, %v2306
    %v2811 = vpack.c.b16 %v2315, %v2307
    %v2812 = vpack.c.b16 %v2316, %v2308
    %v2813 = vpack.c.b16 %v2317, %v2309
    %v2814 = vpack.c.b16 %v2318, %v2310
    %v2815 = vpack.c.b16 %v2319, %v2311
    %v2816 = vpack.c.b16 %v2328, %v2320
    %v2817 = vpack.c.b16 %v2329, %v2321
    %v2818 = vpack.c.b16 %v2330, %v2322
    %v2819 = vpack.c.b16 %v2331, %v2323
    %v2820 = vpack.c.b16 %v2332, %v2324
    %v2821 = vpack.c.b16 %v2333, %v2325
    %v2822 = vpack.c.b16 %v2334, %v2326
    %v2823 = vpack.c.b16 %v2335, %v2327
    %v2824 = vpack.c.b16 %v2344, %v2336
    %v2825 = vpack.c.b16 %v2345, %v2337
    %v2826 = vpack.c.b16 %v2346, %v2338
    %v2827 = vpack.c.b16 %v2347, %v2339
    %v2828 = vpack.c.b16 %v2348, %v2340
    %v2829 = vpack.c.b16 %v2349, %v2341
    %v2830 = vpack.c.b16 %v2350, %v2342
    %v2831 = vpack.c.b16 %v2351, %v2343
    %v2832 = vpack.c.b16 %v2360, %v2352
    %v2833 = vpack.c.b16 %v2361, %v2353
    %v2834 = vpack.c.b16 %v2362, %v2354
    %v2835 = vpack.c.b16 %v2363, %v2355
    %v2836 = vpack.c.b16 %v2364, %v2356
    %v2837 = vpack.c.b16 %v2365, %v2357
    %v2838 = vpack.c.b16 %v2366, %v2358
    %v2839 = vpack.c.b16 %v2367, %v2359
    %v2840 = vpack.c.b16 %v2376, %v2368
    %v2841 = vpack.c.b16 %v2377, %v2369
    %v2842 = vpack.c.b16 %v2378, %v2370
    %v2843 = vpack.c.b16 %v2379, %v2371
    %v2844 = vpack.c.b16 %v2380, %v2372
    %v2845 = vpack.c.b16 %v2381, %v2373
    %v2846 = vpack.c.b16 %v2382, %v2374
    %v2847 = vpack.c.b16 %v2383, %v2375
    %v2848 = vpack.c.b16 %v2392, %v2384
    %v2849 = vpack.c.b16 %v2393, %v2385
    %v2850 = vpack.c.b16 %v2394, %v2386
    %v2851 = vpack.c.b16 %v2395, %v2387
    %v2852 = vpack.c.b16 %v2396, %v2388
    %v2853 = vpack.c.b16 %v2397, %v2389
    %v2854 = vpack.c.b16 %v2398, %v2390
    %v2855 = vpack.c.b16 %v2399, %v2391
    %v2856 = vpack.c.b16 %v2408, %v2400
    %v2857 = vpack.c.b16 %v2409, %v2401
    %v2858 = vpack.c.b16 %v2410, %v2402
    %v2859 = vpack.c.b16 %v2411, %v2403
    %v2860 = vpack.c.b16 %v2412, %v2404
    %v2861 = vpack.c.b16 %v2413, %v2405
    %v2862 = vpack.c.b16 %v2414, %v2406
    %v2863 = vpack.c.b16 %v2415, %v2407
    %v2864 = vpack.c.b16 %v2424, %v2416
    %v2865 = vpack.c.b16 %v2425, %v2417
    %v2866 = vpack.c.b16 %v2426, %v2418
    %v2867 = vpack.c.b16 %v2427, %v2419
    %v2868 = vpack.c.b16 %v2428, %v2420
    %v2869 = vpack.c.b16 %v2429, %v2421
    %v2870 = vpack.c.b16 %v2430, %v2422
    %v2871 = vpack.c.b16 %v2431, %v2423
    %v2872 = vpack.c.b16 %v2440, %v2432
    %v2873 = vpack.c.b16 %v2441, %v2433
    %v2874 = vpack.c.b16 %v2442, %v2434
    %v2875 = vpack.c.b16 %v2443, %v2435
    %v2876 = vpack.c.b16 %v2444, %v2436
    %v2877 = vpack.c.b16 %v2445, %v2437
    %v2878 = vpack.c.b16 %v2446, %v2438
    %v2879 = vpack.c.b16 %v2447, %v2439
    %v2880 = vpack.c.b16 %v2456, %v2448
    %v2881 = vpack.c.b16 %v2457, %v2449
    %v2882 = vpack.c.b16 %v2458, %v2450
    %v2883 = vpack.c.b16 %v2459, %v2451
    %v2884 = vpack.c.b16 %v2460, %v2452
    %v2885 = vpack.c.b16 %v2461, %v2453
    %v2886 = vpack.c.b16 %v2462, %v2454
    %v2887 = vpack.c.b16 %v2463, %v2455
    %v2888 = vpack.c.b16 %v2472, %v2464
    %v2889 = vpack.c.b16 %v2473, %v2465
    %v2890 = vpack.c.b16 %v2474, %v2466
    %v2891 = vpack.c.b16 %v2475, %v2467
    %v2892 = vpack.c.b16 %v2476, %v2468
    %v2893 = vpack.c.b16 %v2477, %v2469
    %v2894 = vpack.c.b16 %v2478, %v2470
    %v2895 = vpack.c.b16 %v2479, %v2471
    %v2896 = vpack.c.b16 %v2488, %v2480
    %v2897 = vpack.c.b16 %v2489, %v2481
    %v2898 = vpack.c.b16 %v2490, %v2482
    %v2899 = vpack.c.b16 %v2491, %v2483
    %v2900 = vpack.c.b16 %v2492, %v2484
    %v2901 = vpack.c.b16 %v2493, %v2485
    %v2902 = vpack.c.b16 %v2494, %v2486
    %v2903 = vpack.c.b16 %v2495, %v2487
    %v2904 = vpack.c.b16 %v2504, %v2496
    %v2905 = vpack.c.b16 %v2505, %v2497
    %v2906 = vpack.c.b16 %v2506, %v2498
    %v2907 = vpack.c.b16 %v2507, %v2499
    %v2908 = vpack.c.b16 %v2508, %v2500
    %v2909 = vpack.c.b16 %v2509, %v2501
    %v2910 = vpack.c.b16 %v2510, %v2502
    %v2911 = vpack.c.b16 %v2511, %v2503
    %v2912 = vpack.c.b16 %v2520, %v2512
    %v2913 = vpack.c.b16 %v2521, %v2513
    %v2914 = vpack.c.b16 %v2522, %v2514
    %v2915 = vpack.c.b16 %v2523, %v2515
    %v2916 = vpack.c.b16 %v2524, %v2516
    %v2917 = vpack.c.b16 %v2525, %v2517
    %v2918 = vpack.c.b16 %v2526, %v2518
    %v2919 = vpack.c.b16 %v2527, %v2519
    %v2920 = vpack.c.b16 %v2536, %v2528
    %v2921 = vpack.c.b16 %v2537, %v2529
    %v2922 = vpack.c.b16 %v2538, %v2530
    %v2923 = vpack.c.b16 %v2539, %v2531
    %v2924 = vpack.c.b16 %v2540, %v2532
    %v2925 = vpack.c.b16 %v2541, %v2533
    %v2926 = vpack.c.b16 %v2542, %v2534
    %v2927 = vpack.c.b16 %v2543, %v2535
    %v2928 = vpack.c.b16 %v2552, %v2544
    %v2929 = vpack.c.b16 %v2553, %v2545
    %v2930 = vpack.c.b16 %v2554, %v2546
    %v2931 = vpack.c.b16 %v2555, %v2547
    %v2932 = vpack.c.b16 %v2556, %v2548
    %v2933 = vpack.c.b16 %v2557, %v2549
    %v2934 = vpack.c.b16 %v2558, %v2550
    %v2935 = vpack.c.b16 %v2559, %v2551
    %v2936 = vpack.c.b16 %v2568, %v2560
    %v2937 = vpack.c.b16 %v2569, %v2561
    %v2938 = vpack.c.b16 %v2570, %v2562
    %v2939 = vpack.c.b16 %v2571, %v2563
    %v2940 = vpack.c.b16 %v2572, %v2564
    %v2941 = vpack.c.b16 %v2573, %v2565
    %v2942 = vpack.c.b16 %v2574, %v2566
    %v2943 = vpack.c.b16 %v2575, %v2567
    %v2944 = vpack.c.b16 %v2584, %v2576
    %v2945 = vpack.c.b16 %v2585, %v2577
    %v2946 = vpack.c.b16 %v2586, %v2578
    %v2947 = vpack.c.b16 %v2587, %v2579
    %v2948 = vpack.c.b16 %v2588, %v2580
    %v2949 = vpack.c.b16 %v2589, %v2581
    %v2950 = vpack.c.b16 %v2590, %v2582
    %v2951 = vpack.c.b16 %v2591, %v2583
    %v2952 = vpack.c.b16 %v2600, %v2592
    %v2953 = vpack.c.b16 %v2601, %v2593
    %v2954 = vpack.c.b16 %v2602, %v2594
    %v2955 = vpack.c.b16 %v2603, %v2595
    %v2956 = vpack.c.b16 %v2604, %v2596
    %v2957 = vpack.c.b16 %v2605, %v2597
    %v2958 = vpack.c.b16 %v2606, %v2598
    %v2959 = vpack.c.b16 %v2607, %v2599
    %v2960 = vpack.c.b16 %v2616, %v2608
    %v2961 = vpack.c.b16 %v2617, %v2609
    %v2962 = vpack.c.b16 %v2618, %v2610
    %v2963 = vpack.c.b16 %v2619, %v2611
    %v2964 = vpack.c.b16 %v2620, %v2612
    %v2965 = vpack.c.b16 %v2621, %v2613
    %v2966 = vpack.c.b16 %v2622, %v2614
    %v2967 = vpack.c.b16 %v2623, %v2615
    %v2968 = vpack.c.b16 %v2632, %v2624
    %v2969 = vpack.c.b16 %v2633, %v2625
    %v2970 = vpack.c.b16 %v2634, %v2626
    %v2971 = vpack.c.b16 %v2635, %v2627
    %v2972 = vpack.c.b16 %v2636, %v2628
    %v2973 = vpack.c.b16 %v2637, %v2629
    %v2974 = vpack.c.b16 %v2638, %v2630
    %v2975 = vpack.c.b16 %v2639, %v2631
    %v2976 = vpack.c.b16 %v2648, %v2640
    %v2977 = vpack.c.b16 %v2649, %v2641
    %v2978 = vpack.c.b16 %v2650, %v2642
    %v2979 = vpack.c.b16 %v2651, %v2643
    %v2980 = vpack.c.b16 %v2652, %v2644
    %v2981 = vpack.c.b16 %v2653, %v2645
    %v2982 = vpack.c.b16 %v2654, %v2646
    %v2983 = vpack.c.b16 %v2655, %v2647
    %v2984 = vpack.c.b16 %v2664, %v2656
    %v2985 = vpack.c.b16 %v2665, %v2657
    %v2986 = vpack.c.b16 %v2666, %v2658
    %v2987 = vpack.c.b16 %v2667, %v2659
    %v2988 = vpack.c.b16 %v2668, %v2660
    %v2989 = vpack.c.b16 %v2669, %v2661
    %v2990 = vpack.c.b16 %v2670, %v2662
    %v2991 = vpack.c.b16 %v2671, %v2663
    %v2992 = vpack.c.b16 %v2680, %v2672
    %v2993 = vpack.c.b16 %v2681, %v2673
    %v2994 = vpack.c.b16 %v2682, %v2674
    %v2995 = vpack.c.b16 %v2683, %v2675
    %v2996 = vpack.c.b16 %v2684, %v2676
    %v2997 = vpack.c.b16 %v2685, %v2677
    %v2998 = vpack.c.b16 %v2686, %v2678
    %v2999 = vpack.c.b16 %v2687, %v2679
    %v3000 = vpack.c.b16 %v2696, %v2688
    %v3001 = vpack.c.b16 %v2697, %v2689
    %v3002 = vpack.c.b16 %v2698, %v2690
    %v3003 = vpack.c.b16 %v2699, %v2691
    %v3004 = vpack.c.b16 %v2700, %v2692
    %v3005 = vpack.c.b16 %v2701, %v2693
    %v3006 = vpack.c.b16 %v2702, %v2694
    %v3007 = vpack.c.b16 %v2703, %v2695
    %v3008 = vpack.c.b16 %v2712, %v2704
    %v3009 = vpack.c.b16 %v2713, %v2705
    %v3010 = vpack.c.b16 %v2714, %v2706
    %v3011 = vpack.c.b16 %v2715, %v2707
    %v3012 = vpack.c.b16 %v2716, %v2708
    %v3013 = vpack.c.b16 %v2717, %v2709
    %v3014 = vpack.c.b16 %v2718, %v2710
    %v3015 = vpack.c.b16 %v2719, %v2711
    %v3016 = vpack.c.b16 %v2728, %v2720
    %v3017 = vpack.c.b16 %v2729, %v2721
    %v3018 = vpack.c.b16 %v2730, %v2722
    %v3019 = vpack.c.b16 %v2731, %v2723
    %v3020 = vpack.c.b16 %v2732, %v2724
    %v3021 = vpack.c.b16 %v2733, %v2725
    %v3022 = vpack.c.b16 %v2734, %v2726
    %v3023 = vpack.c.b16 %v2735, %v2727
    %v3024 = vpack.c.b16 %v2744, %v2736
    %v3025 = vpack.c.b16 %v2745, %v2737
    %v3026 = vpack.c.b16 %v2746, %v2738
    %v3027 = vpack.c.b16 %v2747, %v2739
    %v3028 = vpack.c.b16 %v2748, %v2740
    %v3029 = vpack.c.b16 %v2749, %v2741
    %v3030 = vpack.c.b16 %v2750, %v2742
    %v3031 = vpack.c.b16 %v2751, %v2743
    %v3032 = vpack.c.b16 %v2760, %v2752
    %v3033 = vpack.c.b16 %v2761, %v2753
    %v3034 = vpack.c.b16 %v2762, %v2754
    %v3035 = vpack.c.b16 %v2763, %v2755
    %v3036 = vpack.c.b16 %v2764, %v2756
    %v3037 = vpack.c.b16 %v2765, %v2757
    %v3038 = vpack.c.b16 %v2766, %v2758
    %v3039 = vpack.c.b16 %v2767, %v2759
    %v3040 = vpack.c.b16 %v2776, %v2768
    %v3041 = vpack.c.b16 %v2777, %v2769
    %v3042 = vpack.c.b16 %v2778, %v2770
    %v3043 = vpack.c.b16 %v2779, %v2771
    %v3044 = vpack.c.b16 %v2780, %v2772
    %v3045 = vpack.c.b16 %v2781, %v2773
    %v3046 = vpack.c.b16 %v2782, %v2774
    %v3047 = vpack.c.b16 %v2783, %v2775
    %v3048 = vpack.c.b16 %v2792, %v2784
    %v3049 = vpack.c.b16 %v2793, %v2785
    %v3050 = vpack.c.b16 %v2794, %v2786
    %v3051 = vpack.c.b16 %v2795, %v2787
    %v3052 = vpack.c.b16 %v2796, %v2788
    %v3053 = vpack.c.b16 %v2797, %v2789
    %v3054 = vpack.c.b16 %v2798, %v2790
    %v3055 = vpack.c.b16 %v2799, %v2791
    %3312 = vmatpush.bf16.msra.mxu0 %v2856
    %3313 = vmatpush.bf16.msra.mxu0 %v2848
    %3314 = vmatpush.bf16.msra.mxu0 %v2840
    %3315 = vmatpush.bf16.msra.mxu0 %v2832
    %3316 = vmatpush.bf16.msra.mxu0 %v2824
    %3317 = vmatpush.bf16.msra.mxu0 %v2816
    %3318 = vmatpush.bf16.msra.mxu0 %v2808
    %3319 = vmatpush.bf16.msra.mxu0 %v2800
    %3320 = vmatmul.bf16.gmra.mxu0 %v1772
    %v3321 = vpop.f32.mrf.mxu0
    %v3322 = vadd.f32 0.0, %v3321
    %v3323 = vpop.f32.mrf.mxu0
    %3324 = vdwg.mxu0
    %3325 = vmatpush.bf16.msra.mxu0 %v2920
    %3326 = vmatpush.bf16.msra.mxu0 %v2912
    %3327 = vmatpush.bf16.msra.mxu0 %v2904
    %3328 = vmatpush.bf16.msra.mxu0 %v2896
    %3329 = vmatpush.bf16.msra.mxu0 %v2888
    %3330 = vmatpush.bf16.msra.mxu0 %v2880
    %3331 = vmatpush.bf16.msra.mxu0 %v2872
    %3332 = vmatpush.bf16.msra.mxu0 %v2864
    %3333 = vmatmul.bf16.gmra.mxu0 %v1773
    %v3334 = vpop.f32.mrf.mxu0
    %v3335 = vadd.f32 %v3322, %v3334
    %v3336 = vpop.f32.mrf.mxu0
    %3337 = vdwg.mxu0
    %3338 = vmatpush.bf16.msra.mxu0 %v2984
    %3339 = vmatpush.bf16.msra.mxu0 %v2976
    %3340 = vmatpush.bf16.msra.mxu0 %v2968
    %3341 = vmatpush.bf16.msra.mxu0 %v2960
    %3342 = vmatpush.bf16.msra.mxu0 %v2952
    %3343 = vmatpush.bf16.msra.mxu0 %v2944
    %3344 = vmatpush.bf16.msra.mxu0 %v2936
    %3345 = vmatpush.bf16.msra.mxu0 %v2928
    %3346 = vmatmul.bf16.gmra.mxu0 %v1774
    %v3347 = vpop.f32.mrf.mxu0
    %v3348 = vadd.f32 %v3335, %v3347
    %v3349 = vpop.f32.mrf.mxu0
    %3350 = vdwg.mxu0
    %3351 = vmatpush.bf16.msra.mxu0 %v3048
    %3352 = vmatpush.bf16.msra.mxu0 %v3040
    %3353 = vmatpush.bf16.msra.mxu0 %v3032
    %3354 = vmatpush.bf16.msra.mxu0 %v3024
    %3355 = vmatpush.bf16.msra.mxu0 %v3016
    %3356 = vmatpush.bf16.msra.mxu0 %v3008
    %3357 = vmatpush.bf16.msra.mxu0 %v3000
    %3358 = vmatpush.bf16.msra.mxu0 %v2992
    %3359 = vmatmul.bf16.gmra.mxu0 %v1775
    %v3360 = vpop.f32.mrf.mxu0
    %v3361 = vadd.f32 %v3348, %v3360
    %v3362 = vpop.f32.mrf.mxu0
    %3363 = vdwg.mxu0
    %3364 = vmatpush.bf16.msra.mxu0 %v2857
    %3365 = vmatpush.bf16.msra.mxu0 %v2849
    %3366 = vmatpush.bf16.msra.mxu0 %v2841
    %3367 = vmatpush.bf16.msra.mxu0 %v2833
    %3368 = vmatpush.bf16.msra.mxu0 %v2825
    %3369 = vmatpush.bf16.msra.mxu0 %v2817
    %3370 = vmatpush.bf16.msra.mxu0 %v2809
    %3371 = vmatpush.bf16.msra.mxu0 %v2801
    %3372 = vmatmul.bf16.gmra.mxu0 %v1772
    %v3373 = vpop.f32.mrf.mxu0
    %v3374 = vadd.f32 0.0, %v3373
    %v3375 = vpop.f32.mrf.mxu0
    %3376 = vdwg.mxu0
    %3377 = vmatpush.bf16.msra.mxu0 %v2921
    %3378 = vmatpush.bf16.msra.mxu0 %v2913
    %3379 = vmatpush.bf16.msra.mxu0 %v2905
    %3380 = vmatpush.bf16.msra.mxu0 %v2897
    %3381 = vmatpush.bf16.msra.mxu0 %v2889
    %3382 = vmatpush.bf16.msra.mxu0 %v2881
    %3383 = vmatpush.bf16.msra.mxu0 %v2873
    %3384 = vmatpush.bf16.msra.mxu0 %v2865
    %3385 = vmatmul.bf16.gmra.mxu0 %v1773
    %v3386 = vpop.f32.mrf.mxu0
    %v3387 = vadd.f32 %v3374, %v3386
    %v3388 = vpop.f32.mrf.mxu0
    %3389 = vdwg.mxu0
    %3390 = vmatpush.bf16.msra.mxu0 %v2985
    %3391 = vmatpush.bf16.msra.mxu0 %v2977
    %3392 = vmatpush.bf16.msra.mxu0 %v2969
    %3393 = vmatpush.bf16.msra.mxu0 %v2961
    %3394 = vmatpush.bf16.msra.mxu0 %v2953
    %3395 = vmatpush.bf16.msra.mxu0 %v2945
    %3396 = vmatpush.bf16.msra.mxu0 %v2937
    %3397 = vmatpush.bf16.msra.mxu0 %v2929
    %3398 = vmatmul.bf16.gmra.mxu0 %v1774
    %v3399 = vpop.f32.mrf.mxu0
    %v3400 = vadd.f32 %v3387, %v3399
    %v3401 = vpop.f32.mrf.mxu0
    %3402 = vdwg.mxu0
    %3403 = vmatpush.bf16.msra.mxu0 %v3049
    %3404 = vmatpush.bf16.msra.mxu0 %v3041
    %3405 = vmatpush.bf16.msra.mxu0 %v3033
    %3406 = vmatpush.bf16.msra.mxu0 %v3025
    %3407 = vmatpush.bf16.msra.mxu0 %v3017
    %3408 = vmatpush.bf16.msra.mxu0 %v3009
    %3409 = vmatpush.bf16.msra.mxu0 %v3001
    %3410 = vmatpush.bf16.msra.mxu0 %v2993
    %3411 = vmatmul.bf16.gmra.mxu0 %v1775
    %v3412 = vpop.f32.mrf.mxu0
    %v3413 = vadd.f32 %v3400, %v3412
    %v3414 = vpop.f32.mrf.mxu0
    %3415 = vdwg.mxu0
    %3416 = vmatpush.bf16.msra.mxu0 %v2858
    %3417 = vmatpush.bf16.msra.mxu0 %v2850
    %3418 = vmatpush.bf16.msra.mxu0 %v2842
    %3419 = vmatpush.bf16.msra.mxu0 %v2834
    %3420 = vmatpush.bf16.msra.mxu0 %v2826
    %3421 = vmatpush.bf16.msra.mxu0 %v2818
    %3422 = vmatpush.bf16.msra.mxu0 %v2810
    %3423 = vmatpush.bf16.msra.mxu0 %v2802
    %3424 = vmatmul.bf16.gmra.mxu0 %v1772
    %v3425 = vpop.f32.mrf.mxu0
    %v3426 = vadd.f32 0.0, %v3425
    %v3427 = vpop.f32.mrf.mxu0
    %3428 = vdwg.mxu0
    %3429 = vmatpush.bf16.msra.mxu0 %v2922
    %3430 = vmatpush.bf16.msra.mxu0 %v2914
    %3431 = vmatpush.bf16.msra.mxu0 %v2906
    %3432 = vmatpush.bf16.msra.mxu0 %v2898
    %3433 = vmatpush.bf16.msra.mxu0 %v2890
    %3434 = vmatpush.bf16.msra.mxu0 %v2882
    %3435 = vmatpush.bf16.msra.mxu0 %v2874
    %3436 = vmatpush.bf16.msra.mxu0 %v2866
    %3437 = vmatmul.bf16.gmra.mxu0 %v1773
    %v3438 = vpop.f32.mrf.mxu0
    %v3439 = vadd.f32 %v3426, %v3438
    %v3440 = vpop.f32.mrf.mxu0
    %3441 = vdwg.mxu0
    %3442 = vmatpush.bf16.msra.mxu0 %v2986
    %3443 = vmatpush.bf16.msra.mxu0 %v2978
    %3444 = vmatpush.bf16.msra.mxu0 %v2970
    %3445 = vmatpush.bf16.msra.mxu0 %v2962
    %3446 = vmatpush.bf16.msra.mxu0 %v2954
    %3447 = vmatpush.bf16.msra.mxu0 %v2946
    %3448 = vmatpush.bf16.msra.mxu0 %v2938
    %3449 = vmatpush.bf16.msra.mxu0 %v2930
    %3450 = vmatmul.bf16.gmra.mxu0 %v1774
    %v3451 = vpop.f32.mrf.mxu0
    %v3452 = vadd.f32 %v3439, %v3451
    %v3453 = vpop.f32.mrf.mxu0
    %3454 = vdwg.mxu0
    %3455 = vmatpush.bf16.msra.mxu0 %v3050
    %3456 = vmatpush.bf16.msra.mxu0 %v3042
    %3457 = vmatpush.bf16.msra.mxu0 %v3034
    %3458 = vmatpush.bf16.msra.mxu0 %v3026
    %3459 = vmatpush.bf16.msra.mxu0 %v3018
    %3460 = vmatpush.bf16.msra.mxu0 %v3010
    %3461 = vmatpush.bf16.msra.mxu0 %v3002
    %3462 = vmatpush.bf16.msra.mxu0 %v2994
    %3463 = vmatmul.bf16.gmra.mxu0 %v1775
    %v3464 = vpop.f32.mrf.mxu0
    %v3465 = vadd.f32 %v3452, %v3464
    %v3466 = vpop.f32.mrf.mxu0
    %3467 = vdwg.mxu0
    %3468 = vmatpush.bf16.msra.mxu0 %v2859
    %3469 = vmatpush.bf16.msra.mxu0 %v2851
    %3470 = vmatpush.bf16.msra.mxu0 %v2843
    %3471 = vmatpush.bf16.msra.mxu0 %v2835
    %3472 = vmatpush.bf16.msra.mxu0 %v2827
    %3473 = vmatpush.bf16.msra.mxu0 %v2819
    %3474 = vmatpush.bf16.msra.mxu0 %v2811
    %3475 = vmatpush.bf16.msra.mxu0 %v2803
    %3476 = vmatmul.bf16.gmra.mxu0 %v1772
    %v3477 = vpop.f32.mrf.mxu0
    %v3478 = vadd.f32 0.0, %v3477
    %v3479 = vpop.f32.mrf.mxu0
    %3480 = vdwg.mxu0
    %3481 = vmatpush.bf16.msra.mxu0 %v2923
    %3482 = vmatpush.bf16.msra.mxu0 %v2915
    %3483 = vmatpush.bf16.msra.mxu0 %v2907
    %3484 = vmatpush.bf16.msra.mxu0 %v2899
    %3485 = vmatpush.bf16.msra.mxu0 %v2891
    %3486 = vmatpush.bf16.msra.mxu0 %v2883
    %3487 = vmatpush.bf16.msra.mxu0 %v2875
    %3488 = vmatpush.bf16.msra.mxu0 %v2867
    %3489 = vmatmul.bf16.gmra.mxu0 %v1773
    %v3490 = vpop.f32.mrf.mxu0
    %v3491 = vadd.f32 %v3478, %v3490
    %v3492 = vpop.f32.mrf.mxu0
    %3493 = vdwg.mxu0
    %3494 = vmatpush.bf16.msra.mxu0 %v2987
    %3495 = vmatpush.bf16.msra.mxu0 %v2979
    %3496 = vmatpush.bf16.msra.mxu0 %v2971
    %3497 = vmatpush.bf16.msra.mxu0 %v2963
    %3498 = vmatpush.bf16.msra.mxu0 %v2955
    %3499 = vmatpush.bf16.msra.mxu0 %v2947
    %3500 = vmatpush.bf16.msra.mxu0 %v2939
    %3501 = vmatpush.bf16.msra.mxu0 %v2931
    %3502 = vmatmul.bf16.gmra.mxu0 %v1774
    %v3503 = vpop.f32.mrf.mxu0
    %v3504 = vadd.f32 %v3491, %v3503
    %v3505 = vpop.f32.mrf.mxu0
    %3506 = vdwg.mxu0
    %3507 = vmatpush.bf16.msra.mxu0 %v3051
    %3508 = vmatpush.bf16.msra.mxu0 %v3043
    %3509 = vmatpush.bf16.msra.mxu0 %v3035
    %3510 = vmatpush.bf16.msra.mxu0 %v3027
    %3511 = vmatpush.bf16.msra.mxu0 %v3019
    %3512 = vmatpush.bf16.msra.mxu0 %v3011
    %3513 = vmatpush.bf16.msra.mxu0 %v3003
    %3514 = vmatpush.bf16.msra.mxu0 %v2995
    %3515 = vmatmul.bf16.gmra.mxu0 %v1775
    %v3516 = vpop.f32.mrf.mxu0
    %v3517 = vadd.f32 %v3504, %v3516
    %v3518 = vpop.f32.mrf.mxu0
    %3519 = vdwg.mxu0
    %3520 = vmatpush.bf16.msra.mxu0 %v2860
    %3521 = vmatpush.bf16.msra.mxu0 %v2852
    %3522 = vmatpush.bf16.msra.mxu0 %v2844
    %3523 = vmatpush.bf16.msra.mxu0 %v2836
    %3524 = vmatpush.bf16.msra.mxu0 %v2828
    %3525 = vmatpush.bf16.msra.mxu0 %v2820
    %3526 = vmatpush.bf16.msra.mxu0 %v2812
    %3527 = vmatpush.bf16.msra.mxu0 %v2804
    %3528 = vmatmul.bf16.gmra.mxu0 %v1772
    %v3529 = vpop.f32.mrf.mxu0
    %v3530 = vadd.f32 0.0, %v3529
    %v3531 = vpop.f32.mrf.mxu0
    %3532 = vdwg.mxu0
    %3533 = vmatpush.bf16.msra.mxu0 %v2924
    %3534 = vmatpush.bf16.msra.mxu0 %v2916
    %3535 = vmatpush.bf16.msra.mxu0 %v2908
    %3536 = vmatpush.bf16.msra.mxu0 %v2900
    %3537 = vmatpush.bf16.msra.mxu0 %v2892
    %3538 = vmatpush.bf16.msra.mxu0 %v2884
    %3539 = vmatpush.bf16.msra.mxu0 %v2876
    %3540 = vmatpush.bf16.msra.mxu0 %v2868
    %3541 = vmatmul.bf16.gmra.mxu0 %v1773
    %v3542 = vpop.f32.mrf.mxu0
    %v3543 = vadd.f32 %v3530, %v3542
    %v3544 = vpop.f32.mrf.mxu0
    %3545 = vdwg.mxu0
    %3546 = vmatpush.bf16.msra.mxu0 %v2988
    %3547 = vmatpush.bf16.msra.mxu0 %v2980
    %3548 = vmatpush.bf16.msra.mxu0 %v2972
    %3549 = vmatpush.bf16.msra.mxu0 %v2964
    %3550 = vmatpush.bf16.msra.mxu0 %v2956
    %3551 = vmatpush.bf16.msra.mxu0 %v2948
    %3552 = vmatpush.bf16.msra.mxu0 %v2940
    %3553 = vmatpush.bf16.msra.mxu0 %v2932
    %3554 = vmatmul.bf16.gmra.mxu0 %v1774
    %v3555 = vpop.f32.mrf.mxu0
    %v3556 = vadd.f32 %v3543, %v3555
    %v3557 = vpop.f32.mrf.mxu0
    %3558 = vdwg.mxu0
    %3559 = vmatpush.bf16.msra.mxu0 %v3052
    %3560 = vmatpush.bf16.msra.mxu0 %v3044
    %3561 = vmatpush.bf16.msra.mxu0 %v3036
    %3562 = vmatpush.bf16.msra.mxu0 %v3028
    %3563 = vmatpush.bf16.msra.mxu0 %v3020
    %3564 = vmatpush.bf16.msra.mxu0 %v3012
    %3565 = vmatpush.bf16.msra.mxu0 %v3004
    %3566 = vmatpush.bf16.msra.mxu0 %v2996
    %3567 = vmatmul.bf16.gmra.mxu0 %v1775
    %v3568 = vpop.f32.mrf.mxu0
    %v3569 = vadd.f32 %v3556, %v3568
    %v3570 = vpop.f32.mrf.mxu0
    %3571 = vdwg.mxu0
    %3572 = vmatpush.bf16.msra.mxu0 %v2861
    %3573 = vmatpush.bf16.msra.mxu0 %v2853
    %3574 = vmatpush.bf16.msra.mxu0 %v2845
    %3575 = vmatpush.bf16.msra.mxu0 %v2837
    %3576 = vmatpush.bf16.msra.mxu0 %v2829
    %3577 = vmatpush.bf16.msra.mxu0 %v2821
    %3578 = vmatpush.bf16.msra.mxu0 %v2813
    %3579 = vmatpush.bf16.msra.mxu0 %v2805
    %3580 = vmatmul.bf16.gmra.mxu0 %v1772
    %v3581 = vpop.f32.mrf.mxu0
    %v3582 = vadd.f32 0.0, %v3581
    %v3583 = vpop.f32.mrf.mxu0
    %3584 = vdwg.mxu0
    %3585 = vmatpush.bf16.msra.mxu0 %v2925
    %3586 = vmatpush.bf16.msra.mxu0 %v2917
    %3587 = vmatpush.bf16.msra.mxu0 %v2909
    %3588 = vmatpush.bf16.msra.mxu0 %v2901
    %3589 = vmatpush.bf16.msra.mxu0 %v2893
    %3590 = vmatpush.bf16.msra.mxu0 %v2885
    %3591 = vmatpush.bf16.msra.mxu0 %v2877
    %3592 = vmatpush.bf16.msra.mxu0 %v2869
    %3593 = vmatmul.bf16.gmra.mxu0 %v1773
    %v3594 = vpop.f32.mrf.mxu0
    %v3595 = vadd.f32 %v3582, %v3594
    %v3596 = vpop.f32.mrf.mxu0
    %3597 = vdwg.mxu0
    %3598 = vmatpush.bf16.msra.mxu0 %v2989
    %3599 = vmatpush.bf16.msra.mxu0 %v2981
    %3600 = vmatpush.bf16.msra.mxu0 %v2973
    %3601 = vmatpush.bf16.msra.mxu0 %v2965
    %3602 = vmatpush.bf16.msra.mxu0 %v2957
    %3603 = vmatpush.bf16.msra.mxu0 %v2949
    %3604 = vmatpush.bf16.msra.mxu0 %v2941
    %3605 = vmatpush.bf16.msra.mxu0 %v2933
    %3606 = vmatmul.bf16.gmra.mxu0 %v1774
    %v3607 = vpop.f32.mrf.mxu0
    %v3608 = vadd.f32 %v3595, %v3607
    %v3609 = vpop.f32.mrf.mxu0
    %3610 = vdwg.mxu0
    %3611 = vmatpush.bf16.msra.mxu0 %v3053
    %3612 = vmatpush.bf16.msra.mxu0 %v3045
    %3613 = vmatpush.bf16.msra.mxu0 %v3037
    %3614 = vmatpush.bf16.msra.mxu0 %v3029
    %3615 = vmatpush.bf16.msra.mxu0 %v3021
    %3616 = vmatpush.bf16.msra.mxu0 %v3013
    %3617 = vmatpush.bf16.msra.mxu0 %v3005
    %3618 = vmatpush.bf16.msra.mxu0 %v2997
    %3619 = vmatmul.bf16.gmra.mxu0 %v1775
    %v3620 = vpop.f32.mrf.mxu0
    %v3621 = vadd.f32 %v3608, %v3620
    %v3622 = vpop.f32.mrf.mxu0
    %3623 = vdwg.mxu0
    %3624 = vmatpush.bf16.msra.mxu0 %v2862
    %3625 = vmatpush.bf16.msra.mxu0 %v2854
    %3626 = vmatpush.bf16.msra.mxu0 %v2846
    %3627 = vmatpush.bf16.msra.mxu0 %v2838
    %3628 = vmatpush.bf16.msra.mxu0 %v2830
    %3629 = vmatpush.bf16.msra.mxu0 %v2822
    %3630 = vmatpush.bf16.msra.mxu0 %v2814
    %3631 = vmatpush.bf16.msra.mxu0 %v2806
    %3632 = vmatmul.bf16.gmra.mxu0 %v1772
    %v3633 = vpop.f32.mrf.mxu0
    %v3634 = vadd.f32 0.0, %v3633
    %v3635 = vpop.f32.mrf.mxu0
    %3636 = vdwg.mxu0
    %3637 = vmatpush.bf16.msra.mxu0 %v2926
    %3638 = vmatpush.bf16.msra.mxu0 %v2918
    %3639 = vmatpush.bf16.msra.mxu0 %v2910
    %3640 = vmatpush.bf16.msra.mxu0 %v2902
    %3641 = vmatpush.bf16.msra.mxu0 %v2894
    %3642 = vmatpush.bf16.msra.mxu0 %v2886
    %3643 = vmatpush.bf16.msra.mxu0 %v2878
    %3644 = vmatpush.bf16.msra.mxu0 %v2870
    %3645 = vmatmul.bf16.gmra.mxu0 %v1773
    %v3646 = vpop.f32.mrf.mxu0
    %v3647 = vadd.f32 %v3634, %v3646
    %v3648 = vpop.f32.mrf.mxu0
    %3649 = vdwg.mxu0
    %3650 = vmatpush.bf16.msra.mxu0 %v2990
    %3651 = vmatpush.bf16.msra.mxu0 %v2982
    %3652 = vmatpush.bf16.msra.mxu0 %v2974
    %3653 = vmatpush.bf16.msra.mxu0 %v2966
    %3654 = vmatpush.bf16.msra.mxu0 %v2958
    %3655 = vmatpush.bf16.msra.mxu0 %v2950
    %3656 = vmatpush.bf16.msra.mxu0 %v2942
    %3657 = vmatpush.bf16.msra.mxu0 %v2934
    %3658 = vmatmul.bf16.gmra.mxu0 %v1774
    %v3659 = vpop.f32.mrf.mxu0
    %v3660 = vadd.f32 %v3647, %v3659
    %v3661 = vpop.f32.mrf.mxu0
    %3662 = vdwg.mxu0
    %3663 = vmatpush.bf16.msra.mxu0 %v3054
    %3664 = vmatpush.bf16.msra.mxu0 %v3046
    %3665 = vmatpush.bf16.msra.mxu0 %v3038
    %3666 = vmatpush.bf16.msra.mxu0 %v3030
    %3667 = vmatpush.bf16.msra.mxu0 %v3022
    %3668 = vmatpush.bf16.msra.mxu0 %v3014
    %3669 = vmatpush.bf16.msra.mxu0 %v3006
    %3670 = vmatpush.bf16.msra.mxu0 %v2998
    %3671 = vmatmul.bf16.gmra.mxu0 %v1775
    %v3672 = vpop.f32.mrf.mxu0
    %v3673 = vadd.f32 %v3660, %v3672
    %v3674 = vpop.f32.mrf.mxu0
    %3675 = vdwg.mxu0
    %3676 = vmatpush.bf16.msra.mxu0 %v2863
    %3677 = vmatpush.bf16.msra.mxu0 %v2855
    %3678 = vmatpush.bf16.msra.mxu0 %v2847
    %3679 = vmatpush.bf16.msra.mxu0 %v2839
    %3680 = vmatpush.bf16.msra.mxu0 %v2831
    %3681 = vmatpush.bf16.msra.mxu0 %v2823
    %3682 = vmatpush.bf16.msra.mxu0 %v2815
    %3683 = vmatpush.bf16.msra.mxu0 %v2807
    %3684 = vmatmul.bf16.gmra.mxu0 %v1772
    %v3685 = vpop.f32.mrf.mxu0
    %v3686 = vadd.f32 0.0, %v3685
    %v3687 = vpop.f32.mrf.mxu0
    %3688 = vdwg.mxu0
    %3689 = vmatpush.bf16.msra.mxu0 %v2927
    %3690 = vmatpush.bf16.msra.mxu0 %v2919
    %3691 = vmatpush.bf16.msra.mxu0 %v2911
    %3692 = vmatpush.bf16.msra.mxu0 %v2903
    %3693 = vmatpush.bf16.msra.mxu0 %v2895
    %3694 = vmatpush.bf16.msra.mxu0 %v2887
    %3695 = vmatpush.bf16.msra.mxu0 %v2879
    %3696 = vmatpush.bf16.msra.mxu0 %v2871
    %3697 = vmatmul.bf16.gmra.mxu0 %v1773
    %v3698 = vpop.f32.mrf.mxu0
    %v3699 = vadd.f32 %v3686, %v3698
    %v3700 = vpop.f32.mrf.mxu0
    %3701 = vdwg.mxu0
    %3702 = vmatpush.bf16.msra.mxu0 %v2991
    %3703 = vmatpush.bf16.msra.mxu0 %v2983
    %3704 = vmatpush.bf16.msra.mxu0 %v2975
    %3705 = vmatpush.bf16.msra.mxu0 %v2967
    %3706 = vmatpush.bf16.msra.mxu0 %v2959
    %3707 = vmatpush.bf16.msra.mxu0 %v2951
    %3708 = vmatpush.bf16.msra.mxu0 %v2943
    %3709 = vmatpush.bf16.msra.mxu0 %v2935
    %3710 = vmatmul.bf16.gmra.mxu0 %v1774
    %v3711 = vpop.f32.mrf.mxu0
    %v3712 = vadd.f32 %v3699, %v3711
    %v3713 = vpop.f32.mrf.mxu0
    %3714 = vdwg.mxu0
    %3715 = vmatpush.bf16.msra.mxu0 %v3055
    %3716 = vmatpush.bf16.msra.mxu0 %v3047
    %3717 = vmatpush.bf16.msra.mxu0 %v3039
    %3718 = vmatpush.bf16.msra.mxu0 %v3031
    %3719 = vmatpush.bf16.msra.mxu0 %v3023
    %3720 = vmatpush.bf16.msra.mxu0 %v3015
    %3721 = vmatpush.bf16.msra.mxu0 %v3007
    %3722 = vmatpush.bf16.msra.mxu0 %v2999
    %3723 = vmatmul.bf16.gmra.mxu0 %v1775
    %v3724 = vpop.f32.mrf.mxu0
    %v3725 = vadd.f32 %v3712, %v3724
    %v3726 = vpop.f32.mrf.mxu0
    %3727 = vdwg.mxu0
    %v3728 = vld [vmem:[#allocation23] sm:$0xff]
    %v3729 = vld [vmem:[#allocation25] sm:$0xff]
    %v3730 = vrot.slane %v3361, 4
    %v3731 = vadd.f32 %v3361, %v3730
    %v3732 = vrot.slane %v3731, 2
    %v3733 = vadd.f32 %v3731, %v3732
    %v3734 = vrot.slane %v3733, 1
    %v3735 = vadd.f32 %v3733, %v3734
    %v3736 = vrot.slane %v3413, 4
    %v3737 = vadd.f32 %v3413, %v3736
    %v3738 = vrot.slane %v3737, 2
    %v3739 = vadd.f32 %v3737, %v3738
    %v3740 = vrot.slane %v3739, 1
    %v3741 = vadd.f32 %v3739, %v3740
    %v3742 = vrot.slane %v3465, 4
    %v3743 = vadd.f32 %v3465, %v3742
    %v3744 = vrot.slane %v3743, 2
    %v3745 = vadd.f32 %v3743, %v3744
    %v3746 = vrot.slane %v3745, 1
    %v3747 = vadd.f32 %v3745, %v3746
    %v3748 = vrot.slane %v3517, 4
    %v3749 = vadd.f32 %v3517, %v3748
    %v3750 = vrot.slane %v3749, 2
    %v3751 = vadd.f32 %v3749, %v3750
    %v3752 = vrot.slane %v3751, 1
    %v3753 = vadd.f32 %v3751, %v3752
    %v3754 = vrot.slane %v3569, 4
    %v3755 = vadd.f32 %v3569, %v3754
    %v3756 = vrot.slane %v3755, 2
    %v3757 = vadd.f32 %v3755, %v3756
    %v3758 = vrot.slane %v3757, 1
    %v3759 = vadd.f32 %v3757, %v3758
    %v3760 = vrot.slane %v3621, 4
    %v3761 = vadd.f32 %v3621, %v3760
    %v3762 = vrot.slane %v3761, 2
    %v3763 = vadd.f32 %v3761, %v3762
    %v3764 = vrot.slane %v3763, 1
    %v3765 = vadd.f32 %v3763, %v3764
    %v3766 = vrot.slane %v3673, 4
    %v3767 = vadd.f32 %v3673, %v3766
    %v3768 = vrot.slane %v3767, 2
    %v3769 = vadd.f32 %v3767, %v3768
    %v3770 = vrot.slane %v3769, 1
    %v3771 = vadd.f32 %v3769, %v3770
    %v3772 = vrot.slane %v3725, 4
    %v3773 = vadd.f32 %v3725, %v3772
    %v3774 = vrot.slane %v3773, 2
    %v3775 = vadd.f32 %v3773, %v3774
    %v3776 = vrot.slane %v3775, 1
    %v3777 = vadd.f32 %v3775, %v3776
    %v3778 = vmul.f32 %v3735, 0.125
    %v3779 = vmul.f32 %v3741, 0.125
    %v3780 = vmul.f32 %v3747, 0.125
    %v3781 = vmul.f32 %v3753, 0.125
    %v3782 = vmul.f32 %v3759, 0.125
    %v3783 = vmul.f32 %v3765, 0.125
    %v3784 = vmul.f32 %v3771, 0.125
    %v3785 = vmul.f32 %v3777, 0.125
    %v3786 = vmul.f32 %v3361, %v3361
    %v3787 = vmul.f32 %v3413, %v3413
    %v3788 = vmul.f32 %v3465, %v3465
    %v3789 = vmul.f32 %v3517, %v3517
    %v3790 = vmul.f32 %v3569, %v3569
    %v3791 = vmul.f32 %v3621, %v3621
    %v3792 = vmul.f32 %v3673, %v3673
    %v3793 = vmul.f32 %v3725, %v3725
    %v3794 = vrot.slane %v3786, 4
    %v3795 = vadd.f32 %v3786, %v3794
    %v3796 = vrot.slane %v3795, 2
    %v3797 = vadd.f32 %v3795, %v3796
    %v3798 = vrot.slane %v3797, 1
    %v3799 = vadd.f32 %v3797, %v3798
    %v3800 = vrot.slane %v3787, 4
    %v3801 = vadd.f32 %v3787, %v3800
    %v3802 = vrot.slane %v3801, 2
    %v3803 = vadd.f32 %v3801, %v3802
    %v3804 = vrot.slane %v3803, 1
    %v3805 = vadd.f32 %v3803, %v3804
    %v3806 = vrot.slane %v3788, 4
    %v3807 = vadd.f32 %v3788, %v3806
    %v3808 = vrot.slane %v3807, 2
    %v3809 = vadd.f32 %v3807, %v3808
    %v3810 = vrot.slane %v3809, 1
    %v3811 = vadd.f32 %v3809, %v3810
    %v3812 = vrot.slane %v3789, 4
    %v3813 = vadd.f32 %v3789, %v3812
    %v3814 = vrot.slane %v3813, 2
    %v3815 = vadd.f32 %v3813, %v3814
    %v3816 = vrot.slane %v3815, 1
    %v3817 = vadd.f32 %v3815, %v3816
    %v3818 = vrot.slane %v3790, 4
    %v3819 = vadd.f32 %v3790, %v3818
    %v3820 = vrot.slane %v3819, 2
    %v3821 = vadd.f32 %v3819, %v3820
    %v3822 = vrot.slane %v3821, 1
    %v3823 = vadd.f32 %v3821, %v3822
    %v3824 = vrot.slane %v3791, 4
    %v3825 = vadd.f32 %v3791, %v3824
    %v3826 = vrot.slane %v3825, 2
    %v3827 = vadd.f32 %v3825, %v3826
    %v3828 = vrot.slane %v3827, 1
    %v3829 = vadd.f32 %v3827, %v3828
    %v3830 = vrot.slane %v3792, 4
    %v3831 = vadd.f32 %v3792, %v3830
    %v3832 = vrot.slane %v3831, 2
    %v3833 = vadd.f32 %v3831, %v3832
    %v3834 = vrot.slane %v3833, 1
    %v3835 = vadd.f32 %v3833, %v3834
    %v3836 = vrot.slane %v3793, 4
    %v3837 = vadd.f32 %v3793, %v3836
    %v3838 = vrot.slane %v3837, 2
    %v3839 = vadd.f32 %v3837, %v3838
    %v3840 = vrot.slane %v3839, 1
    %v3841 = vadd.f32 %v3839, %v3840
    %v3842 = vmul.f32 %v3799, 0.125
    %v3843 = vmul.f32 %v3805, 0.125
    %v3844 = vmul.f32 %v3811, 0.125
    %v3845 = vmul.f32 %v3817, 0.125
    %v3846 = vmul.f32 %v3823, 0.125
    %v3847 = vmul.f32 %v3829, 0.125
    %v3848 = vmul.f32 %v3835, 0.125
    %v3849 = vmul.f32 %v3841, 0.125
    %v3850 = vmul.f32 %v3778, %v3778
    %v3851 = vmul.f32 %v3779, %v3779
    %v3852 = vmul.f32 %v3780, %v3780
    %v3853 = vmul.f32 %v3781, %v3781
    %v3854 = vmul.f32 %v3782, %v3782
    %v3855 = vmul.f32 %v3783, %v3783
    %v3856 = vmul.f32 %v3784, %v3784
    %v3857 = vmul.f32 %v3785, %v3785
    %v3858 = vsub.f32 %v3842, %v3850
    %v3859 = vsub.f32 %v3843, %v3851
    %v3860 = vsub.f32 %v3844, %v3852
    %v3861 = vsub.f32 %v3845, %v3853
    %v3862 = vsub.f32 %v3846, %v3854
    %v3863 = vsub.f32 %v3847, %v3855
    %v3864 = vsub.f32 %v3848, %v3856
    %v3865 = vsub.f32 %v3849, %v3857
    %v3866 = vadd.f32 %v3858, 1e-05
    %v3867 = vadd.f32 %v3859, 1e-05
    %v3868 = vadd.f32 %v3860, 1e-05
    %v3869 = vadd.f32 %v3861, 1e-05
    %v3870 = vadd.f32 %v3862, 1e-05
    %v3871 = vadd.f32 %v3863, 1e-05
    %v3872 = vadd.f32 %v3864, 1e-05
    %v3873 = vadd.f32 %v3865, 1e-05
    %v3874 = vrsqrt.pop %v3866
    %v3875 = vmul.f32 %v3874, %v3866
    %v3876 = vmul.f32 %v3875, %v3874
    %v3877 = vmul.f32 0.5, %v3876
    %v3878 = vsub.f32 1.5, %v3877
    %v3879 = vmul.f32 %v3874, %v3878
    %vm3880 = vweird.f32 %v3866
    %vm3881 = vweird.f32 %v3874
    %vm3882 = vmor %vm3880, %vm3881
    %v3883 = vsel %vm3882, %v3874, %v3879
    %v3884 = vrsqrt.pop %v3867
    %v3885 = vmul.f32 %v3884, %v3867
    %v3886 = vmul.f32 %v3885, %v3884
    %v3887 = vmul.f32 0.5, %v3886
    %v3888 = vsub.f32 1.5, %v3887
    %v3889 = vmul.f32 %v3884, %v3888
    %vm3890 = vweird.f32 %v3867
    %vm3891 = vweird.f32 %v3884
    %vm3892 = vmor %vm3890, %vm3891
    %v3893 = vsel %vm3892, %v3884, %v3889
    %v3894 = vrsqrt.pop %v3868
    %v3895 = vmul.f32 %v3894, %v3868
    %v3896 = vmul.f32 %v3895, %v3894
    %v3897 = vmul.f32 0.5, %v3896
    %v3898 = vsub.f32 1.5, %v3897
    %v3899 = vmul.f32 %v3894, %v3898
    %vm3900 = vweird.f32 %v3868
    %vm3901 = vweird.f32 %v3894
    %vm3902 = vmor %vm3900, %vm3901
    %v3903 = vsel %vm3902, %v3894, %v3899
    %v3904 = vrsqrt.pop %v3869
    %v3905 = vmul.f32 %v3904, %v3869
    %v3906 = vmul.f32 %v3905, %v3904
    %v3907 = vmul.f32 0.5, %v3906
    %v3908 = vsub.f32 1.5, %v3907
    %v3909 = vmul.f32 %v3904, %v3908
    %vm3910 = vweird.f32 %v3869
    %vm3911 = vweird.f32 %v3904
    %vm3912 = vmor %vm3910, %vm3911
    %v3913 = vsel %vm3912, %v3904, %v3909
    %v3914 = vrsqrt.pop %v3870
    %v3915 = vmul.f32 %v3914, %v3870
    %v3916 = vmul.f32 %v3915, %v3914
    %v3917 = vmul.f32 0.5, %v3916
    %v3918 = vsub.f32 1.5, %v3917
    %v3919 = vmul.f32 %v3914, %v3918
    %vm3920 = vweird.f32 %v3870
    %vm3921 = vweird.f32 %v3914
    %vm3922 = vmor %vm3920, %vm3921
    %v3923 = vsel %vm3922, %v3914, %v3919
    %v3924 = vrsqrt.pop %v3871
    %v3925 = vmul.f32 %v3924, %v3871
    %v3926 = vmul.f32 %v3925, %v3924
    %v3927 = vmul.f32 0.5, %v3926
    %v3928 = vsub.f32 1.5, %v3927
    %v3929 = vmul.f32 %v3924, %v3928
    %vm3930 = vweird.f32 %v3871
    %vm3931 = vweird.f32 %v3924
    %vm3932 = vmor %vm3930, %vm3931
    %v3933 = vsel %vm3932, %v3924, %v3929
    %v3934 = vrsqrt.pop %v3872
    %v3935 = vmul.f32 %v3934, %v3872
    %v3936 = vmul.f32 %v3935, %v3934
    %v3937 = vmul.f32 0.5, %v3936
    %v3938 = vsub.f32 1.5, %v3937
    %v3939 = vmul.f32 %v3934, %v3938
    %vm3940 = vweird.f32 %v3872
    %vm3941 = vweird.f32 %v3934
    %vm3942 = vmor %vm3940, %vm3941
    %v3943 = vsel %vm3942, %v3934, %v3939
    %v3944 = vrsqrt.pop %v3873
    %v3945 = vmul.f32 %v3944, %v3873
    %v3946 = vmul.f32 %v3945, %v3944
    %v3947 = vmul.f32 0.5, %v3946
    %v3948 = vsub.f32 1.5, %v3947
    %v3949 = vmul.f32 %v3944, %v3948
    %vm3950 = vweird.f32 %v3873
    %vm3951 = vweird.f32 %v3944
    %vm3952 = vmor %vm3950, %vm3951
    %v3953 = vsel %vm3952, %v3944, %v3949
    %v3962 = vrot.slane %v3893, 7
    %v3963 = vrot.slane %v3903, 6
    %v3964 = vrot.slane %v3913, 5
    %v3965 = vrot.slane %v3923, 4
    %v3966 = vrot.slane %v3933, 3
    %v3967 = vrot.slane %v3943, 2
    %v3968 = vrot.slane %v3953, 1
    %v3969 = vsel %vm455, %v3883, %v3962
    %v3970 = vsel %vm1717, %v3963, %v3964
    %v3971 = vsel %vm361, %v3969, %v3970
    %vm3972 = vcmask 1044484
    %v3973 = vsel %vm3972, %v3965, %v3966
    %vm3974 = vcmask 1046534
    %v3975 = vsel %vm3974, %v3967, %v3968
    %vm3976 = vcmask 1045508
    %v3977 = vsel %vm3976, %v3973, %v3975
    %vm3978 = vcmask 1043456
    %v3979 = vsel %vm3978, %v3971, %v3977
    %v3981 = vmul.f32 %v3728, %v3979
    %v3983 = vperm.slane %v3981, 0
    %v3984 = vperm.slane %v3981, 1
    %v3985 = vperm.slane %v3981, 2
    %v3986 = vperm.slane %v3981, 3
    %v3987 = vperm.slane %v3981, 4
    %v3988 = vperm.slane %v3981, 5
    %v3989 = vperm.slane %v3981, 6
    %v3990 = vperm.slane %v3981, 7
    %v3999 = vmul.f32 %v3778, %v3983
    %v4000 = vmul.f32 %v3779, %v3984
    %v4001 = vmul.f32 %v3780, %v3985
    %v4002 = vmul.f32 %v3781, %v3986
    %v4003 = vmul.f32 %v3782, %v3987
    %v4004 = vmul.f32 %v3783, %v3988
    %v4005 = vmul.f32 %v3784, %v3989
    %v4006 = vmul.f32 %v3785, %v3990
    %v4015 = vrot.slane %v4000, 7
    %v4016 = vrot.slane %v4001, 6
    %v4017 = vrot.slane %v4002, 5
    %v4018 = vrot.slane %v4003, 4
    %v4019 = vrot.slane %v4004, 3
    %v4020 = vrot.slane %v4005, 2
    %v4021 = vrot.slane %v4006, 1
    %v4022 = vsel %vm455, %v3999, %v4015
    %v4023 = vsel %vm1717, %v4016, %v4017
    %v4024 = vsel %vm361, %v4022, %v4023
    %v4025 = vsel %vm3972, %v4018, %v4019
    %v4026 = vsel %vm3974, %v4020, %v4021
    %v4027 = vsel %vm3976, %v4025, %v4026
    %v4028 = vsel %vm3978, %v4024, %v4027
    %v4030 = vsub.f32 %v3729, %v4028
    %v4031 = vmul.f32 %v3361, %v3983
    %v4032 = vmul.f32 %v3413, %v3984
    %v4033 = vmul.f32 %v3465, %v3985
    %v4034 = vmul.f32 %v3517, %v3986
    %v4035 = vmul.f32 %v3569, %v3987
    %v4036 = vmul.f32 %v3621, %v3988
    %v4037 = vmul.f32 %v3673, %v3989
    %v4038 = vmul.f32 %v3725, %v3990
    %v4040 = vperm.slane %v4030, 0
    %v4041 = vperm.slane %v4030, 1
    %v4042 = vperm.slane %v4030, 2
    %v4043 = vperm.slane %v4030, 3
    %v4044 = vperm.slane %v4030, 4
    %v4045 = vperm.slane %v4030, 5
    %v4046 = vperm.slane %v4030, 6
    %v4047 = vperm.slane %v4030, 7
    %v4056 = vadd.f32 %v4031, %v4040
    %v4057 = vadd.f32 %v4032, %v4041
    %v4058 = vadd.f32 %v4033, %v4042
    %v4059 = vadd.f32 %v4034, %v4043
    %v4060 = vadd.f32 %v4035, %v4044
    %v4061 = vadd.f32 %v4036, %v4045
    %v4062 = vadd.f32 %v4037, %v4046
    %v4063 = vadd.f32 %v4038, %v4047
    %v4064 = vmax.f32 %v4056, 0.0
    %v4065 = vmax.f32 %v4057, 0.0
    %v4066 = vmax.f32 %v4058, 0.0
    %v4067 = vmax.f32 %v4059, 0.0
    %v4068 = vmax.f32 %v4060, 0.0
    %v4069 = vmax.f32 %v4061, 0.0
    %v4070 = vmax.f32 %v4062, 0.0
    %v4071 = vmax.f32 %v4063, 0.0
    %s4072 = smul.u32 4, 128
    %s4073 = smul.u32 %s4072, 7
    %s4074 = sshll.u32 %s4073, 4
    %4075 = dma.done %s263, %s4074
    %v4076 = vpack.c.bf16 %v4064, %v4064
    %v4077 = vpack.c.bf16 %v4065, %v4065
    %v4078 = vpack.c.bf16 %v4066, %v4066
    %v4079 = vpack.c.bf16 %v4067, %v4067
    %v4080 = vpack.c.bf16 %v4068, %v4068
    %v4081 = vpack.c.bf16 %v4069, %v4069
    %v4082 = vpack.c.bf16 %v4070, %v4070
    %v4083 = vpack.c.bf16 %v4071, %v4071
    %v4084 = vld [vmem:[#allocation3] sm:$0xff]
    %v4085 = vld [vmem:[#allocation3 + $0x8] sm:$0xff]
    %v4086 = vld [vmem:[#allocation3 + $0x10] sm:$0xff]
    %v4087 = vld [vmem:[#allocation3 + $0x18] sm:$0xf]
    %v4088 = vld [vmem:[#allocation3 + $0x1c] sm:$0xff]
    %v4089 = vld [vmem:[#allocation3 + $0x24] sm:$0xff]
    %v4090 = vld [vmem:[#allocation3 + $0x2c] sm:$0xff]
    %v4091 = vld [vmem:[#allocation3 + $0x34] sm:$0xf]
    %v4092 = vld [vmem:[#allocation3 + $0x38] sm:$0xff]
    %v4093 = vld [vmem:[#allocation3 + $0x40] sm:$0xff]
    %v4094 = vld [vmem:[#allocation3 + $0x48] sm:$0xff]
    %v4095 = vld [vmem:[#allocation3 + $0x50] sm:$0xf]
    %v4096 = vld [vmem:[#allocation3 + $0x54] sm:$0xff]
    %v4097 = vld [vmem:[#allocation3 + $0x5c] sm:$0xff]
    %v4098 = vld [vmem:[#allocation3 + $0x64] sm:$0xff]
    %v4099 = vld [vmem:[#allocation3 + $0x6c] sm:$0xf]
    %v4100 = vld [vmem:[#allocation3 + $0x70] sm:$0xff]
    %v4101 = vld [vmem:[#allocation3 + $0x78] sm:$0xff]
    %v4102 = vld [vmem:[#allocation3 + $0x80] sm:$0xff]
    %v4103 = vld [vmem:[#allocation3 + $0x88] sm:$0xf]
    %v4104 = vld [vmem:[#allocation3 + $0x8c] sm:$0xff]
    %v4105 = vld [vmem:[#allocation3 + $0x94] sm:$0xff]
    %v4106 = vld [vmem:[#allocation3 + $0x9c] sm:$0xff]
    %v4107 = vld [vmem:[#allocation3 + $0xa4] sm:$0xf]
    %v4108 = vld [vmem:[#allocation3 + $0xa8] sm:$0xff]
    %v4109 = vld [vmem:[#allocation3 + $0xb0] sm:$0xff]
    %v4110 = vld [vmem:[#allocation3 + $0xb8] sm:$0xff]
    %v4111 = vld [vmem:[#allocation3 + $0xc0] sm:$0xf]
    %v4112 = vld [vmem:[#allocation3 + $0xc4] sm:$0xff]
    %v4113 = vld [vmem:[#allocation3 + $0xcc] sm:$0xff]
    %v4114 = vld [vmem:[#allocation3 + $0xd4] sm:$0xff]
    %v4115 = vld [vmem:[#allocation3 + $0xdc] sm:$0xf]
    %v4116 = vld [vmem:[#allocation3 + $0xe0] sm:$0xff]
    %v4117 = vld [vmem:[#allocation3 + $0xe8] sm:$0xff]
    %v4118 = vld [vmem:[#allocation3 + $0xf0] sm:$0xff]
    %v4119 = vld [vmem:[#allocation3 + $0xf8] sm:$0xf]
    %v4120 = vld [vmem:[#allocation3 + $0xfc] sm:$0xff]
    %v4121 = vld [vmem:[#allocation3 + $0x104] sm:$0xff]
    %v4122 = vld [vmem:[#allocation3 + $0x10c] sm:$0xff]
    %v4123 = vld [vmem:[#allocation3 + $0x114] sm:$0xf]
    %v4124 = vld [vmem:[#allocation3 + $0x118] sm:$0xff]
    %v4125 = vld [vmem:[#allocation3 + $0x120] sm:$0xff]
    %v4126 = vld [vmem:[#allocation3 + $0x128] sm:$0xff]
    %v4127 = vld [vmem:[#allocation3 + $0x130] sm:$0xf]
    %v4128 = vld [vmem:[#allocation3 + $0x134] sm:$0xff]
    %v4129 = vld [vmem:[#allocation3 + $0x13c] sm:$0xff]
    %v4130 = vld [vmem:[#allocation3 + $0x144] sm:$0xff]
    %v4131 = vld [vmem:[#allocation3 + $0x14c] sm:$0xf]
    %v4132 = vld [vmem:[#allocation3 + $0x150] sm:$0xff]
    %v4133 = vld [vmem:[#allocation3 + $0x158] sm:$0xff]
    %v4134 = vld [vmem:[#allocation3 + $0x160] sm:$0xff]
    %v4135 = vld [vmem:[#allocation3 + $0x168] sm:$0xf]
    %v4136 = vld [vmem:[#allocation3 + $0x16c] sm:$0xff]
    %v4137 = vld [vmem:[#allocation3 + $0x174] sm:$0xff]
    %v4138 = vld [vmem:[#allocation3 + $0x17c] sm:$0xff]
    %v4139 = vld [vmem:[#allocation3 + $0x184] sm:$0xf]
    %v4140 = vld [vmem:[#allocation3 + $0x188] sm:$0xff]
    %v4141 = vld [vmem:[#allocation3 + $0x190] sm:$0xff]
    %v4142 = vld [vmem:[#allocation3 + $0x198] sm:$0xff]
    %v4143 = vld [vmem:[#allocation3 + $0x1a0] sm:$0xf]
    %v4144 = vld [vmem:[#allocation3 + $0x1a4] sm:$0xff]
    %v4145 = vld [vmem:[#allocation3 + $0x1ac] sm:$0xff]
    %v4146 = vld [vmem:[#allocation3 + $0x1b4] sm:$0xff]
    %v4147 = vld [vmem:[#allocation3 + $0x1bc] sm:$0xf]
    %v4148 = vld [vmem:[#allocation3 + $0x1c0] sm:$0xff]
    %v4149 = vld [vmem:[#allocation3 + $0x1c8] sm:$0xff]
    %v4150 = vld [vmem:[#allocation3 + $0x1d0] sm:$0xff]
    %v4151 = vld [vmem:[#allocation3 + $0x1d8] sm:$0xf]
    %v4152 = vld [vmem:[#allocation3 + $0x1dc] sm:$0xff]
    %v4153 = vld [vmem:[#allocation3 + $0x1e4] sm:$0xff]
    %v4154 = vld [vmem:[#allocation3 + $0x1ec] sm:$0xff]
    %v4155 = vld [vmem:[#allocation3 + $0x1f4] sm:$0xf]
    %v4156 = vld [vmem:[#allocation3 + $0x1f8] sm:$0xff]
    %v4157 = vld [vmem:[#allocation3 + $0x200] sm:$0xff]
    %v4158 = vld [vmem:[#allocation3 + $0x208] sm:$0xff]
    %v4159 = vld [vmem:[#allocation3 + $0x210] sm:$0xf]
    %v4160 = vld [vmem:[#allocation3 + $0x214] sm:$0xff]
    %v4161 = vld [vmem:[#allocation3 + $0x21c] sm:$0xff]
    %v4162 = vld [vmem:[#allocation3 + $0x224] sm:$0xff]
    %v4163 = vld [vmem:[#allocation3 + $0x22c] sm:$0xf]
    %v4164 = vld [vmem:[#allocation3 + $0x230] sm:$0xff]
    %v4165 = vld [vmem:[#allocation3 + $0x238] sm:$0xff]
    %v4166 = vld [vmem:[#allocation3 + $0x240] sm:$0xff]
    %v4167 = vld [vmem:[#allocation3 + $0x248] sm:$0xf]
    %v4168 = vld [vmem:[#allocation3 + $0x24c] sm:$0xff]
    %v4169 = vld [vmem:[#allocation3 + $0x254] sm:$0xff]
    %v4170 = vld [vmem:[#allocation3 + $0x25c] sm:$0xff]
    %v4171 = vld [vmem:[#allocation3 + $0x264] sm:$0xf]
    %v4172 = vld [vmem:[#allocation3 + $0x268] sm:$0xff]
    %v4173 = vld [vmem:[#allocation3 + $0x270] sm:$0xff]
    %v4174 = vld [vmem:[#allocation3 + $0x278] sm:$0xff]
    %v4175 = vld [vmem:[#allocation3 + $0x280] sm:$0xf]
    %v4176 = vld [vmem:[#allocation3 + $0x284] sm:$0xff]
    %v4177 = vld [vmem:[#allocation3 + $0x28c] sm:$0xff]
    %v4178 = vld [vmem:[#allocation3 + $0x294] sm:$0xff]
    %v4179 = vld [vmem:[#allocation3 + $0x29c] sm:$0xf]
    %v4180 = vld [vmem:[#allocation3 + $0x2a0] sm:$0xff]
    %v4181 = vld [vmem:[#allocation3 + $0x2a8] sm:$0xff]
    %v4182 = vld [vmem:[#allocation3 + $0x2b0] sm:$0xff]
    %v4183 = vld [vmem:[#allocation3 + $0x2b8] sm:$0xf]
    %v4184 = vld [vmem:[#allocation3 + $0x2bc] sm:$0xff]
    %v4185 = vld [vmem:[#allocation3 + $0x2c4] sm:$0xff]
    %v4186 = vld [vmem:[#allocation3 + $0x2cc] sm:$0xff]
    %v4187 = vld [vmem:[#allocation3 + $0x2d4] sm:$0xf]
    %v4188 = vld [vmem:[#allocation3 + $0x2d8] sm:$0xff]
    %v4189 = vld [vmem:[#allocation3 + $0x2e0] sm:$0xff]
    %v4190 = vld [vmem:[#allocation3 + $0x2e8] sm:$0xff]
    %v4191 = vld [vmem:[#allocation3 + $0x2f0] sm:$0xf]
    %v4192 = vld [vmem:[#allocation3 + $0x2f4] sm:$0xff]
    %v4193 = vld [vmem:[#allocation3 + $0x2fc] sm:$0xff]
    %v4194 = vld [vmem:[#allocation3 + $0x304] sm:$0xff]
    %v4195 = vld [vmem:[#allocation3 + $0x30c] sm:$0xf]
    %v4196 = vld [vmem:[#allocation3 + $0x310] sm:$0xff]
    %v4197 = vld [vmem:[#allocation3 + $0x318] sm:$0xff]
    %v4198 = vld [vmem:[#allocation3 + $0x320] sm:$0xff]
    %v4199 = vld [vmem:[#allocation3 + $0x328] sm:$0xf]
    %v4200 = vld [vmem:[#allocation3 + $0x32c] sm:$0xff]
    %v4201 = vld [vmem:[#allocation3 + $0x334] sm:$0xff]
    %v4202 = vld [vmem:[#allocation3 + $0x33c] sm:$0xff]
    %v4203 = vld [vmem:[#allocation3 + $0x344] sm:$0xf]
    %v4204 = vld [vmem:[#allocation3 + $0x348] sm:$0xff]
    %v4205 = vld [vmem:[#allocation3 + $0x350] sm:$0xff]
    %v4206 = vld [vmem:[#allocation3 + $0x358] sm:$0xff]
    %v4207 = vld [vmem:[#allocation3 + $0x360] sm:$0xf]
    %v4208 = vld [vmem:[#allocation3 + $0x364] sm:$0xff]
    %v4209 = vld [vmem:[#allocation3 + $0x36c] sm:$0xff]
    %v4210 = vld [vmem:[#allocation3 + $0x374] sm:$0xff]
    %v4211 = vld [vmem:[#allocation3 + $0x37c] sm:$0xf]
    %v4212 = vld [vmem:[#allocation3 + $0x380] sm:$0xff]
    %v4213 = vld [vmem:[#allocation3 + $0x388] sm:$0xff]
    %v4214 = vld [vmem:[#allocation3 + $0x390] sm:$0xff]
    %v4215 = vld [vmem:[#allocation3 + $0x398] sm:$0xf]
    %v4216 = vld [vmem:[#allocation3 + $0x39c] sm:$0xff]
    %v4217 = vld [vmem:[#allocation3 + $0x3a4] sm:$0xff]
    %v4218 = vld [vmem:[#allocation3 + $0x3ac] sm:$0xff]
    %v4219 = vld [vmem:[#allocation3 + $0x3b4] sm:$0xf]
    %v4220 = vld [vmem:[#allocation3 + $0x3b8] sm:$0xff]
    %v4221 = vld [vmem:[#allocation3 + $0x3c0] sm:$0xff]
    %v4222 = vld [vmem:[#allocation3 + $0x3c8] sm:$0xff]
    %v4223 = vld [vmem:[#allocation3 + $0x3d0] sm:$0xf]
    %v4224 = vld [vmem:[#allocation3 + $0x3d4] sm:$0xff]
    %v4225 = vld [vmem:[#allocation3 + $0x3dc] sm:$0xff]
    %v4226 = vld [vmem:[#allocation3 + $0x3e4] sm:$0xff]
    %v4227 = vld [vmem:[#allocation3 + $0x3ec] sm:$0xf]
    %v4228 = vld [vmem:[#allocation3 + $0x3f0] sm:$0xff]
    %v4229 = vld [vmem:[#allocation3 + $0x3f8] sm:$0xff]
    %v4230 = vld [vmem:[#allocation3 + $0x400] sm:$0xff]
    %v4231 = vld [vmem:[#allocation3 + $0x408] sm:$0xf]
    %v4232 = vld [vmem:[#allocation3 + $0x40c] sm:$0xff]
    %v4233 = vld [vmem:[#allocation3 + $0x414] sm:$0xff]
    %v4234 = vld [vmem:[#allocation3 + $0x41c] sm:$0xff]
    %v4235 = vld [vmem:[#allocation3 + $0x424] sm:$0xf]
    %v4236 = vld [vmem:[#allocation3 + $0x428] sm:$0xff]
    %v4237 = vld [vmem:[#allocation3 + $0x430] sm:$0xff]
    %v4238 = vld [vmem:[#allocation3 + $0x438] sm:$0xff]
    %v4239 = vld [vmem:[#allocation3 + $0x440] sm:$0xf]
    %v4240 = vld [vmem:[#allocation3 + $0x444] sm:$0xff]
    %v4241 = vld [vmem:[#allocation3 + $0x44c] sm:$0xff]
    %v4242 = vld [vmem:[#allocation3 + $0x454] sm:$0xff]
    %v4243 = vld [vmem:[#allocation3 + $0x45c] sm:$0xf]
    %v4244 = vld [vmem:[#allocation3 + $0x460] sm:$0xff]
    %v4245 = vld [vmem:[#allocation3 + $0x468] sm:$0xff]
    %v4246 = vld [vmem:[#allocation3 + $0x470] sm:$0xff]
    %v4247 = vld [vmem:[#allocation3 + $0x478] sm:$0xf]
    %v4248 = vld [vmem:[#allocation3 + $0x47c] sm:$0xff]
    %v4249 = vld [vmem:[#allocation3 + $0x484] sm:$0xff]
    %v4250 = vld [vmem:[#allocation3 + $0x48c] sm:$0xff]
    %v4251 = vld [vmem:[#allocation3 + $0x494] sm:$0xf]
    %v4252 = vld [vmem:[#allocation3 + $0x498] sm:$0xff]
    %v4253 = vld [vmem:[#allocation3 + $0x4a0] sm:$0xff]
    %v4254 = vld [vmem:[#allocation3 + $0x4a8] sm:$0xff]
    %v4255 = vld [vmem:[#allocation3 + $0x4b0] sm:$0xf]
    %v4256 = vld [vmem:[#allocation3 + $0x4b4] sm:$0xff]
    %v4257 = vld [vmem:[#allocation3 + $0x4bc] sm:$0xff]
    %v4258 = vld [vmem:[#allocation3 + $0x4c4] sm:$0xff]
    %v4259 = vld [vmem:[#allocation3 + $0x4cc] sm:$0xf]
    %v4260 = vld [vmem:[#allocation3 + $0x4d0] sm:$0xff]
    %v4261 = vld [vmem:[#allocation3 + $0x4d8] sm:$0xff]
    %v4262 = vld [vmem:[#allocation3 + $0x4e0] sm:$0xff]
    %v4263 = vld [vmem:[#allocation3 + $0x4e8] sm:$0xf]
    %v4264 = vld [vmem:[#allocation3 + $0x4ec] sm:$0xff]
    %v4265 = vld [vmem:[#allocation3 + $0x4f4] sm:$0xff]
    %v4266 = vld [vmem:[#allocation3 + $0x4fc] sm:$0xff]
    %v4267 = vld [vmem:[#allocation3 + $0x504] sm:$0xf]
    %v4268 = vld [vmem:[#allocation3 + $0x508] sm:$0xff]
    %v4269 = vld [vmem:[#allocation3 + $0x510] sm:$0xff]
    %v4270 = vld [vmem:[#allocation3 + $0x518] sm:$0xff]
    %v4271 = vld [vmem:[#allocation3 + $0x520] sm:$0xf]
    %v4272 = vld [vmem:[#allocation3 + $0x524] sm:$0xff]
    %v4273 = vld [vmem:[#allocation3 + $0x52c] sm:$0xff]
    %v4274 = vld [vmem:[#allocation3 + $0x534] sm:$0xff]
    %v4275 = vld [vmem:[#allocation3 + $0x53c] sm:$0xf]
    %v4276 = vld [vmem:[#allocation3 + $0x540] sm:$0xff]
    %v4277 = vld [vmem:[#allocation3 + $0x548] sm:$0xff]
    %v4278 = vld [vmem:[#allocation3 + $0x550] sm:$0xff]
    %v4279 = vld [vmem:[#allocation3 + $0x558] sm:$0xf]
    %v4280 = vld [vmem:[#allocation3 + $0x55c] sm:$0xff]
    %v4281 = vld [vmem:[#allocation3 + $0x564] sm:$0xff]
    %v4282 = vld [vmem:[#allocation3 + $0x56c] sm:$0xff]
    %v4283 = vld [vmem:[#allocation3 + $0x574] sm:$0xf]
    %v4284 = vld [vmem:[#allocation3 + $0x578] sm:$0xff]
    %v4285 = vld [vmem:[#allocation3 + $0x580] sm:$0xff]
    %v4286 = vld [vmem:[#allocation3 + $0x588] sm:$0xff]
    %v4287 = vld [vmem:[#allocation3 + $0x590] sm:$0xf]
    %v4288 = vld [vmem:[#allocation3 + $0x594] sm:$0xff]
    %v4289 = vld [vmem:[#allocation3 + $0x59c] sm:$0xff]
    %v4290 = vld [vmem:[#allocation3 + $0x5a4] sm:$0xff]
    %v4291 = vld [vmem:[#allocation3 + $0x5ac] sm:$0xf]
    %v4292 = vld [vmem:[#allocation3 + $0x5b0] sm:$0xff]
    %v4293 = vld [vmem:[#allocation3 + $0x5b8] sm:$0xff]
    %v4294 = vld [vmem:[#allocation3 + $0x5c0] sm:$0xff]
    %v4295 = vld [vmem:[#allocation3 + $0x5c8] sm:$0xf]
    %v4296 = vld [vmem:[#allocation3 + $0x5cc] sm:$0xff]
    %v4297 = vld [vmem:[#allocation3 + $0x5d4] sm:$0xff]
    %v4298 = vld [vmem:[#allocation3 + $0x5dc] sm:$0xff]
    %v4299 = vld [vmem:[#allocation3 + $0x5e4] sm:$0xf]
    %v4300 = vld [vmem:[#allocation3 + $0x5e8] sm:$0xff]
    %v4301 = vld [vmem:[#allocation3 + $0x5f0] sm:$0xff]
    %v4302 = vld [vmem:[#allocation3 + $0x5f8] sm:$0xff]
    %v4303 = vld [vmem:[#allocation3 + $0x600] sm:$0xf]
    %v4304 = vld [vmem:[#allocation3 + $0x604] sm:$0xff]
    %v4305 = vld [vmem:[#allocation3 + $0x60c] sm:$0xff]
    %v4306 = vld [vmem:[#allocation3 + $0x614] sm:$0xff]
    %v4307 = vld [vmem:[#allocation3 + $0x61c] sm:$0xf]
    %v4308 = vld [vmem:[#allocation3 + $0x620] sm:$0xff]
    %v4309 = vld [vmem:[#allocation3 + $0x628] sm:$0xff]
    %v4310 = vld [vmem:[#allocation3 + $0x630] sm:$0xff]
    %v4311 = vld [vmem:[#allocation3 + $0x638] sm:$0xf]
    %v4312 = vld [vmem:[#allocation3 + $0x63c] sm:$0xff]
    %v4313 = vld [vmem:[#allocation3 + $0x644] sm:$0xff]
    %v4314 = vld [vmem:[#allocation3 + $0x64c] sm:$0xff]
    %v4315 = vld [vmem:[#allocation3 + $0x654] sm:$0xf]
    %v4316 = vld [vmem:[#allocation3 + $0x658] sm:$0xff]
    %v4317 = vld [vmem:[#allocation3 + $0x660] sm:$0xff]
    %v4318 = vld [vmem:[#allocation3 + $0x668] sm:$0xff]
    %v4319 = vld [vmem:[#allocation3 + $0x670] sm:$0xf]
    %v4320 = vld [vmem:[#allocation3 + $0x674] sm:$0xff]
    %v4321 = vld [vmem:[#allocation3 + $0x67c] sm:$0xff]
    %v4322 = vld [vmem:[#allocation3 + $0x684] sm:$0xff]
    %v4323 = vld [vmem:[#allocation3 + $0x68c] sm:$0xf]
    %v4324 = vld [vmem:[#allocation3 + $0x690] sm:$0xff]
    %v4325 = vld [vmem:[#allocation3 + $0x698] sm:$0xff]
    %v4326 = vld [vmem:[#allocation3 + $0x6a0] sm:$0xff]
    %v4327 = vld [vmem:[#allocation3 + $0x6a8] sm:$0xf]
    %v4328 = vld [vmem:[#allocation3 + $0x6ac] sm:$0xff]
    %v4329 = vld [vmem:[#allocation3 + $0x6b4] sm:$0xff]
    %v4330 = vld [vmem:[#allocation3 + $0x6bc] sm:$0xff]
    %v4331 = vld [vmem:[#allocation3 + $0x6c4] sm:$0xf]
    %v4332 = vld [vmem:[#allocation3 + $0x6c8] sm:$0xff]
    %v4333 = vld [vmem:[#allocation3 + $0x6d0] sm:$0xff]
    %v4334 = vld [vmem:[#allocation3 + $0x6d8] sm:$0xff]
    %v4335 = vld [vmem:[#allocation3 + $0x6e0] sm:$0xf]
    %v4336 = vld [vmem:[#allocation3 + $0x6e4] sm:$0xff]
    %v4337 = vld [vmem:[#allocation3 + $0x6ec] sm:$0xff]
    %v4338 = vld [vmem:[#allocation3 + $0x6f4] sm:$0xff]
    %v4339 = vld [vmem:[#allocation3 + $0x6fc] sm:$0xf]
    %v4340 = vld [vmem:[#allocation3 + $0x700] sm:$0xff]
    %v4341 = vld [vmem:[#allocation3 + $0x708] sm:$0xff]
    %v4342 = vld [vmem:[#allocation3 + $0x710] sm:$0xff]
    %v4343 = vld [vmem:[#allocation3 + $0x718] sm:$0xf]
    %v4344 = vld [vmem:[#allocation3 + $0x71c] sm:$0xff]
    %v4345 = vld [vmem:[#allocation3 + $0x724] sm:$0xff]
    %v4346 = vld [vmem:[#allocation3 + $0x72c] sm:$0xff]
    %v4347 = vld [vmem:[#allocation3 + $0x734] sm:$0xf]
    %v4348 = vld [vmem:[#allocation3 + $0x738] sm:$0xff]
    %v4349 = vld [vmem:[#allocation3 + $0x740] sm:$0xff]
    %v4350 = vld [vmem:[#allocation3 + $0x748] sm:$0xff]
    %v4351 = vld [vmem:[#allocation3 + $0x750] sm:$0xf]
    %v4352 = vld [vmem:[#allocation3 + $0x754] sm:$0xff]
    %v4353 = vld [vmem:[#allocation3 + $0x75c] sm:$0xff]
    %v4354 = vld [vmem:[#allocation3 + $0x764] sm:$0xff]
    %v4355 = vld [vmem:[#allocation3 + $0x76c] sm:$0xf]
    %v4356 = vld [vmem:[#allocation3 + $0x770] sm:$0xff]
    %v4357 = vld [vmem:[#allocation3 + $0x778] sm:$0xff]
    %v4358 = vld [vmem:[#allocation3 + $0x780] sm:$0xff]
    %v4359 = vld [vmem:[#allocation3 + $0x788] sm:$0xf]
    %v4360 = vld [vmem:[#allocation3 + $0x78c] sm:$0xff]
    %v4361 = vld [vmem:[#allocation3 + $0x794] sm:$0xff]
    %v4362 = vld [vmem:[#allocation3 + $0x79c] sm:$0xff]
    %v4363 = vld [vmem:[#allocation3 + $0x7a4] sm:$0xf]
    %v4364 = vld [vmem:[#allocation3 + $0x7a8] sm:$0xff]
    %v4365 = vld [vmem:[#allocation3 + $0x7b0] sm:$0xff]
    %v4366 = vld [vmem:[#allocation3 + $0x7b8] sm:$0xff]
    %v4367 = vld [vmem:[#allocation3 + $0x7c0] sm:$0xf]
    %v4368 = vld [vmem:[#allocation3 + $0x7c4] sm:$0xff]
    %v4369 = vld [vmem:[#allocation3 + $0x7cc] sm:$0xff]
    %v4370 = vld [vmem:[#allocation3 + $0x7d4] sm:$0xff]
    %v4371 = vld [vmem:[#allocation3 + $0x7dc] sm:$0xf]
    %v4372 = vld [vmem:[#allocation3 + $0x7e0] sm:$0xff]
    %v4373 = vld [vmem:[#allocation3 + $0x7e8] sm:$0xff]
    %v4374 = vld [vmem:[#allocation3 + $0x7f0] sm:$0xff]
    %v4375 = vld [vmem:[#allocation3 + $0x7f8] sm:$0xf]
    %v4376 = vld [vmem:[#allocation3 + $0x7fc] sm:$0xff]
    %v4377 = vld [vmem:[#allocation3 + $0x804] sm:$0xff]
    %v4378 = vld [vmem:[#allocation3 + $0x80c] sm:$0xff]
    %v4379 = vld [vmem:[#allocation3 + $0x814] sm:$0xf]
    %v4380 = vld [vmem:[#allocation3 + $0x818] sm:$0xff]
    %v4381 = vld [vmem:[#allocation3 + $0x820] sm:$0xff]
    %v4382 = vld [vmem:[#allocation3 + $0x828] sm:$0xff]
    %v4383 = vld [vmem:[#allocation3 + $0x830] sm:$0xf]
    %v4384 = vld [vmem:[#allocation3 + $0x834] sm:$0xff]
    %v4385 = vld [vmem:[#allocation3 + $0x83c] sm:$0xff]
    %v4386 = vld [vmem:[#allocation3 + $0x844] sm:$0xff]
    %v4387 = vld [vmem:[#allocation3 + $0x84c] sm:$0xf]
    %v4388 = vld [vmem:[#allocation3 + $0x850] sm:$0xff]
    %v4389 = vld [vmem:[#allocation3 + $0x858] sm:$0xff]
    %v4390 = vld [vmem:[#allocation3 + $0x860] sm:$0xff]
    %v4391 = vld [vmem:[#allocation3 + $0x868] sm:$0xf]
    %v4392 = vld [vmem:[#allocation3 + $0x86c] sm:$0xff]
    %v4393 = vld [vmem:[#allocation3 + $0x874] sm:$0xff]
    %v4394 = vld [vmem:[#allocation3 + $0x87c] sm:$0xff]
    %v4395 = vld [vmem:[#allocation3 + $0x884] sm:$0xf]
    %v4396 = vld [vmem:[#allocation3 + $0x888] sm:$0xff]
    %v4397 = vld [vmem:[#allocation3 + $0x890] sm:$0xff]
    %v4398 = vld [vmem:[#allocation3 + $0x898] sm:$0xff]
    %v4399 = vld [vmem:[#allocation3 + $0x8a0] sm:$0xf]
    %v4400 = vld [vmem:[#allocation3 + $0x8a4] sm:$0xff]
    %v4401 = vld [vmem:[#allocation3 + $0x8ac] sm:$0xff]
    %v4402 = vld [vmem:[#allocation3 + $0x8b4] sm:$0xff]
    %v4403 = vld [vmem:[#allocation3 + $0x8bc] sm:$0xf]
    %v4404 = vld [vmem:[#allocation3 + $0x8c0] sm:$0xff]
    %v4405 = vld [vmem:[#allocation3 + $0x8c8] sm:$0xff]
    %v4406 = vld [vmem:[#allocation3 + $0x8d0] sm:$0xff]
    %v4407 = vld [vmem:[#allocation3 + $0x8d8] sm:$0xf]
    %v4408 = vld [vmem:[#allocation3 + $0x8dc] sm:$0xff]
    %v4409 = vld [vmem:[#allocation3 + $0x8e4] sm:$0xff]
    %v4410 = vld [vmem:[#allocation3 + $0x8ec] sm:$0xff]
    %v4411 = vld [vmem:[#allocation3 + $0x8f4] sm:$0xf]
    %v4412 = vld [vmem:[#allocation3 + $0x8f8] sm:$0xff]
    %v4413 = vld [vmem:[#allocation3 + $0x900] sm:$0xff]
    %v4414 = vld [vmem:[#allocation3 + $0x908] sm:$0xff]
    %v4415 = vld [vmem:[#allocation3 + $0x910] sm:$0xf]
    %v4416 = vld [vmem:[#allocation3 + $0x914] sm:$0xff]
    %v4417 = vld [vmem:[#allocation3 + $0x91c] sm:$0xff]
    %v4418 = vld [vmem:[#allocation3 + $0x924] sm:$0xff]
    %v4419 = vld [vmem:[#allocation3 + $0x92c] sm:$0xf]
    %v4420 = vld [vmem:[#allocation3 + $0x930] sm:$0xff]
    %v4421 = vld [vmem:[#allocation3 + $0x938] sm:$0xff]
    %v4422 = vld [vmem:[#allocation3 + $0x940] sm:$0xff]
    %v4423 = vld [vmem:[#allocation3 + $0x948] sm:$0xf]
    %v4424 = vld [vmem:[#allocation3 + $0x94c] sm:$0xff]
    %v4425 = vld [vmem:[#allocation3 + $0x954] sm:$0xff]
    %v4426 = vld [vmem:[#allocation3 + $0x95c] sm:$0xff]
    %v4427 = vld [vmem:[#allocation3 + $0x964] sm:$0xf]
    %v4428 = vld [vmem:[#allocation3 + $0x968] sm:$0xff]
    %v4429 = vld [vmem:[#allocation3 + $0x970] sm:$0xff]
    %v4430 = vld [vmem:[#allocation3 + $0x978] sm:$0xff]
    %v4431 = vld [vmem:[#allocation3 + $0x980] sm:$0xf]
    %v4432 = vld [vmem:[#allocation3 + $0x984] sm:$0xff]
    %v4433 = vld [vmem:[#allocation3 + $0x98c] sm:$0xff]
    %v4434 = vld [vmem:[#allocation3 + $0x994] sm:$0xff]
    %v4435 = vld [vmem:[#allocation3 + $0x99c] sm:$0xf]
    %v4436 = vld [vmem:[#allocation3 + $0x9a0] sm:$0xff]
    %v4437 = vld [vmem:[#allocation3 + $0x9a8] sm:$0xff]
    %v4438 = vld [vmem:[#allocation3 + $0x9b0] sm:$0xff]
    %v4439 = vld [vmem:[#allocation3 + $0x9b8] sm:$0xf]
    %v4440 = vld [vmem:[#allocation3 + $0x9bc] sm:$0xff]
    %v4441 = vld [vmem:[#allocation3 + $0x9c4] sm:$0xff]
    %v4442 = vld [vmem:[#allocation3 + $0x9cc] sm:$0xff]
    %v4443 = vld [vmem:[#allocation3 + $0x9d4] sm:$0xf]
    %v4444 = vld [vmem:[#allocation3 + $0x9d8] sm:$0xff]
    %v4445 = vld [vmem:[#allocation3 + $0x9e0] sm:$0xff]
    %v4446 = vld [vmem:[#allocation3 + $0x9e8] sm:$0xff]
    %v4447 = vld [vmem:[#allocation3 + $0x9f0] sm:$0xf]
    %v4448 = vld [vmem:[#allocation3 + $0x9f4] sm:$0xff]
    %v4449 = vld [vmem:[#allocation3 + $0x9fc] sm:$0xff]
    %v4450 = vld [vmem:[#allocation3 + $0xa04] sm:$0xff]
    %v4451 = vld [vmem:[#allocation3 + $0xa0c] sm:$0xf]
    %v4452 = vld [vmem:[#allocation3 + $0xa10] sm:$0xff]
    %v4453 = vld [vmem:[#allocation3 + $0xa18] sm:$0xff]
    %v4454 = vld [vmem:[#allocation3 + $0xa20] sm:$0xff]
    %v4455 = vld [vmem:[#allocation3 + $0xa28] sm:$0xf]
    %v4456 = vld [vmem:[#allocation3 + $0xa2c] sm:$0xff]
    %v4457 = vld [vmem:[#allocation3 + $0xa34] sm:$0xff]
    %v4458 = vld [vmem:[#allocation3 + $0xa3c] sm:$0xff]
    %v4459 = vld [vmem:[#allocation3 + $0xa44] sm:$0xf]
    %v4460 = vld [vmem:[#allocation3 + $0xa48] sm:$0xff]
    %v4461 = vld [vmem:[#allocation3 + $0xa50] sm:$0xff]
    %v4462 = vld [vmem:[#allocation3 + $0xa58] sm:$0xff]
    %v4463 = vld [vmem:[#allocation3 + $0xa60] sm:$0xf]
    %v4464 = vld [vmem:[#allocation3 + $0xa64] sm:$0xff]
    %v4465 = vld [vmem:[#allocation3 + $0xa6c] sm:$0xff]
    %v4466 = vld [vmem:[#allocation3 + $0xa74] sm:$0xff]
    %v4467 = vld [vmem:[#allocation3 + $0xa7c] sm:$0xf]
    %v4468 = vld [vmem:[#allocation3 + $0xa80] sm:$0xff]
    %v4469 = vld [vmem:[#allocation3 + $0xa88] sm:$0xff]
    %v4470 = vld [vmem:[#allocation3 + $0xa90] sm:$0xff]
    %v4471 = vld [vmem:[#allocation3 + $0xa98] sm:$0xf]
    %v4472 = vld [vmem:[#allocation3 + $0xa9c] sm:$0xff]
    %v4473 = vld [vmem:[#allocation3 + $0xaa4] sm:$0xff]
    %v4474 = vld [vmem:[#allocation3 + $0xaac] sm:$0xff]
    %v4475 = vld [vmem:[#allocation3 + $0xab4] sm:$0xf]
    %v4476 = vld [vmem:[#allocation3 + $0xab8] sm:$0xff]
    %v4477 = vld [vmem:[#allocation3 + $0xac0] sm:$0xff]
    %v4478 = vld [vmem:[#allocation3 + $0xac8] sm:$0xff]
    %v4479 = vld [vmem:[#allocation3 + $0xad0] sm:$0xf]
    %v4480 = vld [vmem:[#allocation3 + $0xad4] sm:$0xff]
    %v4481 = vld [vmem:[#allocation3 + $0xadc] sm:$0xff]
    %v4482 = vld [vmem:[#allocation3 + $0xae4] sm:$0xff]
    %v4483 = vld [vmem:[#allocation3 + $0xaec] sm:$0xf]
    %v4484 = vld [vmem:[#allocation3 + $0xaf0] sm:$0xff]
    %v4485 = vld [vmem:[#allocation3 + $0xaf8] sm:$0xff]
    %v4486 = vld [vmem:[#allocation3 + $0xb00] sm:$0xff]
    %v4487 = vld [vmem:[#allocation3 + $0xb08] sm:$0xf]
    %v4488 = vld [vmem:[#allocation3 + $0xb0c] sm:$0xff]
    %v4489 = vld [vmem:[#allocation3 + $0xb14] sm:$0xff]
    %v4490 = vld [vmem:[#allocation3 + $0xb1c] sm:$0xff]
    %v4491 = vld [vmem:[#allocation3 + $0xb24] sm:$0xf]
    %v4492 = vld [vmem:[#allocation3 + $0xb28] sm:$0xff]
    %v4493 = vld [vmem:[#allocation3 + $0xb30] sm:$0xff]
    %v4494 = vld [vmem:[#allocation3 + $0xb38] sm:$0xff]
    %v4495 = vld [vmem:[#allocation3 + $0xb40] sm:$0xf]
    %v4496 = vld [vmem:[#allocation3 + $0xb44] sm:$0xff]
    %v4497 = vld [vmem:[#allocation3 + $0xb4c] sm:$0xff]
    %v4498 = vld [vmem:[#allocation3 + $0xb54] sm:$0xff]
    %v4499 = vld [vmem:[#allocation3 + $0xb5c] sm:$0xf]
    %v4500 = vld [vmem:[#allocation3 + $0xb60] sm:$0xff]
    %v4501 = vld [vmem:[#allocation3 + $0xb68] sm:$0xff]
    %v4502 = vld [vmem:[#allocation3 + $0xb70] sm:$0xff]
    %v4503 = vld [vmem:[#allocation3 + $0xb78] sm:$0xf]
    %v4504 = vld [vmem:[#allocation3 + $0xb7c] sm:$0xff]
    %v4505 = vld [vmem:[#allocation3 + $0xb84] sm:$0xff]
    %v4506 = vld [vmem:[#allocation3 + $0xb8c] sm:$0xff]
    %v4507 = vld [vmem:[#allocation3 + $0xb94] sm:$0xf]
    %v4508 = vld [vmem:[#allocation3 + $0xb98] sm:$0xff]
    %v4509 = vld [vmem:[#allocation3 + $0xba0] sm:$0xff]
    %v4510 = vld [vmem:[#allocation3 + $0xba8] sm:$0xff]
    %v4511 = vld [vmem:[#allocation3 + $0xbb0] sm:$0xf]
    %v4512 = vld [vmem:[#allocation3 + $0xbb4] sm:$0xff]
    %v4513 = vld [vmem:[#allocation3 + $0xbbc] sm:$0xff]
    %v4514 = vld [vmem:[#allocation3 + $0xbc4] sm:$0xff]
    %v4515 = vld [vmem:[#allocation3 + $0xbcc] sm:$0xf]
    %v4516 = vld [vmem:[#allocation3 + $0xbd0] sm:$0xff]
    %v4517 = vld [vmem:[#allocation3 + $0xbd8] sm:$0xff]
    %v4518 = vld [vmem:[#allocation3 + $0xbe0] sm:$0xff]
    %v4519 = vld [vmem:[#allocation3 + $0xbe8] sm:$0xf]
    %v4520 = vld [vmem:[#allocation3 + $0xbec] sm:$0xff]
    %v4521 = vld [vmem:[#allocation3 + $0xbf4] sm:$0xff]
    %v4522 = vld [vmem:[#allocation3 + $0xbfc] sm:$0xff]
    %v4523 = vld [vmem:[#allocation3 + $0xc04] sm:$0xf]
    %v4524 = vld [vmem:[#allocation3 + $0xc08] sm:$0xff]
    %v4525 = vld [vmem:[#allocation3 + $0xc10] sm:$0xff]
    %v4526 = vld [vmem:[#allocation3 + $0xc18] sm:$0xff]
    %v4527 = vld [vmem:[#allocation3 + $0xc20] sm:$0xf]
    %v4528 = vld [vmem:[#allocation3 + $0xc24] sm:$0xff]
    %v4529 = vld [vmem:[#allocation3 + $0xc2c] sm:$0xff]
    %v4530 = vld [vmem:[#allocation3 + $0xc34] sm:$0xff]
    %v4531 = vld [vmem:[#allocation3 + $0xc3c] sm:$0xf]
    %v4532 = vld [vmem:[#allocation3 + $0xc40] sm:$0xff]
    %v4533 = vld [vmem:[#allocation3 + $0xc48] sm:$0xff]
    %v4534 = vld [vmem:[#allocation3 + $0xc50] sm:$0xff]
    %v4535 = vld [vmem:[#allocation3 + $0xc58] sm:$0xf]
    %v4536 = vld [vmem:[#allocation3 + $0xc5c] sm:$0xff]
    %v4537 = vld [vmem:[#allocation3 + $0xc64] sm:$0xff]
    %v4538 = vld [vmem:[#allocation3 + $0xc6c] sm:$0xff]
    %v4539 = vld [vmem:[#allocation3 + $0xc74] sm:$0xf]
    %v4540 = vld [vmem:[#allocation3 + $0xc78] sm:$0xff]
    %v4541 = vld [vmem:[#allocation3 + $0xc80] sm:$0xff]
    %v4542 = vld [vmem:[#allocation3 + $0xc88] sm:$0xff]
    %v4543 = vld [vmem:[#allocation3 + $0xc90] sm:$0xf]
    %v4544 = vld [vmem:[#allocation3 + $0xc94] sm:$0xff]
    %v4545 = vld [vmem:[#allocation3 + $0xc9c] sm:$0xff]
    %v4546 = vld [vmem:[#allocation3 + $0xca4] sm:$0xff]
    %v4547 = vld [vmem:[#allocation3 + $0xcac] sm:$0xf]
    %v4548 = vld [vmem:[#allocation3 + $0xcb0] sm:$0xff]
    %v4549 = vld [vmem:[#allocation3 + $0xcb8] sm:$0xff]
    %v4550 = vld [vmem:[#allocation3 + $0xcc0] sm:$0xff]
    %v4551 = vld [vmem:[#allocation3 + $0xcc8] sm:$0xf]
    %v4552 = vld [vmem:[#allocation3 + $0xccc] sm:$0xff]
    %v4553 = vld [vmem:[#allocation3 + $0xcd4] sm:$0xff]
    %v4554 = vld [vmem:[#allocation3 + $0xcdc] sm:$0xff]
    %v4555 = vld [vmem:[#allocation3 + $0xce4] sm:$0xf]
    %v4556 = vld [vmem:[#allocation3 + $0xce8] sm:$0xff]
    %v4557 = vld [vmem:[#allocation3 + $0xcf0] sm:$0xff]
    %v4558 = vld [vmem:[#allocation3 + $0xcf8] sm:$0xff]
    %v4559 = vld [vmem:[#allocation3 + $0xd00] sm:$0xf]
    %v4560 = vld [vmem:[#allocation3 + $0xd04] sm:$0xff]
    %v4561 = vld [vmem:[#allocation3 + $0xd0c] sm:$0xff]
    %v4562 = vld [vmem:[#allocation3 + $0xd14] sm:$0xff]
    %v4563 = vld [vmem:[#allocation3 + $0xd1c] sm:$0xf]
    %v4564 = vld [vmem:[#allocation3 + $0xd20] sm:$0xff]
    %v4565 = vld [vmem:[#allocation3 + $0xd28] sm:$0xff]
    %v4566 = vld [vmem:[#allocation3 + $0xd30] sm:$0xff]
    %v4567 = vld [vmem:[#allocation3 + $0xd38] sm:$0xf]
    %v4568 = vld [vmem:[#allocation3 + $0xd3c] sm:$0xff]
    %v4569 = vld [vmem:[#allocation3 + $0xd44] sm:$0xff]
    %v4570 = vld [vmem:[#allocation3 + $0xd4c] sm:$0xff]
    %v4571 = vld [vmem:[#allocation3 + $0xd54] sm:$0xf]
    %v4572 = vld [vmem:[#allocation3 + $0xd58] sm:$0xff]
    %v4573 = vld [vmem:[#allocation3 + $0xd60] sm:$0xff]
    %v4574 = vld [vmem:[#allocation3 + $0xd68] sm:$0xff]
    %v4575 = vld [vmem:[#allocation3 + $0xd70] sm:$0xf]
    %v4576 = vld [vmem:[#allocation3 + $0xd74] sm:$0xff]
    %v4577 = vld [vmem:[#allocation3 + $0xd7c] sm:$0xff]
    %v4578 = vld [vmem:[#allocation3 + $0xd84] sm:$0xff]
    %v4579 = vld [vmem:[#allocation3 + $0xd8c] sm:$0xf]
    %v4580 = vld [vmem:[#allocation3 + $0xd90] sm:$0xff]
    %v4581 = vld [vmem:[#allocation3 + $0xd98] sm:$0xff]
    %v4582 = vld [vmem:[#allocation3 + $0xda0] sm:$0xff]
    %v4583 = vld [vmem:[#allocation3 + $0xda8] sm:$0xf]
    %v4584 = vld [vmem:[#allocation3 + $0xdac] sm:$0xff]
    %v4585 = vld [vmem:[#allocation3 + $0xdb4] sm:$0xff]
    %v4586 = vld [vmem:[#allocation3 + $0xdbc] sm:$0xff]
    %v4587 = vld [vmem:[#allocation3 + $0xdc4] sm:$0xf]
    %v4588 = vld [vmem:[#allocation3 + $0xdc8] sm:$0xff]
    %v4589 = vld [vmem:[#allocation3 + $0xdd0] sm:$0xff]
    %v4590 = vld [vmem:[#allocation3 + $0xdd8] sm:$0xff]
    %v4591 = vld [vmem:[#allocation3 + $0xde0] sm:$0xf]
    %v4592 = vld [vmem:[#allocation3 + $0xde4] sm:$0xff]
    %v4593 = vld [vmem:[#allocation3 + $0xdec] sm:$0xff]
    %v4594 = vld [vmem:[#allocation3 + $0xdf4] sm:$0xff]
    %v4595 = vld [vmem:[#allocation3 + $0xdfc] sm:$0xf]
    %v4596 = vld [vmem:[#allocation26] sm:$0xff]
    %v4598 = vperm.slane %v4596, 0
    %v4599 = vperm.slane %v4596, 1
    %v4600 = vperm.slane %v4596, 2
    %v4601 = vperm.slane %v4596, 3
    %v4602 = vperm.slane %v4596, 4
    %v4603 = vperm.slane %v4596, 5
    %v4604 = vperm.slane %v4596, 6
    %v5124 = vunpack.c.l.b16 %v4084
    %v5125 = vunpack.c.h.b16 %v4084
    %v5126 = vunpack.c.l.b16 %v4085
    %v5127 = vunpack.c.h.b16 %v4085
    %v5128 = vunpack.c.l.b16 %v4086
    %v5129 = vunpack.c.h.b16 %v4086
    %v5130 = vunpack.c.l.b16 %v4087
    %v5131 = vunpack.c.l.b16 %v4088
    %v5132 = vunpack.c.h.b16 %v4088
    %v5133 = vunpack.c.l.b16 %v4089
    %v5134 = vunpack.c.h.b16 %v4089
    %v5135 = vunpack.c.l.b16 %v4090
    %v5136 = vunpack.c.h.b16 %v4090
    %v5137 = vunpack.c.l.b16 %v4091
    %v5138 = vunpack.c.l.b16 %v4092
    %v5139 = vunpack.c.h.b16 %v4092
    %v5140 = vunpack.c.l.b16 %v4093
    %v5141 = vunpack.c.h.b16 %v4093
    %v5142 = vunpack.c.l.b16 %v4094
    %v5143 = vunpack.c.h.b16 %v4094
    %v5144 = vunpack.c.l.b16 %v4095
    %v5145 = vunpack.c.l.b16 %v4096
    %v5146 = vunpack.c.h.b16 %v4096
    %v5147 = vunpack.c.l.b16 %v4097
    %v5148 = vunpack.c.h.b16 %v4097
    %v5149 = vunpack.c.l.b16 %v4098
    %v5150 = vunpack.c.h.b16 %v4098
    %v5151 = vunpack.c.l.b16 %v4099
    %v5152 = vunpack.c.l.b16 %v4100
    %v5153 = vunpack.c.h.b16 %v4100
    %v5154 = vunpack.c.l.b16 %v4101
    %v5155 = vunpack.c.h.b16 %v4101
    %v5156 = vunpack.c.l.b16 %v4102
    %v5157 = vunpack.c.h.b16 %v4102
    %v5158 = vunpack.c.l.b16 %v4103
    %v5159 = vunpack.c.l.b16 %v4104
    %v5160 = vunpack.c.h.b16 %v4104
    %v5161 = vunpack.c.l.b16 %v4105
    %v5162 = vunpack.c.h.b16 %v4105
    %v5163 = vunpack.c.l.b16 %v4106
    %v5164 = vunpack.c.h.b16 %v4106
    %v5165 = vunpack.c.l.b16 %v4107
    %v5166 = vunpack.c.l.b16 %v4108
    %v5167 = vunpack.c.h.b16 %v4108
    %v5168 = vunpack.c.l.b16 %v4109
    %v5169 = vunpack.c.h.b16 %v4109
    %v5170 = vunpack.c.l.b16 %v4110
    %v5171 = vunpack.c.h.b16 %v4110
    %v5172 = vunpack.c.l.b16 %v4111
    %v5173 = vunpack.c.l.b16 %v4112
    %v5174 = vunpack.c.h.b16 %v4112
    %v5175 = vunpack.c.l.b16 %v4113
    %v5176 = vunpack.c.h.b16 %v4113
    %v5177 = vunpack.c.l.b16 %v4114
    %v5178 = vunpack.c.h.b16 %v4114
    %v5179 = vunpack.c.l.b16 %v4115
    %v5180 = vunpack.c.l.b16 %v4116
    %v5181 = vunpack.c.h.b16 %v4116
    %v5182 = vunpack.c.l.b16 %v4117
    %v5183 = vunpack.c.h.b16 %v4117
    %v5184 = vunpack.c.l.b16 %v4118
    %v5185 = vunpack.c.h.b16 %v4118
    %v5186 = vunpack.c.l.b16 %v4119
    %v5187 = vunpack.c.l.b16 %v4120
    %v5188 = vunpack.c.h.b16 %v4120
    %v5189 = vunpack.c.l.b16 %v4121
    %v5190 = vunpack.c.h.b16 %v4121
    %v5191 = vunpack.c.l.b16 %v4122
    %v5192 = vunpack.c.h.b16 %v4122
    %v5193 = vunpack.c.l.b16 %v4123
    %v5194 = vunpack.c.l.b16 %v4124
    %v5195 = vunpack.c.h.b16 %v4124
    %v5196 = vunpack.c.l.b16 %v4125
    %v5197 = vunpack.c.h.b16 %v4125
    %v5198 = vunpack.c.l.b16 %v4126
    %v5199 = vunpack.c.h.b16 %v4126
    %v5200 = vunpack.c.l.b16 %v4127
    %v5201 = vunpack.c.l.b16 %v4128
    %v5202 = vunpack.c.h.b16 %v4128
    %v5203 = vunpack.c.l.b16 %v4129
    %v5204 = vunpack.c.h.b16 %v4129
    %v5205 = vunpack.c.l.b16 %v4130
    %v5206 = vunpack.c.h.b16 %v4130
    %v5207 = vunpack.c.l.b16 %v4131
    %v5208 = vunpack.c.l.b16 %v4132
    %v5209 = vunpack.c.h.b16 %v4132
    %v5210 = vunpack.c.l.b16 %v4133
    %v5211 = vunpack.c.h.b16 %v4133
    %v5212 = vunpack.c.l.b16 %v4134
    %v5213 = vunpack.c.h.b16 %v4134
    %v5214 = vunpack.c.l.b16 %v4135
    %v5215 = vunpack.c.l.b16 %v4136
    %v5216 = vunpack.c.h.b16 %v4136
    %v5217 = vunpack.c.l.b16 %v4137
    %v5218 = vunpack.c.h.b16 %v4137
    %v5219 = vunpack.c.l.b16 %v4138
    %v5220 = vunpack.c.h.b16 %v4138
    %v5221 = vunpack.c.l.b16 %v4139
    %v5222 = vunpack.c.l.b16 %v4140
    %v5223 = vunpack.c.h.b16 %v4140
    %v5224 = vunpack.c.l.b16 %v4141
    %v5225 = vunpack.c.h.b16 %v4141
    %v5226 = vunpack.c.l.b16 %v4142
    %v5227 = vunpack.c.h.b16 %v4142
    %v5228 = vunpack.c.l.b16 %v4143
    %v5229 = vunpack.c.l.b16 %v4144
    %v5230 = vunpack.c.h.b16 %v4144
    %v5231 = vunpack.c.l.b16 %v4145
    %v5232 = vunpack.c.h.b16 %v4145
    %v5233 = vunpack.c.l.b16 %v4146
    %v5234 = vunpack.c.h.b16 %v4146
    %v5235 = vunpack.c.l.b16 %v4147
    %v5236 = vunpack.c.l.b16 %v4148
    %v5237 = vunpack.c.h.b16 %v4148
    %v5238 = vunpack.c.l.b16 %v4149
    %v5239 = vunpack.c.h.b16 %v4149
    %v5240 = vunpack.c.l.b16 %v4150
    %v5241 = vunpack.c.h.b16 %v4150
    %v5242 = vunpack.c.l.b16 %v4151
    %v5243 = vunpack.c.l.b16 %v4152
    %v5244 = vunpack.c.h.b16 %v4152
    %v5245 = vunpack.c.l.b16 %v4153
    %v5246 = vunpack.c.h.b16 %v4153
    %v5247 = vunpack.c.l.b16 %v4154
    %v5248 = vunpack.c.h.b16 %v4154
    %v5249 = vunpack.c.l.b16 %v4155
    %v5250 = vunpack.c.l.b16 %v4156
    %v5251 = vunpack.c.h.b16 %v4156
    %v5252 = vunpack.c.l.b16 %v4157
    %v5253 = vunpack.c.h.b16 %v4157
    %v5254 = vunpack.c.l.b16 %v4158
    %v5255 = vunpack.c.h.b16 %v4158
    %v5256 = vunpack.c.l.b16 %v4159
    %v5257 = vunpack.c.l.b16 %v4160
    %v5258 = vunpack.c.h.b16 %v4160
    %v5259 = vunpack.c.l.b16 %v4161
    %v5260 = vunpack.c.h.b16 %v4161
    %v5261 = vunpack.c.l.b16 %v4162
    %v5262 = vunpack.c.h.b16 %v4162
    %v5263 = vunpack.c.l.b16 %v4163
    %v5264 = vunpack.c.l.b16 %v4164
    %v5265 = vunpack.c.h.b16 %v4164
    %v5266 = vunpack.c.l.b16 %v4165
    %v5267 = vunpack.c.h.b16 %v4165
    %v5268 = vunpack.c.l.b16 %v4166
    %v5269 = vunpack.c.h.b16 %v4166
    %v5270 = vunpack.c.l.b16 %v4167
    %v5271 = vunpack.c.l.b16 %v4168
    %v5272 = vunpack.c.h.b16 %v4168
    %v5273 = vunpack.c.l.b16 %v4169
    %v5274 = vunpack.c.h.b16 %v4169
    %v5275 = vunpack.c.l.b16 %v4170
    %v5276 = vunpack.c.h.b16 %v4170
    %v5277 = vunpack.c.l.b16 %v4171
    %v5278 = vunpack.c.l.b16 %v4172
    %v5279 = vunpack.c.h.b16 %v4172
    %v5280 = vunpack.c.l.b16 %v4173
    %v5281 = vunpack.c.h.b16 %v4173
    %v5282 = vunpack.c.l.b16 %v4174
    %v5283 = vunpack.c.h.b16 %v4174
    %v5284 = vunpack.c.l.b16 %v4175
    %v5285 = vunpack.c.l.b16 %v4176
    %v5286 = vunpack.c.h.b16 %v4176
    %v5287 = vunpack.c.l.b16 %v4177
    %v5288 = vunpack.c.h.b16 %v4177
    %v5289 = vunpack.c.l.b16 %v4178
    %v5290 = vunpack.c.h.b16 %v4178
    %v5291 = vunpack.c.l.b16 %v4179
    %v5292 = vunpack.c.l.b16 %v4180
    %v5293 = vunpack.c.h.b16 %v4180
    %v5294 = vunpack.c.l.b16 %v4181
    %v5295 = vunpack.c.h.b16 %v4181
    %v5296 = vunpack.c.l.b16 %v4182
    %v5297 = vunpack.c.h.b16 %v4182
    %v5298 = vunpack.c.l.b16 %v4183
    %v5299 = vunpack.c.l.b16 %v4184
    %v5300 = vunpack.c.h.b16 %v4184
    %v5301 = vunpack.c.l.b16 %v4185
    %v5302 = vunpack.c.h.b16 %v4185
    %v5303 = vunpack.c.l.b16 %v4186
    %v5304 = vunpack.c.h.b16 %v4186
    %v5305 = vunpack.c.l.b16 %v4187
    %v5306 = vunpack.c.l.b16 %v4188
    %v5307 = vunpack.c.h.b16 %v4188
    %v5308 = vunpack.c.l.b16 %v4189
    %v5309 = vunpack.c.h.b16 %v4189
    %v5310 = vunpack.c.l.b16 %v4190
    %v5311 = vunpack.c.h.b16 %v4190
    %v5312 = vunpack.c.l.b16 %v4191
    %v5313 = vunpack.c.l.b16 %v4192
    %v5314 = vunpack.c.h.b16 %v4192
    %v5315 = vunpack.c.l.b16 %v4193
    %v5316 = vunpack.c.h.b16 %v4193
    %v5317 = vunpack.c.l.b16 %v4194
    %v5318 = vunpack.c.h.b16 %v4194
    %v5319 = vunpack.c.l.b16 %v4195
    %v5320 = vunpack.c.l.b16 %v4196
    %v5321 = vunpack.c.h.b16 %v4196
    %v5322 = vunpack.c.l.b16 %v4197
    %v5323 = vunpack.c.h.b16 %v4197
    %v5324 = vunpack.c.l.b16 %v4198
    %v5325 = vunpack.c.h.b16 %v4198
    %v5326 = vunpack.c.l.b16 %v4199
    %v5327 = vunpack.c.l.b16 %v4200
    %v5328 = vunpack.c.h.b16 %v4200
    %v5329 = vunpack.c.l.b16 %v4201
    %v5330 = vunpack.c.h.b16 %v4201
    %v5331 = vunpack.c.l.b16 %v4202
    %v5332 = vunpack.c.h.b16 %v4202
    %v5333 = vunpack.c.l.b16 %v4203
    %v5334 = vunpack.c.l.b16 %v4204
    %v5335 = vunpack.c.h.b16 %v4204
    %v5336 = vunpack.c.l.b16 %v4205
    %v5337 = vunpack.c.h.b16 %v4205
    %v5338 = vunpack.c.l.b16 %v4206
    %v5339 = vunpack.c.h.b16 %v4206
    %v5340 = vunpack.c.l.b16 %v4207
    %v5341 = vunpack.c.l.b16 %v4208
    %v5342 = vunpack.c.h.b16 %v4208
    %v5343 = vunpack.c.l.b16 %v4209
    %v5344 = vunpack.c.h.b16 %v4209
    %v5345 = vunpack.c.l.b16 %v4210
    %v5346 = vunpack.c.h.b16 %v4210
    %v5347 = vunpack.c.l.b16 %v4211
    %v5348 = vunpack.c.l.b16 %v4212
    %v5349 = vunpack.c.h.b16 %v4212
    %v5350 = vunpack.c.l.b16 %v4213
    %v5351 = vunpack.c.h.b16 %v4213
    %v5352 = vunpack.c.l.b16 %v4214
    %v5353 = vunpack.c.h.b16 %v4214
    %v5354 = vunpack.c.l.b16 %v4215
    %v5355 = vunpack.c.l.b16 %v4216
    %v5356 = vunpack.c.h.b16 %v4216
    %v5357 = vunpack.c.l.b16 %v4217
    %v5358 = vunpack.c.h.b16 %v4217
    %v5359 = vunpack.c.l.b16 %v4218
    %v5360 = vunpack.c.h.b16 %v4218
    %v5361 = vunpack.c.l.b16 %v4219
    %v5362 = vunpack.c.l.b16 %v4220
    %v5363 = vunpack.c.h.b16 %v4220
    %v5364 = vunpack.c.l.b16 %v4221
    %v5365 = vunpack.c.h.b16 %v4221
    %v5366 = vunpack.c.l.b16 %v4222
    %v5367 = vunpack.c.h.b16 %v4222
    %v5368 = vunpack.c.l.b16 %v4223
    %v5369 = vunpack.c.l.b16 %v4224
    %v5370 = vunpack.c.h.b16 %v4224
    %v5371 = vunpack.c.l.b16 %v4225
    %v5372 = vunpack.c.h.b16 %v4225
    %v5373 = vunpack.c.l.b16 %v4226
    %v5374 = vunpack.c.h.b16 %v4226
    %v5375 = vunpack.c.l.b16 %v4227
    %v5376 = vunpack.c.l.b16 %v4228
    %v5377 = vunpack.c.h.b16 %v4228
    %v5378 = vunpack.c.l.b16 %v4229
    %v5379 = vunpack.c.h.b16 %v4229
    %v5380 = vunpack.c.l.b16 %v4230
    %v5381 = vunpack.c.h.b16 %v4230
    %v5382 = vunpack.c.l.b16 %v4231
    %v5383 = vunpack.c.l.b16 %v4232
    %v5384 = vunpack.c.h.b16 %v4232
    %v5385 = vunpack.c.l.b16 %v4233
    %v5386 = vunpack.c.h.b16 %v4233
    %v5387 = vunpack.c.l.b16 %v4234
    %v5388 = vunpack.c.h.b16 %v4234
    %v5389 = vunpack.c.l.b16 %v4235
    %v5390 = vunpack.c.l.b16 %v4236
    %v5391 = vunpack.c.h.b16 %v4236
    %v5392 = vunpack.c.l.b16 %v4237
    %v5393 = vunpack.c.h.b16 %v4237
    %v5394 = vunpack.c.l.b16 %v4238
    %v5395 = vunpack.c.h.b16 %v4238
    %v5396 = vunpack.c.l.b16 %v4239
    %v5397 = vunpack.c.l.b16 %v4240
    %v5398 = vunpack.c.h.b16 %v4240
    %v5399 = vunpack.c.l.b16 %v4241
    %v5400 = vunpack.c.h.b16 %v4241
    %v5401 = vunpack.c.l.b16 %v4242
    %v5402 = vunpack.c.h.b16 %v4242
    %v5403 = vunpack.c.l.b16 %v4243
    %v5404 = vunpack.c.l.b16 %v4244
    %v5405 = vunpack.c.h.b16 %v4244
    %v5406 = vunpack.c.l.b16 %v4245
    %v5407 = vunpack.c.h.b16 %v4245
    %v5408 = vunpack.c.l.b16 %v4246
    %v5409 = vunpack.c.h.b16 %v4246
    %v5410 = vunpack.c.l.b16 %v4247
    %v5411 = vunpack.c.l.b16 %v4248
    %v5412 = vunpack.c.h.b16 %v4248
    %v5413 = vunpack.c.l.b16 %v4249
    %v5414 = vunpack.c.h.b16 %v4249
    %v5415 = vunpack.c.l.b16 %v4250
    %v5416 = vunpack.c.h.b16 %v4250
    %v5417 = vunpack.c.l.b16 %v4251
    %v5418 = vunpack.c.l.b16 %v4252
    %v5419 = vunpack.c.h.b16 %v4252
    %v5420 = vunpack.c.l.b16 %v4253
    %v5421 = vunpack.c.h.b16 %v4253
    %v5422 = vunpack.c.l.b16 %v4254
    %v5423 = vunpack.c.h.b16 %v4254
    %v5424 = vunpack.c.l.b16 %v4255
    %v5425 = vunpack.c.l.b16 %v4256
    %v5426 = vunpack.c.h.b16 %v4256
    %v5427 = vunpack.c.l.b16 %v4257
    %v5428 = vunpack.c.h.b16 %v4257
    %v5429 = vunpack.c.l.b16 %v4258
    %v5430 = vunpack.c.h.b16 %v4258
    %v5431 = vunpack.c.l.b16 %v4259
    %v5432 = vunpack.c.l.b16 %v4260
    %v5433 = vunpack.c.h.b16 %v4260
    %v5434 = vunpack.c.l.b16 %v4261
    %v5435 = vunpack.c.h.b16 %v4261
    %v5436 = vunpack.c.l.b16 %v4262
    %v5437 = vunpack.c.h.b16 %v4262
    %v5438 = vunpack.c.l.b16 %v4263
    %v5439 = vunpack.c.l.b16 %v4264
    %v5440 = vunpack.c.h.b16 %v4264
    %v5441 = vunpack.c.l.b16 %v4265
    %v5442 = vunpack.c.h.b16 %v4265
    %v5443 = vunpack.c.l.b16 %v4266
    %v5444 = vunpack.c.h.b16 %v4266
    %v5445 = vunpack.c.l.b16 %v4267
    %v5446 = vunpack.c.l.b16 %v4268
    %v5447 = vunpack.c.h.b16 %v4268
    %v5448 = vunpack.c.l.b16 %v4269
    %v5449 = vunpack.c.h.b16 %v4269
    %v5450 = vunpack.c.l.b16 %v4270
    %v5451 = vunpack.c.h.b16 %v4270
    %v5452 = vunpack.c.l.b16 %v4271
    %v5453 = vunpack.c.l.b16 %v4272
    %v5454 = vunpack.c.h.b16 %v4272
    %v5455 = vunpack.c.l.b16 %v4273
    %v5456 = vunpack.c.h.b16 %v4273
    %v5457 = vunpack.c.l.b16 %v4274
    %v5458 = vunpack.c.h.b16 %v4274
    %v5459 = vunpack.c.l.b16 %v4275
    %v5460 = vunpack.c.l.b16 %v4276
    %v5461 = vunpack.c.h.b16 %v4276
    %v5462 = vunpack.c.l.b16 %v4277
    %v5463 = vunpack.c.h.b16 %v4277
    %v5464 = vunpack.c.l.b16 %v4278
    %v5465 = vunpack.c.h.b16 %v4278
    %v5466 = vunpack.c.l.b16 %v4279
    %v5467 = vunpack.c.l.b16 %v4280
    %v5468 = vunpack.c.h.b16 %v4280
    %v5469 = vunpack.c.l.b16 %v4281
    %v5470 = vunpack.c.h.b16 %v4281
    %v5471 = vunpack.c.l.b16 %v4282
    %v5472 = vunpack.c.h.b16 %v4282
    %v5473 = vunpack.c.l.b16 %v4283
    %v5474 = vunpack.c.l.b16 %v4284
    %v5475 = vunpack.c.h.b16 %v4284
    %v5476 = vunpack.c.l.b16 %v4285
    %v5477 = vunpack.c.h.b16 %v4285
    %v5478 = vunpack.c.l.b16 %v4286
    %v5479 = vunpack.c.h.b16 %v4286
    %v5480 = vunpack.c.l.b16 %v4287
    %v5481 = vunpack.c.l.b16 %v4288
    %v5482 = vunpack.c.h.b16 %v4288
    %v5483 = vunpack.c.l.b16 %v4289
    %v5484 = vunpack.c.h.b16 %v4289
    %v5485 = vunpack.c.l.b16 %v4290
    %v5486 = vunpack.c.h.b16 %v4290
    %v5487 = vunpack.c.l.b16 %v4291
    %v5488 = vunpack.c.l.b16 %v4292
    %v5489 = vunpack.c.h.b16 %v4292
    %v5490 = vunpack.c.l.b16 %v4293
    %v5491 = vunpack.c.h.b16 %v4293
    %v5492 = vunpack.c.l.b16 %v4294
    %v5493 = vunpack.c.h.b16 %v4294
    %v5494 = vunpack.c.l.b16 %v4295
    %v5495 = vunpack.c.l.b16 %v4296
    %v5496 = vunpack.c.h.b16 %v4296
    %v5497 = vunpack.c.l.b16 %v4297
    %v5498 = vunpack.c.h.b16 %v4297
    %v5499 = vunpack.c.l.b16 %v4298
    %v5500 = vunpack.c.h.b16 %v4298
    %v5501 = vunpack.c.l.b16 %v4299
    %v5502 = vunpack.c.l.b16 %v4300
    %v5503 = vunpack.c.h.b16 %v4300
    %v5504 = vunpack.c.l.b16 %v4301
    %v5505 = vunpack.c.h.b16 %v4301
    %v5506 = vunpack.c.l.b16 %v4302
    %v5507 = vunpack.c.h.b16 %v4302
    %v5508 = vunpack.c.l.b16 %v4303
    %v5509 = vunpack.c.l.b16 %v4304
    %v5510 = vunpack.c.h.b16 %v4304
    %v5511 = vunpack.c.l.b16 %v4305
    %v5512 = vunpack.c.h.b16 %v4305
    %v5513 = vunpack.c.l.b16 %v4306
    %v5514 = vunpack.c.h.b16 %v4306
    %v5515 = vunpack.c.l.b16 %v4307
    %v5516 = vunpack.c.l.b16 %v4308
    %v5517 = vunpack.c.h.b16 %v4308
    %v5518 = vunpack.c.l.b16 %v4309
    %v5519 = vunpack.c.h.b16 %v4309
    %v5520 = vunpack.c.l.b16 %v4310
    %v5521 = vunpack.c.h.b16 %v4310
    %v5522 = vunpack.c.l.b16 %v4311
    %v5523 = vunpack.c.l.b16 %v4312
    %v5524 = vunpack.c.h.b16 %v4312
    %v5525 = vunpack.c.l.b16 %v4313
    %v5526 = vunpack.c.h.b16 %v4313
    %v5527 = vunpack.c.l.b16 %v4314
    %v5528 = vunpack.c.h.b16 %v4314
    %v5529 = vunpack.c.l.b16 %v4315
    %v5530 = vunpack.c.l.b16 %v4316
    %v5531 = vunpack.c.h.b16 %v4316
    %v5532 = vunpack.c.l.b16 %v4317
    %v5533 = vunpack.c.h.b16 %v4317
    %v5534 = vunpack.c.l.b16 %v4318
    %v5535 = vunpack.c.h.b16 %v4318
    %v5536 = vunpack.c.l.b16 %v4319
    %v5537 = vunpack.c.l.b16 %v4320
    %v5538 = vunpack.c.h.b16 %v4320
    %v5539 = vunpack.c.l.b16 %v4321
    %v5540 = vunpack.c.h.b16 %v4321
    %v5541 = vunpack.c.l.b16 %v4322
    %v5542 = vunpack.c.h.b16 %v4322
    %v5543 = vunpack.c.l.b16 %v4323
    %v5544 = vunpack.c.l.b16 %v4324
    %v5545 = vunpack.c.h.b16 %v4324
    %v5546 = vunpack.c.l.b16 %v4325
    %v5547 = vunpack.c.h.b16 %v4325
    %v5548 = vunpack.c.l.b16 %v4326
    %v5549 = vunpack.c.h.b16 %v4326
    %v5550 = vunpack.c.l.b16 %v4327
    %v5551 = vunpack.c.l.b16 %v4328
    %v5552 = vunpack.c.h.b16 %v4328
    %v5553 = vunpack.c.l.b16 %v4329
    %v5554 = vunpack.c.h.b16 %v4329
    %v5555 = vunpack.c.l.b16 %v4330
    %v5556 = vunpack.c.h.b16 %v4330
    %v5557 = vunpack.c.l.b16 %v4331
    %v5558 = vunpack.c.l.b16 %v4332
    %v5559 = vunpack.c.h.b16 %v4332
    %v5560 = vunpack.c.l.b16 %v4333
    %v5561 = vunpack.c.h.b16 %v4333
    %v5562 = vunpack.c.l.b16 %v4334
    %v5563 = vunpack.c.h.b16 %v4334
    %v5564 = vunpack.c.l.b16 %v4335
    %v5565 = vunpack.c.l.b16 %v4336
    %v5566 = vunpack.c.h.b16 %v4336
    %v5567 = vunpack.c.l.b16 %v4337
    %v5568 = vunpack.c.h.b16 %v4337
    %v5569 = vunpack.c.l.b16 %v4338
    %v5570 = vunpack.c.h.b16 %v4338
    %v5571 = vunpack.c.l.b16 %v4339
    %v5572 = vunpack.c.l.b16 %v4340
    %v5573 = vunpack.c.h.b16 %v4340
    %v5574 = vunpack.c.l.b16 %v4341
    %v5575 = vunpack.c.h.b16 %v4341
    %v5576 = vunpack.c.l.b16 %v4342
    %v5577 = vunpack.c.h.b16 %v4342
    %v5578 = vunpack.c.l.b16 %v4343
    %v5579 = vunpack.c.l.b16 %v4344
    %v5580 = vunpack.c.h.b16 %v4344
    %v5581 = vunpack.c.l.b16 %v4345
    %v5582 = vunpack.c.h.b16 %v4345
    %v5583 = vunpack.c.l.b16 %v4346
    %v5584 = vunpack.c.h.b16 %v4346
    %v5585 = vunpack.c.l.b16 %v4347
    %v5586 = vunpack.c.l.b16 %v4348
    %v5587 = vunpack.c.h.b16 %v4348
    %v5588 = vunpack.c.l.b16 %v4349
    %v5589 = vunpack.c.h.b16 %v4349
    %v5590 = vunpack.c.l.b16 %v4350
    %v5591 = vunpack.c.h.b16 %v4350
    %v5592 = vunpack.c.l.b16 %v4351
    %v5593 = vunpack.c.l.b16 %v4352
    %v5594 = vunpack.c.h.b16 %v4352
    %v5595 = vunpack.c.l.b16 %v4353
    %v5596 = vunpack.c.h.b16 %v4353
    %v5597 = vunpack.c.l.b16 %v4354
    %v5598 = vunpack.c.h.b16 %v4354
    %v5599 = vunpack.c.l.b16 %v4355
    %v5600 = vunpack.c.l.b16 %v4356
    %v5601 = vunpack.c.h.b16 %v4356
    %v5602 = vunpack.c.l.b16 %v4357
    %v5603 = vunpack.c.h.b16 %v4357
    %v5604 = vunpack.c.l.b16 %v4358
    %v5605 = vunpack.c.h.b16 %v4358
    %v5606 = vunpack.c.l.b16 %v4359
    %v5607 = vunpack.c.l.b16 %v4360
    %v5608 = vunpack.c.h.b16 %v4360
    %v5609 = vunpack.c.l.b16 %v4361
    %v5610 = vunpack.c.h.b16 %v4361
    %v5611 = vunpack.c.l.b16 %v4362
    %v5612 = vunpack.c.h.b16 %v4362
    %v5613 = vunpack.c.l.b16 %v4363
    %v5614 = vunpack.c.l.b16 %v4364
    %v5615 = vunpack.c.h.b16 %v4364
    %v5616 = vunpack.c.l.b16 %v4365
    %v5617 = vunpack.c.h.b16 %v4365
    %v5618 = vunpack.c.l.b16 %v4366
    %v5619 = vunpack.c.h.b16 %v4366
    %v5620 = vunpack.c.l.b16 %v4367
    %v5621 = vunpack.c.l.b16 %v4368
    %v5622 = vunpack.c.h.b16 %v4368
    %v5623 = vunpack.c.l.b16 %v4369
    %v5624 = vunpack.c.h.b16 %v4369
    %v5625 = vunpack.c.l.b16 %v4370
    %v5626 = vunpack.c.h.b16 %v4370
    %v5627 = vunpack.c.l.b16 %v4371
    %v5628 = vunpack.c.l.b16 %v4372
    %v5629 = vunpack.c.h.b16 %v4372
    %v5630 = vunpack.c.l.b16 %v4373
    %v5631 = vunpack.c.h.b16 %v4373
    %v5632 = vunpack.c.l.b16 %v4374
    %v5633 = vunpack.c.h.b16 %v4374
    %v5634 = vunpack.c.l.b16 %v4375
    %v5635 = vunpack.c.l.b16 %v4376
    %v5636 = vunpack.c.h.b16 %v4376
    %v5637 = vunpack.c.l.b16 %v4377
    %v5638 = vunpack.c.h.b16 %v4377
    %v5639 = vunpack.c.l.b16 %v4378
    %v5640 = vunpack.c.h.b16 %v4378
    %v5641 = vunpack.c.l.b16 %v4379
    %v5642 = vunpack.c.l.b16 %v4380
    %v5643 = vunpack.c.h.b16 %v4380
    %v5644 = vunpack.c.l.b16 %v4381
    %v5645 = vunpack.c.h.b16 %v4381
    %v5646 = vunpack.c.l.b16 %v4382
    %v5647 = vunpack.c.h.b16 %v4382
    %v5648 = vunpack.c.l.b16 %v4383
    %v5649 = vunpack.c.l.b16 %v4384
    %v5650 = vunpack.c.h.b16 %v4384
    %v5651 = vunpack.c.l.b16 %v4385
    %v5652 = vunpack.c.h.b16 %v4385
    %v5653 = vunpack.c.l.b16 %v4386
    %v5654 = vunpack.c.h.b16 %v4386
    %v5655 = vunpack.c.l.b16 %v4387
    %v5656 = vunpack.c.l.b16 %v4388
    %v5657 = vunpack.c.h.b16 %v4388
    %v5658 = vunpack.c.l.b16 %v4389
    %v5659 = vunpack.c.h.b16 %v4389
    %v5660 = vunpack.c.l.b16 %v4390
    %v5661 = vunpack.c.h.b16 %v4390
    %v5662 = vunpack.c.l.b16 %v4391
    %v5663 = vunpack.c.l.b16 %v4392
    %v5664 = vunpack.c.h.b16 %v4392
    %v5665 = vunpack.c.l.b16 %v4393
    %v5666 = vunpack.c.h.b16 %v4393
    %v5667 = vunpack.c.l.b16 %v4394
    %v5668 = vunpack.c.h.b16 %v4394
    %v5669 = vunpack.c.l.b16 %v4395
    %v5670 = vunpack.c.l.b16 %v4396
    %v5671 = vunpack.c.h.b16 %v4396
    %v5672 = vunpack.c.l.b16 %v4397
    %v5673 = vunpack.c.h.b16 %v4397
    %v5674 = vunpack.c.l.b16 %v4398
    %v5675 = vunpack.c.h.b16 %v4398
    %v5676 = vunpack.c.l.b16 %v4399
    %v5677 = vunpack.c.l.b16 %v4400
    %v5678 = vunpack.c.h.b16 %v4400
    %v5679 = vunpack.c.l.b16 %v4401
    %v5680 = vunpack.c.h.b16 %v4401
    %v5681 = vunpack.c.l.b16 %v4402
    %v5682 = vunpack.c.h.b16 %v4402
    %v5683 = vunpack.c.l.b16 %v4403
    %v5684 = vunpack.c.l.b16 %v4404
    %v5685 = vunpack.c.h.b16 %v4404
    %v5686 = vunpack.c.l.b16 %v4405
    %v5687 = vunpack.c.h.b16 %v4405
    %v5688 = vunpack.c.l.b16 %v4406
    %v5689 = vunpack.c.h.b16 %v4406
    %v5690 = vunpack.c.l.b16 %v4407
    %v5691 = vunpack.c.l.b16 %v4408
    %v5692 = vunpack.c.h.b16 %v4408
    %v5693 = vunpack.c.l.b16 %v4409
    %v5694 = vunpack.c.h.b16 %v4409
    %v5695 = vunpack.c.l.b16 %v4410
    %v5696 = vunpack.c.h.b16 %v4410
    %v5697 = vunpack.c.l.b16 %v4411
    %v5698 = vunpack.c.l.b16 %v4412
    %v5699 = vunpack.c.h.b16 %v4412
    %v5700 = vunpack.c.l.b16 %v4413
    %v5701 = vunpack.c.h.b16 %v4413
    %v5702 = vunpack.c.l.b16 %v4414
    %v5703 = vunpack.c.h.b16 %v4414
    %v5704 = vunpack.c.l.b16 %v4415
    %v5705 = vunpack.c.l.b16 %v4416
    %v5706 = vunpack.c.h.b16 %v4416
    %v5707 = vunpack.c.l.b16 %v4417
    %v5708 = vunpack.c.h.b16 %v4417
    %v5709 = vunpack.c.l.b16 %v4418
    %v5710 = vunpack.c.h.b16 %v4418
    %v5711 = vunpack.c.l.b16 %v4419
    %v5712 = vunpack.c.l.b16 %v4420
    %v5713 = vunpack.c.h.b16 %v4420
    %v5714 = vunpack.c.l.b16 %v4421
    %v5715 = vunpack.c.h.b16 %v4421
    %v5716 = vunpack.c.l.b16 %v4422
    %v5717 = vunpack.c.h.b16 %v4422
    %v5718 = vunpack.c.l.b16 %v4423
    %v5719 = vunpack.c.l.b16 %v4424
    %v5720 = vunpack.c.h.b16 %v4424
    %v5721 = vunpack.c.l.b16 %v4425
    %v5722 = vunpack.c.h.b16 %v4425
    %v5723 = vunpack.c.l.b16 %v4426
    %v5724 = vunpack.c.h.b16 %v4426
    %v5725 = vunpack.c.l.b16 %v4427
    %v5726 = vunpack.c.l.b16 %v4428
    %v5727 = vunpack.c.h.b16 %v4428
    %v5728 = vunpack.c.l.b16 %v4429
    %v5729 = vunpack.c.h.b16 %v4429
    %v5730 = vunpack.c.l.b16 %v4430
    %v5731 = vunpack.c.h.b16 %v4430
    %v5732 = vunpack.c.l.b16 %v4431
    %v5733 = vunpack.c.l.b16 %v4432
    %v5734 = vunpack.c.h.b16 %v4432
    %v5735 = vunpack.c.l.b16 %v4433
    %v5736 = vunpack.c.h.b16 %v4433
    %v5737 = vunpack.c.l.b16 %v4434
    %v5738 = vunpack.c.h.b16 %v4434
    %v5739 = vunpack.c.l.b16 %v4435
    %v5740 = vunpack.c.l.b16 %v4436
    %v5741 = vunpack.c.h.b16 %v4436
    %v5742 = vunpack.c.l.b16 %v4437
    %v5743 = vunpack.c.h.b16 %v4437
    %v5744 = vunpack.c.l.b16 %v4438
    %v5745 = vunpack.c.h.b16 %v4438
    %v5746 = vunpack.c.l.b16 %v4439
    %v5747 = vunpack.c.l.b16 %v4440
    %v5748 = vunpack.c.h.b16 %v4440
    %v5749 = vunpack.c.l.b16 %v4441
    %v5750 = vunpack.c.h.b16 %v4441
    %v5751 = vunpack.c.l.b16 %v4442
    %v5752 = vunpack.c.h.b16 %v4442
    %v5753 = vunpack.c.l.b16 %v4443
    %v5754 = vunpack.c.l.b16 %v4444
    %v5755 = vunpack.c.h.b16 %v4444
    %v5756 = vunpack.c.l.b16 %v4445
    %v5757 = vunpack.c.h.b16 %v4445
    %v5758 = vunpack.c.l.b16 %v4446
    %v5759 = vunpack.c.h.b16 %v4446
    %v5760 = vunpack.c.l.b16 %v4447
    %v5761 = vunpack.c.l.b16 %v4448
    %v5762 = vunpack.c.h.b16 %v4448
    %v5763 = vunpack.c.l.b16 %v4449
    %v5764 = vunpack.c.h.b16 %v4449
    %v5765 = vunpack.c.l.b16 %v4450
    %v5766 = vunpack.c.h.b16 %v4450
    %v5767 = vunpack.c.l.b16 %v4451
    %v5768 = vunpack.c.l.b16 %v4452
    %v5769 = vunpack.c.h.b16 %v4452
    %v5770 = vunpack.c.l.b16 %v4453
    %v5771 = vunpack.c.h.b16 %v4453
    %v5772 = vunpack.c.l.b16 %v4454
    %v5773 = vunpack.c.h.b16 %v4454
    %v5774 = vunpack.c.l.b16 %v4455
    %v5775 = vunpack.c.l.b16 %v4456
    %v5776 = vunpack.c.h.b16 %v4456
    %v5777 = vunpack.c.l.b16 %v4457
    %v5778 = vunpack.c.h.b16 %v4457
    %v5779 = vunpack.c.l.b16 %v4458
    %v5780 = vunpack.c.h.b16 %v4458
    %v5781 = vunpack.c.l.b16 %v4459
    %v5782 = vunpack.c.l.b16 %v4460
    %v5783 = vunpack.c.h.b16 %v4460
    %v5784 = vunpack.c.l.b16 %v4461
    %v5785 = vunpack.c.h.b16 %v4461
    %v5786 = vunpack.c.l.b16 %v4462
    %v5787 = vunpack.c.h.b16 %v4462
    %v5788 = vunpack.c.l.b16 %v4463
    %v5789 = vunpack.c.l.b16 %v4464
    %v5790 = vunpack.c.h.b16 %v4464
    %v5791 = vunpack.c.l.b16 %v4465
    %v5792 = vunpack.c.h.b16 %v4465
    %v5793 = vunpack.c.l.b16 %v4466
    %v5794 = vunpack.c.h.b16 %v4466
    %v5795 = vunpack.c.l.b16 %v4467
    %v5796 = vunpack.c.l.b16 %v4468
    %v5797 = vunpack.c.h.b16 %v4468
    %v5798 = vunpack.c.l.b16 %v4469
    %v5799 = vunpack.c.h.b16 %v4469
    %v5800 = vunpack.c.l.b16 %v4470
    %v5801 = vunpack.c.h.b16 %v4470
    %v5802 = vunpack.c.l.b16 %v4471
    %v5803 = vunpack.c.l.b16 %v4472
    %v5804 = vunpack.c.h.b16 %v4472
    %v5805 = vunpack.c.l.b16 %v4473
    %v5806 = vunpack.c.h.b16 %v4473
    %v5807 = vunpack.c.l.b16 %v4474
    %v5808 = vunpack.c.h.b16 %v4474
    %v5809 = vunpack.c.l.b16 %v4475
    %v5810 = vunpack.c.l.b16 %v4476
    %v5811 = vunpack.c.h.b16 %v4476
    %v5812 = vunpack.c.l.b16 %v4477
    %v5813 = vunpack.c.h.b16 %v4477
    %v5814 = vunpack.c.l.b16 %v4478
    %v5815 = vunpack.c.h.b16 %v4478
    %v5816 = vunpack.c.l.b16 %v4479
    %v5817 = vunpack.c.l.b16 %v4480
    %v5818 = vunpack.c.h.b16 %v4480
    %v5819 = vunpack.c.l.b16 %v4481
    %v5820 = vunpack.c.h.b16 %v4481
    %v5821 = vunpack.c.l.b16 %v4482
    %v5822 = vunpack.c.h.b16 %v4482
    %v5823 = vunpack.c.l.b16 %v4483
    %v5824 = vunpack.c.l.b16 %v4484
    %v5825 = vunpack.c.h.b16 %v4484
    %v5826 = vunpack.c.l.b16 %v4485
    %v5827 = vunpack.c.h.b16 %v4485
    %v5828 = vunpack.c.l.b16 %v4486
    %v5829 = vunpack.c.h.b16 %v4486
    %v5830 = vunpack.c.l.b16 %v4487
    %v5831 = vunpack.c.l.b16 %v4488
    %v5832 = vunpack.c.h.b16 %v4488
    %v5833 = vunpack.c.l.b16 %v4489
    %v5834 = vunpack.c.h.b16 %v4489
    %v5835 = vunpack.c.l.b16 %v4490
    %v5836 = vunpack.c.h.b16 %v4490
    %v5837 = vunpack.c.l.b16 %v4491
    %v5838 = vunpack.c.l.b16 %v4492
    %v5839 = vunpack.c.h.b16 %v4492
    %v5840 = vunpack.c.l.b16 %v4493
    %v5841 = vunpack.c.h.b16 %v4493
    %v5842 = vunpack.c.l.b16 %v4494
    %v5843 = vunpack.c.h.b16 %v4494
    %v5844 = vunpack.c.l.b16 %v4495
    %v5845 = vunpack.c.l.b16 %v4496
    %v5846 = vunpack.c.h.b16 %v4496
    %v5847 = vunpack.c.l.b16 %v4497
    %v5848 = vunpack.c.h.b16 %v4497
    %v5849 = vunpack.c.l.b16 %v4498
    %v5850 = vunpack.c.h.b16 %v4498
    %v5851 = vunpack.c.l.b16 %v4499
    %v5852 = vunpack.c.l.b16 %v4500
    %v5853 = vunpack.c.h.b16 %v4500
    %v5854 = vunpack.c.l.b16 %v4501
    %v5855 = vunpack.c.h.b16 %v4501
    %v5856 = vunpack.c.l.b16 %v4502
    %v5857 = vunpack.c.h.b16 %v4502
    %v5858 = vunpack.c.l.b16 %v4503
    %v5859 = vunpack.c.l.b16 %v4504
    %v5860 = vunpack.c.h.b16 %v4504
    %v5861 = vunpack.c.l.b16 %v4505
    %v5862 = vunpack.c.h.b16 %v4505
    %v5863 = vunpack.c.l.b16 %v4506
    %v5864 = vunpack.c.h.b16 %v4506
    %v5865 = vunpack.c.l.b16 %v4507
    %v5866 = vunpack.c.l.b16 %v4508
    %v5867 = vunpack.c.h.b16 %v4508
    %v5868 = vunpack.c.l.b16 %v4509
    %v5869 = vunpack.c.h.b16 %v4509
    %v5870 = vunpack.c.l.b16 %v4510
    %v5871 = vunpack.c.h.b16 %v4510
    %v5872 = vunpack.c.l.b16 %v4511
    %v5873 = vunpack.c.l.b16 %v4512
    %v5874 = vunpack.c.h.b16 %v4512
    %v5875 = vunpack.c.l.b16 %v4513
    %v5876 = vunpack.c.h.b16 %v4513
    %v5877 = vunpack.c.l.b16 %v4514
    %v5878 = vunpack.c.h.b16 %v4514
    %v5879 = vunpack.c.l.b16 %v4515
    %v5880 = vunpack.c.l.b16 %v4516
    %v5881 = vunpack.c.h.b16 %v4516
    %v5882 = vunpack.c.l.b16 %v4517
    %v5883 = vunpack.c.h.b16 %v4517
    %v5884 = vunpack.c.l.b16 %v4518
    %v5885 = vunpack.c.h.b16 %v4518
    %v5886 = vunpack.c.l.b16 %v4519
    %v5887 = vunpack.c.l.b16 %v4520
    %v5888 = vunpack.c.h.b16 %v4520
    %v5889 = vunpack.c.l.b16 %v4521
    %v5890 = vunpack.c.h.b16 %v4521
    %v5891 = vunpack.c.l.b16 %v4522
    %v5892 = vunpack.c.h.b16 %v4522
    %v5893 = vunpack.c.l.b16 %v4523
    %v5894 = vunpack.c.l.b16 %v4524
    %v5895 = vunpack.c.h.b16 %v4524
    %v5896 = vunpack.c.l.b16 %v4525
    %v5897 = vunpack.c.h.b16 %v4525
    %v5898 = vunpack.c.l.b16 %v4526
    %v5899 = vunpack.c.h.b16 %v4526
    %v5900 = vunpack.c.l.b16 %v4527
    %v5901 = vunpack.c.l.b16 %v4528
    %v5902 = vunpack.c.h.b16 %v4528
    %v5903 = vunpack.c.l.b16 %v4529
    %v5904 = vunpack.c.h.b16 %v4529
    %v5905 = vunpack.c.l.b16 %v4530
    %v5906 = vunpack.c.h.b16 %v4530
    %v5907 = vunpack.c.l.b16 %v4531
    %v5908 = vunpack.c.l.b16 %v4532
    %v5909 = vunpack.c.h.b16 %v4532
    %v5910 = vunpack.c.l.b16 %v4533
    %v5911 = vunpack.c.h.b16 %v4533
    %v5912 = vunpack.c.l.b16 %v4534
    %v5913 = vunpack.c.h.b16 %v4534
    %v5914 = vunpack.c.l.b16 %v4535
    %v5915 = vunpack.c.l.b16 %v4536
    %v5916 = vunpack.c.h.b16 %v4536
    %v5917 = vunpack.c.l.b16 %v4537
    %v5918 = vunpack.c.h.b16 %v4537
    %v5919 = vunpack.c.l.b16 %v4538
    %v5920 = vunpack.c.h.b16 %v4538
    %v5921 = vunpack.c.l.b16 %v4539
    %v5922 = vunpack.c.l.b16 %v4540
    %v5923 = vunpack.c.h.b16 %v4540
    %v5924 = vunpack.c.l.b16 %v4541
    %v5925 = vunpack.c.h.b16 %v4541
    %v5926 = vunpack.c.l.b16 %v4542
    %v5927 = vunpack.c.h.b16 %v4542
    %v5928 = vunpack.c.l.b16 %v4543
    %v5929 = vunpack.c.l.b16 %v4544
    %v5930 = vunpack.c.h.b16 %v4544
    %v5931 = vunpack.c.l.b16 %v4545
    %v5932 = vunpack.c.h.b16 %v4545
    %v5933 = vunpack.c.l.b16 %v4546
    %v5934 = vunpack.c.h.b16 %v4546
    %v5935 = vunpack.c.l.b16 %v4547
    %v5936 = vunpack.c.l.b16 %v4548
    %v5937 = vunpack.c.h.b16 %v4548
    %v5938 = vunpack.c.l.b16 %v4549
    %v5939 = vunpack.c.h.b16 %v4549
    %v5940 = vunpack.c.l.b16 %v4550
    %v5941 = vunpack.c.h.b16 %v4550
    %v5942 = vunpack.c.l.b16 %v4551
    %v5943 = vunpack.c.l.b16 %v4552
    %v5944 = vunpack.c.h.b16 %v4552
    %v5945 = vunpack.c.l.b16 %v4553
    %v5946 = vunpack.c.h.b16 %v4553
    %v5947 = vunpack.c.l.b16 %v4554
    %v5948 = vunpack.c.h.b16 %v4554
    %v5949 = vunpack.c.l.b16 %v4555
    %v5950 = vunpack.c.l.b16 %v4556
    %v5951 = vunpack.c.h.b16 %v4556
    %v5952 = vunpack.c.l.b16 %v4557
    %v5953 = vunpack.c.h.b16 %v4557
    %v5954 = vunpack.c.l.b16 %v4558
    %v5955 = vunpack.c.h.b16 %v4558
    %v5956 = vunpack.c.l.b16 %v4559
    %v5957 = vunpack.c.l.b16 %v4560
    %v5958 = vunpack.c.h.b16 %v4560
    %v5959 = vunpack.c.l.b16 %v4561
    %v5960 = vunpack.c.h.b16 %v4561
    %v5961 = vunpack.c.l.b16 %v4562
    %v5962 = vunpack.c.h.b16 %v4562
    %v5963 = vunpack.c.l.b16 %v4563
    %v5964 = vunpack.c.l.b16 %v4564
    %v5965 = vunpack.c.h.b16 %v4564
    %v5966 = vunpack.c.l.b16 %v4565
    %v5967 = vunpack.c.h.b16 %v4565
    %v5968 = vunpack.c.l.b16 %v4566
    %v5969 = vunpack.c.h.b16 %v4566
    %v5970 = vunpack.c.l.b16 %v4567
    %v5971 = vunpack.c.l.b16 %v4568
    %v5972 = vunpack.c.h.b16 %v4568
    %v5973 = vunpack.c.l.b16 %v4569
    %v5974 = vunpack.c.h.b16 %v4569
    %v5975 = vunpack.c.l.b16 %v4570
    %v5976 = vunpack.c.h.b16 %v4570
    %v5977 = vunpack.c.l.b16 %v4571
    %v5978 = vunpack.c.l.b16 %v4572
    %v5979 = vunpack.c.h.b16 %v4572
    %v5980 = vunpack.c.l.b16 %v4573
    %v5981 = vunpack.c.h.b16 %v4573
    %v5982 = vunpack.c.l.b16 %v4574
    %v5983 = vunpack.c.h.b16 %v4574
    %v5984 = vunpack.c.l.b16 %v4575
    %v5985 = vunpack.c.l.b16 %v4576
    %v5986 = vunpack.c.h.b16 %v4576
    %v5987 = vunpack.c.l.b16 %v4577
    %v5988 = vunpack.c.h.b16 %v4577
    %v5989 = vunpack.c.l.b16 %v4578
    %v5990 = vunpack.c.h.b16 %v4578
    %v5991 = vunpack.c.l.b16 %v4579
    %v5992 = vunpack.c.l.b16 %v4580
    %v5993 = vunpack.c.h.b16 %v4580
    %v5994 = vunpack.c.l.b16 %v4581
    %v5995 = vunpack.c.h.b16 %v4581
    %v5996 = vunpack.c.l.b16 %v4582
    %v5997 = vunpack.c.h.b16 %v4582
    %v5998 = vunpack.c.l.b16 %v4583
    %v5999 = vunpack.c.l.b16 %v4584
    %v6000 = vunpack.c.h.b16 %v4584
    %v6001 = vunpack.c.l.b16 %v4585
    %v6002 = vunpack.c.h.b16 %v4585
    %v6003 = vunpack.c.l.b16 %v4586
    %v6004 = vunpack.c.h.b16 %v4586
    %v6005 = vunpack.c.l.b16 %v4587
    %v6006 = vunpack.c.l.b16 %v4588
    %v6007 = vunpack.c.h.b16 %v4588
    %v6008 = vunpack.c.l.b16 %v4589
    %v6009 = vunpack.c.h.b16 %v4589
    %v6010 = vunpack.c.l.b16 %v4590
    %v6011 = vunpack.c.h.b16 %v4590
    %v6012 = vunpack.c.l.b16 %v4591
    %v6013 = vunpack.c.l.b16 %v4592
    %v6014 = vunpack.c.h.b16 %v4592
    %v6015 = vunpack.c.l.b16 %v4593
    %v6016 = vunpack.c.h.b16 %v4593
    %v6017 = vunpack.c.l.b16 %v4594
    %v6018 = vunpack.c.h.b16 %v4594
    %v6019 = vunpack.c.l.b16 %v4595
    %v6020 = vpack.c.b16 %v5131, %v5124
    %v6021 = vpack.c.b16 %v5132, %v5125
    %v6022 = vpack.c.b16 %v5133, %v5126
    %v6023 = vpack.c.b16 %v5134, %v5127
    %v6024 = vpack.c.b16 %v5135, %v5128
    %v6025 = vpack.c.b16 %v5136, %v5129
    %v6026 = vpack.c.b16 %v5137, %v5130
    %v6027 = vpack.c.b16 %v5145, %v5138
    %v6028 = vpack.c.b16 %v5146, %v5139
    %v6029 = vpack.c.b16 %v5147, %v5140
    %v6030 = vpack.c.b16 %v5148, %v5141
    %v6031 = vpack.c.b16 %v5149, %v5142
    %v6032 = vpack.c.b16 %v5150, %v5143
    %v6033 = vpack.c.b16 %v5151, %v5144
    %v6034 = vpack.c.b16 %v5159, %v5152
    %v6035 = vpack.c.b16 %v5160, %v5153
    %v6036 = vpack.c.b16 %v5161, %v5154
    %v6037 = vpack.c.b16 %v5162, %v5155
    %v6038 = vpack.c.b16 %v5163, %v5156
    %v6039 = vpack.c.b16 %v5164, %v5157
    %v6040 = vpack.c.b16 %v5165, %v5158
    %v6041 = vpack.c.b16 %v5173, %v5166
    %v6042 = vpack.c.b16 %v5174, %v5167
    %v6043 = vpack.c.b16 %v5175, %v5168
    %v6044 = vpack.c.b16 %v5176, %v5169
    %v6045 = vpack.c.b16 %v5177, %v5170
    %v6046 = vpack.c.b16 %v5178, %v5171
    %v6047 = vpack.c.b16 %v5179, %v5172
    %v6048 = vpack.c.b16 %v5187, %v5180
    %v6049 = vpack.c.b16 %v5188, %v5181
    %v6050 = vpack.c.b16 %v5189, %v5182
    %v6051 = vpack.c.b16 %v5190, %v5183
    %v6052 = vpack.c.b16 %v5191, %v5184
    %v6053 = vpack.c.b16 %v5192, %v5185
    %v6054 = vpack.c.b16 %v5193, %v5186
    %v6055 = vpack.c.b16 %v5201, %v5194
    %v6056 = vpack.c.b16 %v5202, %v5195
    %v6057 = vpack.c.b16 %v5203, %v5196
    %v6058 = vpack.c.b16 %v5204, %v5197
    %v6059 = vpack.c.b16 %v5205, %v5198
    %v6060 = vpack.c.b16 %v5206, %v5199
    %v6061 = vpack.c.b16 %v5207, %v5200
    %v6062 = vpack.c.b16 %v5215, %v5208
    %v6063 = vpack.c.b16 %v5216, %v5209
    %v6064 = vpack.c.b16 %v5217, %v5210
    %v6065 = vpack.c.b16 %v5218, %v5211
    %v6066 = vpack.c.b16 %v5219, %v5212
    %v6067 = vpack.c.b16 %v5220, %v5213
    %v6068 = vpack.c.b16 %v5221, %v5214
    %v6069 = vpack.c.b16 %v5229, %v5222
    %v6070 = vpack.c.b16 %v5230, %v5223
    %v6071 = vpack.c.b16 %v5231, %v5224
    %v6072 = vpack.c.b16 %v5232, %v5225
    %v6073 = vpack.c.b16 %v5233, %v5226
    %v6074 = vpack.c.b16 %v5234, %v5227
    %v6075 = vpack.c.b16 %v5235, %v5228
    %v6076 = vpack.c.b16 %v5243, %v5236
    %v6077 = vpack.c.b16 %v5244, %v5237
    %v6078 = vpack.c.b16 %v5245, %v5238
    %v6079 = vpack.c.b16 %v5246, %v5239
    %v6080 = vpack.c.b16 %v5247, %v5240
    %v6081 = vpack.c.b16 %v5248, %v5241
    %v6082 = vpack.c.b16 %v5249, %v5242
    %v6083 = vpack.c.b16 %v5257, %v5250
    %v6084 = vpack.c.b16 %v5258, %v5251
    %v6085 = vpack.c.b16 %v5259, %v5252
    %v6086 = vpack.c.b16 %v5260, %v5253
    %v6087 = vpack.c.b16 %v5261, %v5254
    %v6088 = vpack.c.b16 %v5262, %v5255
    %v6089 = vpack.c.b16 %v5263, %v5256
    %v6090 = vpack.c.b16 %v5271, %v5264
    %v6091 = vpack.c.b16 %v5272, %v5265
    %v6092 = vpack.c.b16 %v5273, %v5266
    %v6093 = vpack.c.b16 %v5274, %v5267
    %v6094 = vpack.c.b16 %v5275, %v5268
    %v6095 = vpack.c.b16 %v5276, %v5269
    %v6096 = vpack.c.b16 %v5277, %v5270
    %v6097 = vpack.c.b16 %v5285, %v5278
    %v6098 = vpack.c.b16 %v5286, %v5279
    %v6099 = vpack.c.b16 %v5287, %v5280
    %v6100 = vpack.c.b16 %v5288, %v5281
    %v6101 = vpack.c.b16 %v5289, %v5282
    %v6102 = vpack.c.b16 %v5290, %v5283
    %v6103 = vpack.c.b16 %v5291, %v5284
    %v6104 = vpack.c.b16 %v5299, %v5292
    %v6105 = vpack.c.b16 %v5300, %v5293
    %v6106 = vpack.c.b16 %v5301, %v5294
    %v6107 = vpack.c.b16 %v5302, %v5295
    %v6108 = vpack.c.b16 %v5303, %v5296
    %v6109 = vpack.c.b16 %v5304, %v5297
    %v6110 = vpack.c.b16 %v5305, %v5298
    %v6111 = vpack.c.b16 %v5313, %v5306
    %v6112 = vpack.c.b16 %v5314, %v5307
    %v6113 = vpack.c.b16 %v5315, %v5308
    %v6114 = vpack.c.b16 %v5316, %v5309
    %v6115 = vpack.c.b16 %v5317, %v5310
    %v6116 = vpack.c.b16 %v5318, %v5311
    %v6117 = vpack.c.b16 %v5319, %v5312
    %v6118 = vpack.c.b16 %v5327, %v5320
    %v6119 = vpack.c.b16 %v5328, %v5321
    %v6120 = vpack.c.b16 %v5329, %v5322
    %v6121 = vpack.c.b16 %v5330, %v5323
    %v6122 = vpack.c.b16 %v5331, %v5324
    %v6123 = vpack.c.b16 %v5332, %v5325
    %v6124 = vpack.c.b16 %v5333, %v5326
    %v6125 = vpack.c.b16 %v5341, %v5334
    %v6126 = vpack.c.b16 %v5342, %v5335
    %v6127 = vpack.c.b16 %v5343, %v5336
    %v6128 = vpack.c.b16 %v5344, %v5337
    %v6129 = vpack.c.b16 %v5345, %v5338
    %v6130 = vpack.c.b16 %v5346, %v5339
    %v6131 = vpack.c.b16 %v5347, %v5340
    %v6132 = vpack.c.b16 %v5355, %v5348
    %v6133 = vpack.c.b16 %v5356, %v5349
    %v6134 = vpack.c.b16 %v5357, %v5350
    %v6135 = vpack.c.b16 %v5358, %v5351
    %v6136 = vpack.c.b16 %v5359, %v5352
    %v6137 = vpack.c.b16 %v5360, %v5353
    %v6138 = vpack.c.b16 %v5361, %v5354
    %v6139 = vpack.c.b16 %v5369, %v5362
    %v6140 = vpack.c.b16 %v5370, %v5363
    %v6141 = vpack.c.b16 %v5371, %v5364
    %v6142 = vpack.c.b16 %v5372, %v5365
    %v6143 = vpack.c.b16 %v5373, %v5366
    %v6144 = vpack.c.b16 %v5374, %v5367
    %v6145 = vpack.c.b16 %v5375, %v5368
    %v6146 = vpack.c.b16 %v5383, %v5376
    %v6147 = vpack.c.b16 %v5384, %v5377
    %v6148 = vpack.c.b16 %v5385, %v5378
    %v6149 = vpack.c.b16 %v5386, %v5379
    %v6150 = vpack.c.b16 %v5387, %v5380
    %v6151 = vpack.c.b16 %v5388, %v5381
    %v6152 = vpack.c.b16 %v5389, %v5382
    %v6153 = vpack.c.b16 %v5397, %v5390
    %v6154 = vpack.c.b16 %v5398, %v5391
    %v6155 = vpack.c.b16 %v5399, %v5392
    %v6156 = vpack.c.b16 %v5400, %v5393
    %v6157 = vpack.c.b16 %v5401, %v5394
    %v6158 = vpack.c.b16 %v5402, %v5395
    %v6159 = vpack.c.b16 %v5403, %v5396
    %v6160 = vpack.c.b16 %v5411, %v5404
    %v6161 = vpack.c.b16 %v5412, %v5405
    %v6162 = vpack.c.b16 %v5413, %v5406
    %v6163 = vpack.c.b16 %v5414, %v5407
    %v6164 = vpack.c.b16 %v5415, %v5408
    %v6165 = vpack.c.b16 %v5416, %v5409
    %v6166 = vpack.c.b16 %v5417, %v5410
    %v6167 = vpack.c.b16 %v5425, %v5418
    %v6168 = vpack.c.b16 %v5426, %v5419
    %v6169 = vpack.c.b16 %v5427, %v5420
    %v6170 = vpack.c.b16 %v5428, %v5421
    %v6171 = vpack.c.b16 %v5429, %v5422
    %v6172 = vpack.c.b16 %v5430, %v5423
    %v6173 = vpack.c.b16 %v5431, %v5424
    %v6174 = vpack.c.b16 %v5439, %v5432
    %v6175 = vpack.c.b16 %v5440, %v5433
    %v6176 = vpack.c.b16 %v5441, %v5434
    %v6177 = vpack.c.b16 %v5442, %v5435
    %v6178 = vpack.c.b16 %v5443, %v5436
    %v6179 = vpack.c.b16 %v5444, %v5437
    %v6180 = vpack.c.b16 %v5445, %v5438
    %v6181 = vpack.c.b16 %v5453, %v5446
    %v6182 = vpack.c.b16 %v5454, %v5447
    %v6183 = vpack.c.b16 %v5455, %v5448
    %v6184 = vpack.c.b16 %v5456, %v5449
    %v6185 = vpack.c.b16 %v5457, %v5450
    %v6186 = vpack.c.b16 %v5458, %v5451
    %v6187 = vpack.c.b16 %v5459, %v5452
    %v6188 = vpack.c.b16 %v5467, %v5460
    %v6189 = vpack.c.b16 %v5468, %v5461
    %v6190 = vpack.c.b16 %v5469, %v5462
    %v6191 = vpack.c.b16 %v5470, %v5463
    %v6192 = vpack.c.b16 %v5471, %v5464
    %v6193 = vpack.c.b16 %v5472, %v5465
    %v6194 = vpack.c.b16 %v5473, %v5466
    %v6195 = vpack.c.b16 %v5481, %v5474
    %v6196 = vpack.c.b16 %v5482, %v5475
    %v6197 = vpack.c.b16 %v5483, %v5476
    %v6198 = vpack.c.b16 %v5484, %v5477
    %v6199 = vpack.c.b16 %v5485, %v5478
    %v6200 = vpack.c.b16 %v5486, %v5479
    %v6201 = vpack.c.b16 %v5487, %v5480
    %v6202 = vpack.c.b16 %v5495, %v5488
    %v6203 = vpack.c.b16 %v5496, %v5489
    %v6204 = vpack.c.b16 %v5497, %v5490
    %v6205 = vpack.c.b16 %v5498, %v5491
    %v6206 = vpack.c.b16 %v5499, %v5492
    %v6207 = vpack.c.b16 %v5500, %v5493
    %v6208 = vpack.c.b16 %v5501, %v5494
    %v6209 = vpack.c.b16 %v5509, %v5502
    %v6210 = vpack.c.b16 %v5510, %v5503
    %v6211 = vpack.c.b16 %v5511, %v5504
    %v6212 = vpack.c.b16 %v5512, %v5505
    %v6213 = vpack.c.b16 %v5513, %v5506
    %v6214 = vpack.c.b16 %v5514, %v5507
    %v6215 = vpack.c.b16 %v5515, %v5508
    %v6216 = vpack.c.b16 %v5523, %v5516
    %v6217 = vpack.c.b16 %v5524, %v5517
    %v6218 = vpack.c.b16 %v5525, %v5518
    %v6219 = vpack.c.b16 %v5526, %v5519
    %v6220 = vpack.c.b16 %v5527, %v5520
    %v6221 = vpack.c.b16 %v5528, %v5521
    %v6222 = vpack.c.b16 %v5529, %v5522
    %v6223 = vpack.c.b16 %v5537, %v5530
    %v6224 = vpack.c.b16 %v5538, %v5531
    %v6225 = vpack.c.b16 %v5539, %v5532
    %v6226 = vpack.c.b16 %v5540, %v5533
    %v6227 = vpack.c.b16 %v5541, %v5534
    %v6228 = vpack.c.b16 %v5542, %v5535
    %v6229 = vpack.c.b16 %v5543, %v5536
    %v6230 = vpack.c.b16 %v5551, %v5544
    %v6231 = vpack.c.b16 %v5552, %v5545
    %v6232 = vpack.c.b16 %v5553, %v5546
    %v6233 = vpack.c.b16 %v5554, %v5547
    %v6234 = vpack.c.b16 %v5555, %v5548
    %v6235 = vpack.c.b16 %v5556, %v5549
    %v6236 = vpack.c.b16 %v5557, %v5550
    %v6237 = vpack.c.b16 %v5565, %v5558
    %v6238 = vpack.c.b16 %v5566, %v5559
    %v6239 = vpack.c.b16 %v5567, %v5560
    %v6240 = vpack.c.b16 %v5568, %v5561
    %v6241 = vpack.c.b16 %v5569, %v5562
    %v6242 = vpack.c.b16 %v5570, %v5563
    %v6243 = vpack.c.b16 %v5571, %v5564
    %v6244 = vpack.c.b16 %v5579, %v5572
    %v6245 = vpack.c.b16 %v5580, %v5573
    %v6246 = vpack.c.b16 %v5581, %v5574
    %v6247 = vpack.c.b16 %v5582, %v5575
    %v6248 = vpack.c.b16 %v5583, %v5576
    %v6249 = vpack.c.b16 %v5584, %v5577
    %v6250 = vpack.c.b16 %v5585, %v5578
    %v6251 = vpack.c.b16 %v5593, %v5586
    %v6252 = vpack.c.b16 %v5594, %v5587
    %v6253 = vpack.c.b16 %v5595, %v5588
    %v6254 = vpack.c.b16 %v5596, %v5589
    %v6255 = vpack.c.b16 %v5597, %v5590
    %v6256 = vpack.c.b16 %v5598, %v5591
    %v6257 = vpack.c.b16 %v5599, %v5592
    %v6258 = vpack.c.b16 %v5607, %v5600
    %v6259 = vpack.c.b16 %v5608, %v5601
    %v6260 = vpack.c.b16 %v5609, %v5602
    %v6261 = vpack.c.b16 %v5610, %v5603
    %v6262 = vpack.c.b16 %v5611, %v5604
    %v6263 = vpack.c.b16 %v5612, %v5605
    %v6264 = vpack.c.b16 %v5613, %v5606
    %v6265 = vpack.c.b16 %v5621, %v5614
    %v6266 = vpack.c.b16 %v5622, %v5615
    %v6267 = vpack.c.b16 %v5623, %v5616
    %v6268 = vpack.c.b16 %v5624, %v5617
    %v6269 = vpack.c.b16 %v5625, %v5618
    %v6270 = vpack.c.b16 %v5626, %v5619
    %v6271 = vpack.c.b16 %v5627, %v5620
    %v6272 = vpack.c.b16 %v5635, %v5628
    %v6273 = vpack.c.b16 %v5636, %v5629
    %v6274 = vpack.c.b16 %v5637, %v5630
    %v6275 = vpack.c.b16 %v5638, %v5631
    %v6276 = vpack.c.b16 %v5639, %v5632
    %v6277 = vpack.c.b16 %v5640, %v5633
    %v6278 = vpack.c.b16 %v5641, %v5634
    %v6279 = vpack.c.b16 %v5649, %v5642
    %v6280 = vpack.c.b16 %v5650, %v5643
    %v6281 = vpack.c.b16 %v5651, %v5644
    %v6282 = vpack.c.b16 %v5652, %v5645
    %v6283 = vpack.c.b16 %v5653, %v5646
    %v6284 = vpack.c.b16 %v5654, %v5647
    %v6285 = vpack.c.b16 %v5655, %v5648
    %v6286 = vpack.c.b16 %v5663, %v5656
    %v6287 = vpack.c.b16 %v5664, %v5657
    %v6288 = vpack.c.b16 %v5665, %v5658
    %v6289 = vpack.c.b16 %v5666, %v5659
    %v6290 = vpack.c.b16 %v5667, %v5660
    %v6291 = vpack.c.b16 %v5668, %v5661
    %v6292 = vpack.c.b16 %v5669, %v5662
    %v6293 = vpack.c.b16 %v5677, %v5670
    %v6294 = vpack.c.b16 %v5678, %v5671
    %v6295 = vpack.c.b16 %v5679, %v5672
    %v6296 = vpack.c.b16 %v5680, %v5673
    %v6297 = vpack.c.b16 %v5681, %v5674
    %v6298 = vpack.c.b16 %v5682, %v5675
    %v6299 = vpack.c.b16 %v5683, %v5676
    %v6300 = vpack.c.b16 %v5691, %v5684
    %v6301 = vpack.c.b16 %v5692, %v5685
    %v6302 = vpack.c.b16 %v5693, %v5686
    %v6303 = vpack.c.b16 %v5694, %v5687
    %v6304 = vpack.c.b16 %v5695, %v5688
    %v6305 = vpack.c.b16 %v5696, %v5689
    %v6306 = vpack.c.b16 %v5697, %v5690
    %v6307 = vpack.c.b16 %v5705, %v5698
    %v6308 = vpack.c.b16 %v5706, %v5699
    %v6309 = vpack.c.b16 %v5707, %v5700
    %v6310 = vpack.c.b16 %v5708, %v5701
    %v6311 = vpack.c.b16 %v5709, %v5702
    %v6312 = vpack.c.b16 %v5710, %v5703
    %v6313 = vpack.c.b16 %v5711, %v5704
    %v6314 = vpack.c.b16 %v5719, %v5712
    %v6315 = vpack.c.b16 %v5720, %v5713
    %v6316 = vpack.c.b16 %v5721, %v5714
    %v6317 = vpack.c.b16 %v5722, %v5715
    %v6318 = vpack.c.b16 %v5723, %v5716
    %v6319 = vpack.c.b16 %v5724, %v5717
    %v6320 = vpack.c.b16 %v5725, %v5718
    %v6321 = vpack.c.b16 %v5733, %v5726
    %v6322 = vpack.c.b16 %v5734, %v5727
    %v6323 = vpack.c.b16 %v5735, %v5728
    %v6324 = vpack.c.b16 %v5736, %v5729
    %v6325 = vpack.c.b16 %v5737, %v5730
    %v6326 = vpack.c.b16 %v5738, %v5731
    %v6327 = vpack.c.b16 %v5739, %v5732
    %v6328 = vpack.c.b16 %v5747, %v5740
    %v6329 = vpack.c.b16 %v5748, %v5741
    %v6330 = vpack.c.b16 %v5749, %v5742
    %v6331 = vpack.c.b16 %v5750, %v5743
    %v6332 = vpack.c.b16 %v5751, %v5744
    %v6333 = vpack.c.b16 %v5752, %v5745
    %v6334 = vpack.c.b16 %v5753, %v5746
    %v6335 = vpack.c.b16 %v5761, %v5754
    %v6336 = vpack.c.b16 %v5762, %v5755
    %v6337 = vpack.c.b16 %v5763, %v5756
    %v6338 = vpack.c.b16 %v5764, %v5757
    %v6339 = vpack.c.b16 %v5765, %v5758
    %v6340 = vpack.c.b16 %v5766, %v5759
    %v6341 = vpack.c.b16 %v5767, %v5760
    %v6342 = vpack.c.b16 %v5775, %v5768
    %v6343 = vpack.c.b16 %v5776, %v5769
    %v6344 = vpack.c.b16 %v5777, %v5770
    %v6345 = vpack.c.b16 %v5778, %v5771
    %v6346 = vpack.c.b16 %v5779, %v5772
    %v6347 = vpack.c.b16 %v5780, %v5773
    %v6348 = vpack.c.b16 %v5781, %v5774
    %v6349 = vpack.c.b16 %v5789, %v5782
    %v6350 = vpack.c.b16 %v5790, %v5783
    %v6351 = vpack.c.b16 %v5791, %v5784
    %v6352 = vpack.c.b16 %v5792, %v5785
    %v6353 = vpack.c.b16 %v5793, %v5786
    %v6354 = vpack.c.b16 %v5794, %v5787
    %v6355 = vpack.c.b16 %v5795, %v5788
    %v6356 = vpack.c.b16 %v5803, %v5796
    %v6357 = vpack.c.b16 %v5804, %v5797
    %v6358 = vpack.c.b16 %v5805, %v5798
    %v6359 = vpack.c.b16 %v5806, %v5799
    %v6360 = vpack.c.b16 %v5807, %v5800
    %v6361 = vpack.c.b16 %v5808, %v5801
    %v6362 = vpack.c.b16 %v5809, %v5802
    %v6363 = vpack.c.b16 %v5817, %v5810
    %v6364 = vpack.c.b16 %v5818, %v5811
    %v6365 = vpack.c.b16 %v5819, %v5812
    %v6366 = vpack.c.b16 %v5820, %v5813
    %v6367 = vpack.c.b16 %v5821, %v5814
    %v6368 = vpack.c.b16 %v5822, %v5815
    %v6369 = vpack.c.b16 %v5823, %v5816
    %v6370 = vpack.c.b16 %v5831, %v5824
    %v6371 = vpack.c.b16 %v5832, %v5825
    %v6372 = vpack.c.b16 %v5833, %v5826
    %v6373 = vpack.c.b16 %v5834, %v5827
    %v6374 = vpack.c.b16 %v5835, %v5828
    %v6375 = vpack.c.b16 %v5836, %v5829
    %v6376 = vpack.c.b16 %v5837, %v5830
    %v6377 = vpack.c.b16 %v5845, %v5838
    %v6378 = vpack.c.b16 %v5846, %v5839
    %v6379 = vpack.c.b16 %v5847, %v5840
    %v6380 = vpack.c.b16 %v5848, %v5841
    %v6381 = vpack.c.b16 %v5849, %v5842
    %v6382 = vpack.c.b16 %v5850, %v5843
    %v6383 = vpack.c.b16 %v5851, %v5844
    %v6384 = vpack.c.b16 %v5859, %v5852
    %v6385 = vpack.c.b16 %v5860, %v5853
    %v6386 = vpack.c.b16 %v5861, %v5854
    %v6387 = vpack.c.b16 %v5862, %v5855
    %v6388 = vpack.c.b16 %v5863, %v5856
    %v6389 = vpack.c.b16 %v5864, %v5857
    %v6390 = vpack.c.b16 %v5865, %v5858
    %v6391 = vpack.c.b16 %v5873, %v5866
    %v6392 = vpack.c.b16 %v5874, %v5867
    %v6393 = vpack.c.b16 %v5875, %v5868
    %v6394 = vpack.c.b16 %v5876, %v5869
    %v6395 = vpack.c.b16 %v5877, %v5870
    %v6396 = vpack.c.b16 %v5878, %v5871
    %v6397 = vpack.c.b16 %v5879, %v5872
    %v6398 = vpack.c.b16 %v5887, %v5880
    %v6399 = vpack.c.b16 %v5888, %v5881
    %v6400 = vpack.c.b16 %v5889, %v5882
    %v6401 = vpack.c.b16 %v5890, %v5883
    %v6402 = vpack.c.b16 %v5891, %v5884
    %v6403 = vpack.c.b16 %v5892, %v5885
    %v6404 = vpack.c.b16 %v5893, %v5886
    %v6405 = vpack.c.b16 %v5901, %v5894
    %v6406 = vpack.c.b16 %v5902, %v5895
    %v6407 = vpack.c.b16 %v5903, %v5896
    %v6408 = vpack.c.b16 %v5904, %v5897
    %v6409 = vpack.c.b16 %v5905, %v5898
    %v6410 = vpack.c.b16 %v5906, %v5899
    %v6411 = vpack.c.b16 %v5907, %v5900
    %v6412 = vpack.c.b16 %v5915, %v5908
    %v6413 = vpack.c.b16 %v5916, %v5909
    %v6414 = vpack.c.b16 %v5917, %v5910
    %v6415 = vpack.c.b16 %v5918, %v5911
    %v6416 = vpack.c.b16 %v5919, %v5912
    %v6417 = vpack.c.b16 %v5920, %v5913
    %v6418 = vpack.c.b16 %v5921, %v5914
    %v6419 = vpack.c.b16 %v5929, %v5922
    %v6420 = vpack.c.b16 %v5930, %v5923
    %v6421 = vpack.c.b16 %v5931, %v5924
    %v6422 = vpack.c.b16 %v5932, %v5925
    %v6423 = vpack.c.b16 %v5933, %v5926
    %v6424 = vpack.c.b16 %v5934, %v5927
    %v6425 = vpack.c.b16 %v5935, %v5928
    %v6426 = vpack.c.b16 %v5943, %v5936
    %v6427 = vpack.c.b16 %v5944, %v5937
    %v6428 = vpack.c.b16 %v5945, %v5938
    %v6429 = vpack.c.b16 %v5946, %v5939
    %v6430 = vpack.c.b16 %v5947, %v5940
    %v6431 = vpack.c.b16 %v5948, %v5941
    %v6432 = vpack.c.b16 %v5949, %v5942
    %v6433 = vpack.c.b16 %v5957, %v5950
    %v6434 = vpack.c.b16 %v5958, %v5951
    %v6435 = vpack.c.b16 %v5959, %v5952
    %v6436 = vpack.c.b16 %v5960, %v5953
    %v6437 = vpack.c.b16 %v5961, %v5954
    %v6438 = vpack.c.b16 %v5962, %v5955
    %v6439 = vpack.c.b16 %v5963, %v5956
    %v6440 = vpack.c.b16 %v5971, %v5964
    %v6441 = vpack.c.b16 %v5972, %v5965
    %v6442 = vpack.c.b16 %v5973, %v5966
    %v6443 = vpack.c.b16 %v5974, %v5967
    %v6444 = vpack.c.b16 %v5975, %v5968
    %v6445 = vpack.c.b16 %v5976, %v5969
    %v6446 = vpack.c.b16 %v5977, %v5970
    %v6447 = vpack.c.b16 %v5985, %v5978
    %v6448 = vpack.c.b16 %v5986, %v5979
    %v6449 = vpack.c.b16 %v5987, %v5980
    %v6450 = vpack.c.b16 %v5988, %v5981
    %v6451 = vpack.c.b16 %v5989, %v5982
    %v6452 = vpack.c.b16 %v5990, %v5983
    %v6453 = vpack.c.b16 %v5991, %v5984
    %v6454 = vpack.c.b16 %v5999, %v5992
    %v6455 = vpack.c.b16 %v6000, %v5993
    %v6456 = vpack.c.b16 %v6001, %v5994
    %v6457 = vpack.c.b16 %v6002, %v5995
    %v6458 = vpack.c.b16 %v6003, %v5996
    %v6459 = vpack.c.b16 %v6004, %v5997
    %v6460 = vpack.c.b16 %v6005, %v5998
    %v6461 = vpack.c.b16 %v6013, %v6006
    %v6462 = vpack.c.b16 %v6014, %v6007
    %v6463 = vpack.c.b16 %v6015, %v6008
    %v6464 = vpack.c.b16 %v6016, %v6009
    %v6465 = vpack.c.b16 %v6017, %v6010
    %v6466 = vpack.c.b16 %v6018, %v6011
    %v6467 = vpack.c.b16 %v6019, %v6012
    %6916 = vmatpush.bf16.msra.mxu0 %v6069
    %6917 = vmatpush.bf16.msra.mxu0 %v6062
    %6918 = vmatpush.bf16.msra.mxu0 %v6055
    %6919 = vmatpush.bf16.msra.mxu0 %v6048
    %6920 = vmatpush.bf16.msra.mxu0 %v6041
    %6921 = vmatpush.bf16.msra.mxu0 %v6034
    %6922 = vmatpush.bf16.msra.mxu0 %v6027
    %6923 = vmatpush.bf16.msra.mxu0 %v6020
    %6924 = vmatmul.bf16.gmra.mxu0 %v4076
    %v6925 = vpop.f32.mrf.mxu0
    %v6926 = vadd.f32 %v4598, %v6925
    %v6927 = vpop.f32.mrf.mxu0
    %6928 = vdwg.mxu0
    %6929 = vmatpush.bf16.msra.mxu0 %v6125
    %6930 = vmatpush.bf16.msra.mxu0 %v6118
    %6931 = vmatpush.bf16.msra.mxu0 %v6111
    %6932 = vmatpush.bf16.msra.mxu0 %v6104
    %6933 = vmatpush.bf16.msra.mxu0 %v6097
    %6934 = vmatpush.bf16.msra.mxu0 %v6090
    %6935 = vmatpush.bf16.msra.mxu0 %v6083
    %6936 = vmatpush.bf16.msra.mxu0 %v6076
    %6937 = vmatmul.bf16.gmra.mxu0 %v4077
    %v6938 = vpop.f32.mrf.mxu0
    %v6939 = vadd.f32 %v6926, %v6938
    %v6940 = vpop.f32.mrf.mxu0
    %6941 = vdwg.mxu0
    %6942 = vmatpush.bf16.msra.mxu0 %v6181
    %6943 = vmatpush.bf16.msra.mxu0 %v6174
    %6944 = vmatpush.bf16.msra.mxu0 %v6167
    %6945 = vmatpush.bf16.msra.mxu0 %v6160
    %6946 = vmatpush.bf16.msra.mxu0 %v6153
    %6947 = vmatpush.bf16.msra.mxu0 %v6146
    %6948 = vmatpush.bf16.msra.mxu0 %v6139
    %6949 = vmatpush.bf16.msra.mxu0 %v6132
    %6950 = vmatmul.bf16.gmra.mxu0 %v4078
    %v6951 = vpop.f32.mrf.mxu0
    %v6952 = vadd.f32 %v6939, %v6951
    %v6953 = vpop.f32.mrf.mxu0
    %6954 = vdwg.mxu0
    %6955 = vmatpush.bf16.msra.mxu0 %v6237
    %6956 = vmatpush.bf16.msra.mxu0 %v6230
    %6957 = vmatpush.bf16.msra.mxu0 %v6223
    %6958 = vmatpush.bf16.msra.mxu0 %v6216
    %6959 = vmatpush.bf16.msra.mxu0 %v6209
    %6960 = vmatpush.bf16.msra.mxu0 %v6202
    %6961 = vmatpush.bf16.msra.mxu0 %v6195
    %6962 = vmatpush.bf16.msra.mxu0 %v6188
    %6963 = vmatmul.bf16.gmra.mxu0 %v4079
    %v6964 = vpop.f32.mrf.mxu0
    %v6965 = vadd.f32 %v6952, %v6964
    %v6966 = vpop.f32.mrf.mxu0
    %6967 = vdwg.mxu0
    %6968 = vmatpush.bf16.msra.mxu0 %v6293
    %6969 = vmatpush.bf16.msra.mxu0 %v6286
    %6970 = vmatpush.bf16.msra.mxu0 %v6279
    %6971 = vmatpush.bf16.msra.mxu0 %v6272
    %6972 = vmatpush.bf16.msra.mxu0 %v6265
    %6973 = vmatpush.bf16.msra.mxu0 %v6258
    %6974 = vmatpush.bf16.msra.mxu0 %v6251
    %6975 = vmatpush.bf16.msra.mxu0 %v6244
    %6976 = vmatmul.bf16.gmra.mxu0 %v4080
    %v6977 = vpop.f32.mrf.mxu0
    %v6978 = vadd.f32 %v6965, %v6977
    %v6979 = vpop.f32.mrf.mxu0
    %6980 = vdwg.mxu0
    %6981 = vmatpush.bf16.msra.mxu0 %v6349
    %6982 = vmatpush.bf16.msra.mxu0 %v6342
    %6983 = vmatpush.bf16.msra.mxu0 %v6335
    %6984 = vmatpush.bf16.msra.mxu0 %v6328
    %6985 = vmatpush.bf16.msra.mxu0 %v6321
    %6986 = vmatpush.bf16.msra.mxu0 %v6314
    %6987 = vmatpush.bf16.msra.mxu0 %v6307
    %6988 = vmatpush.bf16.msra.mxu0 %v6300
    %6989 = vmatmul.bf16.gmra.mxu0 %v4081
    %v6990 = vpop.f32.mrf.mxu0
    %v6991 = vadd.f32 %v6978, %v6990
    %v6992 = vpop.f32.mrf.mxu0
    %6993 = vdwg.mxu0
    %6994 = vmatpush.bf16.msra.mxu0 %v6405
    %6995 = vmatpush.bf16.msra.mxu0 %v6398
    %6996 = vmatpush.bf16.msra.mxu0 %v6391
    %6997 = vmatpush.bf16.msra.mxu0 %v6384
    %6998 = vmatpush.bf16.msra.mxu0 %v6377
    %6999 = vmatpush.bf16.msra.mxu0 %v6370
    %7000 = vmatpush.bf16.msra.mxu0 %v6363
    %7001 = vmatpush.bf16.msra.mxu0 %v6356
    %7002 = vmatmul.bf16.gmra.mxu0 %v4082
    %v7003 = vpop.f32.mrf.mxu0
    %v7004 = vadd.f32 %v6991, %v7003
    %v7005 = vpop.f32.mrf.mxu0
    %7006 = vdwg.mxu0
    %7007 = vmatpush.bf16.msra.mxu0 %v6461
    %7008 = vmatpush.bf16.msra.mxu0 %v6454
    %7009 = vmatpush.bf16.msra.mxu0 %v6447
    %7010 = vmatpush.bf16.msra.mxu0 %v6440
    %7011 = vmatpush.bf16.msra.mxu0 %v6433
    %7012 = vmatpush.bf16.msra.mxu0 %v6426
    %7013 = vmatpush.bf16.msra.mxu0 %v6419
    %7014 = vmatpush.bf16.msra.mxu0 %v6412
    %7015 = vmatmul.bf16.gmra.mxu0 %v4083
    %v7016 = vpop.f32.mrf.mxu0
    %v7017 = vadd.f32 %v7004, %v7016
    %v7018 = vpop.f32.mrf.mxu0
    %7019 = vdwg.mxu0
    %7020 = vmatpush.bf16.msra.mxu0 %v6070
    %7021 = vmatpush.bf16.msra.mxu0 %v6063
    %7022 = vmatpush.bf16.msra.mxu0 %v6056
    %7023 = vmatpush.bf16.msra.mxu0 %v6049
    %7024 = vmatpush.bf16.msra.mxu0 %v6042
    %7025 = vmatpush.bf16.msra.mxu0 %v6035
    %7026 = vmatpush.bf16.msra.mxu0 %v6028
    %7027 = vmatpush.bf16.msra.mxu0 %v6021
    %7028 = vmatmul.bf16.gmra.mxu0 %v4076
    %v7029 = vpop.f32.mrf.mxu0
    %v7030 = vadd.f32 %v4599, %v7029
    %v7031 = vpop.f32.mrf.mxu0
    %7032 = vdwg.mxu0
    %7033 = vmatpush.bf16.msra.mxu0 %v6126
    %7034 = vmatpush.bf16.msra.mxu0 %v6119
    %7035 = vmatpush.bf16.msra.mxu0 %v6112
    %7036 = vmatpush.bf16.msra.mxu0 %v6105
    %7037 = vmatpush.bf16.msra.mxu0 %v6098
    %7038 = vmatpush.bf16.msra.mxu0 %v6091
    %7039 = vmatpush.bf16.msra.mxu0 %v6084
    %7040 = vmatpush.bf16.msra.mxu0 %v6077
    %7041 = vmatmul.bf16.gmra.mxu0 %v4077
    %v7042 = vpop.f32.mrf.mxu0
    %v7043 = vadd.f32 %v7030, %v7042
    %v7044 = vpop.f32.mrf.mxu0
    %7045 = vdwg.mxu0
    %7046 = vmatpush.bf16.msra.mxu0 %v6182
    %7047 = vmatpush.bf16.msra.mxu0 %v6175
    %7048 = vmatpush.bf16.msra.mxu0 %v6168
    %7049 = vmatpush.bf16.msra.mxu0 %v6161
    %7050 = vmatpush.bf16.msra.mxu0 %v6154
    %7051 = vmatpush.bf16.msra.mxu0 %v6147
    %7052 = vmatpush.bf16.msra.mxu0 %v6140
    %7053 = vmatpush.bf16.msra.mxu0 %v6133
    %7054 = vmatmul.bf16.gmra.mxu0 %v4078
    %v7055 = vpop.f32.mrf.mxu0
    %v7056 = vadd.f32 %v7043, %v7055
    %v7057 = vpop.f32.mrf.mxu0
    %7058 = vdwg.mxu0
    %7059 = vmatpush.bf16.msra.mxu0 %v6238
    %7060 = vmatpush.bf16.msra.mxu0 %v6231
    %7061 = vmatpush.bf16.msra.mxu0 %v6224
    %7062 = vmatpush.bf16.msra.mxu0 %v6217
    %7063 = vmatpush.bf16.msra.mxu0 %v6210
    %7064 = vmatpush.bf16.msra.mxu0 %v6203
    %7065 = vmatpush.bf16.msra.mxu0 %v6196
    %7066 = vmatpush.bf16.msra.mxu0 %v6189
    %7067 = vmatmul.bf16.gmra.mxu0 %v4079
    %v7068 = vpop.f32.mrf.mxu0
    %v7069 = vadd.f32 %v7056, %v7068
    %v7070 = vpop.f32.mrf.mxu0
    %7071 = vdwg.mxu0
    %7072 = vmatpush.bf16.msra.mxu0 %v6294
    %7073 = vmatpush.bf16.msra.mxu0 %v6287
    %7074 = vmatpush.bf16.msra.mxu0 %v6280
    %7075 = vmatpush.bf16.msra.mxu0 %v6273
    %7076 = vmatpush.bf16.msra.mxu0 %v6266
    %7077 = vmatpush.bf16.msra.mxu0 %v6259
    %7078 = vmatpush.bf16.msra.mxu0 %v6252
    %7079 = vmatpush.bf16.msra.mxu0 %v6245
    %7080 = vmatmul.bf16.gmra.mxu0 %v4080
    %v7081 = vpop.f32.mrf.mxu0
    %v7082 = vadd.f32 %v7069, %v7081
    %v7083 = vpop.f32.mrf.mxu0
    %7084 = vdwg.mxu0
    %7085 = vmatpush.bf16.msra.mxu0 %v6350
    %7086 = vmatpush.bf16.msra.mxu0 %v6343
    %7087 = vmatpush.bf16.msra.mxu0 %v6336
    %7088 = vmatpush.bf16.msra.mxu0 %v6329
    %7089 = vmatpush.bf16.msra.mxu0 %v6322
    %7090 = vmatpush.bf16.msra.mxu0 %v6315
    %7091 = vmatpush.bf16.msra.mxu0 %v6308
    %7092 = vmatpush.bf16.msra.mxu0 %v6301
    %7093 = vmatmul.bf16.gmra.mxu0 %v4081
    %v7094 = vpop.f32.mrf.mxu0
    %v7095 = vadd.f32 %v7082, %v7094
    %v7096 = vpop.f32.mrf.mxu0
    %7097 = vdwg.mxu0
    %7098 = vmatpush.bf16.msra.mxu0 %v6406
    %7099 = vmatpush.bf16.msra.mxu0 %v6399
    %7100 = vmatpush.bf16.msra.mxu0 %v6392
    %7101 = vmatpush.bf16.msra.mxu0 %v6385
    %7102 = vmatpush.bf16.msra.mxu0 %v6378
    %7103 = vmatpush.bf16.msra.mxu0 %v6371
    %7104 = vmatpush.bf16.msra.mxu0 %v6364
    %7105 = vmatpush.bf16.msra.mxu0 %v6357
    %7106 = vmatmul.bf16.gmra.mxu0 %v4082
    %v7107 = vpop.f32.mrf.mxu0
    %v7108 = vadd.f32 %v7095, %v7107
    %v7109 = vpop.f32.mrf.mxu0
    %7110 = vdwg.mxu0
    %7111 = vmatpush.bf16.msra.mxu0 %v6462
    %7112 = vmatpush.bf16.msra.mxu0 %v6455
    %7113 = vmatpush.bf16.msra.mxu0 %v6448
    %7114 = vmatpush.bf16.msra.mxu0 %v6441
    %7115 = vmatpush.bf16.msra.mxu0 %v6434
    %7116 = vmatpush.bf16.msra.mxu0 %v6427
    %7117 = vmatpush.bf16.msra.mxu0 %v6420
    %7118 = vmatpush.bf16.msra.mxu0 %v6413
    %7119 = vmatmul.bf16.gmra.mxu0 %v4083
    %v7120 = vpop.f32.mrf.mxu0
    %v7121 = vadd.f32 %v7108, %v7120
    %v7122 = vpop.f32.mrf.mxu0
    %7123 = vdwg.mxu0
    %7124 = vmatpush.bf16.msra.mxu0 %v6071
    %7125 = vmatpush.bf16.msra.mxu0 %v6064
    %7126 = vmatpush.bf16.msra.mxu0 %v6057
    %7127 = vmatpush.bf16.msra.mxu0 %v6050
    %7128 = vmatpush.bf16.msra.mxu0 %v6043
    %7129 = vmatpush.bf16.msra.mxu0 %v6036
    %7130 = vmatpush.bf16.msra.mxu0 %v6029
    %7131 = vmatpush.bf16.msra.mxu0 %v6022
    %7132 = vmatmul.bf16.gmra.mxu0 %v4076
    %v7133 = vpop.f32.mrf.mxu0
    %v7134 = vadd.f32 %v4600, %v7133
    %v7135 = vpop.f32.mrf.mxu0
    %7136 = vdwg.mxu0
    %7137 = vmatpush.bf16.msra.mxu0 %v6127
    %7138 = vmatpush.bf16.msra.mxu0 %v6120
    %7139 = vmatpush.bf16.msra.mxu0 %v6113
    %7140 = vmatpush.bf16.msra.mxu0 %v6106
    %7141 = vmatpush.bf16.msra.mxu0 %v6099
    %7142 = vmatpush.bf16.msra.mxu0 %v6092
    %7143 = vmatpush.bf16.msra.mxu0 %v6085
    %7144 = vmatpush.bf16.msra.mxu0 %v6078
    %7145 = vmatmul.bf16.gmra.mxu0 %v4077
    %v7146 = vpop.f32.mrf.mxu0
    %v7147 = vadd.f32 %v7134, %v7146
    %v7148 = vpop.f32.mrf.mxu0
    %7149 = vdwg.mxu0
    %7150 = vmatpush.bf16.msra.mxu0 %v6183
    %7151 = vmatpush.bf16.msra.mxu0 %v6176
    %7152 = vmatpush.bf16.msra.mxu0 %v6169
    %7153 = vmatpush.bf16.msra.mxu0 %v6162
    %7154 = vmatpush.bf16.msra.mxu0 %v6155
    %7155 = vmatpush.bf16.msra.mxu0 %v6148
    %7156 = vmatpush.bf16.msra.mxu0 %v6141
    %7157 = vmatpush.bf16.msra.mxu0 %v6134
    %7158 = vmatmul.bf16.gmra.mxu0 %v4078
    %v7159 = vpop.f32.mrf.mxu0
    %v7160 = vadd.f32 %v7147, %v7159
    %v7161 = vpop.f32.mrf.mxu0
    %7162 = vdwg.mxu0
    %7163 = vmatpush.bf16.msra.mxu0 %v6239
    %7164 = vmatpush.bf16.msra.mxu0 %v6232
    %7165 = vmatpush.bf16.msra.mxu0 %v6225
    %7166 = vmatpush.bf16.msra.mxu0 %v6218
    %7167 = vmatpush.bf16.msra.mxu0 %v6211
    %7168 = vmatpush.bf16.msra.mxu0 %v6204
    %7169 = vmatpush.bf16.msra.mxu0 %v6197
    %7170 = vmatpush.bf16.msra.mxu0 %v6190
    %7171 = vmatmul.bf16.gmra.mxu0 %v4079
    %v7172 = vpop.f32.mrf.mxu0
    %v7173 = vadd.f32 %v7160, %v7172
    %v7174 = vpop.f32.mrf.mxu0
    %7175 = vdwg.mxu0
    %7176 = vmatpush.bf16.msra.mxu0 %v6295
    %7177 = vmatpush.bf16.msra.mxu0 %v6288
    %7178 = vmatpush.bf16.msra.mxu0 %v6281
    %7179 = vmatpush.bf16.msra.mxu0 %v6274
    %7180 = vmatpush.bf16.msra.mxu0 %v6267
    %7181 = vmatpush.bf16.msra.mxu0 %v6260
    %7182 = vmatpush.bf16.msra.mxu0 %v6253
    %7183 = vmatpush.bf16.msra.mxu0 %v6246
    %7184 = vmatmul.bf16.gmra.mxu0 %v4080
    %v7185 = vpop.f32.mrf.mxu0
    %v7186 = vadd.f32 %v7173, %v7185
    %v7187 = vpop.f32.mrf.mxu0
    %7188 = vdwg.mxu0
    %7189 = vmatpush.bf16.msra.mxu0 %v6351
    %7190 = vmatpush.bf16.msra.mxu0 %v6344
    %7191 = vmatpush.bf16.msra.mxu0 %v6337
    %7192 = vmatpush.bf16.msra.mxu0 %v6330
    %7193 = vmatpush.bf16.msra.mxu0 %v6323
    %7194 = vmatpush.bf16.msra.mxu0 %v6316
    %7195 = vmatpush.bf16.msra.mxu0 %v6309
    %7196 = vmatpush.bf16.msra.mxu0 %v6302
    %7197 = vmatmul.bf16.gmra.mxu0 %v4081
    %v7198 = vpop.f32.mrf.mxu0
    %v7199 = vadd.f32 %v7186, %v7198
    %v7200 = vpop.f32.mrf.mxu0
    %7201 = vdwg.mxu0
    %7202 = vmatpush.bf16.msra.mxu0 %v6407
    %7203 = vmatpush.bf16.msra.mxu0 %v6400
    %7204 = vmatpush.bf16.msra.mxu0 %v6393
    %7205 = vmatpush.bf16.msra.mxu0 %v6386
    %7206 = vmatpush.bf16.msra.mxu0 %v6379
    %7207 = vmatpush.bf16.msra.mxu0 %v6372
    %7208 = vmatpush.bf16.msra.mxu0 %v6365
    %7209 = vmatpush.bf16.msra.mxu0 %v6358
    %7210 = vmatmul.bf16.gmra.mxu0 %v4082
    %v7211 = vpop.f32.mrf.mxu0
    %v7212 = vadd.f32 %v7199, %v7211
    %v7213 = vpop.f32.mrf.mxu0
    %7214 = vdwg.mxu0
    %7215 = vmatpush.bf16.msra.mxu0 %v6463
    %7216 = vmatpush.bf16.msra.mxu0 %v6456
    %7217 = vmatpush.bf16.msra.mxu0 %v6449
    %7218 = vmatpush.bf16.msra.mxu0 %v6442
    %7219 = vmatpush.bf16.msra.mxu0 %v6435
    %7220 = vmatpush.bf16.msra.mxu0 %v6428
    %7221 = vmatpush.bf16.msra.mxu0 %v6421
    %7222 = vmatpush.bf16.msra.mxu0 %v6414
    %7223 = vmatmul.bf16.gmra.mxu0 %v4083
    %v7224 = vpop.f32.mrf.mxu0
    %v7225 = vadd.f32 %v7212, %v7224
    %v7226 = vpop.f32.mrf.mxu0
    %7227 = vdwg.mxu0
    %7228 = vmatpush.bf16.msra.mxu0 %v6072
    %7229 = vmatpush.bf16.msra.mxu0 %v6065
    %7230 = vmatpush.bf16.msra.mxu0 %v6058
    %7231 = vmatpush.bf16.msra.mxu0 %v6051
    %7232 = vmatpush.bf16.msra.mxu0 %v6044
    %7233 = vmatpush.bf16.msra.mxu0 %v6037
    %7234 = vmatpush.bf16.msra.mxu0 %v6030
    %7235 = vmatpush.bf16.msra.mxu0 %v6023
    %7236 = vmatmul.bf16.gmra.mxu0 %v4076
    %v7237 = vpop.f32.mrf.mxu0
    %v7238 = vadd.f32 %v4601, %v7237
    %v7239 = vpop.f32.mrf.mxu0
    %7240 = vdwg.mxu0
    %7241 = vmatpush.bf16.msra.mxu0 %v6128
    %7242 = vmatpush.bf16.msra.mxu0 %v6121
    %7243 = vmatpush.bf16.msra.mxu0 %v6114
    %7244 = vmatpush.bf16.msra.mxu0 %v6107
    %7245 = vmatpush.bf16.msra.mxu0 %v6100
    %7246 = vmatpush.bf16.msra.mxu0 %v6093
    %7247 = vmatpush.bf16.msra.mxu0 %v6086
    %7248 = vmatpush.bf16.msra.mxu0 %v6079
    %7249 = vmatmul.bf16.gmra.mxu0 %v4077
    %v7250 = vpop.f32.mrf.mxu0
    %v7251 = vadd.f32 %v7238, %v7250
    %v7252 = vpop.f32.mrf.mxu0
    %7253 = vdwg.mxu0
    %7254 = vmatpush.bf16.msra.mxu0 %v6184
    %7255 = vmatpush.bf16.msra.mxu0 %v6177
    %7256 = vmatpush.bf16.msra.mxu0 %v6170
    %7257 = vmatpush.bf16.msra.mxu0 %v6163
    %7258 = vmatpush.bf16.msra.mxu0 %v6156
    %7259 = vmatpush.bf16.msra.mxu0 %v6149
    %7260 = vmatpush.bf16.msra.mxu0 %v6142
    %7261 = vmatpush.bf16.msra.mxu0 %v6135
    %7262 = vmatmul.bf16.gmra.mxu0 %v4078
    %v7263 = vpop.f32.mrf.mxu0
    %v7264 = vadd.f32 %v7251, %v7263
    %v7265 = vpop.f32.mrf.mxu0
    %7266 = vdwg.mxu0
    %7267 = vmatpush.bf16.msra.mxu0 %v6240
    %7268 = vmatpush.bf16.msra.mxu0 %v6233
    %7269 = vmatpush.bf16.msra.mxu0 %v6226
    %7270 = vmatpush.bf16.msra.mxu0 %v6219
    %7271 = vmatpush.bf16.msra.mxu0 %v6212
    %7272 = vmatpush.bf16.msra.mxu0 %v6205
    %7273 = vmatpush.bf16.msra.mxu0 %v6198
    %7274 = vmatpush.bf16.msra.mxu0 %v6191
    %7275 = vmatmul.bf16.gmra.mxu0 %v4079
    %v7276 = vpop.f32.mrf.mxu0
    %v7277 = vadd.f32 %v7264, %v7276
    %v7278 = vpop.f32.mrf.mxu0
    %7279 = vdwg.mxu0
    %7280 = vmatpush.bf16.msra.mxu0 %v6296
    %7281 = vmatpush.bf16.msra.mxu0 %v6289
    %7282 = vmatpush.bf16.msra.mxu0 %v6282
    %7283 = vmatpush.bf16.msra.mxu0 %v6275
    %7284 = vmatpush.bf16.msra.mxu0 %v6268
    %7285 = vmatpush.bf16.msra.mxu0 %v6261
    %7286 = vmatpush.bf16.msra.mxu0 %v6254
    %7287 = vmatpush.bf16.msra.mxu0 %v6247
    %7288 = vmatmul.bf16.gmra.mxu0 %v4080
    %v7289 = vpop.f32.mrf.mxu0
    %v7290 = vadd.f32 %v7277, %v7289
    %v7291 = vpop.f32.mrf.mxu0
    %7292 = vdwg.mxu0
    %7293 = vmatpush.bf16.msra.mxu0 %v6352
    %7294 = vmatpush.bf16.msra.mxu0 %v6345
    %7295 = vmatpush.bf16.msra.mxu0 %v6338
    %7296 = vmatpush.bf16.msra.mxu0 %v6331
    %7297 = vmatpush.bf16.msra.mxu0 %v6324
    %7298 = vmatpush.bf16.msra.mxu0 %v6317
    %7299 = vmatpush.bf16.msra.mxu0 %v6310
    %7300 = vmatpush.bf16.msra.mxu0 %v6303
    %7301 = vmatmul.bf16.gmra.mxu0 %v4081
    %v7302 = vpop.f32.mrf.mxu0
    %v7303 = vadd.f32 %v7290, %v7302
    %v7304 = vpop.f32.mrf.mxu0
    %7305 = vdwg.mxu0
    %7306 = vmatpush.bf16.msra.mxu0 %v6408
    %7307 = vmatpush.bf16.msra.mxu0 %v6401
    %7308 = vmatpush.bf16.msra.mxu0 %v6394
    %7309 = vmatpush.bf16.msra.mxu0 %v6387
    %7310 = vmatpush.bf16.msra.mxu0 %v6380
    %7311 = vmatpush.bf16.msra.mxu0 %v6373
    %7312 = vmatpush.bf16.msra.mxu0 %v6366
    %7313 = vmatpush.bf16.msra.mxu0 %v6359
    %7314 = vmatmul.bf16.gmra.mxu0 %v4082
    %v7315 = vpop.f32.mrf.mxu0
    %v7316 = vadd.f32 %v7303, %v7315
    %v7317 = vpop.f32.mrf.mxu0
    %7318 = vdwg.mxu0
    %7319 = vmatpush.bf16.msra.mxu0 %v6464
    %7320 = vmatpush.bf16.msra.mxu0 %v6457
    %7321 = vmatpush.bf16.msra.mxu0 %v6450
    %7322 = vmatpush.bf16.msra.mxu0 %v6443
    %7323 = vmatpush.bf16.msra.mxu0 %v6436
    %7324 = vmatpush.bf16.msra.mxu0 %v6429
    %7325 = vmatpush.bf16.msra.mxu0 %v6422
    %7326 = vmatpush.bf16.msra.mxu0 %v6415
    %7327 = vmatmul.bf16.gmra.mxu0 %v4083
    %v7328 = vpop.f32.mrf.mxu0
    %v7329 = vadd.f32 %v7316, %v7328
    %v7330 = vpop.f32.mrf.mxu0
    %7331 = vdwg.mxu0
    %7332 = vmatpush.bf16.msra.mxu0 %v6073
    %7333 = vmatpush.bf16.msra.mxu0 %v6066
    %7334 = vmatpush.bf16.msra.mxu0 %v6059
    %7335 = vmatpush.bf16.msra.mxu0 %v6052
    %7336 = vmatpush.bf16.msra.mxu0 %v6045
    %7337 = vmatpush.bf16.msra.mxu0 %v6038
    %7338 = vmatpush.bf16.msra.mxu0 %v6031
    %7339 = vmatpush.bf16.msra.mxu0 %v6024
    %7340 = vmatmul.bf16.gmra.mxu0 %v4076
    %v7341 = vpop.f32.mrf.mxu0
    %v7342 = vadd.f32 %v4602, %v7341
    %v7343 = vpop.f32.mrf.mxu0
    %7344 = vdwg.mxu0
    %7345 = vmatpush.bf16.msra.mxu0 %v6129
    %7346 = vmatpush.bf16.msra.mxu0 %v6122
    %7347 = vmatpush.bf16.msra.mxu0 %v6115
    %7348 = vmatpush.bf16.msra.mxu0 %v6108
    %7349 = vmatpush.bf16.msra.mxu0 %v6101
    %7350 = vmatpush.bf16.msra.mxu0 %v6094
    %7351 = vmatpush.bf16.msra.mxu0 %v6087
    %7352 = vmatpush.bf16.msra.mxu0 %v6080
    %7353 = vmatmul.bf16.gmra.mxu0 %v4077
    %v7354 = vpop.f32.mrf.mxu0
    %v7355 = vadd.f32 %v7342, %v7354
    %v7356 = vpop.f32.mrf.mxu0
    %7357 = vdwg.mxu0
    %7358 = vmatpush.bf16.msra.mxu0 %v6185
    %7359 = vmatpush.bf16.msra.mxu0 %v6178
    %7360 = vmatpush.bf16.msra.mxu0 %v6171
    %7361 = vmatpush.bf16.msra.mxu0 %v6164
    %7362 = vmatpush.bf16.msra.mxu0 %v6157
    %7363 = vmatpush.bf16.msra.mxu0 %v6150
    %7364 = vmatpush.bf16.msra.mxu0 %v6143
    %7365 = vmatpush.bf16.msra.mxu0 %v6136
    %7366 = vmatmul.bf16.gmra.mxu0 %v4078
    %v7367 = vpop.f32.mrf.mxu0
    %v7368 = vadd.f32 %v7355, %v7367
    %v7369 = vpop.f32.mrf.mxu0
    %7370 = vdwg.mxu0
    %7371 = vmatpush.bf16.msra.mxu0 %v6241
    %7372 = vmatpush.bf16.msra.mxu0 %v6234
    %7373 = vmatpush.bf16.msra.mxu0 %v6227
    %7374 = vmatpush.bf16.msra.mxu0 %v6220
    %7375 = vmatpush.bf16.msra.mxu0 %v6213
    %7376 = vmatpush.bf16.msra.mxu0 %v6206
    %7377 = vmatpush.bf16.msra.mxu0 %v6199
    %7378 = vmatpush.bf16.msra.mxu0 %v6192
    %7379 = vmatmul.bf16.gmra.mxu0 %v4079
    %v7380 = vpop.f32.mrf.mxu0
    %v7381 = vadd.f32 %v7368, %v7380
    %v7382 = vpop.f32.mrf.mxu0
    %7383 = vdwg.mxu0
    %7384 = vmatpush.bf16.msra.mxu0 %v6297
    %7385 = vmatpush.bf16.msra.mxu0 %v6290
    %7386 = vmatpush.bf16.msra.mxu0 %v6283
    %7387 = vmatpush.bf16.msra.mxu0 %v6276
    %7388 = vmatpush.bf16.msra.mxu0 %v6269
    %7389 = vmatpush.bf16.msra.mxu0 %v6262
    %7390 = vmatpush.bf16.msra.mxu0 %v6255
    %7391 = vmatpush.bf16.msra.mxu0 %v6248
    %7392 = vmatmul.bf16.gmra.mxu0 %v4080
    %v7393 = vpop.f32.mrf.mxu0
    %v7394 = vadd.f32 %v7381, %v7393
    %v7395 = vpop.f32.mrf.mxu0
    %7396 = vdwg.mxu0
    %7397 = vmatpush.bf16.msra.mxu0 %v6353
    %7398 = vmatpush.bf16.msra.mxu0 %v6346
    %7399 = vmatpush.bf16.msra.mxu0 %v6339
    %7400 = vmatpush.bf16.msra.mxu0 %v6332
    %7401 = vmatpush.bf16.msra.mxu0 %v6325
    %7402 = vmatpush.bf16.msra.mxu0 %v6318
    %7403 = vmatpush.bf16.msra.mxu0 %v6311
    %7404 = vmatpush.bf16.msra.mxu0 %v6304
    %7405 = vmatmul.bf16.gmra.mxu0 %v4081
    %v7406 = vpop.f32.mrf.mxu0
    %v7407 = vadd.f32 %v7394, %v7406
    %v7408 = vpop.f32.mrf.mxu0
    %7409 = vdwg.mxu0
    %7410 = vmatpush.bf16.msra.mxu0 %v6409
    %7411 = vmatpush.bf16.msra.mxu0 %v6402
    %7412 = vmatpush.bf16.msra.mxu0 %v6395
    %7413 = vmatpush.bf16.msra.mxu0 %v6388
    %7414 = vmatpush.bf16.msra.mxu0 %v6381
    %7415 = vmatpush.bf16.msra.mxu0 %v6374
    %7416 = vmatpush.bf16.msra.mxu0 %v6367
    %7417 = vmatpush.bf16.msra.mxu0 %v6360
    %7418 = vmatmul.bf16.gmra.mxu0 %v4082
    %v7419 = vpop.f32.mrf.mxu0
    %v7420 = vadd.f32 %v7407, %v7419
    %v7421 = vpop.f32.mrf.mxu0
    %7422 = vdwg.mxu0
    %7423 = vmatpush.bf16.msra.mxu0 %v6465
    %7424 = vmatpush.bf16.msra.mxu0 %v6458
    %7425 = vmatpush.bf16.msra.mxu0 %v6451
    %7426 = vmatpush.bf16.msra.mxu0 %v6444
    %7427 = vmatpush.bf16.msra.mxu0 %v6437
    %7428 = vmatpush.bf16.msra.mxu0 %v6430
    %7429 = vmatpush.bf16.msra.mxu0 %v6423
    %7430 = vmatpush.bf16.msra.mxu0 %v6416
    %7431 = vmatmul.bf16.gmra.mxu0 %v4083
    %v7432 = vpop.f32.mrf.mxu0
    %v7433 = vadd.f32 %v7420, %v7432
    %v7434 = vpop.f32.mrf.mxu0
    %7435 = vdwg.mxu0
    %7436 = vmatpush.bf16.msra.mxu0 %v6074
    %7437 = vmatpush.bf16.msra.mxu0 %v6067
    %7438 = vmatpush.bf16.msra.mxu0 %v6060
    %7439 = vmatpush.bf16.msra.mxu0 %v6053
    %7440 = vmatpush.bf16.msra.mxu0 %v6046
    %7441 = vmatpush.bf16.msra.mxu0 %v6039
    %7442 = vmatpush.bf16.msra.mxu0 %v6032
    %7443 = vmatpush.bf16.msra.mxu0 %v6025
    %7444 = vmatmul.bf16.gmra.mxu0 %v4076
    %v7445 = vpop.f32.mrf.mxu0
    %v7446 = vadd.f32 %v4603, %v7445
    %v7447 = vpop.f32.mrf.mxu0
    %7448 = vdwg.mxu0
    %7449 = vmatpush.bf16.msra.mxu0 %v6130
    %7450 = vmatpush.bf16.msra.mxu0 %v6123
    %7451 = vmatpush.bf16.msra.mxu0 %v6116
    %7452 = vmatpush.bf16.msra.mxu0 %v6109
    %7453 = vmatpush.bf16.msra.mxu0 %v6102
    %7454 = vmatpush.bf16.msra.mxu0 %v6095
    %7455 = vmatpush.bf16.msra.mxu0 %v6088
    %7456 = vmatpush.bf16.msra.mxu0 %v6081
    %7457 = vmatmul.bf16.gmra.mxu0 %v4077
    %v7458 = vpop.f32.mrf.mxu0
    %v7459 = vadd.f32 %v7446, %v7458
    %v7460 = vpop.f32.mrf.mxu0
    %7461 = vdwg.mxu0
    %7462 = vmatpush.bf16.msra.mxu0 %v6186
    %7463 = vmatpush.bf16.msra.mxu0 %v6179
    %7464 = vmatpush.bf16.msra.mxu0 %v6172
    %7465 = vmatpush.bf16.msra.mxu0 %v6165
    %7466 = vmatpush.bf16.msra.mxu0 %v6158
    %7467 = vmatpush.bf16.msra.mxu0 %v6151
    %7468 = vmatpush.bf16.msra.mxu0 %v6144
    %7469 = vmatpush.bf16.msra.mxu0 %v6137
    %7470 = vmatmul.bf16.gmra.mxu0 %v4078
    %v7471 = vpop.f32.mrf.mxu0
    %v7472 = vadd.f32 %v7459, %v7471
    %v7473 = vpop.f32.mrf.mxu0
    %7474 = vdwg.mxu0
    %7475 = vmatpush.bf16.msra.mxu0 %v6242
    %7476 = vmatpush.bf16.msra.mxu0 %v6235
    %7477 = vmatpush.bf16.msra.mxu0 %v6228
    %7478 = vmatpush.bf16.msra.mxu0 %v6221
    %7479 = vmatpush.bf16.msra.mxu0 %v6214
    %7480 = vmatpush.bf16.msra.mxu0 %v6207
    %7481 = vmatpush.bf16.msra.mxu0 %v6200
    %7482 = vmatpush.bf16.msra.mxu0 %v6193
    %7483 = vmatmul.bf16.gmra.mxu0 %v4079
    %v7484 = vpop.f32.mrf.mxu0
    %v7485 = vadd.f32 %v7472, %v7484
    %v7486 = vpop.f32.mrf.mxu0
    %7487 = vdwg.mxu0
    %7488 = vmatpush.bf16.msra.mxu0 %v6298
    %7489 = vmatpush.bf16.msra.mxu0 %v6291
    %7490 = vmatpush.bf16.msra.mxu0 %v6284
    %7491 = vmatpush.bf16.msra.mxu0 %v6277
    %7492 = vmatpush.bf16.msra.mxu0 %v6270
    %7493 = vmatpush.bf16.msra.mxu0 %v6263
    %7494 = vmatpush.bf16.msra.mxu0 %v6256
    %7495 = vmatpush.bf16.msra.mxu0 %v6249
    %7496 = vmatmul.bf16.gmra.mxu0 %v4080
    %v7497 = vpop.f32.mrf.mxu0
    %v7498 = vadd.f32 %v7485, %v7497
    %v7499 = vpop.f32.mrf.mxu0
    %7500 = vdwg.mxu0
    %7501 = vmatpush.bf16.msra.mxu0 %v6354
    %7502 = vmatpush.bf16.msra.mxu0 %v6347
    %7503 = vmatpush.bf16.msra.mxu0 %v6340
    %7504 = vmatpush.bf16.msra.mxu0 %v6333
    %7505 = vmatpush.bf16.msra.mxu0 %v6326
    %7506 = vmatpush.bf16.msra.mxu0 %v6319
    %7507 = vmatpush.bf16.msra.mxu0 %v6312
    %7508 = vmatpush.bf16.msra.mxu0 %v6305
    %7509 = vmatmul.bf16.gmra.mxu0 %v4081
    %v7510 = vpop.f32.mrf.mxu0
    %v7511 = vadd.f32 %v7498, %v7510
    %v7512 = vpop.f32.mrf.mxu0
    %7513 = vdwg.mxu0
    %7514 = vmatpush.bf16.msra.mxu0 %v6410
    %7515 = vmatpush.bf16.msra.mxu0 %v6403
    %7516 = vmatpush.bf16.msra.mxu0 %v6396
    %7517 = vmatpush.bf16.msra.mxu0 %v6389
    %7518 = vmatpush.bf16.msra.mxu0 %v6382
    %7519 = vmatpush.bf16.msra.mxu0 %v6375
    %7520 = vmatpush.bf16.msra.mxu0 %v6368
    %7521 = vmatpush.bf16.msra.mxu0 %v6361
    %7522 = vmatmul.bf16.gmra.mxu0 %v4082
    %v7523 = vpop.f32.mrf.mxu0
    %v7524 = vadd.f32 %v7511, %v7523
    %v7525 = vpop.f32.mrf.mxu0
    %7526 = vdwg.mxu0
    %7527 = vmatpush.bf16.msra.mxu0 %v6466
    %7528 = vmatpush.bf16.msra.mxu0 %v6459
    %7529 = vmatpush.bf16.msra.mxu0 %v6452
    %7530 = vmatpush.bf16.msra.mxu0 %v6445
    %7531 = vmatpush.bf16.msra.mxu0 %v6438
    %7532 = vmatpush.bf16.msra.mxu0 %v6431
    %7533 = vmatpush.bf16.msra.mxu0 %v6424
    %7534 = vmatpush.bf16.msra.mxu0 %v6417
    %7535 = vmatmul.bf16.gmra.mxu0 %v4083
    %v7536 = vpop.f32.mrf.mxu0
    %v7537 = vadd.f32 %v7524, %v7536
    %v7538 = vpop.f32.mrf.mxu0
    %7539 = vdwg.mxu0
    %7540 = vmatpush.bf16.msra.mxu0 %v6075
    %7541 = vmatpush.bf16.msra.mxu0 %v6068
    %7542 = vmatpush.bf16.msra.mxu0 %v6061
    %7543 = vmatpush.bf16.msra.mxu0 %v6054
    %7544 = vmatpush.bf16.msra.mxu0 %v6047
    %7545 = vmatpush.bf16.msra.mxu0 %v6040
    %7546 = vmatpush.bf16.msra.mxu0 %v6033
    %7547 = vmatpush.bf16.msra.mxu0 %v6026
    %7548 = vmatmul.bf16.gmra.mxu0 %v4076
    %v7549 = vpop.f32.mrf.mxu0
    %v7550 = vadd.f32 %v4604, %v7549
    %v7551 = vpop.f32.mrf.mxu0
    %7552 = vdwg.mxu0
    %7553 = vmatpush.bf16.msra.mxu0 %v6131
    %7554 = vmatpush.bf16.msra.mxu0 %v6124
    %7555 = vmatpush.bf16.msra.mxu0 %v6117
    %7556 = vmatpush.bf16.msra.mxu0 %v6110
    %7557 = vmatpush.bf16.msra.mxu0 %v6103
    %7558 = vmatpush.bf16.msra.mxu0 %v6096
    %7559 = vmatpush.bf16.msra.mxu0 %v6089
    %7560 = vmatpush.bf16.msra.mxu0 %v6082
    %7561 = vmatmul.bf16.gmra.mxu0 %v4077
    %v7562 = vpop.f32.mrf.mxu0
    %v7563 = vadd.f32 %v7550, %v7562
    %v7564 = vpop.f32.mrf.mxu0
    %7565 = vdwg.mxu0
    %7566 = vmatpush.bf16.msra.mxu0 %v6187
    %7567 = vmatpush.bf16.msra.mxu0 %v6180
    %7568 = vmatpush.bf16.msra.mxu0 %v6173
    %7569 = vmatpush.bf16.msra.mxu0 %v6166
    %7570 = vmatpush.bf16.msra.mxu0 %v6159
    %7571 = vmatpush.bf16.msra.mxu0 %v6152
    %7572 = vmatpush.bf16.msra.mxu0 %v6145
    %7573 = vmatpush.bf16.msra.mxu0 %v6138
    %7574 = vmatmul.bf16.gmra.mxu0 %v4078
    %v7575 = vpop.f32.mrf.mxu0
    %v7576 = vadd.f32 %v7563, %v7575
    %v7577 = vpop.f32.mrf.mxu0
    %7578 = vdwg.mxu0
    %7579 = vmatpush.bf16.msra.mxu0 %v6243
    %7580 = vmatpush.bf16.msra.mxu0 %v6236
    %7581 = vmatpush.bf16.msra.mxu0 %v6229
    %7582 = vmatpush.bf16.msra.mxu0 %v6222
    %7583 = vmatpush.bf16.msra.mxu0 %v6215
    %7584 = vmatpush.bf16.msra.mxu0 %v6208
    %7585 = vmatpush.bf16.msra.mxu0 %v6201
    %7586 = vmatpush.bf16.msra.mxu0 %v6194
    %7587 = vmatmul.bf16.gmra.mxu0 %v4079
    %v7588 = vpop.f32.mrf.mxu0
    %v7589 = vadd.f32 %v7576, %v7588
    %v7590 = vpop.f32.mrf.mxu0
    %7591 = vdwg.mxu0
    %7592 = vmatpush.bf16.msra.mxu0 %v6299
    %7593 = vmatpush.bf16.msra.mxu0 %v6292
    %7594 = vmatpush.bf16.msra.mxu0 %v6285
    %7595 = vmatpush.bf16.msra.mxu0 %v6278
    %7596 = vmatpush.bf16.msra.mxu0 %v6271
    %7597 = vmatpush.bf16.msra.mxu0 %v6264
    %7598 = vmatpush.bf16.msra.mxu0 %v6257
    %7599 = vmatpush.bf16.msra.mxu0 %v6250
    %7600 = vmatmul.bf16.gmra.mxu0 %v4080
    %v7601 = vpop.f32.mrf.mxu0
    %v7602 = vadd.f32 %v7589, %v7601
    %v7603 = vpop.f32.mrf.mxu0
    %7604 = vdwg.mxu0
    %7605 = vmatpush.bf16.msra.mxu0 %v6355
    %7606 = vmatpush.bf16.msra.mxu0 %v6348
    %7607 = vmatpush.bf16.msra.mxu0 %v6341
    %7608 = vmatpush.bf16.msra.mxu0 %v6334
    %7609 = vmatpush.bf16.msra.mxu0 %v6327
    %7610 = vmatpush.bf16.msra.mxu0 %v6320
    %7611 = vmatpush.bf16.msra.mxu0 %v6313
    %7612 = vmatpush.bf16.msra.mxu0 %v6306
    %7613 = vmatmul.bf16.gmra.mxu0 %v4081
    %v7614 = vpop.f32.mrf.mxu0
    %v7615 = vadd.f32 %v7602, %v7614
    %v7616 = vpop.f32.mrf.mxu0
    %7617 = vdwg.mxu0
    %7618 = vmatpush.bf16.msra.mxu0 %v6411
    %7619 = vmatpush.bf16.msra.mxu0 %v6404
    %7620 = vmatpush.bf16.msra.mxu0 %v6397
    %7621 = vmatpush.bf16.msra.mxu0 %v6390
    %7622 = vmatpush.bf16.msra.mxu0 %v6383
    %7623 = vmatpush.bf16.msra.mxu0 %v6376
    %7624 = vmatpush.bf16.msra.mxu0 %v6369
    %7625 = vmatpush.bf16.msra.mxu0 %v6362
    %7626 = vmatmul.bf16.gmra.mxu0 %v4082
    %v7627 = vpop.f32.mrf.mxu0
    %v7628 = vadd.f32 %v7615, %v7627
    %v7629 = vpop.f32.mrf.mxu0
    %7630 = vdwg.mxu0
    %7631 = vmatpush.bf16.msra.mxu0 %v6467
    %7632 = vmatpush.bf16.msra.mxu0 %v6460
    %7633 = vmatpush.bf16.msra.mxu0 %v6453
    %7634 = vmatpush.bf16.msra.mxu0 %v6446
    %7635 = vmatpush.bf16.msra.mxu0 %v6439
    %7636 = vmatpush.bf16.msra.mxu0 %v6432
    %7637 = vmatpush.bf16.msra.mxu0 %v6425
    %7638 = vmatpush.bf16.msra.mxu0 %v6418
    %7639 = vmatmul.bf16.gmra.mxu0 %v4083
    %v7640 = vpop.f32.mrf.mxu0
    %v7641 = vadd.f32 %v7628, %v7640
    %v7642 = vpop.f32.mrf.mxu0
    %7643 = vdwg.mxu0
    %v7644 = vsub.f32 0.0, %v7017
    %v7645 = vsub.f32 0.0, %v7121
    %v7646 = vsub.f32 0.0, %v7225
    %v7647 = vsub.f32 0.0, %v7329
    %v7648 = vsub.f32 0.0, %v7433
    %v7649 = vsub.f32 0.0, %v7537
    %v7650 = vsub.f32 0.0, %v7641
    %v7651 = vmul.f32 %v7644, 1.442695
    %v7652 = vpow.pop %v7651
    %v7653 = vmul.f32 %v7645, 1.442695
    %v7654 = vpow.pop %v7653
    %v7655 = vmul.f32 %v7646, 1.442695
    %v7656 = vpow.pop %v7655
    %v7657 = vmul.f32 %v7647, 1.442695
    %v7658 = vpow.pop %v7657
    %v7659 = vmul.f32 %v7648, 1.442695
    %v7660 = vpow.pop %v7659
    %v7661 = vmul.f32 %v7649, 1.442695
    %v7662 = vpow.pop %v7661
    %v7663 = vmul.f32 %v7650, 1.442695
    %v7664 = vpow.pop %v7663
    %v7665 = vadd.f32 %v7652, 1.0
    %v7666 = vadd.f32 %v7654, 1.0
    %v7667 = vadd.f32 %v7656, 1.0
    %v7668 = vadd.f32 %v7658, 1.0
    %v7669 = vadd.f32 %v7660, 1.0
    %v7670 = vadd.f32 %v7662, 1.0
    %v7671 = vadd.f32 %v7664, 1.0
    %v7672 = vrcp.pop %v7665
    %v7673 = vrcp.pop %v7666
    %v7674 = vrcp.pop %v7667
    %v7675 = vrcp.pop %v7668
    %v7676 = vrcp.pop %v7669
    %v7677 = vrcp.pop %v7670
    %v7678 = vrcp.pop %v7671
    %7679 = vst [vmem:[#allocation28] sm:$0xff] %v7672
    %7680 = vst [vmem:[#allocation28 + $0x8] sm:$0xff] %v7673
    %7681 = vst [vmem:[#allocation28 + $0x10] sm:$0xff] %v7674
    %7682 = vst [vmem:[#allocation28 + $0x18] sm:$0xff] %v7675
    %7683 = vst [vmem:[#allocation28 + $0x20] sm:$0xff] %v7676
    %7684 = vst [vmem:[#allocation28 + $0x28] sm:$0xff] %v7677
    %7685 = vst [vmem:[#allocation28 + $0x30] sm:$0xff] %v7678
    // Predicated region
    $region126: #{tpu_custom_call.1} parent=1 // pred_check
      _
    $region127: #{tpu_custom_call.1} parent=1 // pred_check_branch
      %7687 = sbr.rel (0) target = $region129
    $region128: #{tpu_custom_call.1} parent=1 // pred_region
      %7689 = vsyncadd [#allocation7], 0
      %s7691 = sshll.u32 [#allocation28], 4
      %s7692 = int_to_ptr.vmem [resolvable:$true] %s7691
      %s7693 = sshll.u32 %s17, 4
      %s7694 = int_to_ptr.hbm [resolvable:$true] %s7693
      %7696 = dma.vmem_to_hbm [thread:$0]  %s7692, 896, %s7694, [#allocation7]
    $region129: #{tpu_custom_call.1} parent=1 // pred_fallthru
      _
    // Predicated region
    $region130: #{tpu_custom_call.1} parent=1 // pred_check
      _
    $region131: #{tpu_custom_call.1} parent=1 // pred_check_branch
      %7698 = sbr.rel (0) target = $region133
    $region132: #{tpu_custom_call.1} parent=1 // pred_region
      %7700 = dma.done [#allocation7], 896
    $region133: #{tpu_custom_call.1} parent=1 // pred_fallthru
      _
    %7701 = vsyncpa [#allocation6], 1
    %7702 = vsyncpa [#allocation9], 1
    %7703 = vsyncpa [#allocation12], 1
    %7704 = vsyncpa [#allocation15], 1
    %7705 = vsyncpa [#allocation18], 1
    %7706 = vsyncpa [#allocation21], 1
    %7707 = vsyncpa [#allocation24], 1
    %7708 = vsyncpa [#allocation27], 1
    %7709 = vsyncpa [#allocation7], 1
  %7710 = vsyncmov [#allocation4]
  %s7711 = vpop.sfrf %7710
  %p7712 = scmp.eq.s32.totalorder %s7711, 0
  %p7713 = pneg %p7712
  %7715 = shalt.err (%p7713)
  %s7716 = scalar_lea.sflag [#allocation4], 1
  %7717 = vsyncmov %s7716
  %s7718 = vpop.sfrf %7717
  %p7719 = scmp.eq.s32.totalorder %s7718, 0
  %p7720 = pneg %p7719
  %7722 = shalt.err (%p7720)

</llo_original>
